<compile_context>
chip_gen: v7x
topology: tpu7x:2x2x1
jax: 0.10.0
libtpu: 0.0.40
codegen_flags: <defaults>
</compile_context>

<pallas_src>
import math

import jax
import jax.numpy as jnp
import numpy as np
from jax import lax
from jax.experimental import pallas as pl
from jax.experimental.pallas import tpu as pltpu


# ---------------------------------------------------------------------------
# Fused attention kernel: one grid step == one block of batch elements,
# all heads.  Everything (projections, scores, softmax, value weighting and
# the output projection) stays resident in VMEM for the block.
# ---------------------------------------------------------------------------
def make_attention_kernel(n_head, hidden_dim, out_dim, scale, fast_math):
    cdt = jnp.bfloat16 if fast_math else jnp.float32
    prec = None if fast_math else lax.Precision.HIGHEST

    def mm(a, b):  # 2-D matmul, f32 accumulate
        return jnp.dot(a.astype(cdt), b.astype(cdt),
                       preferred_element_type=jnp.float32, precision=prec)

    def bmm(eq, a, b):  # batched (single batch dim) matmul, f32 accumulate
        return jnp.einsum(eq, a.astype(cdt), b.astype(cdt),
                          preferred_element_type=jnp.float32, precision=prec)

    def kernel(k_ref, q_ref, wk_ref, bk_ref, wq_ref, bq_ref, wp_ref, bp_ref,
               out_ref, score_ref):
        b_blk, k_len, embed_dim = k_ref.shape
        q_len = q_ref.shape[1]
        rk = b_blk * k_len
        rq = b_blk * q_len

        # Flatten the batch block into the matmul M dimension (leading-dim
        # reshape only -> free) so projections see b_blk*len rows.
        k2 = k_ref[...].reshape(rk, embed_dim)
        q2 = q_ref[...].reshape(rq, embed_dim)

        o_heads = []
        for h in range(n_head):            # static unroll; n_head is small
            # Head-major weights: wk_ref[h] is a leading-axis index, so no
            # 16-lane column slices of kx/qx anywhere in the kernel.
            kx = mm(k2, wk_ref[h]) + bk_ref[h]           # (rk, hd) f32
            qx = mm(q2, wq_ref[h]) + bq_ref[h]           # (rq, hd) f32
            if scale != 1.0:                             # scaled_dot_product
                qx = qx * scale

            kx3 = kx.reshape(b_blk, k_len, hidden_dim)   # free leading split
            qx3 = qx.reshape(b_blk, q_len, hidden_dim)

            # score = qx @ kx^T, batched over the batch block, contraction on
            # the last dims (no explicit transpose of kx3).
            s = bmm('bqd,bkd->bqk', qx3, kx3)            # (b_blk, q, k) f32

            # softmax over the key axis (f32, max-subtracted)
            m = jnp.max(s, axis=-1, keepdims=True)
            e = jnp.exp(s - m)
            p = e * pl.reciprocal(jnp.sum(e, axis=-1, keepdims=True),
                                  approx=fast_math)
            score_ref[h] = p.astype(score_ref.dtype)     # one block write/head

            # attention-weighted values (values == kx per the reference)
            o = bmm('bqk,bkd->bqd', p, kx3)              # (b_blk, q, hd) f32
            o_heads.append(o.reshape(rq, hidden_dim))

        # Output projection.
        if n_head > 1 and hidden_dim % 128 == 0:
            # Lane-tile-aligned heads: concat once, ONE K = n_head*hd matmul.
            o_cat = jnp.concatenate(o_heads, axis=-1)                 # (rq, nhd)
            wp = wp_ref[...].reshape(n_head * hidden_dim, out_dim)    # free
            y = mm(o_cat, wp)
        else:
            # Toy / unaligned sizes: per-head accumulation (no unaligned lane
            # concatenate, weights indexed on the leading axis).
            y = mm(o_heads[0], wp_ref[0])
            for h in range(1, n_head):
                y = y + mm(o_heads[h], wp_ref[h])
        y = y + bp_ref[...]

        out_ref[...] = y.reshape(b_blk, q_len, out_dim).astype(out_ref.dtype)

    return kernel


def _pick_batch_block(mb, k_len, q_len, target_rows=128, max_rows=1024):
    """Smallest divisor of mb whose row count reaches ~128 (fills MXU rows),
    capped so the per-step block stays comfortably inside VMEM."""
    max_len = max(k_len, q_len)
    best = 1
    for d in range(1, mb + 1):
        if mb % d:
            continue
        rows = d * max_len
        if rows <= max_rows:
            best = d
            if rows >= target_rows:
                break
    return best


# ---------------------------------------------------------------------------
# Wrapper
# ---------------------------------------------------------------------------
def attention_forward(k, q, params, *, n_head, hidden_dim,
                      score_function='dot_product', fast_math=False,
                      b_blk=None):
    """Returns (output, score) matching the PyTorch Attention.forward."""
    if k.ndim == 2:
        k = k[:, None, :]
    if q.ndim == 2:
        q = q[:, None, :]
    mb, k_len, embed_dim = k.shape
    q_len = q.shape[1]
    out_dim = params["w_proj"].shape[1]

    if score_function == 'dot_product':
        scale = 1.0
    elif score_function == 'scaled_dot_product':
        scale = 1.0 / math.sqrt(hidden_dim)
    else:
        # TODO(synk): 'mlp' and 'bi_linear' score functions not implemented.
        raise NotImplementedError(score_function)

    if b_blk is None:
        b_blk = _pick_batch_block(mb, k_len, q_len)
    assert mb % b_blk == 0, "b_blk must divide the batch size"

    # Head-major weight layouts (host-side, one-time layout plumbing) so the
    # kernel indexes heads on a leading axis instead of 16-lane column slices.
    w_kh = params["w_k"].reshape(embed_dim, n_head, hidden_dim).transpose(1, 0, 2)
    w_qh = params["w_q"].reshape(embed_dim, n_head, hidden_dim).transpose(1, 0, 2)
    b_kh = params["b_k"].reshape(n_head, 1, hidden_dim)
    b_qh = params["b_q"].reshape(n_head, 1, hidden_dim)
    w_ph = params["w_proj"].reshape(n_head, hidden_dim, out_dim)
    b_p = params["b_proj"].reshape(1, out_dim)

    score_dtype = jnp.bfloat16 if fast_math else jnp.float32
    kernel = make_attention_kernel(n_head, hidden_dim, out_dim, scale, fast_math)

    grid = (mb // b_blk,)
    output, score = pl.pallas_call(
        kernel,
        out_shape=(
            jax.ShapeDtypeStruct((mb, q_len, out_dim), jnp.float32),
            jax.ShapeDtypeStruct((n_head, mb, q_len, k_len), score_dtype),
        ),
        grid=grid,
        in_specs=[
            pl.BlockSpec((b_blk, k_len, embed_dim), lambda b: (b, 0, 0)),       # k
            pl.BlockSpec((b_blk, q_len, embed_dim), lambda b: (b, 0, 0)),       # q
            pl.BlockSpec((n_head, embed_dim, hidden_dim), lambda b: (0, 0, 0)), # w_k
            pl.BlockSpec((n_head, 1, hidden_dim), lambda b: (0, 0, 0)),         # b_k
            pl.BlockSpec((n_head, embed_dim, hidden_dim), lambda b: (0, 0, 0)), # w_q
            pl.BlockSpec((n_head, 1, hidden_dim), lambda b: (0, 0, 0)),         # b_q
            pl.BlockSpec((n_head, hidden_dim, out_dim), lambda b: (0, 0, 0)),   # w_proj
            pl.BlockSpec((1, out_dim), lambda b: (0, 0)),                       # b_proj
        ],
        out_specs=(
            pl.BlockSpec((b_blk, q_len, out_dim), lambda b: (b, 0, 0)),
            pl.BlockSpec((n_head, b_blk, q_len, k_len), lambda b: (0, b, 0, 0)),
        ),
        compiler_params=pltpu.CompilerParams(
            dimension_semantics=("parallel",),
            vmem_limit_bytes=32 * 1024 * 1024),
    )(k, q, w_kh, b_kh, w_qh, b_qh, w_ph, b_p)

    # PyTorch returns score with leading dim n_head*mb (head-major), which is
    # exactly a free reshape of our (n_head, mb, q_len, k_len) layout.
    score = score.reshape(n_head * mb, q_len, k_len)
    # nn.Dropout(p=0) in eval == identity; nothing to do.
    return output, score


# ---------------------------------------------------------------------------
# Pure-JAX reference (mirrors the PyTorch forward exactly; HIGHEST precision
# so the f32 comparison is meaningful on TPU)
# ---------------------------------------------------------------------------
def attention_reference(k, q, params, *, n_head, hidden_dim,
                        score_function='dot_product'):
    hp = lax.Precision.HIGHEST
    mb, k_len, _ = k.shape
    q_len = q.shape[1]
    kx = jnp.einsum('ble,ef->blf', k, params["w_k"], precision=hp) + params["b_k"]
    kx = kx.reshape(mb, k_len, n_head, hidden_dim)
    kx = jnp.transpose(kx, (2, 0, 1, 3)).reshape(-1, k_len, hidden_dim)
    qx = jnp.einsum('ble,ef->blf', q, params["w_q"], precision=hp) + params["b_q"]
    qx = qx.reshape(mb, q_len, n_head, hidden_dim)
    qx = jnp.transpose(qx, (2, 0, 1, 3)).reshape(-1, q_len, hidden_dim)
    s = jnp.einsum("bqd,bkd->bqk", qx, kx, precision=hp)
    if score_function == 'scaled_dot_product':
        s = s / math.sqrt(hidden_dim)
    s = jax.nn.softmax(s, axis=-1)
    out = jnp.einsum("bqk,bkd->bqd", s, kx, precision=hp)
    out = jnp.concatenate(jnp.split(out, n_head, axis=0), axis=-1)
    out = jnp.einsum('bqd,do->bqo', out, params["w_proj"], precision=hp)
    out = out + params["b_proj"]
    return out, s


# ---------------------------------------------------------------------------
# Deterministic parameter init (shapes per Attention.__init__)
# ---------------------------------------------------------------------------
def init_params(key, embed_dim, hidden_dim, n_head, out_dim):
    ks = jax.random.split(key, 6)

    def lin(kw, kb, fan_in, fan_out):
        bound = 1.0 / math.sqrt(fan_in)
        w = jax.random.uniform(kw, (fan_in, fan_out), jnp.float32, -bound, bound)
        b = jax.random.uniform(kb, (fan_out,), jnp.float32, -bound, bound)
        return w, b

    w_q, b_q = lin(ks[0], ks[1], embed_dim, n_head * hidden_dim)
    w_k, b_k = lin(ks[2], ks[3], embed_dim, n_head * hidden_dim)
    w_proj, b_proj = lin(ks[4], ks[5], n_head * hidden_dim, out_dim)
    # score_function='dot_product' -> self.weight is None (no extra parameter).
    return {"w_q": w_q, "b_q": b_q, "w_k": w_k, "b_k": b_k,
            "w_proj": w_proj, "b_proj": b_proj}


if __name__ == "__main__":
    embed_dim, n_head = 32, 2
    hidden_dim = embed_dim // n_head          # default: embed_dim // n_head
    out_dim = embed_dim                       # default: embed_dim
    mb, k_len, q_len = 2, 8, 8

    root = jax.random.PRNGKey(0)
    kp, kk, kq = jax.random.split(root, 3)
    params = init_params(kp, embed_dim, hidden_dim, n_head, out_dim)
    k = jax.random.normal(kk, (mb, k_len, embed_dim), jnp.float32)
    q = jax.random.normal(kq, (mb, q_len, embed_dim), jnp.float32)

    out, score = attention_forward(k, q, params,
                                   n_head=n_head, hidden_dim=hidden_dim)
    jax.block_until_ready((out, score))

    out_ref, score_ref = attention_reference(
        k, q, params, n_head=n_head, hidden_dim=hidden_dim)
    np.testing.assert_allclose(np.asarray(out), np.asarray(out_ref),
                               rtol=1e-5, atol=1e-5)
    np.testing.assert_allclose(np.asarray(score), np.asarray(score_ref),
                               rtol=1e-5, atol=1e-5)

    print("KERNEL_OK")
</pallas_src>

<mosaic_0001>
module attributes {stable_mosaic.version = 11 : i64} {
  func.func @kernel(%arg0: i32, %arg1: memref<2x8x32xf32, #tpu.memory_space<vmem>>, %arg2: memref<2x8x32xf32, #tpu.memory_space<vmem>>, %arg3: memref<2x32x16xf32, #tpu.memory_space<vmem>>, %arg4: memref<2x1x16xf32, #tpu.memory_space<vmem>>, %arg5: memref<2x32x16xf32, #tpu.memory_space<vmem>>, %arg6: memref<2x1x16xf32, #tpu.memory_space<vmem>>, %arg7: memref<2x16x32xf32, #tpu.memory_space<vmem>>, %arg8: memref<1x32xf32, #tpu.memory_space<vmem>>, %arg9: memref<2x8x32xf32, #tpu.memory_space<vmem>>, %arg10: memref<2x2x8x8xf32, #tpu.memory_space<vmem>>) attributes {dimension_semantics = [#tpu.dimension_semantics<parallel>], iteration_bounds = array<i64: 1>, scalar_prefetch = 0 : i64, scratch_operands = 0 : i64, tpu.core_type = #tpu.core_type<tc>, window_params = [{transform_indices = @transform_0, window_bounds = array<i64: 2, 8, 32>}, {transform_indices = @transform_1, window_bounds = array<i64: 2, 8, 32>}, {pipeline_mode = #tpu.pipeline_mode<synchronous>, transform_indices = @transform_2, window_bounds = array<i64: 2, 32, 16>}, {pipeline_mode = #tpu.pipeline_mode<synchronous>, transform_indices = @transform_3, window_bounds = array<i64: 2, 1, 16>}, {pipeline_mode = #tpu.pipeline_mode<synchronous>, transform_indices = @transform_4, window_bounds = array<i64: 2, 32, 16>}, {pipeline_mode = #tpu.pipeline_mode<synchronous>, transform_indices = @transform_5, window_bounds = array<i64: 2, 1, 16>}, {pipeline_mode = #tpu.pipeline_mode<synchronous>, transform_indices = @transform_6, window_bounds = array<i64: 2, 16, 32>}, {pipeline_mode = #tpu.pipeline_mode<synchronous>, transform_indices = @transform_7, window_bounds = array<i64: 1, 32>}, {transform_indices = @transform_8, window_bounds = array<i64: 2, 8, 32>}, {transform_indices = @transform_9, window_bounds = array<i64: 2, 2, 8, 8>}]} {
    %c0 = arith.constant 0 : index
    %c0_0 = arith.constant 0 : index
    %c0_1 = arith.constant 0 : index
    %0 = vector.load %arg1[%c0, %c0_0, %c0_1] : memref<2x8x32xf32, #tpu.memory_space<vmem>>, vector<2x8x32xf32>
    %1 = vector.shape_cast %0 : vector<2x8x32xf32> to vector<16x32xf32>
    %c0_2 = arith.constant 0 : index
    %c0_3 = arith.constant 0 : index
    %c0_4 = arith.constant 0 : index
    %2 = vector.load %arg2[%c0_2, %c0_3, %c0_4] : memref<2x8x32xf32, #tpu.memory_space<vmem>>, vector<2x8x32xf32>
    %3 = vector.shape_cast %2 : vector<2x8x32xf32> to vector<16x32xf32>
    %c0_5 = arith.constant 0 : index
    %c0_6 = arith.constant 0 : index
    %c0_7 = arith.constant 0 : index
    %4 = vector.load %arg3[%c0_5, %c0_6, %c0_7] : memref<2x32x16xf32, #tpu.memory_space<vmem>>, vector<1x32x16xf32>
    %5 = vector.shape_cast %4 : vector<1x32x16xf32> to vector<32x16xf32>
    %cst = arith.constant dense<0.000000e+00> : vector<16x16xf32>
    %6 = tpu.matmul %1, %5, %cst {dimension_numbers = #tpu.dot_dimension_numbers<[1], [0], [0], [1], [0, 0, 1, 1], [], []>, precision = #tpu.contract_precision<fp32>} : vector<16x32xf32>, vector<32x16xf32>, vector<16x16xf32> -> vector<16x16xf32>
    %c0_8 = arith.constant 0 : index
    %c0_9 = arith.constant 0 : index
    %c0_10 = arith.constant 0 : index
    %7 = vector.load %arg4[%c0_8, %c0_9, %c0_10] : memref<2x1x16xf32, #tpu.memory_space<vmem>>, vector<1x1x16xf32>
    %8 = vector.shape_cast %7 : vector<1x1x16xf32> to vector<1x16xf32>
    %9 = vector.broadcast %8 : vector<1x16xf32> to vector<16x16xf32>
    %10 = arith.addf %6, %9 : vector<16x16xf32>
    %c0_11 = arith.constant 0 : index
    %c0_12 = arith.constant 0 : index
    %c0_13 = arith.constant 0 : index
    %11 = vector.load %arg5[%c0_11, %c0_12, %c0_13] : memref<2x32x16xf32, #tpu.memory_space<vmem>>, vector<1x32x16xf32>
    %12 = vector.shape_cast %11 : vector<1x32x16xf32> to vector<32x16xf32>
    %cst_14 = arith.constant dense<0.000000e+00> : vector<16x16xf32>
    %13 = tpu.matmul %3, %12, %cst_14 {dimension_numbers = #tpu.dot_dimension_numbers<[1], [0], [0], [1], [0, 0, 1, 1], [], []>, precision = #tpu.contract_precision<fp32>} : vector<16x32xf32>, vector<32x16xf32>, vector<16x16xf32> -> vector<16x16xf32>
    %c0_15 = arith.constant 0 : index
    %c0_16 = arith.constant 0 : index
    %c0_17 = arith.constant 0 : index
    %14 = vector.load %arg6[%c0_15, %c0_16, %c0_17] : memref<2x1x16xf32, #tpu.memory_space<vmem>>, vector<1x1x16xf32>
    %15 = vector.shape_cast %14 : vector<1x1x16xf32> to vector<1x16xf32>
    %16 = vector.broadcast %15 : vector<1x16xf32> to vector<16x16xf32>
    %17 = arith.addf %13, %16 : vector<16x16xf32>
    %18 = vector.shape_cast %10 : vector<16x16xf32> to vector<2x8x16xf32>
    %19 = vector.shape_cast %17 : vector<16x16xf32> to vector<2x8x16xf32>
    "tpu.trace_start"() <{level = 10 : i32, message = "bqd,bkd->bqk"}> : () -> ()
    %cst_18 = arith.constant dense<0.000000e+00> : vector<2x8x8xf32>
    %20 = tpu.matmul %19, %18, %cst_18 {dimension_numbers = #tpu.dot_dimension_numbers<[2], [2], [1], [1], [0, 0, 0, 1, 1, 1], [0], [0]>, precision = #tpu.contract_precision<fp32>} : vector<2x8x16xf32>, vector<2x8x16xf32>, vector<2x8x8xf32> -> vector<2x8x8xf32>
    "tpu.trace_stop"() : () -> ()
    %cst_19 = arith.constant dense<0xFF800000> : vector<2x8xf32>
    %21 = vector.multi_reduction <maximumf>, %20, %cst_19 [2] : vector<2x8x8xf32> to vector<2x8xf32>
    %22 = vector.shape_cast %21 : vector<2x8xf32> to vector<2x8x1xf32>
    %23 = vector.broadcast %22 : vector<2x8x1xf32> to vector<2x8x8xf32>
    %24 = arith.subf %20, %23 : vector<2x8x8xf32>
    %25 = math.exp %24 : vector<2x8x8xf32>
    %cst_20 = arith.constant dense<0.000000e+00> : vector<2x8xf32>
    %26 = vector.multi_reduction <add>, %25, %cst_20 [2] : vector<2x8x8xf32> to vector<2x8xf32>
    %27 = vector.shape_cast %26 : vector<2x8xf32> to vector<2x8x1xf32>
    %28 = tpu.reciprocal %27 : vector<2x8x1xf32> -> vector<2x8x1xf32>
    %29 = vector.broadcast %28 : vector<2x8x1xf32> to vector<2x8x8xf32>
    %30 = arith.mulf %25, %29 : vector<2x8x8xf32>
    %c0_21 = arith.constant 0 : index
    %c0_22 = arith.constant 0 : index
    %c0_23 = arith.constant 0 : index
    %c0_24 = arith.constant 0 : index
    %31 = vector.load %arg10[%c0_21, %c0_22, %c0_23, %c0_24] : memref<2x2x8x8xf32, #tpu.memory_space<vmem>>, vector<1x2x8x8xf32>
    %32 = vector.shape_cast %31 : vector<1x2x8x8xf32> to vector<2x8x8xf32>
    %33 = vector.shape_cast %30 : vector<2x8x8xf32> to vector<1x2x8x8xf32>
    tpu.vector_store %arg10[%c0_21, %c0_22, %c0_23, %c0_24], %33 {strides = array<i32>} : memref<2x2x8x8xf32, #tpu.memory_space<vmem>>, vector<1x2x8x8xf32>,
    "tpu.trace_start"() <{level = 10 : i32, message = "bqk,bkd->bqd"}> : () -> ()
    %cst_25 = arith.constant dense<0.000000e+00> : vector<2x8x16xf32>
    %34 = tpu.matmul %30, %18, %cst_25 {dimension_numbers = #tpu.dot_dimension_numbers<[2], [1], [1], [2], [0, 0, 0, 1, 1, 2], [0], [0]>, precision = #tpu.contract_precision<fp32>} : vector<2x8x8xf32>, vector<2x8x16xf32>, vector<2x8x16xf32> -> vector<2x8x16xf32>
    "tpu.trace_stop"() : () -> ()
    %35 = vector.shape_cast %34 : vector<2x8x16xf32> to vector<16x16xf32>
    %c1 = arith.constant 1 : index
    %c0_26 = arith.constant 0 : index
    %c0_27 = arith.constant 0 : index
    %36 = vector.load %arg3[%c1, %c0_26, %c0_27] : memref<2x32x16xf32, #tpu.memory_space<vmem>>, vector<1x32x16xf32>
    %37 = vector.shape_cast %36 : vector<1x32x16xf32> to vector<32x16xf32>
    %cst_28 = arith.constant dense<0.000000e+00> : vector<16x16xf32>
    %38 = tpu.matmul %1, %37, %cst_28 {dimension_numbers = #tpu.dot_dimension_numbers<[1], [0], [0], [1], [0, 0, 1, 1], [], []>, precision = #tpu.contract_precision<fp32>} : vector<16x32xf32>, vector<32x16xf32>, vector<16x16xf32> -> vector<16x16xf32>
    %c1_29 = arith.constant 1 : index
    %c0_30 = arith.constant 0 : index
    %c0_31 = arith.constant 0 : index
    %39 = vector.load %arg4[%c1_29, %c0_30, %c0_31] : memref<2x1x16xf32, #tpu.memory_space<vmem>>, vector<1x1x16xf32>
    %40 = vector.shape_cast %39 : vector<1x1x16xf32> to vector<1x16xf32>
    %41 = vector.broadcast %40 : vector<1x16xf32> to vector<16x16xf32>
    %42 = arith.addf %38, %41 : vector<16x16xf32>
    %c1_32 = arith.constant 1 : index
    %c0_33 = arith.constant 0 : index
    %c0_34 = arith.constant 0 : index
    %43 = vector.load %arg5[%c1_32, %c0_33, %c0_34] : memref<2x32x16xf32, #tpu.memory_space<vmem>>, vector<1x32x16xf32>
    %44 = vector.shape_cast %43 : vector<1x32x16xf32> to vector<32x16xf32>
    %cst_35 = arith.constant dense<0.000000e+00> : vector<16x16xf32>
    %45 = tpu.matmul %3, %44, %cst_35 {dimension_numbers = #tpu.dot_dimension_numbers<[1], [0], [0], [1], [0, 0, 1, 1], [], []>, precision = #tpu.contract_precision<fp32>} : vector<16x32xf32>, vector<32x16xf32>, vector<16x16xf32> -> vector<16x16xf32>
    %c1_36 = arith.constant 1 : index
    %c0_37 = arith.constant 0 : index
    %c0_38 = arith.constant 0 : index
    %46 = vector.load %arg6[%c1_36, %c0_37, %c0_38] : memref<2x1x16xf32, #tpu.memory_space<vmem>>, vector<1x1x16xf32>
    %47 = vector.shape_cast %46 : vector<1x1x16xf32> to vector<1x16xf32>
    %48 = vector.broadcast %47 : vector<1x16xf32> to vector<16x16xf32>
    %49 = arith.addf %45, %48 : vector<16x16xf32>
    %50 = vector.shape_cast %42 : vector<16x16xf32> to vector<2x8x16xf32>
    %51 = vector.shape_cast %49 : vector<16x16xf32> to vector<2x8x16xf32>
    "tpu.trace_start"() <{level = 10 : i32, message = "bqd,bkd->bqk"}> : () -> ()
    %cst_39 = arith.constant dense<0.000000e+00> : vector<2x8x8xf32>
    %52 = tpu.matmul %51, %50, %cst_39 {dimension_numbers = #tpu.dot_dimension_numbers<[2], [2], [1], [1], [0, 0, 0, 1, 1, 1], [0], [0]>, precision = #tpu.contract_precision<fp32>} : vector<2x8x16xf32>, vector<2x8x16xf32>, vector<2x8x8xf32> -> vector<2x8x8xf32>
    "tpu.trace_stop"() : () -> ()
    %cst_40 = arith.constant dense<0xFF800000> : vector<2x8xf32>
    %53 = vector.multi_reduction <maximumf>, %52, %cst_40 [2] : vector<2x8x8xf32> to vector<2x8xf32>
    %54 = vector.shape_cast %53 : vector<2x8xf32> to vector<2x8x1xf32>
    %55 = vector.broadcast %54 : vector<2x8x1xf32> to vector<2x8x8xf32>
    %56 = arith.subf %52, %55 : vector<2x8x8xf32>
    %57 = math.exp %56 : vector<2x8x8xf32>
    %cst_41 = arith.constant dense<0.000000e+00> : vector<2x8xf32>
    %58 = vector.multi_reduction <add>, %57, %cst_41 [2] : vector<2x8x8xf32> to vector<2x8xf32>
    %59 = vector.shape_cast %58 : vector<2x8xf32> to vector<2x8x1xf32>
    %60 = tpu.reciprocal %59 : vector<2x8x1xf32> -> vector<2x8x1xf32>
    %61 = vector.broadcast %60 : vector<2x8x1xf32> to vector<2x8x8xf32>
    %62 = arith.mulf %57, %61 : vector<2x8x8xf32>
    %c1_42 = arith.constant 1 : index
    %c0_43 = arith.constant 0 : index
    %c0_44 = arith.constant 0 : index
    %c0_45 = arith.constant 0 : index
    %63 = vector.load %arg10[%c1_42, %c0_43, %c0_44, %c0_45] : memref<2x2x8x8xf32, #tpu.memory_space<vmem>>, vector<1x2x8x8xf32>
    %64 = vector.shape_cast %63 : vector<1x2x8x8xf32> to vector<2x8x8xf32>
    %65 = vector.shape_cast %62 : vector<2x8x8xf32> to vector<1x2x8x8xf32>
    tpu.vector_store %arg10[%c1_42, %c0_43, %c0_44, %c0_45], %65 {strides = array<i32>} : memref<2x2x8x8xf32, #tpu.memory_space<vmem>>, vector<1x2x8x8xf32>,
    "tpu.trace_start"() <{level = 10 : i32, message = "bqk,bkd->bqd"}> : () -> ()
    %cst_46 = arith.constant dense<0.000000e+00> : vector<2x8x16xf32>
    %66 = tpu.matmul %62, %50, %cst_46 {dimension_numbers = #tpu.dot_dimension_numbers<[2], [1], [1], [2], [0, 0, 0, 1, 1, 2], [0], [0]>, precision = #tpu.contract_precision<fp32>} : vector<2x8x8xf32>, vector<2x8x16xf32>, vector<2x8x16xf32> -> vector<2x8x16xf32>
    "tpu.trace_stop"() : () -> ()
    %67 = vector.shape_cast %66 : vector<2x8x16xf32> to vector<16x16xf32>
    %c0_47 = arith.constant 0 : index
    %c0_48 = arith.constant 0 : index
    %c0_49 = arith.constant 0 : index
    %68 = vector.load %arg7[%c0_47, %c0_48, %c0_49] : memref<2x16x32xf32, #tpu.memory_space<vmem>>, vector<1x16x32xf32>
    %69 = vector.shape_cast %68 : vector<1x16x32xf32> to vector<16x32xf32>
    %cst_50 = arith.constant dense<0.000000e+00> : vector<16x32xf32>
    %70 = tpu.matmul %35, %69, %cst_50 {dimension_numbers = #tpu.dot_dimension_numbers<[1], [0], [0], [1], [0, 0, 1, 1], [], []>, precision = #tpu.contract_precision<fp32>} : vector<16x16xf32>, vector<16x32xf32>, vector<16x32xf32> -> vector<16x32xf32>
    %c1_51 = arith.constant 1 : index
    %c0_52 = arith.constant 0 : index
    %c0_53 = arith.constant 0 : index
    %71 = vector.load %arg7[%c1_51, %c0_52, %c0_53] : memref<2x16x32xf32, #tpu.memory_space<vmem>>, vector<1x16x32xf32>
    %72 = vector.shape_cast %71 : vector<1x16x32xf32> to vector<16x32xf32>
    %cst_54 = arith.constant dense<0.000000e+00> : vector<16x32xf32>
    %73 = tpu.matmul %67, %72, %cst_54 {dimension_numbers = #tpu.dot_dimension_numbers<[1], [0], [0], [1], [0, 0, 1, 1], [], []>, precision = #tpu.contract_precision<fp32>} : vector<16x16xf32>, vector<16x32xf32>, vector<16x32xf32> -> vector<16x32xf32>
    %74 = arith.addf %70, %73 : vector<16x32xf32>
    %c0_55 = arith.constant 0 : index
    %c0_56 = arith.constant 0 : index
    %75 = vector.load %arg8[%c0_55, %c0_56] : memref<1x32xf32, #tpu.memory_space<vmem>>, vector<1x32xf32>
    %76 = vector.broadcast %75 : vector<1x32xf32> to vector<16x32xf32>
    %77 = arith.addf %74, %76 : vector<16x32xf32>
    %78 = vector.shape_cast %77 : vector<16x32xf32> to vector<2x8x32xf32>
    %c0_57 = arith.constant 0 : index
    %c0_58 = arith.constant 0 : index
    %c0_59 = arith.constant 0 : index
    %79 = vector.load %arg9[%c0_57, %c0_58, %c0_59] : memref<2x8x32xf32, #tpu.memory_space<vmem>>, vector<2x8x32xf32>
    tpu.vector_store %arg9[%c0_57, %c0_58, %c0_59], %78 {strides = array<i32>} : memref<2x8x32xf32, #tpu.memory_space<vmem>>, vector<2x8x32xf32>,
    return
  }
  func.func @transform_0(%arg0: i32) -> (i32, i32, i32) {
    %c0_i32 = arith.constant 0 : i32
    %c0_i32_0 = arith.constant 0 : i32
    %c0_i32_1 = arith.constant 0 : i32
    return %arg0, %c0_i32, %c0_i32_0 : i32, i32, i32
  }
  func.func @transform_1(%arg0: i32) -> (i32, i32, i32) {
    %c0_i32 = arith.constant 0 : i32
    %c0_i32_0 = arith.constant 0 : i32
    %c0_i32_1 = arith.constant 0 : i32
    return %arg0, %c0_i32, %c0_i32_0 : i32, i32, i32
  }
  func.func @transform_2(%arg0: i32) -> (i32, i32, i32) {
    %c0_i32 = arith.constant 0 : i32
    %c0_i32_0 = arith.constant 0 : i32
    %c0_i32_1 = arith.constant 0 : i32
    %c0_i32_2 = arith.constant 0 : i32
    return %c0_i32, %c0_i32_0, %c0_i32_1 : i32, i32, i32
  }
  func.func @transform_3(%arg0: i32) -> (i32, i32, i32) {
    %c0_i32 = arith.constant 0 : i32
    %c0_i32_0 = arith.constant 0 : i32
    %c0_i32_1 = arith.constant 0 : i32
    %c0_i32_2 = arith.constant 0 : i32
    return %c0_i32, %c0_i32_0, %c0_i32_1 : i32, i32, i32
  }
  func.func @transform_4(%arg0: i32) -> (i32, i32, i32) {
    %c0_i32 = arith.constant 0 : i32
    %c0_i32_0 = arith.constant 0 : i32
    %c0_i32_1 = arith.constant 0 : i32
    %c0_i32_2 = arith.constant 0 : i32
    return %c0_i32, %c0_i32_0, %c0_i32_1 : i32, i32, i32
  }
  func.func @transform_5(%arg0: i32) -> (i32, i32, i32) {
    %c0_i32 = arith.constant 0 : i32
    %c0_i32_0 = arith.constant 0 : i32
    %c0_i32_1 = arith.constant 0 : i32
    %c0_i32_2 = arith.constant 0 : i32
    return %c0_i32, %c0_i32_0, %c0_i32_1 : i32, i32, i32
  }
  func.func @transform_6(%arg0: i32) -> (i32, i32, i32) {
    %c0_i32 = arith.constant 0 : i32
    %c0_i32_0 = arith.constant 0 : i32
    %c0_i32_1 = arith.constant 0 : i32
    %c0_i32_2 = arith.constant 0 : i32
    return %c0_i32, %c0_i32_0, %c0_i32_1 : i32, i32, i32
  }
  func.func @transform_7(%arg0: i32) -> (i32, i32) {
    %c0_i32 = arith.constant 0 : i32
    %c0_i32_0 = arith.constant 0 : i32
    %c0_i32_1 = arith.constant 0 : i32
    return %c0_i32, %c0_i32_0 : i32, i32
  }
  func.func @transform_8(%arg0: i32) -> (i32, i32, i32) {
    %c0_i32 = arith.constant 0 : i32
    %c0_i32_0 = arith.constant 0 : i32
    %c0_i32_1 = arith.constant 0 : i32
    return %arg0, %c0_i32, %c0_i32_0 : i32, i32, i32
  }
  func.func @transform_9(%arg0: i32) -> (i32, i32, i32, i32) {
    %c0_i32 = arith.constant 0 : i32
    %c0_i32_0 = arith.constant 0 : i32
    %c0_i32_1 = arith.constant 0 : i32
    %c0_i32_2 = arith.constant 0 : i32
    return %c0_i32, %arg0, %c0_i32_0, %c0_i32_1 : i32, i32, i32, i32
  }
}

</mosaic_0001>

<llo_original>
// kernel: tpu_custom_call.1
$region0: #{tpu_custom_call.1}
  #allocation0 [shape = 'u32[]', space=smem, size = 0x4, offset = 0x4, fixed_abs, tag = 'smem constant byte address 0x4 - core index']
  #allocation1 [shape = 'u32[144,128]{1,0:T(1,128)}', space=vmem, size = 0x12000, scoped, tag = 'internal scratch']
  %s0 = inlined_call_operand.vmem [shape: f32[2,8,32], index: 0, kind: input, shape index: {}]
  %s1 = inlined_call_operand.vmem [shape: f32[2,8,32], index: 1, kind: input, shape index: {}]
  %s2 = inlined_call_operand.vmem [shape: f32[2,32,16], index: 2, kind: input, shape index: {}]
  %s3 = inlined_call_operand.vmem [shape: f32[2,1,16], index: 3, kind: input, shape index: {}]
  %s4 = inlined_call_operand.vmem [shape: f32[2,32,16], index: 4, kind: input, shape index: {}]
  %s5 = inlined_call_operand.vmem [shape: f32[2,1,16], index: 5, kind: input, shape index: {}]
  %s6 = inlined_call_operand.vmem [shape: f32[2,16,32], index: 6, kind: input, shape index: {}]
  %s7 = inlined_call_operand.vmem [shape: f32[1,32], index: 7, kind: input, shape index: {}]
  %s8 = inlined_call_operand.hbm [shape: f32[2,8,32], index: 8, kind: output, shape index: {0}]
  %s9 = inlined_call_operand.hbm [shape: f32[2,2,8,8], index: 9, kind: output, shape index: {1}]
  %10 = xla_tuple %s8, %s9
  %s11 = sld [smem:[#allocation0]]
  $region50: #{tpu_custom_call.1} parent=0
    _
  %s13 = ssub.s32 1, %s11
  %s14 = scalar_select 0, %s13, %s11
  $region1: #{tpu_custom_call.1} parent=0
    #allocation2 [shape = 'u8[8192]{0}', space=vmem, size = 0x2000, scoped, tag = 'output window, operand 0, single buffered']
    #allocation3 [shape = 's32[1]{0}', space=sflag, size = 0x4, scoped, tag = 'scoped memory for tpu_custom_call.1']
    #allocation4 [shape = 'u8[16384]{0}', space=vmem, size = 0x4000, scoped, tag = 'output window, operand 1, single buffered']
    #allocation5 [shape = 's32[1]{0}', space=sflag, size = 0x4, scoped, tag = 'scoped memory for tpu_custom_call.1']
    %15 = vsyncpa [#allocation3], 0
    %16 = vsyncpa [#allocation5], 0
    // Predicated region
    $region2: #{tpu_custom_call.1} parent=1 // pred_check
      _
    $region3: #{tpu_custom_call.1} parent=1 // pred_check_branch
      %18 = sbr.rel (0) target = $region5
    $region4: #{tpu_custom_call.1} parent=1 // pred_region
      _
    $region5: #{tpu_custom_call.1} parent=1 // pred_fallthru
      _
    // Predicated region
    $region6: #{tpu_custom_call.1} parent=1 // pred_check
      _
    $region7: #{tpu_custom_call.1} parent=1 // pred_check_branch
      %20 = sbr.rel (0) target = $region9
    $region8: #{tpu_custom_call.1} parent=1 // pred_region
      _
    $region9: #{tpu_custom_call.1} parent=1 // pred_fallthru
      _
    // Predicated region
    $region10: #{tpu_custom_call.1} parent=1 // pred_check
      _
    $region11: #{tpu_custom_call.1} parent=1 // pred_check_branch
      %22 = sbr.rel (0) target = $region13
    $region12: #{tpu_custom_call.1} parent=1 // pred_region
      _
    $region13: #{tpu_custom_call.1} parent=1 // pred_fallthru
      _
    // Predicated region
    $region14: #{tpu_custom_call.1} parent=1 // pred_check
      _
    $region15: #{tpu_custom_call.1} parent=1 // pred_check_branch
      %24 = sbr.rel (0) target = $region17
    $region16: #{tpu_custom_call.1} parent=1 // pred_region
      _
    $region17: #{tpu_custom_call.1} parent=1 // pred_fallthru
      _
    // Predicated region
    $region18: #{tpu_custom_call.1} parent=1 // pred_check
      _
    $region19: #{tpu_custom_call.1} parent=1 // pred_check_branch
      %26 = sbr.rel (0) target = $region21
    $region20: #{tpu_custom_call.1} parent=1 // pred_region
      _
    $region21: #{tpu_custom_call.1} parent=1 // pred_fallthru
      _
    // Predicated region
    $region22: #{tpu_custom_call.1} parent=1 // pred_check
      _
    $region23: #{tpu_custom_call.1} parent=1 // pred_check_branch
      %28 = sbr.rel (0) target = $region25
    $region24: #{tpu_custom_call.1} parent=1 // pred_region
      _
    $region25: #{tpu_custom_call.1} parent=1 // pred_fallthru
      _
    // Predicated region
    $region26: #{tpu_custom_call.1} parent=1 // pred_check
      _
    $region27: #{tpu_custom_call.1} parent=1 // pred_check_branch
      %30 = sbr.rel (0) target = $region29
    $region28: #{tpu_custom_call.1} parent=1 // pred_region
      _
    $region29: #{tpu_custom_call.1} parent=1 // pred_fallthru
      _
    // Predicated region
    $region30: #{tpu_custom_call.1} parent=1 // pred_check
      _
    $region31: #{tpu_custom_call.1} parent=1 // pred_check_branch
      %32 = sbr.rel (0) target = $region33
    $region32: #{tpu_custom_call.1} parent=1 // pred_region
      _
    $region33: #{tpu_custom_call.1} parent=1 // pred_fallthru
      _
    %v33 = vld [vmem:[%s0] sm:$0xff]
    %v34 = vld [vmem:[%s0 + $0x8] sm:$0xff]
    %v35 = vld [vmem:[%s1] sm:$0xff]
    %v36 = vld [vmem:[%s1 + $0x8] sm:$0xff]
    %v37 = vld [vmem:[%s2] sm:$0xff]
    %v38 = vld [vmem:[%s2 + $0x8] sm:$0xff]
    %v39 = vld [vmem:[%s2 + $0x10] sm:$0xff]
    %v40 = vld [vmem:[%s2 + $0x18] sm:$0xff]
    %v41 = vld [vmem:[%s3] sm:$0x1]
    %v43 = vlaneseq
    %v44 = vshrl.u32 %v43, 7
    %v45 = vsub.s32 0, %v44
    %v46 = vrot.slane %v41, %v45
    %vm48 = vcmask 261120
    %v50 = vsel %vm48, %v33, 0
    %v53 = vsel %vm48, %v34, 0
    %55 = vmatprep.subr.mxu0 0.0
    %v56 = vand.u32 %v37, 4294901760
    %57 = vmatpush1.msra.mxu0 %v56
    %58 = vmatprep.subr.mxu0 0.0
    %v59 = vand.u32 %v38, 4294901760
    %60 = vmatpush1.msra.mxu0 %v59
    %61 = vmatprep.subr.mxu0 0.0
    %v62 = vand.u32 %v39, 4294901760
    %63 = vmatpush1.msra.mxu0 %v62
    %64 = vmatprep.subr.mxu0 0.0
    %v65 = vand.u32 %v40, 4294901760
    %66 = vmatpush1.msra.mxu0 %v65
    %67 = vmatprep.subr.mxu0 0.0
    %68 = vmatpush1.msra.mxu0 0.0
    %69 = vmatprep.subr.mxu0 0.0
    %70 = vmatpush1.msra.mxu0 0.0
    %71 = vmatprep.subr.mxu0 0.0
    %72 = vmatpush1.msra.mxu0 0.0
    %73 = vmatprep.subr.mxu0 0.0
    %74 = vmatpush1.msra.mxu0 0.0
    %75 = vmatprep.subr.mxu0 0.0
    %76 = vmatpush1.msra.mxu0 0.0
    %77 = vmatprep.subr.mxu0 0.0
    %78 = vmatpush1.msra.mxu0 0.0
    %79 = vmatprep.subr.mxu0 0.0
    %80 = vmatpush1.msra.mxu0 0.0
    %81 = vmatprep.subr.mxu0 0.0
    %82 = vmatpush1.msra.mxu0 0.0
    %83 = vmatprep.subr.mxu0 0.0
    %84 = vmatpush1.msra.mxu0 0.0
    %85 = vmatprep.subr.mxu0 0.0
    %86 = vmatpush1.msra.mxu0 0.0
    %87 = vmatprep.subr.mxu0 0.0
    %88 = vmatpush1.msra.mxu0 0.0
    %89 = vmatprep.subr.mxu0 0.0
    %90 = vmatpush1.msra.mxu0 0.0
    %91 = vmatprep.subr.mxu0 0.0
    %92 = vmatpush1.msra.mxu0 0.0
    %93 = vmatprep.subr.mxu0 0.0
    %94 = vmatpush1.msra.mxu0 0.0
    %95 = vmatprep.subr.mxu0 0.0
    %96 = vmatpush1.msra.mxu0 0.0
    %97 = vmatprep.subr.mxu0 0.0
    %98 = vmatpush1.msra.mxu0 0.0
    %99 = vmatprep.subr.mxu0 0.0
    %100 = vmatpush1.msra.mxu0 0.0
    %101 = vmatprep.subr.mxu0 0.0
    %102 = vmatpush1.msra.mxu0 0.0
    %103 = vmatprep.subr.mxu0 0.0
    %104 = vmatpush1.msra.mxu0 0.0
    %105 = vmatprep.subr.mxu0 0.0
    %106 = vmatpush1.msra.mxu0 0.0
    %107 = vmatprep.subr.mxu0 0.0
    %108 = vmatpush1.msra.mxu0 0.0
    %109 = vmatprep.subr.mxu0 0.0
    %110 = vmatpush1.msra.mxu0 0.0
    %111 = vmatprep.subr.mxu0 0.0
    %112 = vmatpush1.msra.mxu0 0.0
    %113 = vmatprep.subr.mxu0 0.0
    %114 = vmatpush1.msra.mxu0 0.0
    %115 = vmatprep.subr.mxu0 0.0
    %116 = vmatpush1.msra.mxu0 0.0
    %117 = vmatprep.subr.mxu0 0.0
    %118 = vmatpush1.msra.mxu0 0.0
    %119 = vmatprep.subr.mxu0 0.0
    %120 = vmatpush1.msra.mxu0 0.0
    %121 = vmatprep.subr.mxu0 0.0
    %122 = vmatpush1.msra.mxu0 0.0
    %123 = vmatprep.mubr.f32.mxu0 0.0
    %v124 = vand.u32 %v50, 4294901760
    %v125 = vsub.f32 %v50, %v124
    %v126 = vand.u32 %v125, 4294901760
    %v127 = vsub.f32 %v125, %v126
    %v128 = vand.u32 %v127, 4294901760
    %129 = vmatmul.mubr.f32.gmra.mrb[0].mxu0 %v128
    %v130 = vpop.f32.mrb[0].mxu0
    %v131 = vadd.f32 %v46, %v130
    %v132 = vpop.f32.mrb[0].mxu0
    %133 = vmatprep.mubr.f32.mxu0 0.0
    %v134 = vand.u32 %v53, 4294901760
    %v135 = vsub.f32 %v53, %v134
    %v136 = vand.u32 %v135, 4294901760
    %v137 = vsub.f32 %v135, %v136
    %v138 = vand.u32 %v137, 4294901760
    %139 = vmatmul.mubr.f32.gmra.mrb[0].mxu0 %v138
    %v140 = vpop.f32.mrb[0].mxu0
    %v141 = vadd.f32 %v46, %v140
    %v142 = vpop.f32.mrb[0].mxu0
    %143 = vdwg.mxu0
    %144 = vmatprep.subr.mxu0 0.0
    %v145 = vand.u32 %v37, 4294901760
    %v146 = vsub.f32 %v37, %v145
    %v147 = vand.u32 %v146, 4294901760
    %v148 = vsub.f32 %v146, %v147
    %v149 = vand.u32 %v148, 4294901760
    %150 = vmatpush1.msra.mxu0 %v149
    %151 = vmatprep.subr.mxu0 0.0
    %v152 = vand.u32 %v38, 4294901760
    %v153 = vsub.f32 %v38, %v152
    %v154 = vand.u32 %v153, 4294901760
    %v155 = vsub.f32 %v153, %v154
    %v156 = vand.u32 %v155, 4294901760
    %157 = vmatpush1.msra.mxu0 %v156
    %158 = vmatprep.subr.mxu0 0.0
    %v159 = vand.u32 %v39, 4294901760
    %v160 = vsub.f32 %v39, %v159
    %v161 = vand.u32 %v160, 4294901760
    %v162 = vsub.f32 %v160, %v161
    %v163 = vand.u32 %v162, 4294901760
    %164 = vmatpush1.msra.mxu0 %v163
    %165 = vmatprep.subr.mxu0 0.0
    %v166 = vand.u32 %v40, 4294901760
    %v167 = vsub.f32 %v40, %v166
    %v168 = vand.u32 %v167, 4294901760
    %v169 = vsub.f32 %v167, %v168
    %v170 = vand.u32 %v169, 4294901760
    %171 = vmatpush1.msra.mxu0 %v170
    %172 = vmatprep.subr.mxu0 0.0
    %173 = vmatpush1.msra.mxu0 0.0
    %174 = vmatprep.subr.mxu0 0.0
    %175 = vmatpush1.msra.mxu0 0.0
    %176 = vmatprep.subr.mxu0 0.0
    %177 = vmatpush1.msra.mxu0 0.0
    %178 = vmatprep.subr.mxu0 0.0
    %179 = vmatpush1.msra.mxu0 0.0
    %180 = vmatprep.subr.mxu0 0.0
    %181 = vmatpush1.msra.mxu0 0.0
    %182 = vmatprep.subr.mxu0 0.0
    %183 = vmatpush1.msra.mxu0 0.0
    %184 = vmatprep.subr.mxu0 0.0
    %185 = vmatpush1.msra.mxu0 0.0
    %186 = vmatprep.subr.mxu0 0.0
    %187 = vmatpush1.msra.mxu0 0.0
    %188 = vmatprep.subr.mxu0 0.0
    %189 = vmatpush1.msra.mxu0 0.0
    %190 = vmatprep.subr.mxu0 0.0
    %191 = vmatpush1.msra.mxu0 0.0
    %192 = vmatprep.subr.mxu0 0.0
    %193 = vmatpush1.msra.mxu0 0.0
    %194 = vmatprep.subr.mxu0 0.0
    %195 = vmatpush1.msra.mxu0 0.0
    %196 = vmatprep.subr.mxu0 0.0
    %197 = vmatpush1.msra.mxu0 0.0
    %198 = vmatprep.subr.mxu0 0.0
    %199 = vmatpush1.msra.mxu0 0.0
    %200 = vmatprep.subr.mxu0 0.0
    %201 = vmatpush1.msra.mxu0 0.0
    %202 = vmatprep.subr.mxu0 0.0
    %203 = vmatpush1.msra.mxu0 0.0
    %204 = vmatprep.subr.mxu0 0.0
    %205 = vmatpush1.msra.mxu0 0.0
    %206 = vmatprep.subr.mxu0 0.0
    %207 = vmatpush1.msra.mxu0 0.0
    %208 = vmatprep.subr.mxu0 0.0
    %209 = vmatpush1.msra.mxu0 0.0
    %210 = vmatprep.subr.mxu0 0.0
    %211 = vmatpush1.msra.mxu0 0.0
    %212 = vmatprep.subr.mxu0 0.0
    %213 = vmatpush1.msra.mxu0 0.0
    %214 = vmatprep.subr.mxu0 0.0
    %215 = vmatpush1.msra.mxu0 0.0
    %216 = vmatprep.subr.mxu0 0.0
    %217 = vmatpush1.msra.mxu0 0.0
    %218 = vmatprep.subr.mxu0 0.0
    %219 = vmatpush1.msra.mxu0 0.0
    %220 = vmatprep.subr.mxu0 0.0
    %221 = vmatpush1.msra.mxu0 0.0
    %222 = vmatprep.subr.mxu0 0.0
    %223 = vmatpush1.msra.mxu0 0.0
    %224 = vmatprep.subr.mxu0 0.0
    %225 = vmatpush1.msra.mxu0 0.0
    %226 = vmatprep.subr.mxu0 0.0
    %227 = vmatpush1.msra.mxu0 0.0
    %228 = vmatprep.mubr.f32.mxu0 0.0
    %v229 = vand.u32 %v50, 4294901760
    %230 = vmatmul.mubr.f32.gmra.mrb[0].mxu0 %v229
    %v231 = vpop.f32.mrb[0].mxu0
    %v232 = vadd.f32 %v131, %v231
    %v233 = vpop.f32.mrb[0].mxu0
    %234 = vmatprep.mubr.f32.mxu0 0.0
    %v235 = vand.u32 %v53, 4294901760
    %236 = vmatmul.mubr.f32.gmra.mrb[0].mxu0 %v235
    %v237 = vpop.f32.mrb[0].mxu0
    %v238 = vadd.f32 %v141, %v237
    %v239 = vpop.f32.mrb[0].mxu0
    %240 = vdwg.mxu0
    %241 = vmatprep.subr.mxu0 0.0
    %v242 = vand.u32 %v37, 4294901760
    %v243 = vsub.f32 %v37, %v242
    %244 = vmatpush1.msra.mxu0 %v243
    %245 = vmatprep.subr.mxu0 0.0
    %v246 = vand.u32 %v38, 4294901760
    %v247 = vsub.f32 %v38, %v246
    %248 = vmatpush1.msra.mxu0 %v247
    %249 = vmatprep.subr.mxu0 0.0
    %v250 = vand.u32 %v39, 4294901760
    %v251 = vsub.f32 %v39, %v250
    %252 = vmatpush1.msra.mxu0 %v251
    %253 = vmatprep.subr.mxu0 0.0
    %v254 = vand.u32 %v40, 4294901760
    %v255 = vsub.f32 %v40, %v254
    %256 = vmatpush1.msra.mxu0 %v255
    %257 = vmatprep.subr.mxu0 0.0
    %258 = vmatpush1.msra.mxu0 0.0
    %259 = vmatprep.subr.mxu0 0.0
    %260 = vmatpush1.msra.mxu0 0.0
    %261 = vmatprep.subr.mxu0 0.0
    %262 = vmatpush1.msra.mxu0 0.0
    %263 = vmatprep.subr.mxu0 0.0
    %264 = vmatpush1.msra.mxu0 0.0
    %265 = vmatprep.subr.mxu0 0.0
    %266 = vmatpush1.msra.mxu0 0.0
    %267 = vmatprep.subr.mxu0 0.0
    %268 = vmatpush1.msra.mxu0 0.0
    %269 = vmatprep.subr.mxu0 0.0
    %270 = vmatpush1.msra.mxu0 0.0
    %271 = vmatprep.subr.mxu0 0.0
    %272 = vmatpush1.msra.mxu0 0.0
    %273 = vmatprep.subr.mxu0 0.0
    %274 = vmatpush1.msra.mxu0 0.0
    %275 = vmatprep.subr.mxu0 0.0
    %276 = vmatpush1.msra.mxu0 0.0
    %277 = vmatprep.subr.mxu0 0.0
    %278 = vmatpush1.msra.mxu0 0.0
    %279 = vmatprep.subr.mxu0 0.0
    %280 = vmatpush1.msra.mxu0 0.0
    %281 = vmatprep.subr.mxu0 0.0
    %282 = vmatpush1.msra.mxu0 0.0
    %283 = vmatprep.subr.mxu0 0.0
    %284 = vmatpush1.msra.mxu0 0.0
    %285 = vmatprep.subr.mxu0 0.0
    %286 = vmatpush1.msra.mxu0 0.0
    %287 = vmatprep.subr.mxu0 0.0
    %288 = vmatpush1.msra.mxu0 0.0
    %289 = vmatprep.subr.mxu0 0.0
    %290 = vmatpush1.msra.mxu0 0.0
    %291 = vmatprep.subr.mxu0 0.0
    %292 = vmatpush1.msra.mxu0 0.0
    %293 = vmatprep.subr.mxu0 0.0
    %294 = vmatpush1.msra.mxu0 0.0
    %295 = vmatprep.subr.mxu0 0.0
    %296 = vmatpush1.msra.mxu0 0.0
    %297 = vmatprep.subr.mxu0 0.0
    %298 = vmatpush1.msra.mxu0 0.0
    %299 = vmatprep.subr.mxu0 0.0
    %300 = vmatpush1.msra.mxu0 0.0
    %301 = vmatprep.subr.mxu0 0.0
    %302 = vmatpush1.msra.mxu0 0.0
    %303 = vmatprep.subr.mxu0 0.0
    %304 = vmatpush1.msra.mxu0 0.0
    %305 = vmatprep.subr.mxu0 0.0
    %306 = vmatpush1.msra.mxu0 0.0
    %307 = vmatprep.subr.mxu0 0.0
    %308 = vmatpush1.msra.mxu0 0.0
    %309 = vmatprep.subr.mxu0 0.0
    %310 = vmatpush1.msra.mxu0 0.0
    %311 = vmatprep.subr.mxu0 0.0
    %312 = vmatpush1.msra.mxu0 0.0
    %313 = vmatprep.mubr.f32.mxu0 0.0
    %v314 = vand.u32 %v50, 4294901760
    %v315 = vsub.f32 %v50, %v314
    %316 = vmatmul.mubr.f32.gmra.mrb[0].mxu0 %v315
    %v317 = vpop.f32.mrb[0].mxu0
    %v318 = vadd.f32 %v232, %v317
    %v319 = vpop.f32.mrb[0].mxu0
    %320 = vmatprep.mubr.f32.mxu0 0.0
    %v321 = vand.u32 %v53, 4294901760
    %v322 = vsub.f32 %v53, %v321
    %323 = vmatmul.mubr.f32.gmra.mrb[0].mxu0 %v322
    %v324 = vpop.f32.mrb[0].mxu0
    %v325 = vadd.f32 %v238, %v324
    %v326 = vpop.f32.mrb[0].mxu0
    %327 = vdwg.mxu0
    %328 = vmatprep.subr.mxu0 0.0
    %v329 = vand.u32 %v37, 4294901760
    %330 = vmatpush1.msra.mxu0 %v329
    %331 = vmatprep.subr.mxu0 0.0
    %v332 = vand.u32 %v38, 4294901760
    %333 = vmatpush1.msra.mxu0 %v332
    %334 = vmatprep.subr.mxu0 0.0
    %v335 = vand.u32 %v39, 4294901760
    %336 = vmatpush1.msra.mxu0 %v335
    %337 = vmatprep.subr.mxu0 0.0
    %v338 = vand.u32 %v40, 4294901760
    %339 = vmatpush1.msra.mxu0 %v338
    %340 = vmatprep.subr.mxu0 0.0
    %341 = vmatpush1.msra.mxu0 0.0
    %342 = vmatprep.subr.mxu0 0.0
    %343 = vmatpush1.msra.mxu0 0.0
    %344 = vmatprep.subr.mxu0 0.0
    %345 = vmatpush1.msra.mxu0 0.0
    %346 = vmatprep.subr.mxu0 0.0
    %347 = vmatpush1.msra.mxu0 0.0
    %348 = vmatprep.subr.mxu0 0.0
    %349 = vmatpush1.msra.mxu0 0.0
    %350 = vmatprep.subr.mxu0 0.0
    %351 = vmatpush1.msra.mxu0 0.0
    %352 = vmatprep.subr.mxu0 0.0
    %353 = vmatpush1.msra.mxu0 0.0
    %354 = vmatprep.subr.mxu0 0.0
    %355 = vmatpush1.msra.mxu0 0.0
    %356 = vmatprep.subr.mxu0 0.0
    %357 = vmatpush1.msra.mxu0 0.0
    %358 = vmatprep.subr.mxu0 0.0
    %359 = vmatpush1.msra.mxu0 0.0
    %360 = vmatprep.subr.mxu0 0.0
    %361 = vmatpush1.msra.mxu0 0.0
    %362 = vmatprep.subr.mxu0 0.0
    %363 = vmatpush1.msra.mxu0 0.0
    %364 = vmatprep.subr.mxu0 0.0
    %365 = vmatpush1.msra.mxu0 0.0
    %366 = vmatprep.subr.mxu0 0.0
    %367 = vmatpush1.msra.mxu0 0.0
    %368 = vmatprep.subr.mxu0 0.0
    %369 = vmatpush1.msra.mxu0 0.0
    %370 = vmatprep.subr.mxu0 0.0
    %371 = vmatpush1.msra.mxu0 0.0
    %372 = vmatprep.subr.mxu0 0.0
    %373 = vmatpush1.msra.mxu0 0.0
    %374 = vmatprep.subr.mxu0 0.0
    %375 = vmatpush1.msra.mxu0 0.0
    %376 = vmatprep.subr.mxu0 0.0
    %377 = vmatpush1.msra.mxu0 0.0
    %378 = vmatprep.subr.mxu0 0.0
    %379 = vmatpush1.msra.mxu0 0.0
    %380 = vmatprep.subr.mxu0 0.0
    %381 = vmatpush1.msra.mxu0 0.0
    %382 = vmatprep.subr.mxu0 0.0
    %383 = vmatpush1.msra.mxu0 0.0
    %384 = vmatprep.subr.mxu0 0.0
    %385 = vmatpush1.msra.mxu0 0.0
    %386 = vmatprep.subr.mxu0 0.0
    %387 = vmatpush1.msra.mxu0 0.0
    %388 = vmatprep.subr.mxu0 0.0
    %389 = vmatpush1.msra.mxu0 0.0
    %390 = vmatprep.subr.mxu0 0.0
    %391 = vmatpush1.msra.mxu0 0.0
    %392 = vmatprep.subr.mxu0 0.0
    %393 = vmatpush1.msra.mxu0 0.0
    %394 = vmatprep.subr.mxu0 0.0
    %395 = vmatpush1.msra.mxu0 0.0
    %396 = vmatprep.mubr.f32.mxu0 0.0
    %v397 = vand.u32 %v50, 4294901760
    %v398 = vsub.f32 %v50, %v397
    %v399 = vand.u32 %v398, 4294901760
    %400 = vmatmul.mubr.f32.gmra.mrb[0].mxu0 %v399
    %v401 = vpop.f32.mrb[0].mxu0
    %v402 = vadd.f32 %v318, %v401
    %v403 = vpop.f32.mrb[0].mxu0
    %404 = vmatprep.mubr.f32.mxu0 0.0
    %v405 = vand.u32 %v53, 4294901760
    %v406 = vsub.f32 %v53, %v405
    %v407 = vand.u32 %v406, 4294901760
    %408 = vmatmul.mubr.f32.gmra.mrb[0].mxu0 %v407
    %v409 = vpop.f32.mrb[0].mxu0
    %v410 = vadd.f32 %v325, %v409
    %v411 = vpop.f32.mrb[0].mxu0
    %412 = vdwg.mxu0
    %413 = vmatprep.subr.mxu0 0.0
    %v414 = vand.u32 %v37, 4294901760
    %v415 = vsub.f32 %v37, %v414
    %v416 = vand.u32 %v415, 4294901760
    %417 = vmatpush1.msra.mxu0 %v416
    %418 = vmatprep.subr.mxu0 0.0
    %v419 = vand.u32 %v38, 4294901760
    %v420 = vsub.f32 %v38, %v419
    %v421 = vand.u32 %v420, 4294901760
    %422 = vmatpush1.msra.mxu0 %v421
    %423 = vmatprep.subr.mxu0 0.0
    %v424 = vand.u32 %v39, 4294901760
    %v425 = vsub.f32 %v39, %v424
    %v426 = vand.u32 %v425, 4294901760
    %427 = vmatpush1.msra.mxu0 %v426
    %428 = vmatprep.subr.mxu0 0.0
    %v429 = vand.u32 %v40, 4294901760
    %v430 = vsub.f32 %v40, %v429
    %v431 = vand.u32 %v430, 4294901760
    %432 = vmatpush1.msra.mxu0 %v431
    %433 = vmatprep.subr.mxu0 0.0
    %434 = vmatpush1.msra.mxu0 0.0
    %435 = vmatprep.subr.mxu0 0.0
    %436 = vmatpush1.msra.mxu0 0.0
    %437 = vmatprep.subr.mxu0 0.0
    %438 = vmatpush1.msra.mxu0 0.0
    %439 = vmatprep.subr.mxu0 0.0
    %440 = vmatpush1.msra.mxu0 0.0
    %441 = vmatprep.subr.mxu0 0.0
    %442 = vmatpush1.msra.mxu0 0.0
    %443 = vmatprep.subr.mxu0 0.0
    %444 = vmatpush1.msra.mxu0 0.0
    %445 = vmatprep.subr.mxu0 0.0
    %446 = vmatpush1.msra.mxu0 0.0
    %447 = vmatprep.subr.mxu0 0.0
    %448 = vmatpush1.msra.mxu0 0.0
    %449 = vmatprep.subr.mxu0 0.0
    %450 = vmatpush1.msra.mxu0 0.0
    %451 = vmatprep.subr.mxu0 0.0
    %452 = vmatpush1.msra.mxu0 0.0
    %453 = vmatprep.subr.mxu0 0.0
    %454 = vmatpush1.msra.mxu0 0.0
    %455 = vmatprep.subr.mxu0 0.0
    %456 = vmatpush1.msra.mxu0 0.0
    %457 = vmatprep.subr.mxu0 0.0
    %458 = vmatpush1.msra.mxu0 0.0
    %459 = vmatprep.subr.mxu0 0.0
    %460 = vmatpush1.msra.mxu0 0.0
    %461 = vmatprep.subr.mxu0 0.0
    %462 = vmatpush1.msra.mxu0 0.0
    %463 = vmatprep.subr.mxu0 0.0
    %464 = vmatpush1.msra.mxu0 0.0
    %465 = vmatprep.subr.mxu0 0.0
    %466 = vmatpush1.msra.mxu0 0.0
    %467 = vmatprep.subr.mxu0 0.0
    %468 = vmatpush1.msra.mxu0 0.0
    %469 = vmatprep.subr.mxu0 0.0
    %470 = vmatpush1.msra.mxu0 0.0
    %471 = vmatprep.subr.mxu0 0.0
    %472 = vmatpush1.msra.mxu0 0.0
    %473 = vmatprep.subr.mxu0 0.0
    %474 = vmatpush1.msra.mxu0 0.0
    %475 = vmatprep.subr.mxu0 0.0
    %476 = vmatpush1.msra.mxu0 0.0
    %477 = vmatprep.subr.mxu0 0.0
    %478 = vmatpush1.msra.mxu0 0.0
    %479 = vmatprep.subr.mxu0 0.0
    %480 = vmatpush1.msra.mxu0 0.0
    %481 = vmatprep.subr.mxu0 0.0
    %482 = vmatpush1.msra.mxu0 0.0
    %483 = vmatprep.subr.mxu0 0.0
    %484 = vmatpush1.msra.mxu0 0.0
    %485 = vmatprep.subr.mxu0 0.0
    %486 = vmatpush1.msra.mxu0 0.0
    %487 = vmatprep.subr.mxu0 0.0
    %488 = vmatpush1.msra.mxu0 0.0
    %489 = vmatprep.mubr.f32.mxu0 0.0
    %v490 = vand.u32 %v50, 4294901760
    %491 = vmatmul.mubr.f32.gmra.mrb[0].mxu0 %v490
    %v492 = vpop.f32.mrb[0].mxu0
    %v493 = vadd.f32 %v402, %v492
    %v494 = vpop.f32.mrb[0].mxu0
    %495 = vmatprep.mubr.f32.mxu0 0.0
    %v496 = vand.u32 %v53, 4294901760
    %497 = vmatmul.mubr.f32.gmra.mrb[0].mxu0 %v496
    %v498 = vpop.f32.mrb[0].mxu0
    %v499 = vadd.f32 %v410, %v498
    %v500 = vpop.f32.mrb[0].mxu0
    %501 = vdwg.mxu0
    %502 = vmatprep.subr.mxu0 0.0
    %v503 = vand.u32 %v37, 4294901760
    %504 = vmatpush1.msra.mxu0 %v503
    %505 = vmatprep.subr.mxu0 0.0
    %v506 = vand.u32 %v38, 4294901760
    %507 = vmatpush1.msra.mxu0 %v506
    %508 = vmatprep.subr.mxu0 0.0
    %v509 = vand.u32 %v39, 4294901760
    %510 = vmatpush1.msra.mxu0 %v509
    %511 = vmatprep.subr.mxu0 0.0
    %v512 = vand.u32 %v40, 4294901760
    %513 = vmatpush1.msra.mxu0 %v512
    %514 = vmatprep.subr.mxu0 0.0
    %515 = vmatpush1.msra.mxu0 0.0
    %516 = vmatprep.subr.mxu0 0.0
    %517 = vmatpush1.msra.mxu0 0.0
    %518 = vmatprep.subr.mxu0 0.0
    %519 = vmatpush1.msra.mxu0 0.0
    %520 = vmatprep.subr.mxu0 0.0
    %521 = vmatpush1.msra.mxu0 0.0
    %522 = vmatprep.subr.mxu0 0.0
    %523 = vmatpush1.msra.mxu0 0.0
    %524 = vmatprep.subr.mxu0 0.0
    %525 = vmatpush1.msra.mxu0 0.0
    %526 = vmatprep.subr.mxu0 0.0
    %527 = vmatpush1.msra.mxu0 0.0
    %528 = vmatprep.subr.mxu0 0.0
    %529 = vmatpush1.msra.mxu0 0.0
    %530 = vmatprep.subr.mxu0 0.0
    %531 = vmatpush1.msra.mxu0 0.0
    %532 = vmatprep.subr.mxu0 0.0
    %533 = vmatpush1.msra.mxu0 0.0
    %534 = vmatprep.subr.mxu0 0.0
    %535 = vmatpush1.msra.mxu0 0.0
    %536 = vmatprep.subr.mxu0 0.0
    %537 = vmatpush1.msra.mxu0 0.0
    %538 = vmatprep.subr.mxu0 0.0
    %539 = vmatpush1.msra.mxu0 0.0
    %540 = vmatprep.subr.mxu0 0.0
    %541 = vmatpush1.msra.mxu0 0.0
    %542 = vmatprep.subr.mxu0 0.0
    %543 = vmatpush1.msra.mxu0 0.0
    %544 = vmatprep.subr.mxu0 0.0
    %545 = vmatpush1.msra.mxu0 0.0
    %546 = vmatprep.subr.mxu0 0.0
    %547 = vmatpush1.msra.mxu0 0.0
    %548 = vmatprep.subr.mxu0 0.0
    %549 = vmatpush1.msra.mxu0 0.0
    %550 = vmatprep.subr.mxu0 0.0
    %551 = vmatpush1.msra.mxu0 0.0
    %552 = vmatprep.subr.mxu0 0.0
    %553 = vmatpush1.msra.mxu0 0.0
    %554 = vmatprep.subr.mxu0 0.0
    %555 = vmatpush1.msra.mxu0 0.0
    %556 = vmatprep.subr.mxu0 0.0
    %557 = vmatpush1.msra.mxu0 0.0
    %558 = vmatprep.subr.mxu0 0.0
    %559 = vmatpush1.msra.mxu0 0.0
    %560 = vmatprep.subr.mxu0 0.0
    %561 = vmatpush1.msra.mxu0 0.0
    %562 = vmatprep.subr.mxu0 0.0
    %563 = vmatpush1.msra.mxu0 0.0
    %564 = vmatprep.subr.mxu0 0.0
    %565 = vmatpush1.msra.mxu0 0.0
    %566 = vmatprep.subr.mxu0 0.0
    %567 = vmatpush1.msra.mxu0 0.0
    %568 = vmatprep.subr.mxu0 0.0
    %569 = vmatpush1.msra.mxu0 0.0
    %570 = vmatprep.mubr.f32.mxu0 0.0
    %v571 = vand.u32 %v50, 4294901760
    %572 = vmatmul.mubr.f32.gmra.mrb[0].mxu0 %v571
    %v573 = vpop.f32.mrb[0].mxu0
    %v574 = vadd.f32 %v493, %v573
    %v575 = vpop.f32.mrb[0].mxu0
    %576 = vmatprep.mubr.f32.mxu0 0.0
    %v577 = vand.u32 %v53, 4294901760
    %578 = vmatmul.mubr.f32.gmra.mrb[0].mxu0 %v577
    %v579 = vpop.f32.mrb[0].mxu0
    %v580 = vadd.f32 %v499, %v579
    %v581 = vpop.f32.mrb[0].mxu0
    %582 = vdwg.mxu0
    %v583 = vld [vmem:[%s4] sm:$0xff]
    %v584 = vld [vmem:[%s4 + $0x8] sm:$0xff]
    %v585 = vld [vmem:[%s4 + $0x10] sm:$0xff]
    %v586 = vld [vmem:[%s4 + $0x18] sm:$0xff]
    %v587 = vld [vmem:[%s5] sm:$0x1]
    %v589 = vlaneseq
    %v590 = vshrl.u32 %v589, 7
    %v591 = vsub.s32 0, %v590
    %v592 = vrot.slane %v587, %v591
    %v595 = vsel %vm48, %v35, 0
    %v598 = vsel %vm48, %v36, 0
    %600 = vmatprep.subr.mxu0 0.0
    %v601 = vand.u32 %v583, 4294901760
    %602 = vmatpush1.msra.mxu0 %v601
    %603 = vmatprep.subr.mxu0 0.0
    %v604 = vand.u32 %v584, 4294901760
    %605 = vmatpush1.msra.mxu0 %v604
    %606 = vmatprep.subr.mxu0 0.0
    %v607 = vand.u32 %v585, 4294901760
    %608 = vmatpush1.msra.mxu0 %v607
    %609 = vmatprep.subr.mxu0 0.0
    %v610 = vand.u32 %v586, 4294901760
    %611 = vmatpush1.msra.mxu0 %v610
    %612 = vmatprep.subr.mxu0 0.0
    %613 = vmatpush1.msra.mxu0 0.0
    %614 = vmatprep.subr.mxu0 0.0
    %615 = vmatpush1.msra.mxu0 0.0
    %616 = vmatprep.subr.mxu0 0.0
    %617 = vmatpush1.msra.mxu0 0.0
    %618 = vmatprep.subr.mxu0 0.0
    %619 = vmatpush1.msra.mxu0 0.0
    %620 = vmatprep.subr.mxu0 0.0
    %621 = vmatpush1.msra.mxu0 0.0
    %622 = vmatprep.subr.mxu0 0.0
    %623 = vmatpush1.msra.mxu0 0.0
    %624 = vmatprep.subr.mxu0 0.0
    %625 = vmatpush1.msra.mxu0 0.0
    %626 = vmatprep.subr.mxu0 0.0
    %627 = vmatpush1.msra.mxu0 0.0
    %628 = vmatprep.subr.mxu0 0.0
    %629 = vmatpush1.msra.mxu0 0.0
    %630 = vmatprep.subr.mxu0 0.0
    %631 = vmatpush1.msra.mxu0 0.0
    %632 = vmatprep.subr.mxu0 0.0
    %633 = vmatpush1.msra.mxu0 0.0
    %634 = vmatprep.subr.mxu0 0.0
    %635 = vmatpush1.msra.mxu0 0.0
    %636 = vmatprep.subr.mxu0 0.0
    %637 = vmatpush1.msra.mxu0 0.0
    %638 = vmatprep.subr.mxu0 0.0
    %639 = vmatpush1.msra.mxu0 0.0
    %640 = vmatprep.subr.mxu0 0.0
    %641 = vmatpush1.msra.mxu0 0.0
    %642 = vmatprep.subr.mxu0 0.0
    %643 = vmatpush1.msra.mxu0 0.0
    %644 = vmatprep.subr.mxu0 0.0
    %645 = vmatpush1.msra.mxu0 0.0
    %646 = vmatprep.subr.mxu0 0.0
    %647 = vmatpush1.msra.mxu0 0.0
    %648 = vmatprep.subr.mxu0 0.0
    %649 = vmatpush1.msra.mxu0 0.0
    %650 = vmatprep.subr.mxu0 0.0
    %651 = vmatpush1.msra.mxu0 0.0
    %652 = vmatprep.subr.mxu0 0.0
    %653 = vmatpush1.msra.mxu0 0.0
    %654 = vmatprep.subr.mxu0 0.0
    %655 = vmatpush1.msra.mxu0 0.0
    %656 = vmatprep.subr.mxu0 0.0
    %657 = vmatpush1.msra.mxu0 0.0
    %658 = vmatprep.subr.mxu0 0.0
    %659 = vmatpush1.msra.mxu0 0.0
    %660 = vmatprep.subr.mxu0 0.0
    %661 = vmatpush1.msra.mxu0 0.0
    %662 = vmatprep.subr.mxu0 0.0
    %663 = vmatpush1.msra.mxu0 0.0
    %664 = vmatprep.subr.mxu0 0.0
    %665 = vmatpush1.msra.mxu0 0.0
    %666 = vmatprep.subr.mxu0 0.0
    %667 = vmatpush1.msra.mxu0 0.0
    %668 = vmatprep.mubr.f32.mxu0 0.0
    %v669 = vand.u32 %v595, 4294901760
    %v670 = vsub.f32 %v595, %v669
    %v671 = vand.u32 %v670, 4294901760
    %v672 = vsub.f32 %v670, %v671
    %v673 = vand.u32 %v672, 4294901760
    %674 = vmatmul.mubr.f32.gmra.mrb[0].mxu0 %v673
    %v675 = vpop.f32.mrb[0].mxu0
    %v676 = vadd.f32 %v592, %v675
    %v677 = vpop.f32.mrb[0].mxu0
    %678 = vmatprep.mubr.f32.mxu0 0.0
    %v679 = vand.u32 %v598, 4294901760
    %v680 = vsub.f32 %v598, %v679
    %v681 = vand.u32 %v680, 4294901760
    %v682 = vsub.f32 %v680, %v681
    %v683 = vand.u32 %v682, 4294901760
    %684 = vmatmul.mubr.f32.gmra.mrb[0].mxu0 %v683
    %v685 = vpop.f32.mrb[0].mxu0
    %v686 = vadd.f32 %v592, %v685
    %v687 = vpop.f32.mrb[0].mxu0
    %688 = vdwg.mxu0
    %689 = vmatprep.subr.mxu0 0.0
    %v690 = vand.u32 %v583, 4294901760
    %v691 = vsub.f32 %v583, %v690
    %v692 = vand.u32 %v691, 4294901760
    %v693 = vsub.f32 %v691, %v692
    %v694 = vand.u32 %v693, 4294901760
    %695 = vmatpush1.msra.mxu0 %v694
    %696 = vmatprep.subr.mxu0 0.0
    %v697 = vand.u32 %v584, 4294901760
    %v698 = vsub.f32 %v584, %v697
    %v699 = vand.u32 %v698, 4294901760
    %v700 = vsub.f32 %v698, %v699
    %v701 = vand.u32 %v700, 4294901760
    %702 = vmatpush1.msra.mxu0 %v701
    %703 = vmatprep.subr.mxu0 0.0
    %v704 = vand.u32 %v585, 4294901760
    %v705 = vsub.f32 %v585, %v704
    %v706 = vand.u32 %v705, 4294901760
    %v707 = vsub.f32 %v705, %v706
    %v708 = vand.u32 %v707, 4294901760
    %709 = vmatpush1.msra.mxu0 %v708
    %710 = vmatprep.subr.mxu0 0.0
    %v711 = vand.u32 %v586, 4294901760
    %v712 = vsub.f32 %v586, %v711
    %v713 = vand.u32 %v712, 4294901760
    %v714 = vsub.f32 %v712, %v713
    %v715 = vand.u32 %v714, 4294901760
    %716 = vmatpush1.msra.mxu0 %v715
    %717 = vmatprep.subr.mxu0 0.0
    %718 = vmatpush1.msra.mxu0 0.0
    %719 = vmatprep.subr.mxu0 0.0
    %720 = vmatpush1.msra.mxu0 0.0
    %721 = vmatprep.subr.mxu0 0.0
    %722 = vmatpush1.msra.mxu0 0.0
    %723 = vmatprep.subr.mxu0 0.0
    %724 = vmatpush1.msra.mxu0 0.0
    %725 = vmatprep.subr.mxu0 0.0
    %726 = vmatpush1.msra.mxu0 0.0
    %727 = vmatprep.subr.mxu0 0.0
    %728 = vmatpush1.msra.mxu0 0.0
    %729 = vmatprep.subr.mxu0 0.0
    %730 = vmatpush1.msra.mxu0 0.0
    %731 = vmatprep.subr.mxu0 0.0
    %732 = vmatpush1.msra.mxu0 0.0
    %733 = vmatprep.subr.mxu0 0.0
    %734 = vmatpush1.msra.mxu0 0.0
    %735 = vmatprep.subr.mxu0 0.0
    %736 = vmatpush1.msra.mxu0 0.0
    %737 = vmatprep.subr.mxu0 0.0
    %738 = vmatpush1.msra.mxu0 0.0
    %739 = vmatprep.subr.mxu0 0.0
    %740 = vmatpush1.msra.mxu0 0.0
    %741 = vmatprep.subr.mxu0 0.0
    %742 = vmatpush1.msra.mxu0 0.0
    %743 = vmatprep.subr.mxu0 0.0
    %744 = vmatpush1.msra.mxu0 0.0
    %745 = vmatprep.subr.mxu0 0.0
    %746 = vmatpush1.msra.mxu0 0.0
    %747 = vmatprep.subr.mxu0 0.0
    %748 = vmatpush1.msra.mxu0 0.0
    %749 = vmatprep.subr.mxu0 0.0
    %750 = vmatpush1.msra.mxu0 0.0
    %751 = vmatprep.subr.mxu0 0.0
    %752 = vmatpush1.msra.mxu0 0.0
    %753 = vmatprep.subr.mxu0 0.0
    %754 = vmatpush1.msra.mxu0 0.0
    %755 = vmatprep.subr.mxu0 0.0
    %756 = vmatpush1.msra.mxu0 0.0
    %757 = vmatprep.subr.mxu0 0.0
    %758 = vmatpush1.msra.mxu0 0.0
    %759 = vmatprep.subr.mxu0 0.0
    %760 = vmatpush1.msra.mxu0 0.0
    %761 = vmatprep.subr.mxu0 0.0
    %762 = vmatpush1.msra.mxu0 0.0
    %763 = vmatprep.subr.mxu0 0.0
    %764 = vmatpush1.msra.mxu0 0.0
    %765 = vmatprep.subr.mxu0 0.0
    %766 = vmatpush1.msra.mxu0 0.0
    %767 = vmatprep.subr.mxu0 0.0
    %768 = vmatpush1.msra.mxu0 0.0
    %769 = vmatprep.subr.mxu0 0.0
    %770 = vmatpush1.msra.mxu0 0.0
    %771 = vmatprep.subr.mxu0 0.0
    %772 = vmatpush1.msra.mxu0 0.0
    %773 = vmatprep.mubr.f32.mxu0 0.0
    %v774 = vand.u32 %v595, 4294901760
    %775 = vmatmul.mubr.f32.gmra.mrb[0].mxu0 %v774
    %v776 = vpop.f32.mrb[0].mxu0
    %v777 = vadd.f32 %v676, %v776
    %v778 = vpop.f32.mrb[0].mxu0
    %779 = vmatprep.mubr.f32.mxu0 0.0
    %v780 = vand.u32 %v598, 4294901760
    %781 = vmatmul.mubr.f32.gmra.mrb[0].mxu0 %v780
    %v782 = vpop.f32.mrb[0].mxu0
    %v783 = vadd.f32 %v686, %v782
    %v784 = vpop.f32.mrb[0].mxu0
    %785 = vdwg.mxu0
    %786 = vmatprep.subr.mxu0 0.0
    %v787 = vand.u32 %v583, 4294901760
    %v788 = vsub.f32 %v583, %v787
    %789 = vmatpush1.msra.mxu0 %v788
    %790 = vmatprep.subr.mxu0 0.0
    %v791 = vand.u32 %v584, 4294901760
    %v792 = vsub.f32 %v584, %v791
    %793 = vmatpush1.msra.mxu0 %v792
    %794 = vmatprep.subr.mxu0 0.0
    %v795 = vand.u32 %v585, 4294901760
    %v796 = vsub.f32 %v585, %v795
    %797 = vmatpush1.msra.mxu0 %v796
    %798 = vmatprep.subr.mxu0 0.0
    %v799 = vand.u32 %v586, 4294901760
    %v800 = vsub.f32 %v586, %v799
    %801 = vmatpush1.msra.mxu0 %v800
    %802 = vmatprep.subr.mxu0 0.0
    %803 = vmatpush1.msra.mxu0 0.0
    %804 = vmatprep.subr.mxu0 0.0
    %805 = vmatpush1.msra.mxu0 0.0
    %806 = vmatprep.subr.mxu0 0.0
    %807 = vmatpush1.msra.mxu0 0.0
    %808 = vmatprep.subr.mxu0 0.0
    %809 = vmatpush1.msra.mxu0 0.0
    %810 = vmatprep.subr.mxu0 0.0
    %811 = vmatpush1.msra.mxu0 0.0
    %812 = vmatprep.subr.mxu0 0.0
    %813 = vmatpush1.msra.mxu0 0.0
    %814 = vmatprep.subr.mxu0 0.0
    %815 = vmatpush1.msra.mxu0 0.0
    %816 = vmatprep.subr.mxu0 0.0
    %817 = vmatpush1.msra.mxu0 0.0
    %818 = vmatprep.subr.mxu0 0.0
    %819 = vmatpush1.msra.mxu0 0.0
    %820 = vmatprep.subr.mxu0 0.0
    %821 = vmatpush1.msra.mxu0 0.0
    %822 = vmatprep.subr.mxu0 0.0
    %823 = vmatpush1.msra.mxu0 0.0
    %824 = vmatprep.subr.mxu0 0.0
    %825 = vmatpush1.msra.mxu0 0.0
    %826 = vmatprep.subr.mxu0 0.0
    %827 = vmatpush1.msra.mxu0 0.0
    %828 = vmatprep.subr.mxu0 0.0
    %829 = vmatpush1.msra.mxu0 0.0
    %830 = vmatprep.subr.mxu0 0.0
    %831 = vmatpush1.msra.mxu0 0.0
    %832 = vmatprep.subr.mxu0 0.0
    %833 = vmatpush1.msra.mxu0 0.0
    %834 = vmatprep.subr.mxu0 0.0
    %835 = vmatpush1.msra.mxu0 0.0
    %836 = vmatprep.subr.mxu0 0.0
    %837 = vmatpush1.msra.mxu0 0.0
    %838 = vmatprep.subr.mxu0 0.0
    %839 = vmatpush1.msra.mxu0 0.0
    %840 = vmatprep.subr.mxu0 0.0
    %841 = vmatpush1.msra.mxu0 0.0
    %842 = vmatprep.subr.mxu0 0.0
    %843 = vmatpush1.msra.mxu0 0.0
    %844 = vmatprep.subr.mxu0 0.0
    %845 = vmatpush1.msra.mxu0 0.0
    %846 = vmatprep.subr.mxu0 0.0
    %847 = vmatpush1.msra.mxu0 0.0
    %848 = vmatprep.subr.mxu0 0.0
    %849 = vmatpush1.msra.mxu0 0.0
    %850 = vmatprep.subr.mxu0 0.0
    %851 = vmatpush1.msra.mxu0 0.0
    %852 = vmatprep.subr.mxu0 0.0
    %853 = vmatpush1.msra.mxu0 0.0
    %854 = vmatprep.subr.mxu0 0.0
    %855 = vmatpush1.msra.mxu0 0.0
    %856 = vmatprep.subr.mxu0 0.0
    %857 = vmatpush1.msra.mxu0 0.0
    %858 = vmatprep.mubr.f32.mxu0 0.0
    %v859 = vand.u32 %v595, 4294901760
    %v860 = vsub.f32 %v595, %v859
    %861 = vmatmul.mubr.f32.gmra.mrb[0].mxu0 %v860
    %v862 = vpop.f32.mrb[0].mxu0
    %v863 = vadd.f32 %v777, %v862
    %v864 = vpop.f32.mrb[0].mxu0
    %865 = vmatprep.mubr.f32.mxu0 0.0
    %v866 = vand.u32 %v598, 4294901760
    %v867 = vsub.f32 %v598, %v866
    %868 = vmatmul.mubr.f32.gmra.mrb[0].mxu0 %v867
    %v869 = vpop.f32.mrb[0].mxu0
    %v870 = vadd.f32 %v783, %v869
    %v871 = vpop.f32.mrb[0].mxu0
    %872 = vdwg.mxu0
    %873 = vmatprep.subr.mxu0 0.0
    %v874 = vand.u32 %v583, 4294901760
    %875 = vmatpush1.msra.mxu0 %v874
    %876 = vmatprep.subr.mxu0 0.0
    %v877 = vand.u32 %v584, 4294901760
    %878 = vmatpush1.msra.mxu0 %v877
    %879 = vmatprep.subr.mxu0 0.0
    %v880 = vand.u32 %v585, 4294901760
    %881 = vmatpush1.msra.mxu0 %v880
    %882 = vmatprep.subr.mxu0 0.0
    %v883 = vand.u32 %v586, 4294901760
    %884 = vmatpush1.msra.mxu0 %v883
    %885 = vmatprep.subr.mxu0 0.0
    %886 = vmatpush1.msra.mxu0 0.0
    %887 = vmatprep.subr.mxu0 0.0
    %888 = vmatpush1.msra.mxu0 0.0
    %889 = vmatprep.subr.mxu0 0.0
    %890 = vmatpush1.msra.mxu0 0.0
    %891 = vmatprep.subr.mxu0 0.0
    %892 = vmatpush1.msra.mxu0 0.0
    %893 = vmatprep.subr.mxu0 0.0
    %894 = vmatpush1.msra.mxu0 0.0
    %895 = vmatprep.subr.mxu0 0.0
    %896 = vmatpush1.msra.mxu0 0.0
    %897 = vmatprep.subr.mxu0 0.0
    %898 = vmatpush1.msra.mxu0 0.0
    %899 = vmatprep.subr.mxu0 0.0
    %900 = vmatpush1.msra.mxu0 0.0
    %901 = vmatprep.subr.mxu0 0.0
    %902 = vmatpush1.msra.mxu0 0.0
    %903 = vmatprep.subr.mxu0 0.0
    %904 = vmatpush1.msra.mxu0 0.0
    %905 = vmatprep.subr.mxu0 0.0
    %906 = vmatpush1.msra.mxu0 0.0
    %907 = vmatprep.subr.mxu0 0.0
    %908 = vmatpush1.msra.mxu0 0.0
    %909 = vmatprep.subr.mxu0 0.0
    %910 = vmatpush1.msra.mxu0 0.0
    %911 = vmatprep.subr.mxu0 0.0
    %912 = vmatpush1.msra.mxu0 0.0
    %913 = vmatprep.subr.mxu0 0.0
    %914 = vmatpush1.msra.mxu0 0.0
    %915 = vmatprep.subr.mxu0 0.0
    %916 = vmatpush1.msra.mxu0 0.0
    %917 = vmatprep.subr.mxu0 0.0
    %918 = vmatpush1.msra.mxu0 0.0
    %919 = vmatprep.subr.mxu0 0.0
    %920 = vmatpush1.msra.mxu0 0.0
    %921 = vmatprep.subr.mxu0 0.0
    %922 = vmatpush1.msra.mxu0 0.0
    %923 = vmatprep.subr.mxu0 0.0
    %924 = vmatpush1.msra.mxu0 0.0
    %925 = vmatprep.subr.mxu0 0.0
    %926 = vmatpush1.msra.mxu0 0.0
    %927 = vmatprep.subr.mxu0 0.0
    %928 = vmatpush1.msra.mxu0 0.0
    %929 = vmatprep.subr.mxu0 0.0
    %930 = vmatpush1.msra.mxu0 0.0
    %931 = vmatprep.subr.mxu0 0.0
    %932 = vmatpush1.msra.mxu0 0.0
    %933 = vmatprep.subr.mxu0 0.0
    %934 = vmatpush1.msra.mxu0 0.0
    %935 = vmatprep.subr.mxu0 0.0
    %936 = vmatpush1.msra.mxu0 0.0
    %937 = vmatprep.subr.mxu0 0.0
    %938 = vmatpush1.msra.mxu0 0.0
    %939 = vmatprep.subr.mxu0 0.0
    %940 = vmatpush1.msra.mxu0 0.0
    %941 = vmatprep.mubr.f32.mxu0 0.0
    %v942 = vand.u32 %v595, 4294901760
    %v943 = vsub.f32 %v595, %v942
    %v944 = vand.u32 %v943, 4294901760
    %945 = vmatmul.mubr.f32.gmra.mrb[0].mxu0 %v944
    %v946 = vpop.f32.mrb[0].mxu0
    %v947 = vadd.f32 %v863, %v946
    %v948 = vpop.f32.mrb[0].mxu0
    %949 = vmatprep.mubr.f32.mxu0 0.0
    %v950 = vand.u32 %v598, 4294901760
    %v951 = vsub.f32 %v598, %v950
    %v952 = vand.u32 %v951, 4294901760
    %953 = vmatmul.mubr.f32.gmra.mrb[0].mxu0 %v952
    %v954 = vpop.f32.mrb[0].mxu0
    %v955 = vadd.f32 %v870, %v954
    %v956 = vpop.f32.mrb[0].mxu0
    %957 = vdwg.mxu0
    %958 = vmatprep.subr.mxu0 0.0
    %v959 = vand.u32 %v583, 4294901760
    %v960 = vsub.f32 %v583, %v959
    %v961 = vand.u32 %v960, 4294901760
    %962 = vmatpush1.msra.mxu0 %v961
    %963 = vmatprep.subr.mxu0 0.0
    %v964 = vand.u32 %v584, 4294901760
    %v965 = vsub.f32 %v584, %v964
    %v966 = vand.u32 %v965, 4294901760
    %967 = vmatpush1.msra.mxu0 %v966
    %968 = vmatprep.subr.mxu0 0.0
    %v969 = vand.u32 %v585, 4294901760
    %v970 = vsub.f32 %v585, %v969
    %v971 = vand.u32 %v970, 4294901760
    %972 = vmatpush1.msra.mxu0 %v971
    %973 = vmatprep.subr.mxu0 0.0
    %v974 = vand.u32 %v586, 4294901760
    %v975 = vsub.f32 %v586, %v974
    %v976 = vand.u32 %v975, 4294901760
    %977 = vmatpush1.msra.mxu0 %v976
    %978 = vmatprep.subr.mxu0 0.0
    %979 = vmatpush1.msra.mxu0 0.0
    %980 = vmatprep.subr.mxu0 0.0
    %981 = vmatpush1.msra.mxu0 0.0
    %982 = vmatprep.subr.mxu0 0.0
    %983 = vmatpush1.msra.mxu0 0.0
    %984 = vmatprep.subr.mxu0 0.0
    %985 = vmatpush1.msra.mxu0 0.0
    %986 = vmatprep.subr.mxu0 0.0
    %987 = vmatpush1.msra.mxu0 0.0
    %988 = vmatprep.subr.mxu0 0.0
    %989 = vmatpush1.msra.mxu0 0.0
    %990 = vmatprep.subr.mxu0 0.0
    %991 = vmatpush1.msra.mxu0 0.0
    %992 = vmatprep.subr.mxu0 0.0
    %993 = vmatpush1.msra.mxu0 0.0
    %994 = vmatprep.subr.mxu0 0.0
    %995 = vmatpush1.msra.mxu0 0.0
    %996 = vmatprep.subr.mxu0 0.0
    %997 = vmatpush1.msra.mxu0 0.0
    %998 = vmatprep.subr.mxu0 0.0
    %999 = vmatpush1.msra.mxu0 0.0
    %1000 = vmatprep.subr.mxu0 0.0
    %1001 = vmatpush1.msra.mxu0 0.0
    %1002 = vmatprep.subr.mxu0 0.0
    %1003 = vmatpush1.msra.mxu0 0.0
    %1004 = vmatprep.subr.mxu0 0.0
    %1005 = vmatpush1.msra.mxu0 0.0
    %1006 = vmatprep.subr.mxu0 0.0
    %1007 = vmatpush1.msra.mxu0 0.0
    %1008 = vmatprep.subr.mxu0 0.0
    %1009 = vmatpush1.msra.mxu0 0.0
    %1010 = vmatprep.subr.mxu0 0.0
    %1011 = vmatpush1.msra.mxu0 0.0
    %1012 = vmatprep.subr.mxu0 0.0
    %1013 = vmatpush1.msra.mxu0 0.0
    %1014 = vmatprep.subr.mxu0 0.0
    %1015 = vmatpush1.msra.mxu0 0.0
    %1016 = vmatprep.subr.mxu0 0.0
    %1017 = vmatpush1.msra.mxu0 0.0
    %1018 = vmatprep.subr.mxu0 0.0
    %1019 = vmatpush1.msra.mxu0 0.0
    %1020 = vmatprep.subr.mxu0 0.0
    %1021 = vmatpush1.msra.mxu0 0.0
    %1022 = vmatprep.subr.mxu0 0.0
    %1023 = vmatpush1.msra.mxu0 0.0
    %1024 = vmatprep.subr.mxu0 0.0
    %1025 = vmatpush1.msra.mxu0 0.0
    %1026 = vmatprep.subr.mxu0 0.0
    %1027 = vmatpush1.msra.mxu0 0.0
    %1028 = vmatprep.subr.mxu0 0.0
    %1029 = vmatpush1.msra.mxu0 0.0
    %1030 = vmatprep.subr.mxu0 0.0
    %1031 = vmatpush1.msra.mxu0 0.0
    %1032 = vmatprep.subr.mxu0 0.0
    %1033 = vmatpush1.msra.mxu0 0.0
    %1034 = vmatprep.mubr.f32.mxu0 0.0
    %v1035 = vand.u32 %v595, 4294901760
    %1036 = vmatmul.mubr.f32.gmra.mrb[0].mxu0 %v1035
    %v1037 = vpop.f32.mrb[0].mxu0
    %v1038 = vadd.f32 %v947, %v1037
    %v1039 = vpop.f32.mrb[0].mxu0
    %1040 = vmatprep.mubr.f32.mxu0 0.0
    %v1041 = vand.u32 %v598, 4294901760
    %1042 = vmatmul.mubr.f32.gmra.mrb[0].mxu0 %v1041
    %v1043 = vpop.f32.mrb[0].mxu0
    %v1044 = vadd.f32 %v955, %v1043
    %v1045 = vpop.f32.mrb[0].mxu0
    %1046 = vdwg.mxu0
    %1047 = vmatprep.subr.mxu0 0.0
    %v1048 = vand.u32 %v583, 4294901760
    %1049 = vmatpush1.msra.mxu0 %v1048
    %1050 = vmatprep.subr.mxu0 0.0
    %v1051 = vand.u32 %v584, 4294901760
    %1052 = vmatpush1.msra.mxu0 %v1051
    %1053 = vmatprep.subr.mxu0 0.0
    %v1054 = vand.u32 %v585, 4294901760
    %1055 = vmatpush1.msra.mxu0 %v1054
    %1056 = vmatprep.subr.mxu0 0.0
    %v1057 = vand.u32 %v586, 4294901760
    %1058 = vmatpush1.msra.mxu0 %v1057
    %1059 = vmatprep.subr.mxu0 0.0
    %1060 = vmatpush1.msra.mxu0 0.0
    %1061 = vmatprep.subr.mxu0 0.0
    %1062 = vmatpush1.msra.mxu0 0.0
    %1063 = vmatprep.subr.mxu0 0.0
    %1064 = vmatpush1.msra.mxu0 0.0
    %1065 = vmatprep.subr.mxu0 0.0
    %1066 = vmatpush1.msra.mxu0 0.0
    %1067 = vmatprep.subr.mxu0 0.0
    %1068 = vmatpush1.msra.mxu0 0.0
    %1069 = vmatprep.subr.mxu0 0.0
    %1070 = vmatpush1.msra.mxu0 0.0
    %1071 = vmatprep.subr.mxu0 0.0
    %1072 = vmatpush1.msra.mxu0 0.0
    %1073 = vmatprep.subr.mxu0 0.0
    %1074 = vmatpush1.msra.mxu0 0.0
    %1075 = vmatprep.subr.mxu0 0.0
    %1076 = vmatpush1.msra.mxu0 0.0
    %1077 = vmatprep.subr.mxu0 0.0
    %1078 = vmatpush1.msra.mxu0 0.0
    %1079 = vmatprep.subr.mxu0 0.0
    %1080 = vmatpush1.msra.mxu0 0.0
    %1081 = vmatprep.subr.mxu0 0.0
    %1082 = vmatpush1.msra.mxu0 0.0
    %1083 = vmatprep.subr.mxu0 0.0
    %1084 = vmatpush1.msra.mxu0 0.0
    %1085 = vmatprep.subr.mxu0 0.0
    %1086 = vmatpush1.msra.mxu0 0.0
    %1087 = vmatprep.subr.mxu0 0.0
    %1088 = vmatpush1.msra.mxu0 0.0
    %1089 = vmatprep.subr.mxu0 0.0
    %1090 = vmatpush1.msra.mxu0 0.0
    %1091 = vmatprep.subr.mxu0 0.0
    %1092 = vmatpush1.msra.mxu0 0.0
    %1093 = vmatprep.subr.mxu0 0.0
    %1094 = vmatpush1.msra.mxu0 0.0
    %1095 = vmatprep.subr.mxu0 0.0
    %1096 = vmatpush1.msra.mxu0 0.0
    %1097 = vmatprep.subr.mxu0 0.0
    %1098 = vmatpush1.msra.mxu0 0.0
    %1099 = vmatprep.subr.mxu0 0.0
    %1100 = vmatpush1.msra.mxu0 0.0
    %1101 = vmatprep.subr.mxu0 0.0
    %1102 = vmatpush1.msra.mxu0 0.0
    %1103 = vmatprep.subr.mxu0 0.0
    %1104 = vmatpush1.msra.mxu0 0.0
    %1105 = vmatprep.subr.mxu0 0.0
    %1106 = vmatpush1.msra.mxu0 0.0
    %1107 = vmatprep.subr.mxu0 0.0
    %1108 = vmatpush1.msra.mxu0 0.0
    %1109 = vmatprep.subr.mxu0 0.0
    %1110 = vmatpush1.msra.mxu0 0.0
    %1111 = vmatprep.subr.mxu0 0.0
    %1112 = vmatpush1.msra.mxu0 0.0
    %1113 = vmatprep.subr.mxu0 0.0
    %1114 = vmatpush1.msra.mxu0 0.0
    %1115 = vmatprep.mubr.f32.mxu0 0.0
    %v1116 = vand.u32 %v595, 4294901760
    %1117 = vmatmul.mubr.f32.gmra.mrb[0].mxu0 %v1116
    %v1118 = vpop.f32.mrb[0].mxu0
    %v1119 = vadd.f32 %v1038, %v1118
    %v1120 = vpop.f32.mrb[0].mxu0
    %1121 = vmatprep.mubr.f32.mxu0 0.0
    %v1122 = vand.u32 %v598, 4294901760
    %1123 = vmatmul.mubr.f32.gmra.mrb[0].mxu0 %v1122
    %v1124 = vpop.f32.mrb[0].mxu0
    %v1125 = vadd.f32 %v1044, %v1124
    %v1126 = vpop.f32.mrb[0].mxu0
    %1127 = vdwg.mxu0
    %vm1128 = vcmask 130048
    %v1130 = vsel %vm1128, %v1119, 0
    %v1133 = vsel %vm1128, %v574, 0
    %1135 = vmatprep.subr.mxu0 0.0
    %v1136 = vand.u32 %v1133, 4294901760
    %1137 = vmatpush1.xpose.msra.mxu0 %v1136
    %1138 = vmatprep.subr.mxu0 0.0
    %1139 = vmatpush1.xpose.msra.mxu0 0.0
    %1140 = vmatprep.subr.mxu0 0.0
    %1141 = vmatpush1.xpose.msra.mxu0 0.0
    %1142 = vmatprep.subr.mxu0 0.0
    %1143 = vmatpush1.xpose.msra.mxu0 0.0
    %1144 = vmatprep.subr.mxu0 0.0
    %1145 = vmatpush1.xpose.msra.mxu0 0.0
    %1146 = vmatprep.subr.mxu0 0.0
    %1147 = vmatpush1.xpose.msra.mxu0 0.0
    %1148 = vmatprep.subr.mxu0 0.0
    %1149 = vmatpush1.xpose.msra.mxu0 0.0
    %1150 = vmatprep.subr.mxu0 0.0
    %1151 = vmatpush1.xpose.msra.mxu0 0.0
    %1152 = vmatprep.subr.mxu0 0.0
    %1153 = vmatpush1.xpose.msra.mxu0 0.0
    %1154 = vmatprep.subr.mxu0 0.0
    %1155 = vmatpush1.xpose.msra.mxu0 0.0
    %1156 = vmatprep.subr.mxu0 0.0
    %1157 = vmatpush1.xpose.msra.mxu0 0.0
    %1158 = vmatprep.subr.mxu0 0.0
    %1159 = vmatpush1.xpose.msra.mxu0 0.0
    %1160 = vmatprep.subr.mxu0 0.0
    %1161 = vmatpush1.xpose.msra.mxu0 0.0
    %1162 = vmatprep.subr.mxu0 0.0
    %1163 = vmatpush1.xpose.msra.mxu0 0.0
    %1164 = vmatprep.subr.mxu0 0.0
    %1165 = vmatpush1.xpose.msra.mxu0 0.0
    %1166 = vmatprep.subr.mxu0 0.0
    %1167 = vmatpush1.xpose.msra.mxu0 0.0
    %1168 = vmatprep.subr.mxu0 0.0
    %1169 = vmatpush1.xpose.msra.mxu0 0.0
    %1170 = vmatprep.subr.mxu0 0.0
    %1171 = vmatpush1.xpose.msra.mxu0 0.0
    %1172 = vmatprep.subr.mxu0 0.0
    %1173 = vmatpush1.xpose.msra.mxu0 0.0
    %1174 = vmatprep.subr.mxu0 0.0
    %1175 = vmatpush1.xpose.msra.mxu0 0.0
    %1176 = vmatprep.subr.mxu0 0.0
    %1177 = vmatpush1.xpose.msra.mxu0 0.0
    %1178 = vmatprep.subr.mxu0 0.0
    %1179 = vmatpush1.xpose.msra.mxu0 0.0
    %1180 = vmatprep.subr.mxu0 0.0
    %1181 = vmatpush1.xpose.msra.mxu0 0.0
    %1182 = vmatprep.subr.mxu0 0.0
    %1183 = vmatpush1.xpose.msra.mxu0 0.0
    %1184 = vmatprep.subr.mxu0 0.0
    %1185 = vmatpush1.xpose.msra.mxu0 0.0
    %1186 = vmatprep.subr.mxu0 0.0
    %1187 = vmatpush1.xpose.msra.mxu0 0.0
    %1188 = vmatprep.subr.mxu0 0.0
    %1189 = vmatpush1.xpose.msra.mxu0 0.0
    %1190 = vmatprep.subr.mxu0 0.0
    %1191 = vmatpush1.xpose.msra.mxu0 0.0
    %1192 = vmatprep.subr.mxu0 0.0
    %1193 = vmatpush1.xpose.msra.mxu0 0.0
    %1194 = vmatprep.subr.mxu0 0.0
    %1195 = vmatpush1.xpose.msra.mxu0 0.0
    %1196 = vmatprep.subr.mxu0 0.0
    %1197 = vmatpush1.xpose.msra.mxu0 0.0
    %1198 = vmatprep.subr.mxu0 0.0
    %1199 = vmatpush1.xpose.msra.mxu0 0.0
    %1200 = vmatprep.mubr.f32.mxu0 0.0
    %v1201 = vand.u32 %v1130, 4294901760
    %v1202 = vsub.f32 %v1130, %v1201
    %v1203 = vand.u32 %v1202, 4294901760
    %v1204 = vsub.f32 %v1202, %v1203
    %v1205 = vand.u32 %v1204, 4294901760
    %1206 = vmatmul.mubr.f32.gmra.mrb[0].mxu0 %v1205
    %v1207 = vpop.f32.mrb[0].mxu0
    %v1208 = vadd.f32 0.0, %v1207
    %v1209 = vpop.f32.mrb[0].mxu0
    %1210 = vdwg.mxu0
    %1211 = vmatprep.subr.mxu0 0.0
    %v1212 = vand.u32 %v1133, 4294901760
    %v1213 = vsub.f32 %v1133, %v1212
    %v1214 = vand.u32 %v1213, 4294901760
    %v1215 = vsub.f32 %v1213, %v1214
    %v1216 = vand.u32 %v1215, 4294901760
    %1217 = vmatpush1.xpose.msra.mxu0 %v1216
    %1218 = vmatprep.subr.mxu0 0.0
    %1219 = vmatpush1.xpose.msra.mxu0 0.0
    %1220 = vmatprep.subr.mxu0 0.0
    %1221 = vmatpush1.xpose.msra.mxu0 0.0
    %1222 = vmatprep.subr.mxu0 0.0
    %1223 = vmatpush1.xpose.msra.mxu0 0.0
    %1224 = vmatprep.subr.mxu0 0.0
    %1225 = vmatpush1.xpose.msra.mxu0 0.0
    %1226 = vmatprep.subr.mxu0 0.0
    %1227 = vmatpush1.xpose.msra.mxu0 0.0
    %1228 = vmatprep.subr.mxu0 0.0
    %1229 = vmatpush1.xpose.msra.mxu0 0.0
    %1230 = vmatprep.subr.mxu0 0.0
    %1231 = vmatpush1.xpose.msra.mxu0 0.0
    %1232 = vmatprep.subr.mxu0 0.0
    %1233 = vmatpush1.xpose.msra.mxu0 0.0
    %1234 = vmatprep.subr.mxu0 0.0
    %1235 = vmatpush1.xpose.msra.mxu0 0.0
    %1236 = vmatprep.subr.mxu0 0.0
    %1237 = vmatpush1.xpose.msra.mxu0 0.0
    %1238 = vmatprep.subr.mxu0 0.0
    %1239 = vmatpush1.xpose.msra.mxu0 0.0
    %1240 = vmatprep.subr.mxu0 0.0
    %1241 = vmatpush1.xpose.msra.mxu0 0.0
    %1242 = vmatprep.subr.mxu0 0.0
    %1243 = vmatpush1.xpose.msra.mxu0 0.0
    %1244 = vmatprep.subr.mxu0 0.0
    %1245 = vmatpush1.xpose.msra.mxu0 0.0
    %1246 = vmatprep.subr.mxu0 0.0
    %1247 = vmatpush1.xpose.msra.mxu0 0.0
    %1248 = vmatprep.subr.mxu0 0.0
    %1249 = vmatpush1.xpose.msra.mxu0 0.0
    %1250 = vmatprep.subr.mxu0 0.0
    %1251 = vmatpush1.xpose.msra.mxu0 0.0
    %1252 = vmatprep.subr.mxu0 0.0
    %1253 = vmatpush1.xpose.msra.mxu0 0.0
    %1254 = vmatprep.subr.mxu0 0.0
    %1255 = vmatpush1.xpose.msra.mxu0 0.0
    %1256 = vmatprep.subr.mxu0 0.0
    %1257 = vmatpush1.xpose.msra.mxu0 0.0
    %1258 = vmatprep.subr.mxu0 0.0
    %1259 = vmatpush1.xpose.msra.mxu0 0.0
    %1260 = vmatprep.subr.mxu0 0.0
    %1261 = vmatpush1.xpose.msra.mxu0 0.0
    %1262 = vmatprep.subr.mxu0 0.0
    %1263 = vmatpush1.xpose.msra.mxu0 0.0
    %1264 = vmatprep.subr.mxu0 0.0
    %1265 = vmatpush1.xpose.msra.mxu0 0.0
    %1266 = vmatprep.subr.mxu0 0.0
    %1267 = vmatpush1.xpose.msra.mxu0 0.0
    %1268 = vmatprep.subr.mxu0 0.0
    %1269 = vmatpush1.xpose.msra.mxu0 0.0
    %1270 = vmatprep.subr.mxu0 0.0
    %1271 = vmatpush1.xpose.msra.mxu0 0.0
    %1272 = vmatprep.subr.mxu0 0.0
    %1273 = vmatpush1.xpose.msra.mxu0 0.0
    %1274 = vmatprep.subr.mxu0 0.0
    %1275 = vmatpush1.xpose.msra.mxu0 0.0
    %1276 = vmatprep.subr.mxu0 0.0
    %1277 = vmatpush1.xpose.msra.mxu0 0.0
    %1278 = vmatprep.subr.mxu0 0.0
    %1279 = vmatpush1.xpose.msra.mxu0 0.0
    %1280 = vmatprep.mubr.f32.mxu0 0.0
    %v1281 = vand.u32 %v1130, 4294901760
    %1282 = vmatmul.mubr.f32.gmra.mrb[0].mxu0 %v1281
    %v1283 = vpop.f32.mrb[0].mxu0
    %v1284 = vadd.f32 %v1208, %v1283
    %v1285 = vpop.f32.mrb[0].mxu0
    %1286 = vdwg.mxu0
    %1287 = vmatprep.subr.mxu0 0.0
    %v1288 = vand.u32 %v1133, 4294901760
    %v1289 = vsub.f32 %v1133, %v1288
    %1290 = vmatpush1.xpose.msra.mxu0 %v1289
    %1291 = vmatprep.subr.mxu0 0.0
    %1292 = vmatpush1.xpose.msra.mxu0 0.0
    %1293 = vmatprep.subr.mxu0 0.0
    %1294 = vmatpush1.xpose.msra.mxu0 0.0
    %1295 = vmatprep.subr.mxu0 0.0
    %1296 = vmatpush1.xpose.msra.mxu0 0.0
    %1297 = vmatprep.subr.mxu0 0.0
    %1298 = vmatpush1.xpose.msra.mxu0 0.0
    %1299 = vmatprep.subr.mxu0 0.0
    %1300 = vmatpush1.xpose.msra.mxu0 0.0
    %1301 = vmatprep.subr.mxu0 0.0
    %1302 = vmatpush1.xpose.msra.mxu0 0.0
    %1303 = vmatprep.subr.mxu0 0.0
    %1304 = vmatpush1.xpose.msra.mxu0 0.0
    %1305 = vmatprep.subr.mxu0 0.0
    %1306 = vmatpush1.xpose.msra.mxu0 0.0
    %1307 = vmatprep.subr.mxu0 0.0
    %1308 = vmatpush1.xpose.msra.mxu0 0.0
    %1309 = vmatprep.subr.mxu0 0.0
    %1310 = vmatpush1.xpose.msra.mxu0 0.0
    %1311 = vmatprep.subr.mxu0 0.0
    %1312 = vmatpush1.xpose.msra.mxu0 0.0
    %1313 = vmatprep.subr.mxu0 0.0
    %1314 = vmatpush1.xpose.msra.mxu0 0.0
    %1315 = vmatprep.subr.mxu0 0.0
    %1316 = vmatpush1.xpose.msra.mxu0 0.0
    %1317 = vmatprep.subr.mxu0 0.0
    %1318 = vmatpush1.xpose.msra.mxu0 0.0
    %1319 = vmatprep.subr.mxu0 0.0
    %1320 = vmatpush1.xpose.msra.mxu0 0.0
    %1321 = vmatprep.subr.mxu0 0.0
    %1322 = vmatpush1.xpose.msra.mxu0 0.0
    %1323 = vmatprep.subr.mxu0 0.0
    %1324 = vmatpush1.xpose.msra.mxu0 0.0
    %1325 = vmatprep.subr.mxu0 0.0
    %1326 = vmatpush1.xpose.msra.mxu0 0.0
    %1327 = vmatprep.subr.mxu0 0.0
    %1328 = vmatpush1.xpose.msra.mxu0 0.0
    %1329 = vmatprep.subr.mxu0 0.0
    %1330 = vmatpush1.xpose.msra.mxu0 0.0
    %1331 = vmatprep.subr.mxu0 0.0
    %1332 = vmatpush1.xpose.msra.mxu0 0.0
    %1333 = vmatprep.subr.mxu0 0.0
    %1334 = vmatpush1.xpose.msra.mxu0 0.0
    %1335 = vmatprep.subr.mxu0 0.0
    %1336 = vmatpush1.xpose.msra.mxu0 0.0
    %1337 = vmatprep.subr.mxu0 0.0
    %1338 = vmatpush1.xpose.msra.mxu0 0.0
    %1339 = vmatprep.subr.mxu0 0.0
    %1340 = vmatpush1.xpose.msra.mxu0 0.0
    %1341 = vmatprep.subr.mxu0 0.0
    %1342 = vmatpush1.xpose.msra.mxu0 0.0
    %1343 = vmatprep.subr.mxu0 0.0
    %1344 = vmatpush1.xpose.msra.mxu0 0.0
    %1345 = vmatprep.subr.mxu0 0.0
    %1346 = vmatpush1.xpose.msra.mxu0 0.0
    %1347 = vmatprep.subr.mxu0 0.0
    %1348 = vmatpush1.xpose.msra.mxu0 0.0
    %1349 = vmatprep.subr.mxu0 0.0
    %1350 = vmatpush1.xpose.msra.mxu0 0.0
    %1351 = vmatprep.subr.mxu0 0.0
    %1352 = vmatpush1.xpose.msra.mxu0 0.0
    %1353 = vmatprep.mubr.f32.mxu0 0.0
    %v1354 = vand.u32 %v1130, 4294901760
    %v1355 = vsub.f32 %v1130, %v1354
    %1356 = vmatmul.mubr.f32.gmra.mrb[0].mxu0 %v1355
    %v1357 = vpop.f32.mrb[0].mxu0
    %v1358 = vadd.f32 %v1284, %v1357
    %v1359 = vpop.f32.mrb[0].mxu0
    %1360 = vdwg.mxu0
    %1361 = vmatprep.subr.mxu0 0.0
    %v1362 = vand.u32 %v1133, 4294901760
    %1363 = vmatpush1.xpose.msra.mxu0 %v1362
    %1364 = vmatprep.subr.mxu0 0.0
    %1365 = vmatpush1.xpose.msra.mxu0 0.0
    %1366 = vmatprep.subr.mxu0 0.0
    %1367 = vmatpush1.xpose.msra.mxu0 0.0
    %1368 = vmatprep.subr.mxu0 0.0
    %1369 = vmatpush1.xpose.msra.mxu0 0.0
    %1370 = vmatprep.subr.mxu0 0.0
    %1371 = vmatpush1.xpose.msra.mxu0 0.0
    %1372 = vmatprep.subr.mxu0 0.0
    %1373 = vmatpush1.xpose.msra.mxu0 0.0
    %1374 = vmatprep.subr.mxu0 0.0
    %1375 = vmatpush1.xpose.msra.mxu0 0.0
    %1376 = vmatprep.subr.mxu0 0.0
    %1377 = vmatpush1.xpose.msra.mxu0 0.0
    %1378 = vmatprep.subr.mxu0 0.0
    %1379 = vmatpush1.xpose.msra.mxu0 0.0
    %1380 = vmatprep.subr.mxu0 0.0
    %1381 = vmatpush1.xpose.msra.mxu0 0.0
    %1382 = vmatprep.subr.mxu0 0.0
    %1383 = vmatpush1.xpose.msra.mxu0 0.0
    %1384 = vmatprep.subr.mxu0 0.0
    %1385 = vmatpush1.xpose.msra.mxu0 0.0
    %1386 = vmatprep.subr.mxu0 0.0
    %1387 = vmatpush1.xpose.msra.mxu0 0.0
    %1388 = vmatprep.subr.mxu0 0.0
    %1389 = vmatpush1.xpose.msra.mxu0 0.0
    %1390 = vmatprep.subr.mxu0 0.0
    %1391 = vmatpush1.xpose.msra.mxu0 0.0
    %1392 = vmatprep.subr.mxu0 0.0
    %1393 = vmatpush1.xpose.msra.mxu0 0.0
    %1394 = vmatprep.subr.mxu0 0.0
    %1395 = vmatpush1.xpose.msra.mxu0 0.0
    %1396 = vmatprep.subr.mxu0 0.0
    %1397 = vmatpush1.xpose.msra.mxu0 0.0
    %1398 = vmatprep.subr.mxu0 0.0
    %1399 = vmatpush1.xpose.msra.mxu0 0.0
    %1400 = vmatprep.subr.mxu0 0.0
    %1401 = vmatpush1.xpose.msra.mxu0 0.0
    %1402 = vmatprep.subr.mxu0 0.0
    %1403 = vmatpush1.xpose.msra.mxu0 0.0
    %1404 = vmatprep.subr.mxu0 0.0
    %1405 = vmatpush1.xpose.msra.mxu0 0.0
    %1406 = vmatprep.subr.mxu0 0.0
    %1407 = vmatpush1.xpose.msra.mxu0 0.0
    %1408 = vmatprep.subr.mxu0 0.0
    %1409 = vmatpush1.xpose.msra.mxu0 0.0
    %1410 = vmatprep.subr.mxu0 0.0
    %1411 = vmatpush1.xpose.msra.mxu0 0.0
    %1412 = vmatprep.subr.mxu0 0.0
    %1413 = vmatpush1.xpose.msra.mxu0 0.0
    %1414 = vmatprep.subr.mxu0 0.0
    %1415 = vmatpush1.xpose.msra.mxu0 0.0
    %1416 = vmatprep.subr.mxu0 0.0
    %1417 = vmatpush1.xpose.msra.mxu0 0.0
    %1418 = vmatprep.subr.mxu0 0.0
    %1419 = vmatpush1.xpose.msra.mxu0 0.0
    %1420 = vmatprep.subr.mxu0 0.0
    %1421 = vmatpush1.xpose.msra.mxu0 0.0
    %1422 = vmatprep.subr.mxu0 0.0
    %1423 = vmatpush1.xpose.msra.mxu0 0.0
    %1424 = vmatprep.subr.mxu0 0.0
    %1425 = vmatpush1.xpose.msra.mxu0 0.0
    %1426 = vmatprep.mubr.f32.mxu0 0.0
    %v1427 = vand.u32 %v1130, 4294901760
    %v1428 = vsub.f32 %v1130, %v1427
    %v1429 = vand.u32 %v1428, 4294901760
    %1430 = vmatmul.mubr.f32.gmra.mrb[0].mxu0 %v1429
    %v1431 = vpop.f32.mrb[0].mxu0
    %v1432 = vadd.f32 %v1358, %v1431
    %v1433 = vpop.f32.mrb[0].mxu0
    %1434 = vdwg.mxu0
    %1435 = vmatprep.subr.mxu0 0.0
    %v1436 = vand.u32 %v1133, 4294901760
    %v1437 = vsub.f32 %v1133, %v1436
    %v1438 = vand.u32 %v1437, 4294901760
    %1439 = vmatpush1.xpose.msra.mxu0 %v1438
    %1440 = vmatprep.subr.mxu0 0.0
    %1441 = vmatpush1.xpose.msra.mxu0 0.0
    %1442 = vmatprep.subr.mxu0 0.0
    %1443 = vmatpush1.xpose.msra.mxu0 0.0
    %1444 = vmatprep.subr.mxu0 0.0
    %1445 = vmatpush1.xpose.msra.mxu0 0.0
    %1446 = vmatprep.subr.mxu0 0.0
    %1447 = vmatpush1.xpose.msra.mxu0 0.0
    %1448 = vmatprep.subr.mxu0 0.0
    %1449 = vmatpush1.xpose.msra.mxu0 0.0
    %1450 = vmatprep.subr.mxu0 0.0
    %1451 = vmatpush1.xpose.msra.mxu0 0.0
    %1452 = vmatprep.subr.mxu0 0.0
    %1453 = vmatpush1.xpose.msra.mxu0 0.0
    %1454 = vmatprep.subr.mxu0 0.0
    %1455 = vmatpush1.xpose.msra.mxu0 0.0
    %1456 = vmatprep.subr.mxu0 0.0
    %1457 = vmatpush1.xpose.msra.mxu0 0.0
    %1458 = vmatprep.subr.mxu0 0.0
    %1459 = vmatpush1.xpose.msra.mxu0 0.0
    %1460 = vmatprep.subr.mxu0 0.0
    %1461 = vmatpush1.xpose.msra.mxu0 0.0
    %1462 = vmatprep.subr.mxu0 0.0
    %1463 = vmatpush1.xpose.msra.mxu0 0.0
    %1464 = vmatprep.subr.mxu0 0.0
    %1465 = vmatpush1.xpose.msra.mxu0 0.0
    %1466 = vmatprep.subr.mxu0 0.0
    %1467 = vmatpush1.xpose.msra.mxu0 0.0
    %1468 = vmatprep.subr.mxu0 0.0
    %1469 = vmatpush1.xpose.msra.mxu0 0.0
    %1470 = vmatprep.subr.mxu0 0.0
    %1471 = vmatpush1.xpose.msra.mxu0 0.0
    %1472 = vmatprep.subr.mxu0 0.0
    %1473 = vmatpush1.xpose.msra.mxu0 0.0
    %1474 = vmatprep.subr.mxu0 0.0
    %1475 = vmatpush1.xpose.msra.mxu0 0.0
    %1476 = vmatprep.subr.mxu0 0.0
    %1477 = vmatpush1.xpose.msra.mxu0 0.0
    %1478 = vmatprep.subr.mxu0 0.0
    %1479 = vmatpush1.xpose.msra.mxu0 0.0
    %1480 = vmatprep.subr.mxu0 0.0
    %1481 = vmatpush1.xpose.msra.mxu0 0.0
    %1482 = vmatprep.subr.mxu0 0.0
    %1483 = vmatpush1.xpose.msra.mxu0 0.0
    %1484 = vmatprep.subr.mxu0 0.0
    %1485 = vmatpush1.xpose.msra.mxu0 0.0
    %1486 = vmatprep.subr.mxu0 0.0
    %1487 = vmatpush1.xpose.msra.mxu0 0.0
    %1488 = vmatprep.subr.mxu0 0.0
    %1489 = vmatpush1.xpose.msra.mxu0 0.0
    %1490 = vmatprep.subr.mxu0 0.0
    %1491 = vmatpush1.xpose.msra.mxu0 0.0
    %1492 = vmatprep.subr.mxu0 0.0
    %1493 = vmatpush1.xpose.msra.mxu0 0.0
    %1494 = vmatprep.subr.mxu0 0.0
    %1495 = vmatpush1.xpose.msra.mxu0 0.0
    %1496 = vmatprep.subr.mxu0 0.0
    %1497 = vmatpush1.xpose.msra.mxu0 0.0
    %1498 = vmatprep.subr.mxu0 0.0
    %1499 = vmatpush1.xpose.msra.mxu0 0.0
    %1500 = vmatprep.subr.mxu0 0.0
    %1501 = vmatpush1.xpose.msra.mxu0 0.0
    %1502 = vmatprep.mubr.f32.mxu0 0.0
    %v1503 = vand.u32 %v1130, 4294901760
    %1504 = vmatmul.mubr.f32.gmra.mrb[0].mxu0 %v1503
    %v1505 = vpop.f32.mrb[0].mxu0
    %v1506 = vadd.f32 %v1432, %v1505
    %v1507 = vpop.f32.mrb[0].mxu0
    %1508 = vdwg.mxu0
    %1509 = vmatprep.subr.mxu0 0.0
    %v1510 = vand.u32 %v1133, 4294901760
    %1511 = vmatpush1.xpose.msra.mxu0 %v1510
    %1512 = vmatprep.subr.mxu0 0.0
    %1513 = vmatpush1.xpose.msra.mxu0 0.0
    %1514 = vmatprep.subr.mxu0 0.0
    %1515 = vmatpush1.xpose.msra.mxu0 0.0
    %1516 = vmatprep.subr.mxu0 0.0
    %1517 = vmatpush1.xpose.msra.mxu0 0.0
    %1518 = vmatprep.subr.mxu0 0.0
    %1519 = vmatpush1.xpose.msra.mxu0 0.0
    %1520 = vmatprep.subr.mxu0 0.0
    %1521 = vmatpush1.xpose.msra.mxu0 0.0
    %1522 = vmatprep.subr.mxu0 0.0
    %1523 = vmatpush1.xpose.msra.mxu0 0.0
    %1524 = vmatprep.subr.mxu0 0.0
    %1525 = vmatpush1.xpose.msra.mxu0 0.0
    %1526 = vmatprep.subr.mxu0 0.0
    %1527 = vmatpush1.xpose.msra.mxu0 0.0
    %1528 = vmatprep.subr.mxu0 0.0
    %1529 = vmatpush1.xpose.msra.mxu0 0.0
    %1530 = vmatprep.subr.mxu0 0.0
    %1531 = vmatpush1.xpose.msra.mxu0 0.0
    %1532 = vmatprep.subr.mxu0 0.0
    %1533 = vmatpush1.xpose.msra.mxu0 0.0
    %1534 = vmatprep.subr.mxu0 0.0
    %1535 = vmatpush1.xpose.msra.mxu0 0.0
    %1536 = vmatprep.subr.mxu0 0.0
    %1537 = vmatpush1.xpose.msra.mxu0 0.0
    %1538 = vmatprep.subr.mxu0 0.0
    %1539 = vmatpush1.xpose.msra.mxu0 0.0
    %1540 = vmatprep.subr.mxu0 0.0
    %1541 = vmatpush1.xpose.msra.mxu0 0.0
    %1542 = vmatprep.subr.mxu0 0.0
    %1543 = vmatpush1.xpose.msra.mxu0 0.0
    %1544 = vmatprep.subr.mxu0 0.0
    %1545 = vmatpush1.xpose.msra.mxu0 0.0
    %1546 = vmatprep.subr.mxu0 0.0
    %1547 = vmatpush1.xpose.msra.mxu0 0.0
    %1548 = vmatprep.subr.mxu0 0.0
    %1549 = vmatpush1.xpose.msra.mxu0 0.0
    %1550 = vmatprep.subr.mxu0 0.0
    %1551 = vmatpush1.xpose.msra.mxu0 0.0
    %1552 = vmatprep.subr.mxu0 0.0
    %1553 = vmatpush1.xpose.msra.mxu0 0.0
    %1554 = vmatprep.subr.mxu0 0.0
    %1555 = vmatpush1.xpose.msra.mxu0 0.0
    %1556 = vmatprep.subr.mxu0 0.0
    %1557 = vmatpush1.xpose.msra.mxu0 0.0
    %1558 = vmatprep.subr.mxu0 0.0
    %1559 = vmatpush1.xpose.msra.mxu0 0.0
    %1560 = vmatprep.subr.mxu0 0.0
    %1561 = vmatpush1.xpose.msra.mxu0 0.0
    %1562 = vmatprep.subr.mxu0 0.0
    %1563 = vmatpush1.xpose.msra.mxu0 0.0
    %1564 = vmatprep.subr.mxu0 0.0
    %1565 = vmatpush1.xpose.msra.mxu0 0.0
    %1566 = vmatprep.subr.mxu0 0.0
    %1567 = vmatpush1.xpose.msra.mxu0 0.0
    %1568 = vmatprep.subr.mxu0 0.0
    %1569 = vmatpush1.xpose.msra.mxu0 0.0
    %1570 = vmatprep.subr.mxu0 0.0
    %1571 = vmatpush1.xpose.msra.mxu0 0.0
    %1572 = vmatprep.subr.mxu0 0.0
    %1573 = vmatpush1.xpose.msra.mxu0 0.0
    %1574 = vmatprep.mubr.f32.mxu0 0.0
    %v1575 = vand.u32 %v1130, 4294901760
    %1576 = vmatmul.mubr.f32.gmra.mrb[0].mxu0 %v1575
    %v1577 = vpop.f32.mrb[0].mxu0
    %v1578 = vadd.f32 %v1506, %v1577
    %v1579 = vpop.f32.mrb[0].mxu0
    %1580 = vdwg.mxu0
    %v1582 = vsel %vm1128, %v1125, 0
    %v1585 = vsel %vm1128, %v580, 0
    %1587 = vmatprep.subr.mxu0 0.0
    %v1588 = vand.u32 %v1585, 4294901760
    %1589 = vmatpush1.xpose.msra.mxu0 %v1588
    %1590 = vmatprep.subr.mxu0 0.0
    %1591 = vmatpush1.xpose.msra.mxu0 0.0
    %1592 = vmatprep.subr.mxu0 0.0
    %1593 = vmatpush1.xpose.msra.mxu0 0.0
    %1594 = vmatprep.subr.mxu0 0.0
    %1595 = vmatpush1.xpose.msra.mxu0 0.0
    %1596 = vmatprep.subr.mxu0 0.0
    %1597 = vmatpush1.xpose.msra.mxu0 0.0
    %1598 = vmatprep.subr.mxu0 0.0
    %1599 = vmatpush1.xpose.msra.mxu0 0.0
    %1600 = vmatprep.subr.mxu0 0.0
    %1601 = vmatpush1.xpose.msra.mxu0 0.0
    %1602 = vmatprep.subr.mxu0 0.0
    %1603 = vmatpush1.xpose.msra.mxu0 0.0
    %1604 = vmatprep.subr.mxu0 0.0
    %1605 = vmatpush1.xpose.msra.mxu0 0.0
    %1606 = vmatprep.subr.mxu0 0.0
    %1607 = vmatpush1.xpose.msra.mxu0 0.0
    %1608 = vmatprep.subr.mxu0 0.0
    %1609 = vmatpush1.xpose.msra.mxu0 0.0
    %1610 = vmatprep.subr.mxu0 0.0
    %1611 = vmatpush1.xpose.msra.mxu0 0.0
    %1612 = vmatprep.subr.mxu0 0.0
    %1613 = vmatpush1.xpose.msra.mxu0 0.0
    %1614 = vmatprep.subr.mxu0 0.0
    %1615 = vmatpush1.xpose.msra.mxu0 0.0
    %1616 = vmatprep.subr.mxu0 0.0
    %1617 = vmatpush1.xpose.msra.mxu0 0.0
    %1618 = vmatprep.subr.mxu0 0.0
    %1619 = vmatpush1.xpose.msra.mxu0 0.0
    %1620 = vmatprep.subr.mxu0 0.0
    %1621 = vmatpush1.xpose.msra.mxu0 0.0
    %1622 = vmatprep.subr.mxu0 0.0
    %1623 = vmatpush1.xpose.msra.mxu0 0.0
    %1624 = vmatprep.subr.mxu0 0.0
    %1625 = vmatpush1.xpose.msra.mxu0 0.0
    %1626 = vmatprep.subr.mxu0 0.0
    %1627 = vmatpush1.xpose.msra.mxu0 0.0
    %1628 = vmatprep.subr.mxu0 0.0
    %1629 = vmatpush1.xpose.msra.mxu0 0.0
    %1630 = vmatprep.subr.mxu0 0.0
    %1631 = vmatpush1.xpose.msra.mxu0 0.0
    %1632 = vmatprep.subr.mxu0 0.0
    %1633 = vmatpush1.xpose.msra.mxu0 0.0
    %1634 = vmatprep.subr.mxu0 0.0
    %1635 = vmatpush1.xpose.msra.mxu0 0.0
    %1636 = vmatprep.subr.mxu0 0.0
    %1637 = vmatpush1.xpose.msra.mxu0 0.0
    %1638 = vmatprep.subr.mxu0 0.0
    %1639 = vmatpush1.xpose.msra.mxu0 0.0
    %1640 = vmatprep.subr.mxu0 0.0
    %1641 = vmatpush1.xpose.msra.mxu0 0.0
    %1642 = vmatprep.subr.mxu0 0.0
    %1643 = vmatpush1.xpose.msra.mxu0 0.0
    %1644 = vmatprep.subr.mxu0 0.0
    %1645 = vmatpush1.xpose.msra.mxu0 0.0
    %1646 = vmatprep.subr.mxu0 0.0
    %1647 = vmatpush1.xpose.msra.mxu0 0.0
    %1648 = vmatprep.subr.mxu0 0.0
    %1649 = vmatpush1.xpose.msra.mxu0 0.0
    %1650 = vmatprep.subr.mxu0 0.0
    %1651 = vmatpush1.xpose.msra.mxu0 0.0
    %1652 = vmatprep.mubr.f32.mxu0 0.0
    %v1653 = vand.u32 %v1582, 4294901760
    %v1654 = vsub.f32 %v1582, %v1653
    %v1655 = vand.u32 %v1654, 4294901760
    %v1656 = vsub.f32 %v1654, %v1655
    %v1657 = vand.u32 %v1656, 4294901760
    %1658 = vmatmul.mubr.f32.gmra.mrb[0].mxu0 %v1657
    %v1659 = vpop.f32.mrb[0].mxu0
    %v1660 = vadd.f32 0.0, %v1659
    %v1661 = vpop.f32.mrb[0].mxu0
    %1662 = vdwg.mxu0
    %1663 = vmatprep.subr.mxu0 0.0
    %v1664 = vand.u32 %v1585, 4294901760
    %v1665 = vsub.f32 %v1585, %v1664
    %v1666 = vand.u32 %v1665, 4294901760
    %v1667 = vsub.f32 %v1665, %v1666
    %v1668 = vand.u32 %v1667, 4294901760
    %1669 = vmatpush1.xpose.msra.mxu0 %v1668
    %1670 = vmatprep.subr.mxu0 0.0
    %1671 = vmatpush1.xpose.msra.mxu0 0.0
    %1672 = vmatprep.subr.mxu0 0.0
    %1673 = vmatpush1.xpose.msra.mxu0 0.0
    %1674 = vmatprep.subr.mxu0 0.0
    %1675 = vmatpush1.xpose.msra.mxu0 0.0
    %1676 = vmatprep.subr.mxu0 0.0
    %1677 = vmatpush1.xpose.msra.mxu0 0.0
    %1678 = vmatprep.subr.mxu0 0.0
    %1679 = vmatpush1.xpose.msra.mxu0 0.0
    %1680 = vmatprep.subr.mxu0 0.0
    %1681 = vmatpush1.xpose.msra.mxu0 0.0
    %1682 = vmatprep.subr.mxu0 0.0
    %1683 = vmatpush1.xpose.msra.mxu0 0.0
    %1684 = vmatprep.subr.mxu0 0.0
    %1685 = vmatpush1.xpose.msra.mxu0 0.0
    %1686 = vmatprep.subr.mxu0 0.0
    %1687 = vmatpush1.xpose.msra.mxu0 0.0
    %1688 = vmatprep.subr.mxu0 0.0
    %1689 = vmatpush1.xpose.msra.mxu0 0.0
    %1690 = vmatprep.subr.mxu0 0.0
    %1691 = vmatpush1.xpose.msra.mxu0 0.0
    %1692 = vmatprep.subr.mxu0 0.0
    %1693 = vmatpush1.xpose.msra.mxu0 0.0
    %1694 = vmatprep.subr.mxu0 0.0
    %1695 = vmatpush1.xpose.msra.mxu0 0.0
    %1696 = vmatprep.subr.mxu0 0.0
    %1697 = vmatpush1.xpose.msra.mxu0 0.0
    %1698 = vmatprep.subr.mxu0 0.0
    %1699 = vmatpush1.xpose.msra.mxu0 0.0
    %1700 = vmatprep.subr.mxu0 0.0
    %1701 = vmatpush1.xpose.msra.mxu0 0.0
    %1702 = vmatprep.subr.mxu0 0.0
    %1703 = vmatpush1.xpose.msra.mxu0 0.0
    %1704 = vmatprep.subr.mxu0 0.0
    %1705 = vmatpush1.xpose.msra.mxu0 0.0
    %1706 = vmatprep.subr.mxu0 0.0
    %1707 = vmatpush1.xpose.msra.mxu0 0.0
    %1708 = vmatprep.subr.mxu0 0.0
    %1709 = vmatpush1.xpose.msra.mxu0 0.0
    %1710 = vmatprep.subr.mxu0 0.0
    %1711 = vmatpush1.xpose.msra.mxu0 0.0
    %1712 = vmatprep.subr.mxu0 0.0
    %1713 = vmatpush1.xpose.msra.mxu0 0.0
    %1714 = vmatprep.subr.mxu0 0.0
    %1715 = vmatpush1.xpose.msra.mxu0 0.0
    %1716 = vmatprep.subr.mxu0 0.0
    %1717 = vmatpush1.xpose.msra.mxu0 0.0
    %1718 = vmatprep.subr.mxu0 0.0
    %1719 = vmatpush1.xpose.msra.mxu0 0.0
    %1720 = vmatprep.subr.mxu0 0.0
    %1721 = vmatpush1.xpose.msra.mxu0 0.0
    %1722 = vmatprep.subr.mxu0 0.0
    %1723 = vmatpush1.xpose.msra.mxu0 0.0
    %1724 = vmatprep.subr.mxu0 0.0
    %1725 = vmatpush1.xpose.msra.mxu0 0.0
    %1726 = vmatprep.subr.mxu0 0.0
    %1727 = vmatpush1.xpose.msra.mxu0 0.0
    %1728 = vmatprep.subr.mxu0 0.0
    %1729 = vmatpush1.xpose.msra.mxu0 0.0
    %1730 = vmatprep.subr.mxu0 0.0
    %1731 = vmatpush1.xpose.msra.mxu0 0.0
    %1732 = vmatprep.mubr.f32.mxu0 0.0
    %v1733 = vand.u32 %v1582, 4294901760
    %1734 = vmatmul.mubr.f32.gmra.mrb[0].mxu0 %v1733
    %v1735 = vpop.f32.mrb[0].mxu0
    %v1736 = vadd.f32 %v1660, %v1735
    %v1737 = vpop.f32.mrb[0].mxu0
    %1738 = vdwg.mxu0
    %1739 = vmatprep.subr.mxu0 0.0
    %v1740 = vand.u32 %v1585, 4294901760
    %v1741 = vsub.f32 %v1585, %v1740
    %1742 = vmatpush1.xpose.msra.mxu0 %v1741
    %1743 = vmatprep.subr.mxu0 0.0
    %1744 = vmatpush1.xpose.msra.mxu0 0.0
    %1745 = vmatprep.subr.mxu0 0.0
    %1746 = vmatpush1.xpose.msra.mxu0 0.0
    %1747 = vmatprep.subr.mxu0 0.0
    %1748 = vmatpush1.xpose.msra.mxu0 0.0
    %1749 = vmatprep.subr.mxu0 0.0
    %1750 = vmatpush1.xpose.msra.mxu0 0.0
    %1751 = vmatprep.subr.mxu0 0.0
    %1752 = vmatpush1.xpose.msra.mxu0 0.0
    %1753 = vmatprep.subr.mxu0 0.0
    %1754 = vmatpush1.xpose.msra.mxu0 0.0
    %1755 = vmatprep.subr.mxu0 0.0
    %1756 = vmatpush1.xpose.msra.mxu0 0.0
    %1757 = vmatprep.subr.mxu0 0.0
    %1758 = vmatpush1.xpose.msra.mxu0 0.0
    %1759 = vmatprep.subr.mxu0 0.0
    %1760 = vmatpush1.xpose.msra.mxu0 0.0
    %1761 = vmatprep.subr.mxu0 0.0
    %1762 = vmatpush1.xpose.msra.mxu0 0.0
    %1763 = vmatprep.subr.mxu0 0.0
    %1764 = vmatpush1.xpose.msra.mxu0 0.0
    %1765 = vmatprep.subr.mxu0 0.0
    %1766 = vmatpush1.xpose.msra.mxu0 0.0
    %1767 = vmatprep.subr.mxu0 0.0
    %1768 = vmatpush1.xpose.msra.mxu0 0.0
    %1769 = vmatprep.subr.mxu0 0.0
    %1770 = vmatpush1.xpose.msra.mxu0 0.0
    %1771 = vmatprep.subr.mxu0 0.0
    %1772 = vmatpush1.xpose.msra.mxu0 0.0
    %1773 = vmatprep.subr.mxu0 0.0
    %1774 = vmatpush1.xpose.msra.mxu0 0.0
    %1775 = vmatprep.subr.mxu0 0.0
    %1776 = vmatpush1.xpose.msra.mxu0 0.0
    %1777 = vmatprep.subr.mxu0 0.0
    %1778 = vmatpush1.xpose.msra.mxu0 0.0
    %1779 = vmatprep.subr.mxu0 0.0
    %1780 = vmatpush1.xpose.msra.mxu0 0.0
    %1781 = vmatprep.subr.mxu0 0.0
    %1782 = vmatpush1.xpose.msra.mxu0 0.0
    %1783 = vmatprep.subr.mxu0 0.0
    %1784 = vmatpush1.xpose.msra.mxu0 0.0
    %1785 = vmatprep.subr.mxu0 0.0
    %1786 = vmatpush1.xpose.msra.mxu0 0.0
    %1787 = vmatprep.subr.mxu0 0.0
    %1788 = vmatpush1.xpose.msra.mxu0 0.0
    %1789 = vmatprep.subr.mxu0 0.0
    %1790 = vmatpush1.xpose.msra.mxu0 0.0
    %1791 = vmatprep.subr.mxu0 0.0
    %1792 = vmatpush1.xpose.msra.mxu0 0.0
    %1793 = vmatprep.subr.mxu0 0.0
    %1794 = vmatpush1.xpose.msra.mxu0 0.0
    %1795 = vmatprep.subr.mxu0 0.0
    %1796 = vmatpush1.xpose.msra.mxu0 0.0
    %1797 = vmatprep.subr.mxu0 0.0
    %1798 = vmatpush1.xpose.msra.mxu0 0.0
    %1799 = vmatprep.subr.mxu0 0.0
    %1800 = vmatpush1.xpose.msra.mxu0 0.0
    %1801 = vmatprep.subr.mxu0 0.0
    %1802 = vmatpush1.xpose.msra.mxu0 0.0
    %1803 = vmatprep.subr.mxu0 0.0
    %1804 = vmatpush1.xpose.msra.mxu0 0.0
    %1805 = vmatprep.mubr.f32.mxu0 0.0
    %v1806 = vand.u32 %v1582, 4294901760
    %v1807 = vsub.f32 %v1582, %v1806
    %1808 = vmatmul.mubr.f32.gmra.mrb[0].mxu0 %v1807
    %v1809 = vpop.f32.mrb[0].mxu0
    %v1810 = vadd.f32 %v1736, %v1809
    %v1811 = vpop.f32.mrb[0].mxu0
    %1812 = vdwg.mxu0
    %1813 = vmatprep.subr.mxu0 0.0
    %v1814 = vand.u32 %v1585, 4294901760
    %1815 = vmatpush1.xpose.msra.mxu0 %v1814
    %1816 = vmatprep.subr.mxu0 0.0
    %1817 = vmatpush1.xpose.msra.mxu0 0.0
    %1818 = vmatprep.subr.mxu0 0.0
    %1819 = vmatpush1.xpose.msra.mxu0 0.0
    %1820 = vmatprep.subr.mxu0 0.0
    %1821 = vmatpush1.xpose.msra.mxu0 0.0
    %1822 = vmatprep.subr.mxu0 0.0
    %1823 = vmatpush1.xpose.msra.mxu0 0.0
    %1824 = vmatprep.subr.mxu0 0.0
    %1825 = vmatpush1.xpose.msra.mxu0 0.0
    %1826 = vmatprep.subr.mxu0 0.0
    %1827 = vmatpush1.xpose.msra.mxu0 0.0
    %1828 = vmatprep.subr.mxu0 0.0
    %1829 = vmatpush1.xpose.msra.mxu0 0.0
    %1830 = vmatprep.subr.mxu0 0.0
    %1831 = vmatpush1.xpose.msra.mxu0 0.0
    %1832 = vmatprep.subr.mxu0 0.0
    %1833 = vmatpush1.xpose.msra.mxu0 0.0
    %1834 = vmatprep.subr.mxu0 0.0
    %1835 = vmatpush1.xpose.msra.mxu0 0.0
    %1836 = vmatprep.subr.mxu0 0.0
    %1837 = vmatpush1.xpose.msra.mxu0 0.0
    %1838 = vmatprep.subr.mxu0 0.0
    %1839 = vmatpush1.xpose.msra.mxu0 0.0
    %1840 = vmatprep.subr.mxu0 0.0
    %1841 = vmatpush1.xpose.msra.mxu0 0.0
    %1842 = vmatprep.subr.mxu0 0.0
    %1843 = vmatpush1.xpose.msra.mxu0 0.0
    %1844 = vmatprep.subr.mxu0 0.0
    %1845 = vmatpush1.xpose.msra.mxu0 0.0
    %1846 = vmatprep.subr.mxu0 0.0
    %1847 = vmatpush1.xpose.msra.mxu0 0.0
    %1848 = vmatprep.subr.mxu0 0.0
    %1849 = vmatpush1.xpose.msra.mxu0 0.0
    %1850 = vmatprep.subr.mxu0 0.0
    %1851 = vmatpush1.xpose.msra.mxu0 0.0
    %1852 = vmatprep.subr.mxu0 0.0
    %1853 = vmatpush1.xpose.msra.mxu0 0.0
    %1854 = vmatprep.subr.mxu0 0.0
    %1855 = vmatpush1.xpose.msra.mxu0 0.0
    %1856 = vmatprep.subr.mxu0 0.0
    %1857 = vmatpush1.xpose.msra.mxu0 0.0
    %1858 = vmatprep.subr.mxu0 0.0
    %1859 = vmatpush1.xpose.msra.mxu0 0.0
    %1860 = vmatprep.subr.mxu0 0.0
    %1861 = vmatpush1.xpose.msra.mxu0 0.0
    %1862 = vmatprep.subr.mxu0 0.0
    %1863 = vmatpush1.xpose.msra.mxu0 0.0
    %1864 = vmatprep.subr.mxu0 0.0
    %1865 = vmatpush1.xpose.msra.mxu0 0.0
    %1866 = vmatprep.subr.mxu0 0.0
    %1867 = vmatpush1.xpose.msra.mxu0 0.0
    %1868 = vmatprep.subr.mxu0 0.0
    %1869 = vmatpush1.xpose.msra.mxu0 0.0
    %1870 = vmatprep.subr.mxu0 0.0
    %1871 = vmatpush1.xpose.msra.mxu0 0.0
    %1872 = vmatprep.subr.mxu0 0.0
    %1873 = vmatpush1.xpose.msra.mxu0 0.0
    %1874 = vmatprep.subr.mxu0 0.0
    %1875 = vmatpush1.xpose.msra.mxu0 0.0
    %1876 = vmatprep.subr.mxu0 0.0
    %1877 = vmatpush1.xpose.msra.mxu0 0.0
    %1878 = vmatprep.mubr.f32.mxu0 0.0
    %v1879 = vand.u32 %v1582, 4294901760
    %v1880 = vsub.f32 %v1582, %v1879
    %v1881 = vand.u32 %v1880, 4294901760
    %1882 = vmatmul.mubr.f32.gmra.mrb[0].mxu0 %v1881
    %v1883 = vpop.f32.mrb[0].mxu0
    %v1884 = vadd.f32 %v1810, %v1883
    %v1885 = vpop.f32.mrb[0].mxu0
    %1886 = vdwg.mxu0
    %1887 = vmatprep.subr.mxu0 0.0
    %v1888 = vand.u32 %v1585, 4294901760
    %v1889 = vsub.f32 %v1585, %v1888
    %v1890 = vand.u32 %v1889, 4294901760
    %1891 = vmatpush1.xpose.msra.mxu0 %v1890
    %1892 = vmatprep.subr.mxu0 0.0
    %1893 = vmatpush1.xpose.msra.mxu0 0.0
    %1894 = vmatprep.subr.mxu0 0.0
    %1895 = vmatpush1.xpose.msra.mxu0 0.0
    %1896 = vmatprep.subr.mxu0 0.0
    %1897 = vmatpush1.xpose.msra.mxu0 0.0
    %1898 = vmatprep.subr.mxu0 0.0
    %1899 = vmatpush1.xpose.msra.mxu0 0.0
    %1900 = vmatprep.subr.mxu0 0.0
    %1901 = vmatpush1.xpose.msra.mxu0 0.0
    %1902 = vmatprep.subr.mxu0 0.0
    %1903 = vmatpush1.xpose.msra.mxu0 0.0
    %1904 = vmatprep.subr.mxu0 0.0
    %1905 = vmatpush1.xpose.msra.mxu0 0.0
    %1906 = vmatprep.subr.mxu0 0.0
    %1907 = vmatpush1.xpose.msra.mxu0 0.0
    %1908 = vmatprep.subr.mxu0 0.0
    %1909 = vmatpush1.xpose.msra.mxu0 0.0
    %1910 = vmatprep.subr.mxu0 0.0
    %1911 = vmatpush1.xpose.msra.mxu0 0.0
    %1912 = vmatprep.subr.mxu0 0.0
    %1913 = vmatpush1.xpose.msra.mxu0 0.0
    %1914 = vmatprep.subr.mxu0 0.0
    %1915 = vmatpush1.xpose.msra.mxu0 0.0
    %1916 = vmatprep.subr.mxu0 0.0
    %1917 = vmatpush1.xpose.msra.mxu0 0.0
    %1918 = vmatprep.subr.mxu0 0.0
    %1919 = vmatpush1.xpose.msra.mxu0 0.0
    %1920 = vmatprep.subr.mxu0 0.0
    %1921 = vmatpush1.xpose.msra.mxu0 0.0
    %1922 = vmatprep.subr.mxu0 0.0
    %1923 = vmatpush1.xpose.msra.mxu0 0.0
    %1924 = vmatprep.subr.mxu0 0.0
    %1925 = vmatpush1.xpose.msra.mxu0 0.0
    %1926 = vmatprep.subr.mxu0 0.0
    %1927 = vmatpush1.xpose.msra.mxu0 0.0
    %1928 = vmatprep.subr.mxu0 0.0
    %1929 = vmatpush1.xpose.msra.mxu0 0.0
    %1930 = vmatprep.subr.mxu0 0.0
    %1931 = vmatpush1.xpose.msra.mxu0 0.0
    %1932 = vmatprep.subr.mxu0 0.0
    %1933 = vmatpush1.xpose.msra.mxu0 0.0
    %1934 = vmatprep.subr.mxu0 0.0
    %1935 = vmatpush1.xpose.msra.mxu0 0.0
    %1936 = vmatprep.subr.mxu0 0.0
    %1937 = vmatpush1.xpose.msra.mxu0 0.0
    %1938 = vmatprep.subr.mxu0 0.0
    %1939 = vmatpush1.xpose.msra.mxu0 0.0
    %1940 = vmatprep.subr.mxu0 0.0
    %1941 = vmatpush1.xpose.msra.mxu0 0.0
    %1942 = vmatprep.subr.mxu0 0.0
    %1943 = vmatpush1.xpose.msra.mxu0 0.0
    %1944 = vmatprep.subr.mxu0 0.0
    %1945 = vmatpush1.xpose.msra.mxu0 0.0
    %1946 = vmatprep.subr.mxu0 0.0
    %1947 = vmatpush1.xpose.msra.mxu0 0.0
    %1948 = vmatprep.subr.mxu0 0.0
    %1949 = vmatpush1.xpose.msra.mxu0 0.0
    %1950 = vmatprep.subr.mxu0 0.0
    %1951 = vmatpush1.xpose.msra.mxu0 0.0
    %1952 = vmatprep.subr.mxu0 0.0
    %1953 = vmatpush1.xpose.msra.mxu0 0.0
    %1954 = vmatprep.mubr.f32.mxu0 0.0
    %v1955 = vand.u32 %v1582, 4294901760
    %1956 = vmatmul.mubr.f32.gmra.mrb[0].mxu0 %v1955
    %v1957 = vpop.f32.mrb[0].mxu0
    %v1958 = vadd.f32 %v1884, %v1957
    %v1959 = vpop.f32.mrb[0].mxu0
    %1960 = vdwg.mxu0
    %1961 = vmatprep.subr.mxu0 0.0
    %v1962 = vand.u32 %v1585, 4294901760
    %1963 = vmatpush1.xpose.msra.mxu0 %v1962
    %1964 = vmatprep.subr.mxu0 0.0
    %1965 = vmatpush1.xpose.msra.mxu0 0.0
    %1966 = vmatprep.subr.mxu0 0.0
    %1967 = vmatpush1.xpose.msra.mxu0 0.0
    %1968 = vmatprep.subr.mxu0 0.0
    %1969 = vmatpush1.xpose.msra.mxu0 0.0
    %1970 = vmatprep.subr.mxu0 0.0
    %1971 = vmatpush1.xpose.msra.mxu0 0.0
    %1972 = vmatprep.subr.mxu0 0.0
    %1973 = vmatpush1.xpose.msra.mxu0 0.0
    %1974 = vmatprep.subr.mxu0 0.0
    %1975 = vmatpush1.xpose.msra.mxu0 0.0
    %1976 = vmatprep.subr.mxu0 0.0
    %1977 = vmatpush1.xpose.msra.mxu0 0.0
    %1978 = vmatprep.subr.mxu0 0.0
    %1979 = vmatpush1.xpose.msra.mxu0 0.0
    %1980 = vmatprep.subr.mxu0 0.0
    %1981 = vmatpush1.xpose.msra.mxu0 0.0
    %1982 = vmatprep.subr.mxu0 0.0
    %1983 = vmatpush1.xpose.msra.mxu0 0.0
    %1984 = vmatprep.subr.mxu0 0.0
    %1985 = vmatpush1.xpose.msra.mxu0 0.0
    %1986 = vmatprep.subr.mxu0 0.0
    %1987 = vmatpush1.xpose.msra.mxu0 0.0
    %1988 = vmatprep.subr.mxu0 0.0
    %1989 = vmatpush1.xpose.msra.mxu0 0.0
    %1990 = vmatprep.subr.mxu0 0.0
    %1991 = vmatpush1.xpose.msra.mxu0 0.0
    %1992 = vmatprep.subr.mxu0 0.0
    %1993 = vmatpush1.xpose.msra.mxu0 0.0
    %1994 = vmatprep.subr.mxu0 0.0
    %1995 = vmatpush1.xpose.msra.mxu0 0.0
    %1996 = vmatprep.subr.mxu0 0.0
    %1997 = vmatpush1.xpose.msra.mxu0 0.0
    %1998 = vmatprep.subr.mxu0 0.0
    %1999 = vmatpush1.xpose.msra.mxu0 0.0
    %2000 = vmatprep.subr.mxu0 0.0
    %2001 = vmatpush1.xpose.msra.mxu0 0.0
    %2002 = vmatprep.subr.mxu0 0.0
    %2003 = vmatpush1.xpose.msra.mxu0 0.0
    %2004 = vmatprep.subr.mxu0 0.0
    %2005 = vmatpush1.xpose.msra.mxu0 0.0
    %2006 = vmatprep.subr.mxu0 0.0
    %2007 = vmatpush1.xpose.msra.mxu0 0.0
    %2008 = vmatprep.subr.mxu0 0.0
    %2009 = vmatpush1.xpose.msra.mxu0 0.0
    %2010 = vmatprep.subr.mxu0 0.0
    %2011 = vmatpush1.xpose.msra.mxu0 0.0
    %2012 = vmatprep.subr.mxu0 0.0
    %2013 = vmatpush1.xpose.msra.mxu0 0.0
    %2014 = vmatprep.subr.mxu0 0.0
    %2015 = vmatpush1.xpose.msra.mxu0 0.0
    %2016 = vmatprep.subr.mxu0 0.0
    %2017 = vmatpush1.xpose.msra.mxu0 0.0
    %2018 = vmatprep.subr.mxu0 0.0
    %2019 = vmatpush1.xpose.msra.mxu0 0.0
    %2020 = vmatprep.subr.mxu0 0.0
    %2021 = vmatpush1.xpose.msra.mxu0 0.0
    %2022 = vmatprep.subr.mxu0 0.0
    %2023 = vmatpush1.xpose.msra.mxu0 0.0
    %2024 = vmatprep.subr.mxu0 0.0
    %2025 = vmatpush1.xpose.msra.mxu0 0.0
    %2026 = vmatprep.mubr.f32.mxu0 0.0
    %v2027 = vand.u32 %v1582, 4294901760
    %2028 = vmatmul.mubr.f32.gmra.mrb[0].mxu0 %v2027
    %v2029 = vpop.f32.mrb[0].mxu0
    %v2030 = vadd.f32 %v1958, %v2029
    %v2031 = vpop.f32.mrb[0].mxu0
    %2032 = vdwg.mxu0
    %vm2033 = vcmask 64512
    %v2034 = vsel %vm2033, %v1578, -inf
    %2035 = vmax.xlane.f32.xlu0 %v2034
    %v2036 = vpop.xlane.xlu0 %2035
    %v2037 = vsel %vm2033, %v2030, -inf
    %2038 = vmax.xlane.f32.xlu0 %v2037
    %v2039 = vpop.xlane.xlu0 %2038
    %v2040 = vsub.f32 %v1578, %v2036
    %v2041 = vsub.f32 %v2030, %v2039
    %v2042 = vmul.f32 %v2040, 1.442695
    %v2043 = vpow.pop %v2042
    %v2044 = vmul.f32 %v2041, 1.442695
    %v2045 = vpow.pop %v2044
    %v2046 = vsel %vm2033, %v2043, 0.0
    %2047 = vadd.xlane.f32.xlu0 %v2046
    %v2048 = vpop.xlane.xlu0 %2047
    %v2049 = vsel %vm2033, %v2045, 0.0
    %2050 = vadd.xlane.f32.xlu0 %v2049
    %v2051 = vpop.xlane.xlu0 %2050
    %v2052 = vrcp.pop %v2048
    %v2053 = vrcp.pop %v2051
    %v2054 = vmul.f32 %v2043, %v2052
    %v2055 = vmul.f32 %v2045, %v2053
    %2056 = vst.msk [vmem:[#allocation4] sm:$0xff] %vm2033, %v2054
    %2057 = vst.msk [vmem:[#allocation4 + $0x8] sm:$0xff] %vm2033, %v2055
    %v2059 = vsel %vm2033, %v2054, 0
    %2061 = vmatprep.subr.mxu0 0.0
    %v2062 = vand.u32 %v574, 4294901760
    %2063 = vmatpush1.msra.mxu0 %v2062
    %2064 = vmatprep.subr.mxu0 0.0
    %2065 = vmatpush1.msra.mxu0 0.0
    %2066 = vmatprep.subr.mxu0 0.0
    %2067 = vmatpush1.msra.mxu0 0.0
    %2068 = vmatprep.subr.mxu0 0.0
    %2069 = vmatpush1.msra.mxu0 0.0
    %2070 = vmatprep.subr.mxu0 0.0
    %2071 = vmatpush1.msra.mxu0 0.0
    %2072 = vmatprep.subr.mxu0 0.0
    %2073 = vmatpush1.msra.mxu0 0.0
    %2074 = vmatprep.subr.mxu0 0.0
    %2075 = vmatpush1.msra.mxu0 0.0
    %2076 = vmatprep.subr.mxu0 0.0
    %2077 = vmatpush1.msra.mxu0 0.0
    %2078 = vmatprep.subr.mxu0 0.0
    %2079 = vmatpush1.msra.mxu0 0.0
    %2080 = vmatprep.subr.mxu0 0.0
    %2081 = vmatpush1.msra.mxu0 0.0
    %2082 = vmatprep.subr.mxu0 0.0
    %2083 = vmatpush1.msra.mxu0 0.0
    %2084 = vmatprep.subr.mxu0 0.0
    %2085 = vmatpush1.msra.mxu0 0.0
    %2086 = vmatprep.subr.mxu0 0.0
    %2087 = vmatpush1.msra.mxu0 0.0
    %2088 = vmatprep.subr.mxu0 0.0
    %2089 = vmatpush1.msra.mxu0 0.0
    %2090 = vmatprep.subr.mxu0 0.0
    %2091 = vmatpush1.msra.mxu0 0.0
    %2092 = vmatprep.subr.mxu0 0.0
    %2093 = vmatpush1.msra.mxu0 0.0
    %2094 = vmatprep.subr.mxu0 0.0
    %2095 = vmatpush1.msra.mxu0 0.0
    %2096 = vmatprep.subr.mxu0 0.0
    %2097 = vmatpush1.msra.mxu0 0.0
    %2098 = vmatprep.subr.mxu0 0.0
    %2099 = vmatpush1.msra.mxu0 0.0
    %2100 = vmatprep.subr.mxu0 0.0
    %2101 = vmatpush1.msra.mxu0 0.0
    %2102 = vmatprep.subr.mxu0 0.0
    %2103 = vmatpush1.msra.mxu0 0.0
    %2104 = vmatprep.subr.mxu0 0.0
    %2105 = vmatpush1.msra.mxu0 0.0
    %2106 = vmatprep.subr.mxu0 0.0
    %2107 = vmatpush1.msra.mxu0 0.0
    %2108 = vmatprep.subr.mxu0 0.0
    %2109 = vmatpush1.msra.mxu0 0.0
    %2110 = vmatprep.subr.mxu0 0.0
    %2111 = vmatpush1.msra.mxu0 0.0
    %2112 = vmatprep.subr.mxu0 0.0
    %2113 = vmatpush1.msra.mxu0 0.0
    %2114 = vmatprep.subr.mxu0 0.0
    %2115 = vmatpush1.msra.mxu0 0.0
    %2116 = vmatprep.subr.mxu0 0.0
    %2117 = vmatpush1.msra.mxu0 0.0
    %2118 = vmatprep.subr.mxu0 0.0
    %2119 = vmatpush1.msra.mxu0 0.0
    %2120 = vmatprep.subr.mxu0 0.0
    %2121 = vmatpush1.msra.mxu0 0.0
    %2122 = vmatprep.subr.mxu0 0.0
    %2123 = vmatpush1.msra.mxu0 0.0
    %2124 = vmatprep.subr.mxu0 0.0
    %2125 = vmatpush1.msra.mxu0 0.0
    %2126 = vmatprep.mubr.f32.mxu0 0.0
    %v2127 = vand.u32 %v2059, 4294901760
    %v2128 = vsub.f32 %v2059, %v2127
    %v2129 = vand.u32 %v2128, 4294901760
    %v2130 = vsub.f32 %v2128, %v2129
    %v2131 = vand.u32 %v2130, 4294901760
    %2132 = vmatmul.mubr.f32.gmra.mrb[0].mxu0 %v2131
    %v2133 = vpop.f32.mrb[0].mxu0
    %v2134 = vadd.f32 0.0, %v2133
    %v2135 = vpop.f32.mrb[0].mxu0
    %2136 = vdwg.mxu0
    %2137 = vmatprep.subr.mxu0 0.0
    %v2138 = vand.u32 %v574, 4294901760
    %v2139 = vsub.f32 %v574, %v2138
    %v2140 = vand.u32 %v2139, 4294901760
    %v2141 = vsub.f32 %v2139, %v2140
    %v2142 = vand.u32 %v2141, 4294901760
    %2143 = vmatpush1.msra.mxu0 %v2142
    %2144 = vmatprep.subr.mxu0 0.0
    %2145 = vmatpush1.msra.mxu0 0.0
    %2146 = vmatprep.subr.mxu0 0.0
    %2147 = vmatpush1.msra.mxu0 0.0
    %2148 = vmatprep.subr.mxu0 0.0
    %2149 = vmatpush1.msra.mxu0 0.0
    %2150 = vmatprep.subr.mxu0 0.0
    %2151 = vmatpush1.msra.mxu0 0.0
    %2152 = vmatprep.subr.mxu0 0.0
    %2153 = vmatpush1.msra.mxu0 0.0
    %2154 = vmatprep.subr.mxu0 0.0
    %2155 = vmatpush1.msra.mxu0 0.0
    %2156 = vmatprep.subr.mxu0 0.0
    %2157 = vmatpush1.msra.mxu0 0.0
    %2158 = vmatprep.subr.mxu0 0.0
    %2159 = vmatpush1.msra.mxu0 0.0
    %2160 = vmatprep.subr.mxu0 0.0
    %2161 = vmatpush1.msra.mxu0 0.0
    %2162 = vmatprep.subr.mxu0 0.0
    %2163 = vmatpush1.msra.mxu0 0.0
    %2164 = vmatprep.subr.mxu0 0.0
    %2165 = vmatpush1.msra.mxu0 0.0
    %2166 = vmatprep.subr.mxu0 0.0
    %2167 = vmatpush1.msra.mxu0 0.0
    %2168 = vmatprep.subr.mxu0 0.0
    %2169 = vmatpush1.msra.mxu0 0.0
    %2170 = vmatprep.subr.mxu0 0.0
    %2171 = vmatpush1.msra.mxu0 0.0
    %2172 = vmatprep.subr.mxu0 0.0
    %2173 = vmatpush1.msra.mxu0 0.0
    %2174 = vmatprep.subr.mxu0 0.0
    %2175 = vmatpush1.msra.mxu0 0.0
    %2176 = vmatprep.subr.mxu0 0.0
    %2177 = vmatpush1.msra.mxu0 0.0
    %2178 = vmatprep.subr.mxu0 0.0
    %2179 = vmatpush1.msra.mxu0 0.0
    %2180 = vmatprep.subr.mxu0 0.0
    %2181 = vmatpush1.msra.mxu0 0.0
    %2182 = vmatprep.subr.mxu0 0.0
    %2183 = vmatpush1.msra.mxu0 0.0
    %2184 = vmatprep.subr.mxu0 0.0
    %2185 = vmatpush1.msra.mxu0 0.0
    %2186 = vmatprep.subr.mxu0 0.0
    %2187 = vmatpush1.msra.mxu0 0.0
    %2188 = vmatprep.subr.mxu0 0.0
    %2189 = vmatpush1.msra.mxu0 0.0
    %2190 = vmatprep.subr.mxu0 0.0
    %2191 = vmatpush1.msra.mxu0 0.0
    %2192 = vmatprep.subr.mxu0 0.0
    %2193 = vmatpush1.msra.mxu0 0.0
    %2194 = vmatprep.subr.mxu0 0.0
    %2195 = vmatpush1.msra.mxu0 0.0
    %2196 = vmatprep.subr.mxu0 0.0
    %2197 = vmatpush1.msra.mxu0 0.0
    %2198 = vmatprep.subr.mxu0 0.0
    %2199 = vmatpush1.msra.mxu0 0.0
    %2200 = vmatprep.subr.mxu0 0.0
    %2201 = vmatpush1.msra.mxu0 0.0
    %2202 = vmatprep.subr.mxu0 0.0
    %2203 = vmatpush1.msra.mxu0 0.0
    %2204 = vmatprep.subr.mxu0 0.0
    %2205 = vmatpush1.msra.mxu0 0.0
    %2206 = vmatprep.mubr.f32.mxu0 0.0
    %v2207 = vand.u32 %v2059, 4294901760
    %2208 = vmatmul.mubr.f32.gmra.mrb[0].mxu0 %v2207
    %v2209 = vpop.f32.mrb[0].mxu0
    %v2210 = vadd.f32 %v2134, %v2209
    %v2211 = vpop.f32.mrb[0].mxu0
    %2212 = vdwg.mxu0
    %2213 = vmatprep.subr.mxu0 0.0
    %v2214 = vand.u32 %v574, 4294901760
    %v2215 = vsub.f32 %v574, %v2214
    %2216 = vmatpush1.msra.mxu0 %v2215
    %2217 = vmatprep.subr.mxu0 0.0
    %2218 = vmatpush1.msra.mxu0 0.0
    %2219 = vmatprep.subr.mxu0 0.0
    %2220 = vmatpush1.msra.mxu0 0.0
    %2221 = vmatprep.subr.mxu0 0.0
    %2222 = vmatpush1.msra.mxu0 0.0
    %2223 = vmatprep.subr.mxu0 0.0
    %2224 = vmatpush1.msra.mxu0 0.0
    %2225 = vmatprep.subr.mxu0 0.0
    %2226 = vmatpush1.msra.mxu0 0.0
    %2227 = vmatprep.subr.mxu0 0.0
    %2228 = vmatpush1.msra.mxu0 0.0
    %2229 = vmatprep.subr.mxu0 0.0
    %2230 = vmatpush1.msra.mxu0 0.0
    %2231 = vmatprep.subr.mxu0 0.0
    %2232 = vmatpush1.msra.mxu0 0.0
    %2233 = vmatprep.subr.mxu0 0.0
    %2234 = vmatpush1.msra.mxu0 0.0
    %2235 = vmatprep.subr.mxu0 0.0
    %2236 = vmatpush1.msra.mxu0 0.0
    %2237 = vmatprep.subr.mxu0 0.0
    %2238 = vmatpush1.msra.mxu0 0.0
    %2239 = vmatprep.subr.mxu0 0.0
    %2240 = vmatpush1.msra.mxu0 0.0
    %2241 = vmatprep.subr.mxu0 0.0
    %2242 = vmatpush1.msra.mxu0 0.0
    %2243 = vmatprep.subr.mxu0 0.0
    %2244 = vmatpush1.msra.mxu0 0.0
    %2245 = vmatprep.subr.mxu0 0.0
    %2246 = vmatpush1.msra.mxu0 0.0
    %2247 = vmatprep.subr.mxu0 0.0
    %2248 = vmatpush1.msra.mxu0 0.0
    %2249 = vmatprep.subr.mxu0 0.0
    %2250 = vmatpush1.msra.mxu0 0.0
    %2251 = vmatprep.subr.mxu0 0.0
    %2252 = vmatpush1.msra.mxu0 0.0
    %2253 = vmatprep.subr.mxu0 0.0
    %2254 = vmatpush1.msra.mxu0 0.0
    %2255 = vmatprep.subr.mxu0 0.0
    %2256 = vmatpush1.msra.mxu0 0.0
    %2257 = vmatprep.subr.mxu0 0.0
    %2258 = vmatpush1.msra.mxu0 0.0
    %2259 = vmatprep.subr.mxu0 0.0
    %2260 = vmatpush1.msra.mxu0 0.0
    %2261 = vmatprep.subr.mxu0 0.0
    %2262 = vmatpush1.msra.mxu0 0.0
    %2263 = vmatprep.subr.mxu0 0.0
    %2264 = vmatpush1.msra.mxu0 0.0
    %2265 = vmatprep.subr.mxu0 0.0
    %2266 = vmatpush1.msra.mxu0 0.0
    %2267 = vmatprep.subr.mxu0 0.0
    %2268 = vmatpush1.msra.mxu0 0.0
    %2269 = vmatprep.subr.mxu0 0.0
    %2270 = vmatpush1.msra.mxu0 0.0
    %2271 = vmatprep.subr.mxu0 0.0
    %2272 = vmatpush1.msra.mxu0 0.0
    %2273 = vmatprep.subr.mxu0 0.0
    %2274 = vmatpush1.msra.mxu0 0.0
    %2275 = vmatprep.subr.mxu0 0.0
    %2276 = vmatpush1.msra.mxu0 0.0
    %2277 = vmatprep.subr.mxu0 0.0
    %2278 = vmatpush1.msra.mxu0 0.0
    %2279 = vmatprep.mubr.f32.mxu0 0.0
    %v2280 = vand.u32 %v2059, 4294901760
    %v2281 = vsub.f32 %v2059, %v2280
    %2282 = vmatmul.mubr.f32.gmra.mrb[0].mxu0 %v2281
    %v2283 = vpop.f32.mrb[0].mxu0
    %v2284 = vadd.f32 %v2210, %v2283
    %v2285 = vpop.f32.mrb[0].mxu0
    %2286 = vdwg.mxu0
    %2287 = vmatprep.subr.mxu0 0.0
    %v2288 = vand.u32 %v574, 4294901760
    %2289 = vmatpush1.msra.mxu0 %v2288
    %2290 = vmatprep.subr.mxu0 0.0
    %2291 = vmatpush1.msra.mxu0 0.0
    %2292 = vmatprep.subr.mxu0 0.0
    %2293 = vmatpush1.msra.mxu0 0.0
    %2294 = vmatprep.subr.mxu0 0.0
    %2295 = vmatpush1.msra.mxu0 0.0
    %2296 = vmatprep.subr.mxu0 0.0
    %2297 = vmatpush1.msra.mxu0 0.0
    %2298 = vmatprep.subr.mxu0 0.0
    %2299 = vmatpush1.msra.mxu0 0.0
    %2300 = vmatprep.subr.mxu0 0.0
    %2301 = vmatpush1.msra.mxu0 0.0
    %2302 = vmatprep.subr.mxu0 0.0
    %2303 = vmatpush1.msra.mxu0 0.0
    %2304 = vmatprep.subr.mxu0 0.0
    %2305 = vmatpush1.msra.mxu0 0.0
    %2306 = vmatprep.subr.mxu0 0.0
    %2307 = vmatpush1.msra.mxu0 0.0
    %2308 = vmatprep.subr.mxu0 0.0
    %2309 = vmatpush1.msra.mxu0 0.0
    %2310 = vmatprep.subr.mxu0 0.0
    %2311 = vmatpush1.msra.mxu0 0.0
    %2312 = vmatprep.subr.mxu0 0.0
    %2313 = vmatpush1.msra.mxu0 0.0
    %2314 = vmatprep.subr.mxu0 0.0
    %2315 = vmatpush1.msra.mxu0 0.0
    %2316 = vmatprep.subr.mxu0 0.0
    %2317 = vmatpush1.msra.mxu0 0.0
    %2318 = vmatprep.subr.mxu0 0.0
    %2319 = vmatpush1.msra.mxu0 0.0
    %2320 = vmatprep.subr.mxu0 0.0
    %2321 = vmatpush1.msra.mxu0 0.0
    %2322 = vmatprep.subr.mxu0 0.0
    %2323 = vmatpush1.msra.mxu0 0.0
    %2324 = vmatprep.subr.mxu0 0.0
    %2325 = vmatpush1.msra.mxu0 0.0
    %2326 = vmatprep.subr.mxu0 0.0
    %2327 = vmatpush1.msra.mxu0 0.0
    %2328 = vmatprep.subr.mxu0 0.0
    %2329 = vmatpush1.msra.mxu0 0.0
    %2330 = vmatprep.subr.mxu0 0.0
    %2331 = vmatpush1.msra.mxu0 0.0
    %2332 = vmatprep.subr.mxu0 0.0
    %2333 = vmatpush1.msra.mxu0 0.0
    %2334 = vmatprep.subr.mxu0 0.0
    %2335 = vmatpush1.msra.mxu0 0.0
    %2336 = vmatprep.subr.mxu0 0.0
    %2337 = vmatpush1.msra.mxu0 0.0
    %2338 = vmatprep.subr.mxu0 0.0
    %2339 = vmatpush1.msra.mxu0 0.0
    %2340 = vmatprep.subr.mxu0 0.0
    %2341 = vmatpush1.msra.mxu0 0.0
    %2342 = vmatprep.subr.mxu0 0.0
    %2343 = vmatpush1.msra.mxu0 0.0
    %2344 = vmatprep.subr.mxu0 0.0
    %2345 = vmatpush1.msra.mxu0 0.0
    %2346 = vmatprep.subr.mxu0 0.0
    %2347 = vmatpush1.msra.mxu0 0.0
    %2348 = vmatprep.subr.mxu0 0.0
    %2349 = vmatpush1.msra.mxu0 0.0
    %2350 = vmatprep.subr.mxu0 0.0
    %2351 = vmatpush1.msra.mxu0 0.0
    %2352 = vmatprep.mubr.f32.mxu0 0.0
    %v2353 = vand.u32 %v2059, 4294901760
    %v2354 = vsub.f32 %v2059, %v2353
    %v2355 = vand.u32 %v2354, 4294901760
    %2356 = vmatmul.mubr.f32.gmra.mrb[0].mxu0 %v2355
    %v2357 = vpop.f32.mrb[0].mxu0
    %v2358 = vadd.f32 %v2284, %v2357
    %v2359 = vpop.f32.mrb[0].mxu0
    %2360 = vdwg.mxu0
    %2361 = vmatprep.subr.mxu0 0.0
    %v2362 = vand.u32 %v574, 4294901760
    %v2363 = vsub.f32 %v574, %v2362
    %v2364 = vand.u32 %v2363, 4294901760
    %2365 = vmatpush1.msra.mxu0 %v2364
    %2366 = vmatprep.subr.mxu0 0.0
    %2367 = vmatpush1.msra.mxu0 0.0
    %2368 = vmatprep.subr.mxu0 0.0
    %2369 = vmatpush1.msra.mxu0 0.0
    %2370 = vmatprep.subr.mxu0 0.0
    %2371 = vmatpush1.msra.mxu0 0.0
    %2372 = vmatprep.subr.mxu0 0.0
    %2373 = vmatpush1.msra.mxu0 0.0
    %2374 = vmatprep.subr.mxu0 0.0
    %2375 = vmatpush1.msra.mxu0 0.0
    %2376 = vmatprep.subr.mxu0 0.0
    %2377 = vmatpush1.msra.mxu0 0.0
    %2378 = vmatprep.subr.mxu0 0.0
    %2379 = vmatpush1.msra.mxu0 0.0
    %2380 = vmatprep.subr.mxu0 0.0
    %2381 = vmatpush1.msra.mxu0 0.0
    %2382 = vmatprep.subr.mxu0 0.0
    %2383 = vmatpush1.msra.mxu0 0.0
    %2384 = vmatprep.subr.mxu0 0.0
    %2385 = vmatpush1.msra.mxu0 0.0
    %2386 = vmatprep.subr.mxu0 0.0
    %2387 = vmatpush1.msra.mxu0 0.0
    %2388 = vmatprep.subr.mxu0 0.0
    %2389 = vmatpush1.msra.mxu0 0.0
    %2390 = vmatprep.subr.mxu0 0.0
    %2391 = vmatpush1.msra.mxu0 0.0
    %2392 = vmatprep.subr.mxu0 0.0
    %2393 = vmatpush1.msra.mxu0 0.0
    %2394 = vmatprep.subr.mxu0 0.0
    %2395 = vmatpush1.msra.mxu0 0.0
    %2396 = vmatprep.subr.mxu0 0.0
    %2397 = vmatpush1.msra.mxu0 0.0
    %2398 = vmatprep.subr.mxu0 0.0
    %2399 = vmatpush1.msra.mxu0 0.0
    %2400 = vmatprep.subr.mxu0 0.0
    %2401 = vmatpush1.msra.mxu0 0.0
    %2402 = vmatprep.subr.mxu0 0.0
    %2403 = vmatpush1.msra.mxu0 0.0
    %2404 = vmatprep.subr.mxu0 0.0
    %2405 = vmatpush1.msra.mxu0 0.0
    %2406 = vmatprep.subr.mxu0 0.0
    %2407 = vmatpush1.msra.mxu0 0.0
    %2408 = vmatprep.subr.mxu0 0.0
    %2409 = vmatpush1.msra.mxu0 0.0
    %2410 = vmatprep.subr.mxu0 0.0
    %2411 = vmatpush1.msra.mxu0 0.0
    %2412 = vmatprep.subr.mxu0 0.0
    %2413 = vmatpush1.msra.mxu0 0.0
    %2414 = vmatprep.subr.mxu0 0.0
    %2415 = vmatpush1.msra.mxu0 0.0
    %2416 = vmatprep.subr.mxu0 0.0
    %2417 = vmatpush1.msra.mxu0 0.0
    %2418 = vmatprep.subr.mxu0 0.0
    %2419 = vmatpush1.msra.mxu0 0.0
    %2420 = vmatprep.subr.mxu0 0.0
    %2421 = vmatpush1.msra.mxu0 0.0
    %2422 = vmatprep.subr.mxu0 0.0
    %2423 = vmatpush1.msra.mxu0 0.0
    %2424 = vmatprep.subr.mxu0 0.0
    %2425 = vmatpush1.msra.mxu0 0.0
    %2426 = vmatprep.subr.mxu0 0.0
    %2427 = vmatpush1.msra.mxu0 0.0
    %2428 = vmatprep.mubr.f32.mxu0 0.0
    %v2429 = vand.u32 %v2059, 4294901760
    %2430 = vmatmul.mubr.f32.gmra.mrb[0].mxu0 %v2429
    %v2431 = vpop.f32.mrb[0].mxu0
    %v2432 = vadd.f32 %v2358, %v2431
    %v2433 = vpop.f32.mrb[0].mxu0
    %2434 = vdwg.mxu0
    %2435 = vmatprep.subr.mxu0 0.0
    %v2436 = vand.u32 %v574, 4294901760
    %2437 = vmatpush1.msra.mxu0 %v2436
    %2438 = vmatprep.subr.mxu0 0.0
    %2439 = vmatpush1.msra.mxu0 0.0
    %2440 = vmatprep.subr.mxu0 0.0
    %2441 = vmatpush1.msra.mxu0 0.0
    %2442 = vmatprep.subr.mxu0 0.0
    %2443 = vmatpush1.msra.mxu0 0.0
    %2444 = vmatprep.subr.mxu0 0.0
    %2445 = vmatpush1.msra.mxu0 0.0
    %2446 = vmatprep.subr.mxu0 0.0
    %2447 = vmatpush1.msra.mxu0 0.0
    %2448 = vmatprep.subr.mxu0 0.0
    %2449 = vmatpush1.msra.mxu0 0.0
    %2450 = vmatprep.subr.mxu0 0.0
    %2451 = vmatpush1.msra.mxu0 0.0
    %2452 = vmatprep.subr.mxu0 0.0
    %2453 = vmatpush1.msra.mxu0 0.0
    %2454 = vmatprep.subr.mxu0 0.0
    %2455 = vmatpush1.msra.mxu0 0.0
    %2456 = vmatprep.subr.mxu0 0.0
    %2457 = vmatpush1.msra.mxu0 0.0
    %2458 = vmatprep.subr.mxu0 0.0
    %2459 = vmatpush1.msra.mxu0 0.0
    %2460 = vmatprep.subr.mxu0 0.0
    %2461 = vmatpush1.msra.mxu0 0.0
    %2462 = vmatprep.subr.mxu0 0.0
    %2463 = vmatpush1.msra.mxu0 0.0
    %2464 = vmatprep.subr.mxu0 0.0
    %2465 = vmatpush1.msra.mxu0 0.0
    %2466 = vmatprep.subr.mxu0 0.0
    %2467 = vmatpush1.msra.mxu0 0.0
    %2468 = vmatprep.subr.mxu0 0.0
    %2469 = vmatpush1.msra.mxu0 0.0
    %2470 = vmatprep.subr.mxu0 0.0
    %2471 = vmatpush1.msra.mxu0 0.0
    %2472 = vmatprep.subr.mxu0 0.0
    %2473 = vmatpush1.msra.mxu0 0.0
    %2474 = vmatprep.subr.mxu0 0.0
    %2475 = vmatpush1.msra.mxu0 0.0
    %2476 = vmatprep.subr.mxu0 0.0
    %2477 = vmatpush1.msra.mxu0 0.0
    %2478 = vmatprep.subr.mxu0 0.0
    %2479 = vmatpush1.msra.mxu0 0.0
    %2480 = vmatprep.subr.mxu0 0.0
    %2481 = vmatpush1.msra.mxu0 0.0
    %2482 = vmatprep.subr.mxu0 0.0
    %2483 = vmatpush1.msra.mxu0 0.0
    %2484 = vmatprep.subr.mxu0 0.0
    %2485 = vmatpush1.msra.mxu0 0.0
    %2486 = vmatprep.subr.mxu0 0.0
    %2487 = vmatpush1.msra.mxu0 0.0
    %2488 = vmatprep.subr.mxu0 0.0
    %2489 = vmatpush1.msra.mxu0 0.0
    %2490 = vmatprep.subr.mxu0 0.0
    %2491 = vmatpush1.msra.mxu0 0.0
    %2492 = vmatprep.subr.mxu0 0.0
    %2493 = vmatpush1.msra.mxu0 0.0
    %2494 = vmatprep.subr.mxu0 0.0
    %2495 = vmatpush1.msra.mxu0 0.0
    %2496 = vmatprep.subr.mxu0 0.0
    %2497 = vmatpush1.msra.mxu0 0.0
    %2498 = vmatprep.subr.mxu0 0.0
    %2499 = vmatpush1.msra.mxu0 0.0
    %2500 = vmatprep.mubr.f32.mxu0 0.0
    %v2501 = vand.u32 %v2059, 4294901760
    %2502 = vmatmul.mubr.f32.gmra.mrb[0].mxu0 %v2501
    %v2503 = vpop.f32.mrb[0].mxu0
    %v2504 = vadd.f32 %v2432, %v2503
    %v2505 = vpop.f32.mrb[0].mxu0
    %2506 = vdwg.mxu0
    %v2508 = vsel %vm2033, %v2055, 0
    %2510 = vmatprep.subr.mxu0 0.0
    %v2511 = vand.u32 %v580, 4294901760
    %2512 = vmatpush1.msra.mxu0 %v2511
    %2513 = vmatprep.subr.mxu0 0.0
    %2514 = vmatpush1.msra.mxu0 0.0
    %2515 = vmatprep.subr.mxu0 0.0
    %2516 = vmatpush1.msra.mxu0 0.0
    %2517 = vmatprep.subr.mxu0 0.0
    %2518 = vmatpush1.msra.mxu0 0.0
    %2519 = vmatprep.subr.mxu0 0.0
    %2520 = vmatpush1.msra.mxu0 0.0
    %2521 = vmatprep.subr.mxu0 0.0
    %2522 = vmatpush1.msra.mxu0 0.0
    %2523 = vmatprep.subr.mxu0 0.0
    %2524 = vmatpush1.msra.mxu0 0.0
    %2525 = vmatprep.subr.mxu0 0.0
    %2526 = vmatpush1.msra.mxu0 0.0
    %2527 = vmatprep.subr.mxu0 0.0
    %2528 = vmatpush1.msra.mxu0 0.0
    %2529 = vmatprep.subr.mxu0 0.0
    %2530 = vmatpush1.msra.mxu0 0.0
    %2531 = vmatprep.subr.mxu0 0.0
    %2532 = vmatpush1.msra.mxu0 0.0
    %2533 = vmatprep.subr.mxu0 0.0
    %2534 = vmatpush1.msra.mxu0 0.0
    %2535 = vmatprep.subr.mxu0 0.0
    %2536 = vmatpush1.msra.mxu0 0.0
    %2537 = vmatprep.subr.mxu0 0.0
    %2538 = vmatpush1.msra.mxu0 0.0
    %2539 = vmatprep.subr.mxu0 0.0
    %2540 = vmatpush1.msra.mxu0 0.0
    %2541 = vmatprep.subr.mxu0 0.0
    %2542 = vmatpush1.msra.mxu0 0.0
    %2543 = vmatprep.subr.mxu0 0.0
    %2544 = vmatpush1.msra.mxu0 0.0
    %2545 = vmatprep.subr.mxu0 0.0
    %2546 = vmatpush1.msra.mxu0 0.0
    %2547 = vmatprep.subr.mxu0 0.0
    %2548 = vmatpush1.msra.mxu0 0.0
    %2549 = vmatprep.subr.mxu0 0.0
    %2550 = vmatpush1.msra.mxu0 0.0
    %2551 = vmatprep.subr.mxu0 0.0
    %2552 = vmatpush1.msra.mxu0 0.0
    %2553 = vmatprep.subr.mxu0 0.0
    %2554 = vmatpush1.msra.mxu0 0.0
    %2555 = vmatprep.subr.mxu0 0.0
    %2556 = vmatpush1.msra.mxu0 0.0
    %2557 = vmatprep.subr.mxu0 0.0
    %2558 = vmatpush1.msra.mxu0 0.0
    %2559 = vmatprep.subr.mxu0 0.0
    %2560 = vmatpush1.msra.mxu0 0.0
    %2561 = vmatprep.subr.mxu0 0.0
    %2562 = vmatpush1.msra.mxu0 0.0
    %2563 = vmatprep.subr.mxu0 0.0
    %2564 = vmatpush1.msra.mxu0 0.0
    %2565 = vmatprep.subr.mxu0 0.0
    %2566 = vmatpush1.msra.mxu0 0.0
    %2567 = vmatprep.subr.mxu0 0.0
    %2568 = vmatpush1.msra.mxu0 0.0
    %2569 = vmatprep.subr.mxu0 0.0
    %2570 = vmatpush1.msra.mxu0 0.0
    %2571 = vmatprep.subr.mxu0 0.0
    %2572 = vmatpush1.msra.mxu0 0.0
    %2573 = vmatprep.subr.mxu0 0.0
    %2574 = vmatpush1.msra.mxu0 0.0
    %2575 = vmatprep.mubr.f32.mxu0 0.0
    %v2576 = vand.u32 %v2508, 4294901760
    %v2577 = vsub.f32 %v2508, %v2576
    %v2578 = vand.u32 %v2577, 4294901760
    %v2579 = vsub.f32 %v2577, %v2578
    %v2580 = vand.u32 %v2579, 4294901760
    %2581 = vmatmul.mubr.f32.gmra.mrb[0].mxu0 %v2580
    %v2582 = vpop.f32.mrb[0].mxu0
    %v2583 = vadd.f32 0.0, %v2582
    %v2584 = vpop.f32.mrb[0].mxu0
    %2585 = vdwg.mxu0
    %2586 = vmatprep.subr.mxu0 0.0
    %v2587 = vand.u32 %v580, 4294901760
    %v2588 = vsub.f32 %v580, %v2587
    %v2589 = vand.u32 %v2588, 4294901760
    %v2590 = vsub.f32 %v2588, %v2589
    %v2591 = vand.u32 %v2590, 4294901760
    %2592 = vmatpush1.msra.mxu0 %v2591
    %2593 = vmatprep.subr.mxu0 0.0
    %2594 = vmatpush1.msra.mxu0 0.0
    %2595 = vmatprep.subr.mxu0 0.0
    %2596 = vmatpush1.msra.mxu0 0.0
    %2597 = vmatprep.subr.mxu0 0.0
    %2598 = vmatpush1.msra.mxu0 0.0
    %2599 = vmatprep.subr.mxu0 0.0
    %2600 = vmatpush1.msra.mxu0 0.0
    %2601 = vmatprep.subr.mxu0 0.0
    %2602 = vmatpush1.msra.mxu0 0.0
    %2603 = vmatprep.subr.mxu0 0.0
    %2604 = vmatpush1.msra.mxu0 0.0
    %2605 = vmatprep.subr.mxu0 0.0
    %2606 = vmatpush1.msra.mxu0 0.0
    %2607 = vmatprep.subr.mxu0 0.0
    %2608 = vmatpush1.msra.mxu0 0.0
    %2609 = vmatprep.subr.mxu0 0.0
    %2610 = vmatpush1.msra.mxu0 0.0
    %2611 = vmatprep.subr.mxu0 0.0
    %2612 = vmatpush1.msra.mxu0 0.0
    %2613 = vmatprep.subr.mxu0 0.0
    %2614 = vmatpush1.msra.mxu0 0.0
    %2615 = vmatprep.subr.mxu0 0.0
    %2616 = vmatpush1.msra.mxu0 0.0
    %2617 = vmatprep.subr.mxu0 0.0
    %2618 = vmatpush1.msra.mxu0 0.0
    %2619 = vmatprep.subr.mxu0 0.0
    %2620 = vmatpush1.msra.mxu0 0.0
    %2621 = vmatprep.subr.mxu0 0.0
    %2622 = vmatpush1.msra.mxu0 0.0
    %2623 = vmatprep.subr.mxu0 0.0
    %2624 = vmatpush1.msra.mxu0 0.0
    %2625 = vmatprep.subr.mxu0 0.0
    %2626 = vmatpush1.msra.mxu0 0.0
    %2627 = vmatprep.subr.mxu0 0.0
    %2628 = vmatpush1.msra.mxu0 0.0
    %2629 = vmatprep.subr.mxu0 0.0
    %2630 = vmatpush1.msra.mxu0 0.0
    %2631 = vmatprep.subr.mxu0 0.0
    %2632 = vmatpush1.msra.mxu0 0.0
    %2633 = vmatprep.subr.mxu0 0.0
    %2634 = vmatpush1.msra.mxu0 0.0
    %2635 = vmatprep.subr.mxu0 0.0
    %2636 = vmatpush1.msra.mxu0 0.0
    %2637 = vmatprep.subr.mxu0 0.0
    %2638 = vmatpush1.msra.mxu0 0.0
    %2639 = vmatprep.subr.mxu0 0.0
    %2640 = vmatpush1.msra.mxu0 0.0
    %2641 = vmatprep.subr.mxu0 0.0
    %2642 = vmatpush1.msra.mxu0 0.0
    %2643 = vmatprep.subr.mxu0 0.0
    %2644 = vmatpush1.msra.mxu0 0.0
    %2645 = vmatprep.subr.mxu0 0.0
    %2646 = vmatpush1.msra.mxu0 0.0
    %2647 = vmatprep.subr.mxu0 0.0
    %2648 = vmatpush1.msra.mxu0 0.0
    %2649 = vmatprep.subr.mxu0 0.0
    %2650 = vmatpush1.msra.mxu0 0.0
    %2651 = vmatprep.subr.mxu0 0.0
    %2652 = vmatpush1.msra.mxu0 0.0
    %2653 = vmatprep.subr.mxu0 0.0
    %2654 = vmatpush1.msra.mxu0 0.0
    %2655 = vmatprep.mubr.f32.mxu0 0.0
    %v2656 = vand.u32 %v2508, 4294901760
    %2657 = vmatmul.mubr.f32.gmra.mrb[0].mxu0 %v2656
    %v2658 = vpop.f32.mrb[0].mxu0
    %v2659 = vadd.f32 %v2583, %v2658
    %v2660 = vpop.f32.mrb[0].mxu0
    %2661 = vdwg.mxu0
    %2662 = vmatprep.subr.mxu0 0.0
    %v2663 = vand.u32 %v580, 4294901760
    %v2664 = vsub.f32 %v580, %v2663
    %2665 = vmatpush1.msra.mxu0 %v2664
    %2666 = vmatprep.subr.mxu0 0.0
    %2667 = vmatpush1.msra.mxu0 0.0
    %2668 = vmatprep.subr.mxu0 0.0
    %2669 = vmatpush1.msra.mxu0 0.0
    %2670 = vmatprep.subr.mxu0 0.0
    %2671 = vmatpush1.msra.mxu0 0.0
    %2672 = vmatprep.subr.mxu0 0.0
    %2673 = vmatpush1.msra.mxu0 0.0
    %2674 = vmatprep.subr.mxu0 0.0
    %2675 = vmatpush1.msra.mxu0 0.0
    %2676 = vmatprep.subr.mxu0 0.0
    %2677 = vmatpush1.msra.mxu0 0.0
    %2678 = vmatprep.subr.mxu0 0.0
    %2679 = vmatpush1.msra.mxu0 0.0
    %2680 = vmatprep.subr.mxu0 0.0
    %2681 = vmatpush1.msra.mxu0 0.0
    %2682 = vmatprep.subr.mxu0 0.0
    %2683 = vmatpush1.msra.mxu0 0.0
    %2684 = vmatprep.subr.mxu0 0.0
    %2685 = vmatpush1.msra.mxu0 0.0
    %2686 = vmatprep.subr.mxu0 0.0
    %2687 = vmatpush1.msra.mxu0 0.0
    %2688 = vmatprep.subr.mxu0 0.0
    %2689 = vmatpush1.msra.mxu0 0.0
    %2690 = vmatprep.subr.mxu0 0.0
    %2691 = vmatpush1.msra.mxu0 0.0
    %2692 = vmatprep.subr.mxu0 0.0
    %2693 = vmatpush1.msra.mxu0 0.0
    %2694 = vmatprep.subr.mxu0 0.0
    %2695 = vmatpush1.msra.mxu0 0.0
    %2696 = vmatprep.subr.mxu0 0.0
    %2697 = vmatpush1.msra.mxu0 0.0
    %2698 = vmatprep.subr.mxu0 0.0
    %2699 = vmatpush1.msra.mxu0 0.0
    %2700 = vmatprep.subr.mxu0 0.0
    %2701 = vmatpush1.msra.mxu0 0.0
    %2702 = vmatprep.subr.mxu0 0.0
    %2703 = vmatpush1.msra.mxu0 0.0
    %2704 = vmatprep.subr.mxu0 0.0
    %2705 = vmatpush1.msra.mxu0 0.0
    %2706 = vmatprep.subr.mxu0 0.0
    %2707 = vmatpush1.msra.mxu0 0.0
    %2708 = vmatprep.subr.mxu0 0.0
    %2709 = vmatpush1.msra.mxu0 0.0
    %2710 = vmatprep.subr.mxu0 0.0
    %2711 = vmatpush1.msra.mxu0 0.0
    %2712 = vmatprep.subr.mxu0 0.0
    %2713 = vmatpush1.msra.mxu0 0.0
    %2714 = vmatprep.subr.mxu0 0.0
    %2715 = vmatpush1.msra.mxu0 0.0
    %2716 = vmatprep.subr.mxu0 0.0
    %2717 = vmatpush1.msra.mxu0 0.0
    %2718 = vmatprep.subr.mxu0 0.0
    %2719 = vmatpush1.msra.mxu0 0.0
    %2720 = vmatprep.subr.mxu0 0.0
    %2721 = vmatpush1.msra.mxu0 0.0
    %2722 = vmatprep.subr.mxu0 0.0
    %2723 = vmatpush1.msra.mxu0 0.0
    %2724 = vmatprep.subr.mxu0 0.0
    %2725 = vmatpush1.msra.mxu0 0.0
    %2726 = vmatprep.subr.mxu0 0.0
    %2727 = vmatpush1.msra.mxu0 0.0
    %2728 = vmatprep.mubr.f32.mxu0 0.0
    %v2729 = vand.u32 %v2508, 4294901760
    %v2730 = vsub.f32 %v2508, %v2729
    %2731 = vmatmul.mubr.f32.gmra.mrb[0].mxu0 %v2730
    %v2732 = vpop.f32.mrb[0].mxu0
    %v2733 = vadd.f32 %v2659, %v2732
    %v2734 = vpop.f32.mrb[0].mxu0
    %2735 = vdwg.mxu0
    %2736 = vmatprep.subr.mxu0 0.0
    %v2737 = vand.u32 %v580, 4294901760
    %2738 = vmatpush1.msra.mxu0 %v2737
    %2739 = vmatprep.subr.mxu0 0.0
    %2740 = vmatpush1.msra.mxu0 0.0
    %2741 = vmatprep.subr.mxu0 0.0
    %2742 = vmatpush1.msra.mxu0 0.0
    %2743 = vmatprep.subr.mxu0 0.0
    %2744 = vmatpush1.msra.mxu0 0.0
    %2745 = vmatprep.subr.mxu0 0.0
    %2746 = vmatpush1.msra.mxu0 0.0
    %2747 = vmatprep.subr.mxu0 0.0
    %2748 = vmatpush1.msra.mxu0 0.0
    %2749 = vmatprep.subr.mxu0 0.0
    %2750 = vmatpush1.msra.mxu0 0.0
    %2751 = vmatprep.subr.mxu0 0.0
    %2752 = vmatpush1.msra.mxu0 0.0
    %2753 = vmatprep.subr.mxu0 0.0
    %2754 = vmatpush1.msra.mxu0 0.0
    %2755 = vmatprep.subr.mxu0 0.0
    %2756 = vmatpush1.msra.mxu0 0.0
    %2757 = vmatprep.subr.mxu0 0.0
    %2758 = vmatpush1.msra.mxu0 0.0
    %2759 = vmatprep.subr.mxu0 0.0
    %2760 = vmatpush1.msra.mxu0 0.0
    %2761 = vmatprep.subr.mxu0 0.0
    %2762 = vmatpush1.msra.mxu0 0.0
    %2763 = vmatprep.subr.mxu0 0.0
    %2764 = vmatpush1.msra.mxu0 0.0
    %2765 = vmatprep.subr.mxu0 0.0
    %2766 = vmatpush1.msra.mxu0 0.0
    %2767 = vmatprep.subr.mxu0 0.0
    %2768 = vmatpush1.msra.mxu0 0.0
    %2769 = vmatprep.subr.mxu0 0.0
    %2770 = vmatpush1.msra.mxu0 0.0
    %2771 = vmatprep.subr.mxu0 0.0
    %2772 = vmatpush1.msra.mxu0 0.0
    %2773 = vmatprep.subr.mxu0 0.0
    %2774 = vmatpush1.msra.mxu0 0.0
    %2775 = vmatprep.subr.mxu0 0.0
    %2776 = vmatpush1.msra.mxu0 0.0
    %2777 = vmatprep.subr.mxu0 0.0
    %2778 = vmatpush1.msra.mxu0 0.0
    %2779 = vmatprep.subr.mxu0 0.0
    %2780 = vmatpush1.msra.mxu0 0.0
    %2781 = vmatprep.subr.mxu0 0.0
    %2782 = vmatpush1.msra.mxu0 0.0
    %2783 = vmatprep.subr.mxu0 0.0
    %2784 = vmatpush1.msra.mxu0 0.0
    %2785 = vmatprep.subr.mxu0 0.0
    %2786 = vmatpush1.msra.mxu0 0.0
    %2787 = vmatprep.subr.mxu0 0.0
    %2788 = vmatpush1.msra.mxu0 0.0
    %2789 = vmatprep.subr.mxu0 0.0
    %2790 = vmatpush1.msra.mxu0 0.0
    %2791 = vmatprep.subr.mxu0 0.0
    %2792 = vmatpush1.msra.mxu0 0.0
    %2793 = vmatprep.subr.mxu0 0.0
    %2794 = vmatpush1.msra.mxu0 0.0
    %2795 = vmatprep.subr.mxu0 0.0
    %2796 = vmatpush1.msra.mxu0 0.0
    %2797 = vmatprep.subr.mxu0 0.0
    %2798 = vmatpush1.msra.mxu0 0.0
    %2799 = vmatprep.subr.mxu0 0.0
    %2800 = vmatpush1.msra.mxu0 0.0
    %2801 = vmatprep.mubr.f32.mxu0 0.0
    %v2802 = vand.u32 %v2508, 4294901760
    %v2803 = vsub.f32 %v2508, %v2802
    %v2804 = vand.u32 %v2803, 4294901760
    %2805 = vmatmul.mubr.f32.gmra.mrb[0].mxu0 %v2804
    %v2806 = vpop.f32.mrb[0].mxu0
    %v2807 = vadd.f32 %v2733, %v2806
    %v2808 = vpop.f32.mrb[0].mxu0
    %2809 = vdwg.mxu0
    %2810 = vmatprep.subr.mxu0 0.0
    %v2811 = vand.u32 %v580, 4294901760
    %v2812 = vsub.f32 %v580, %v2811
    %v2813 = vand.u32 %v2812, 4294901760
    %2814 = vmatpush1.msra.mxu0 %v2813
    %2815 = vmatprep.subr.mxu0 0.0
    %2816 = vmatpush1.msra.mxu0 0.0
    %2817 = vmatprep.subr.mxu0 0.0
    %2818 = vmatpush1.msra.mxu0 0.0
    %2819 = vmatprep.subr.mxu0 0.0
    %2820 = vmatpush1.msra.mxu0 0.0
    %2821 = vmatprep.subr.mxu0 0.0
    %2822 = vmatpush1.msra.mxu0 0.0
    %2823 = vmatprep.subr.mxu0 0.0
    %2824 = vmatpush1.msra.mxu0 0.0
    %2825 = vmatprep.subr.mxu0 0.0
    %2826 = vmatpush1.msra.mxu0 0.0
    %2827 = vmatprep.subr.mxu0 0.0
    %2828 = vmatpush1.msra.mxu0 0.0
    %2829 = vmatprep.subr.mxu0 0.0
    %2830 = vmatpush1.msra.mxu0 0.0
    %2831 = vmatprep.subr.mxu0 0.0
    %2832 = vmatpush1.msra.mxu0 0.0
    %2833 = vmatprep.subr.mxu0 0.0
    %2834 = vmatpush1.msra.mxu0 0.0
    %2835 = vmatprep.subr.mxu0 0.0
    %2836 = vmatpush1.msra.mxu0 0.0
    %2837 = vmatprep.subr.mxu0 0.0
    %2838 = vmatpush1.msra.mxu0 0.0
    %2839 = vmatprep.subr.mxu0 0.0
    %2840 = vmatpush1.msra.mxu0 0.0
    %2841 = vmatprep.subr.mxu0 0.0
    %2842 = vmatpush1.msra.mxu0 0.0
    %2843 = vmatprep.subr.mxu0 0.0
    %2844 = vmatpush1.msra.mxu0 0.0
    %2845 = vmatprep.subr.mxu0 0.0
    %2846 = vmatpush1.msra.mxu0 0.0
    %2847 = vmatprep.subr.mxu0 0.0
    %2848 = vmatpush1.msra.mxu0 0.0
    %2849 = vmatprep.subr.mxu0 0.0
    %2850 = vmatpush1.msra.mxu0 0.0
    %2851 = vmatprep.subr.mxu0 0.0
    %2852 = vmatpush1.msra.mxu0 0.0
    %2853 = vmatprep.subr.mxu0 0.0
    %2854 = vmatpush1.msra.mxu0 0.0
    %2855 = vmatprep.subr.mxu0 0.0
    %2856 = vmatpush1.msra.mxu0 0.0
    %2857 = vmatprep.subr.mxu0 0.0
    %2858 = vmatpush1.msra.mxu0 0.0
    %2859 = vmatprep.subr.mxu0 0.0
    %2860 = vmatpush1.msra.mxu0 0.0
    %2861 = vmatprep.subr.mxu0 0.0
    %2862 = vmatpush1.msra.mxu0 0.0
    %2863 = vmatprep.subr.mxu0 0.0
    %2864 = vmatpush1.msra.mxu0 0.0
    %2865 = vmatprep.subr.mxu0 0.0
    %2866 = vmatpush1.msra.mxu0 0.0
    %2867 = vmatprep.subr.mxu0 0.0
    %2868 = vmatpush1.msra.mxu0 0.0
    %2869 = vmatprep.subr.mxu0 0.0
    %2870 = vmatpush1.msra.mxu0 0.0
    %2871 = vmatprep.subr.mxu0 0.0
    %2872 = vmatpush1.msra.mxu0 0.0
    %2873 = vmatprep.subr.mxu0 0.0
    %2874 = vmatpush1.msra.mxu0 0.0
    %2875 = vmatprep.subr.mxu0 0.0
    %2876 = vmatpush1.msra.mxu0 0.0
    %2877 = vmatprep.mubr.f32.mxu0 0.0
    %v2878 = vand.u32 %v2508, 4294901760
    %2879 = vmatmul.mubr.f32.gmra.mrb[0].mxu0 %v2878
    %v2880 = vpop.f32.mrb[0].mxu0
    %v2881 = vadd.f32 %v2807, %v2880
    %v2882 = vpop.f32.mrb[0].mxu0
    %2883 = vdwg.mxu0
    %2884 = vmatprep.subr.mxu0 0.0
    %v2885 = vand.u32 %v580, 4294901760
    %2886 = vmatpush1.msra.mxu0 %v2885
    %2887 = vmatprep.subr.mxu0 0.0
    %2888 = vmatpush1.msra.mxu0 0.0
    %2889 = vmatprep.subr.mxu0 0.0
    %2890 = vmatpush1.msra.mxu0 0.0
    %2891 = vmatprep.subr.mxu0 0.0
    %2892 = vmatpush1.msra.mxu0 0.0
    %2893 = vmatprep.subr.mxu0 0.0
    %2894 = vmatpush1.msra.mxu0 0.0
    %2895 = vmatprep.subr.mxu0 0.0
    %2896 = vmatpush1.msra.mxu0 0.0
    %2897 = vmatprep.subr.mxu0 0.0
    %2898 = vmatpush1.msra.mxu0 0.0
    %2899 = vmatprep.subr.mxu0 0.0
    %2900 = vmatpush1.msra.mxu0 0.0
    %2901 = vmatprep.subr.mxu0 0.0
    %2902 = vmatpush1.msra.mxu0 0.0
    %2903 = vmatprep.subr.mxu0 0.0
    %2904 = vmatpush1.msra.mxu0 0.0
    %2905 = vmatprep.subr.mxu0 0.0
    %2906 = vmatpush1.msra.mxu0 0.0
    %2907 = vmatprep.subr.mxu0 0.0
    %2908 = vmatpush1.msra.mxu0 0.0
    %2909 = vmatprep.subr.mxu0 0.0
    %2910 = vmatpush1.msra.mxu0 0.0
    %2911 = vmatprep.subr.mxu0 0.0
    %2912 = vmatpush1.msra.mxu0 0.0
    %2913 = vmatprep.subr.mxu0 0.0
    %2914 = vmatpush1.msra.mxu0 0.0
    %2915 = vmatprep.subr.mxu0 0.0
    %2916 = vmatpush1.msra.mxu0 0.0
    %2917 = vmatprep.subr.mxu0 0.0
    %2918 = vmatpush1.msra.mxu0 0.0
    %2919 = vmatprep.subr.mxu0 0.0
    %2920 = vmatpush1.msra.mxu0 0.0
    %2921 = vmatprep.subr.mxu0 0.0
    %2922 = vmatpush1.msra.mxu0 0.0
    %2923 = vmatprep.subr.mxu0 0.0
    %2924 = vmatpush1.msra.mxu0 0.0
    %2925 = vmatprep.subr.mxu0 0.0
    %2926 = vmatpush1.msra.mxu0 0.0
    %2927 = vmatprep.subr.mxu0 0.0
    %2928 = vmatpush1.msra.mxu0 0.0
    %2929 = vmatprep.subr.mxu0 0.0
    %2930 = vmatpush1.msra.mxu0 0.0
    %2931 = vmatprep.subr.mxu0 0.0
    %2932 = vmatpush1.msra.mxu0 0.0
    %2933 = vmatprep.subr.mxu0 0.0
    %2934 = vmatpush1.msra.mxu0 0.0
    %2935 = vmatprep.subr.mxu0 0.0
    %2936 = vmatpush1.msra.mxu0 0.0
    %2937 = vmatprep.subr.mxu0 0.0
    %2938 = vmatpush1.msra.mxu0 0.0
    %2939 = vmatprep.subr.mxu0 0.0
    %2940 = vmatpush1.msra.mxu0 0.0
    %2941 = vmatprep.subr.mxu0 0.0
    %2942 = vmatpush1.msra.mxu0 0.0
    %2943 = vmatprep.subr.mxu0 0.0
    %2944 = vmatpush1.msra.mxu0 0.0
    %2945 = vmatprep.subr.mxu0 0.0
    %2946 = vmatpush1.msra.mxu0 0.0
    %2947 = vmatprep.subr.mxu0 0.0
    %2948 = vmatpush1.msra.mxu0 0.0
    %2949 = vmatprep.mubr.f32.mxu0 0.0
    %v2950 = vand.u32 %v2508, 4294901760
    %2951 = vmatmul.mubr.f32.gmra.mrb[0].mxu0 %v2950
    %v2952 = vpop.f32.mrb[0].mxu0
    %v2953 = vadd.f32 %v2881, %v2952
    %v2954 = vpop.f32.mrb[0].mxu0
    %2955 = vdwg.mxu0
    %s2956 = scalar_lea.vmem %s2, 32
    %v2957 = vld [vmem:[%s2956] sm:$0xff]
    %v2958 = vld [vmem:[%s2956 + $0x8] sm:$0xff]
    %v2959 = vld [vmem:[%s2956 + $0x10] sm:$0xff]
    %v2960 = vld [vmem:[%s2956 + $0x18] sm:$0xff]
    %s2961 = scalar_lea.vmem %s3, 1
    %v2962 = vld [vmem:[%s2961] sm:$0x1]
    %v2964 = vlaneseq
    %v2965 = vshrl.u32 %v2964, 7
    %v2966 = vsub.s32 0, %v2965
    %v2967 = vrot.slane %v2962, %v2966
    %2969 = vmatprep.subr.mxu0 0.0
    %v2970 = vand.u32 %v2957, 4294901760
    %2971 = vmatpush1.msra.mxu0 %v2970
    %2972 = vmatprep.subr.mxu0 0.0
    %v2973 = vand.u32 %v2958, 4294901760
    %2974 = vmatpush1.msra.mxu0 %v2973
    %2975 = vmatprep.subr.mxu0 0.0
    %v2976 = vand.u32 %v2959, 4294901760
    %2977 = vmatpush1.msra.mxu0 %v2976
    %2978 = vmatprep.subr.mxu0 0.0
    %v2979 = vand.u32 %v2960, 4294901760
    %2980 = vmatpush1.msra.mxu0 %v2979
    %2981 = vmatprep.subr.mxu0 0.0
    %2982 = vmatpush1.msra.mxu0 0.0
    %2983 = vmatprep.subr.mxu0 0.0
    %2984 = vmatpush1.msra.mxu0 0.0
    %2985 = vmatprep.subr.mxu0 0.0
    %2986 = vmatpush1.msra.mxu0 0.0
    %2987 = vmatprep.subr.mxu0 0.0
    %2988 = vmatpush1.msra.mxu0 0.0
    %2989 = vmatprep.subr.mxu0 0.0
    %2990 = vmatpush1.msra.mxu0 0.0
    %2991 = vmatprep.subr.mxu0 0.0
    %2992 = vmatpush1.msra.mxu0 0.0
    %2993 = vmatprep.subr.mxu0 0.0
    %2994 = vmatpush1.msra.mxu0 0.0
    %2995 = vmatprep.subr.mxu0 0.0
    %2996 = vmatpush1.msra.mxu0 0.0
    %2997 = vmatprep.subr.mxu0 0.0
    %2998 = vmatpush1.msra.mxu0 0.0
    %2999 = vmatprep.subr.mxu0 0.0
    %3000 = vmatpush1.msra.mxu0 0.0
    %3001 = vmatprep.subr.mxu0 0.0
    %3002 = vmatpush1.msra.mxu0 0.0
    %3003 = vmatprep.subr.mxu0 0.0
    %3004 = vmatpush1.msra.mxu0 0.0
    %3005 = vmatprep.subr.mxu0 0.0
    %3006 = vmatpush1.msra.mxu0 0.0
    %3007 = vmatprep.subr.mxu0 0.0
    %3008 = vmatpush1.msra.mxu0 0.0
    %3009 = vmatprep.subr.mxu0 0.0
    %3010 = vmatpush1.msra.mxu0 0.0
    %3011 = vmatprep.subr.mxu0 0.0
    %3012 = vmatpush1.msra.mxu0 0.0
    %3013 = vmatprep.subr.mxu0 0.0
    %3014 = vmatpush1.msra.mxu0 0.0
    %3015 = vmatprep.subr.mxu0 0.0
    %3016 = vmatpush1.msra.mxu0 0.0
    %3017 = vmatprep.subr.mxu0 0.0
    %3018 = vmatpush1.msra.mxu0 0.0
    %3019 = vmatprep.subr.mxu0 0.0
    %3020 = vmatpush1.msra.mxu0 0.0
    %3021 = vmatprep.subr.mxu0 0.0
    %3022 = vmatpush1.msra.mxu0 0.0
    %3023 = vmatprep.subr.mxu0 0.0
    %3024 = vmatpush1.msra.mxu0 0.0
    %3025 = vmatprep.subr.mxu0 0.0
    %3026 = vmatpush1.msra.mxu0 0.0
    %3027 = vmatprep.subr.mxu0 0.0
    %3028 = vmatpush1.msra.mxu0 0.0
    %3029 = vmatprep.subr.mxu0 0.0
    %3030 = vmatpush1.msra.mxu0 0.0
    %3031 = vmatprep.subr.mxu0 0.0
    %3032 = vmatpush1.msra.mxu0 0.0
    %3033 = vmatprep.subr.mxu0 0.0
    %3034 = vmatpush1.msra.mxu0 0.0
    %3035 = vmatprep.subr.mxu0 0.0
    %3036 = vmatpush1.msra.mxu0 0.0
    %3037 = vmatprep.mubr.f32.mxu0 0.0
    %v3038 = vand.u32 %v50, 4294901760
    %v3039 = vsub.f32 %v50, %v3038
    %v3040 = vand.u32 %v3039, 4294901760
    %v3041 = vsub.f32 %v3039, %v3040
    %v3042 = vand.u32 %v3041, 4294901760
    %3043 = vmatmul.mubr.f32.gmra.mrb[0].mxu0 %v3042
    %v3044 = vpop.f32.mrb[0].mxu0
    %v3045 = vadd.f32 %v2967, %v3044
    %v3046 = vpop.f32.mrb[0].mxu0
    %3047 = vmatprep.mubr.f32.mxu0 0.0
    %v3048 = vand.u32 %v53, 4294901760
    %v3049 = vsub.f32 %v53, %v3048
    %v3050 = vand.u32 %v3049, 4294901760
    %v3051 = vsub.f32 %v3049, %v3050
    %v3052 = vand.u32 %v3051, 4294901760
    %3053 = vmatmul.mubr.f32.gmra.mrb[0].mxu0 %v3052
    %v3054 = vpop.f32.mrb[0].mxu0
    %v3055 = vadd.f32 %v2967, %v3054
    %v3056 = vpop.f32.mrb[0].mxu0
    %3057 = vdwg.mxu0
    %3058 = vmatprep.subr.mxu0 0.0
    %v3059 = vand.u32 %v2957, 4294901760
    %v3060 = vsub.f32 %v2957, %v3059
    %v3061 = vand.u32 %v3060, 4294901760
    %v3062 = vsub.f32 %v3060, %v3061
    %v3063 = vand.u32 %v3062, 4294901760
    %3064 = vmatpush1.msra.mxu0 %v3063
    %3065 = vmatprep.subr.mxu0 0.0
    %v3066 = vand.u32 %v2958, 4294901760
    %v3067 = vsub.f32 %v2958, %v3066
    %v3068 = vand.u32 %v3067, 4294901760
    %v3069 = vsub.f32 %v3067, %v3068
    %v3070 = vand.u32 %v3069, 4294901760
    %3071 = vmatpush1.msra.mxu0 %v3070
    %3072 = vmatprep.subr.mxu0 0.0
    %v3073 = vand.u32 %v2959, 4294901760
    %v3074 = vsub.f32 %v2959, %v3073
    %v3075 = vand.u32 %v3074, 4294901760
    %v3076 = vsub.f32 %v3074, %v3075
    %v3077 = vand.u32 %v3076, 4294901760
    %3078 = vmatpush1.msra.mxu0 %v3077
    %3079 = vmatprep.subr.mxu0 0.0
    %v3080 = vand.u32 %v2960, 4294901760
    %v3081 = vsub.f32 %v2960, %v3080
    %v3082 = vand.u32 %v3081, 4294901760
    %v3083 = vsub.f32 %v3081, %v3082
    %v3084 = vand.u32 %v3083, 4294901760
    %3085 = vmatpush1.msra.mxu0 %v3084
    %3086 = vmatprep.subr.mxu0 0.0
    %3087 = vmatpush1.msra.mxu0 0.0
    %3088 = vmatprep.subr.mxu0 0.0
    %3089 = vmatpush1.msra.mxu0 0.0
    %3090 = vmatprep.subr.mxu0 0.0
    %3091 = vmatpush1.msra.mxu0 0.0
    %3092 = vmatprep.subr.mxu0 0.0
    %3093 = vmatpush1.msra.mxu0 0.0
    %3094 = vmatprep.subr.mxu0 0.0
    %3095 = vmatpush1.msra.mxu0 0.0
    %3096 = vmatprep.subr.mxu0 0.0
    %3097 = vmatpush1.msra.mxu0 0.0
    %3098 = vmatprep.subr.mxu0 0.0
    %3099 = vmatpush1.msra.mxu0 0.0
    %3100 = vmatprep.subr.mxu0 0.0
    %3101 = vmatpush1.msra.mxu0 0.0
    %3102 = vmatprep.subr.mxu0 0.0
    %3103 = vmatpush1.msra.mxu0 0.0
    %3104 = vmatprep.subr.mxu0 0.0
    %3105 = vmatpush1.msra.mxu0 0.0
    %3106 = vmatprep.subr.mxu0 0.0
    %3107 = vmatpush1.msra.mxu0 0.0
    %3108 = vmatprep.subr.mxu0 0.0
    %3109 = vmatpush1.msra.mxu0 0.0
    %3110 = vmatprep.subr.mxu0 0.0
    %3111 = vmatpush1.msra.mxu0 0.0
    %3112 = vmatprep.subr.mxu0 0.0
    %3113 = vmatpush1.msra.mxu0 0.0
    %3114 = vmatprep.subr.mxu0 0.0
    %3115 = vmatpush1.msra.mxu0 0.0
    %3116 = vmatprep.subr.mxu0 0.0
    %3117 = vmatpush1.msra.mxu0 0.0
    %3118 = vmatprep.subr.mxu0 0.0
    %3119 = vmatpush1.msra.mxu0 0.0
    %3120 = vmatprep.subr.mxu0 0.0
    %3121 = vmatpush1.msra.mxu0 0.0
    %3122 = vmatprep.subr.mxu0 0.0
    %3123 = vmatpush1.msra.mxu0 0.0
    %3124 = vmatprep.subr.mxu0 0.0
    %3125 = vmatpush1.msra.mxu0 0.0
    %3126 = vmatprep.subr.mxu0 0.0
    %3127 = vmatpush1.msra.mxu0 0.0
    %3128 = vmatprep.subr.mxu0 0.0
    %3129 = vmatpush1.msra.mxu0 0.0
    %3130 = vmatprep.subr.mxu0 0.0
    %3131 = vmatpush1.msra.mxu0 0.0
    %3132 = vmatprep.subr.mxu0 0.0
    %3133 = vmatpush1.msra.mxu0 0.0
    %3134 = vmatprep.subr.mxu0 0.0
    %3135 = vmatpush1.msra.mxu0 0.0
    %3136 = vmatprep.subr.mxu0 0.0
    %3137 = vmatpush1.msra.mxu0 0.0
    %3138 = vmatprep.subr.mxu0 0.0
    %3139 = vmatpush1.msra.mxu0 0.0
    %3140 = vmatprep.subr.mxu0 0.0
    %3141 = vmatpush1.msra.mxu0 0.0
    %3142 = vmatprep.mubr.f32.mxu0 0.0
    %v3143 = vand.u32 %v50, 4294901760
    %3144 = vmatmul.mubr.f32.gmra.mrb[0].mxu0 %v3143
    %v3145 = vpop.f32.mrb[0].mxu0
    %v3146 = vadd.f32 %v3045, %v3145
    %v3147 = vpop.f32.mrb[0].mxu0
    %3148 = vmatprep.mubr.f32.mxu0 0.0
    %v3149 = vand.u32 %v53, 4294901760
    %3150 = vmatmul.mubr.f32.gmra.mrb[0].mxu0 %v3149
    %v3151 = vpop.f32.mrb[0].mxu0
    %v3152 = vadd.f32 %v3055, %v3151
    %v3153 = vpop.f32.mrb[0].mxu0
    %3154 = vdwg.mxu0
    %3155 = vmatprep.subr.mxu0 0.0
    %v3156 = vand.u32 %v2957, 4294901760
    %v3157 = vsub.f32 %v2957, %v3156
    %3158 = vmatpush1.msra.mxu0 %v3157
    %3159 = vmatprep.subr.mxu0 0.0
    %v3160 = vand.u32 %v2958, 4294901760
    %v3161 = vsub.f32 %v2958, %v3160
    %3162 = vmatpush1.msra.mxu0 %v3161
    %3163 = vmatprep.subr.mxu0 0.0
    %v3164 = vand.u32 %v2959, 4294901760
    %v3165 = vsub.f32 %v2959, %v3164
    %3166 = vmatpush1.msra.mxu0 %v3165
    %3167 = vmatprep.subr.mxu0 0.0
    %v3168 = vand.u32 %v2960, 4294901760
    %v3169 = vsub.f32 %v2960, %v3168
    %3170 = vmatpush1.msra.mxu0 %v3169
    %3171 = vmatprep.subr.mxu0 0.0
    %3172 = vmatpush1.msra.mxu0 0.0
    %3173 = vmatprep.subr.mxu0 0.0
    %3174 = vmatpush1.msra.mxu0 0.0
    %3175 = vmatprep.subr.mxu0 0.0
    %3176 = vmatpush1.msra.mxu0 0.0
    %3177 = vmatprep.subr.mxu0 0.0
    %3178 = vmatpush1.msra.mxu0 0.0
    %3179 = vmatprep.subr.mxu0 0.0
    %3180 = vmatpush1.msra.mxu0 0.0
    %3181 = vmatprep.subr.mxu0 0.0
    %3182 = vmatpush1.msra.mxu0 0.0
    %3183 = vmatprep.subr.mxu0 0.0
    %3184 = vmatpush1.msra.mxu0 0.0
    %3185 = vmatprep.subr.mxu0 0.0
    %3186 = vmatpush1.msra.mxu0 0.0
    %3187 = vmatprep.subr.mxu0 0.0
    %3188 = vmatpush1.msra.mxu0 0.0
    %3189 = vmatprep.subr.mxu0 0.0
    %3190 = vmatpush1.msra.mxu0 0.0
    %3191 = vmatprep.subr.mxu0 0.0
    %3192 = vmatpush1.msra.mxu0 0.0
    %3193 = vmatprep.subr.mxu0 0.0
    %3194 = vmatpush1.msra.mxu0 0.0
    %3195 = vmatprep.subr.mxu0 0.0
    %3196 = vmatpush1.msra.mxu0 0.0
    %3197 = vmatprep.subr.mxu0 0.0
    %3198 = vmatpush1.msra.mxu0 0.0
    %3199 = vmatprep.subr.mxu0 0.0
    %3200 = vmatpush1.msra.mxu0 0.0
    %3201 = vmatprep.subr.mxu0 0.0
    %3202 = vmatpush1.msra.mxu0 0.0
    %3203 = vmatprep.subr.mxu0 0.0
    %3204 = vmatpush1.msra.mxu0 0.0
    %3205 = vmatprep.subr.mxu0 0.0
    %3206 = vmatpush1.msra.mxu0 0.0
    %3207 = vmatprep.subr.mxu0 0.0
    %3208 = vmatpush1.msra.mxu0 0.0
    %3209 = vmatprep.subr.mxu0 0.0
    %3210 = vmatpush1.msra.mxu0 0.0
    %3211 = vmatprep.subr.mxu0 0.0
    %3212 = vmatpush1.msra.mxu0 0.0
    %3213 = vmatprep.subr.mxu0 0.0
    %3214 = vmatpush1.msra.mxu0 0.0
    %3215 = vmatprep.subr.mxu0 0.0
    %3216 = vmatpush1.msra.mxu0 0.0
    %3217 = vmatprep.subr.mxu0 0.0
    %3218 = vmatpush1.msra.mxu0 0.0
    %3219 = vmatprep.subr.mxu0 0.0
    %3220 = vmatpush1.msra.mxu0 0.0
    %3221 = vmatprep.subr.mxu0 0.0
    %3222 = vmatpush1.msra.mxu0 0.0
    %3223 = vmatprep.subr.mxu0 0.0
    %3224 = vmatpush1.msra.mxu0 0.0
    %3225 = vmatprep.subr.mxu0 0.0
    %3226 = vmatpush1.msra.mxu0 0.0
    %3227 = vmatprep.mubr.f32.mxu0 0.0
    %v3228 = vand.u32 %v50, 4294901760
    %v3229 = vsub.f32 %v50, %v3228
    %3230 = vmatmul.mubr.f32.gmra.mrb[0].mxu0 %v3229
    %v3231 = vpop.f32.mrb[0].mxu0
    %v3232 = vadd.f32 %v3146, %v3231
    %v3233 = vpop.f32.mrb[0].mxu0
    %3234 = vmatprep.mubr.f32.mxu0 0.0
    %v3235 = vand.u32 %v53, 4294901760
    %v3236 = vsub.f32 %v53, %v3235
    %3237 = vmatmul.mubr.f32.gmra.mrb[0].mxu0 %v3236
    %v3238 = vpop.f32.mrb[0].mxu0
    %v3239 = vadd.f32 %v3152, %v3238
    %v3240 = vpop.f32.mrb[0].mxu0
    %3241 = vdwg.mxu0
    %3242 = vmatprep.subr.mxu0 0.0
    %v3243 = vand.u32 %v2957, 4294901760
    %3244 = vmatpush1.msra.mxu0 %v3243
    %3245 = vmatprep.subr.mxu0 0.0
    %v3246 = vand.u32 %v2958, 4294901760
    %3247 = vmatpush1.msra.mxu0 %v3246
    %3248 = vmatprep.subr.mxu0 0.0
    %v3249 = vand.u32 %v2959, 4294901760
    %3250 = vmatpush1.msra.mxu0 %v3249
    %3251 = vmatprep.subr.mxu0 0.0
    %v3252 = vand.u32 %v2960, 4294901760
    %3253 = vmatpush1.msra.mxu0 %v3252
    %3254 = vmatprep.subr.mxu0 0.0
    %3255 = vmatpush1.msra.mxu0 0.0
    %3256 = vmatprep.subr.mxu0 0.0
    %3257 = vmatpush1.msra.mxu0 0.0
    %3258 = vmatprep.subr.mxu0 0.0
    %3259 = vmatpush1.msra.mxu0 0.0
    %3260 = vmatprep.subr.mxu0 0.0
    %3261 = vmatpush1.msra.mxu0 0.0
    %3262 = vmatprep.subr.mxu0 0.0
    %3263 = vmatpush1.msra.mxu0 0.0
    %3264 = vmatprep.subr.mxu0 0.0
    %3265 = vmatpush1.msra.mxu0 0.0
    %3266 = vmatprep.subr.mxu0 0.0
    %3267 = vmatpush1.msra.mxu0 0.0
    %3268 = vmatprep.subr.mxu0 0.0
    %3269 = vmatpush1.msra.mxu0 0.0
    %3270 = vmatprep.subr.mxu0 0.0
    %3271 = vmatpush1.msra.mxu0 0.0
    %3272 = vmatprep.subr.mxu0 0.0
    %3273 = vmatpush1.msra.mxu0 0.0
    %3274 = vmatprep.subr.mxu0 0.0
    %3275 = vmatpush1.msra.mxu0 0.0
    %3276 = vmatprep.subr.mxu0 0.0
    %3277 = vmatpush1.msra.mxu0 0.0
    %3278 = vmatprep.subr.mxu0 0.0
    %3279 = vmatpush1.msra.mxu0 0.0
    %3280 = vmatprep.subr.mxu0 0.0
    %3281 = vmatpush1.msra.mxu0 0.0
    %3282 = vmatprep.subr.mxu0 0.0
    %3283 = vmatpush1.msra.mxu0 0.0
    %3284 = vmatprep.subr.mxu0 0.0
    %3285 = vmatpush1.msra.mxu0 0.0
    %3286 = vmatprep.subr.mxu0 0.0
    %3287 = vmatpush1.msra.mxu0 0.0
    %3288 = vmatprep.subr.mxu0 0.0
    %3289 = vmatpush1.msra.mxu0 0.0
    %3290 = vmatprep.subr.mxu0 0.0
    %3291 = vmatpush1.msra.mxu0 0.0
    %3292 = vmatprep.subr.mxu0 0.0
    %3293 = vmatpush1.msra.mxu0 0.0
    %3294 = vmatprep.subr.mxu0 0.0
    %3295 = vmatpush1.msra.mxu0 0.0
    %3296 = vmatprep.subr.mxu0 0.0
    %3297 = vmatpush1.msra.mxu0 0.0
    %3298 = vmatprep.subr.mxu0 0.0
    %3299 = vmatpush1.msra.mxu0 0.0
    %3300 = vmatprep.subr.mxu0 0.0
    %3301 = vmatpush1.msra.mxu0 0.0
    %3302 = vmatprep.subr.mxu0 0.0
    %3303 = vmatpush1.msra.mxu0 0.0
    %3304 = vmatprep.subr.mxu0 0.0
    %3305 = vmatpush1.msra.mxu0 0.0
    %3306 = vmatprep.subr.mxu0 0.0
    %3307 = vmatpush1.msra.mxu0 0.0
    %3308 = vmatprep.subr.mxu0 0.0
    %3309 = vmatpush1.msra.mxu0 0.0
    %3310 = vmatprep.mubr.f32.mxu0 0.0
    %v3311 = vand.u32 %v50, 4294901760
    %v3312 = vsub.f32 %v50, %v3311
    %v3313 = vand.u32 %v3312, 4294901760
    %3314 = vmatmul.mubr.f32.gmra.mrb[0].mxu0 %v3313
    %v3315 = vpop.f32.mrb[0].mxu0
    %v3316 = vadd.f32 %v3232, %v3315
    %v3317 = vpop.f32.mrb[0].mxu0
    %3318 = vmatprep.mubr.f32.mxu0 0.0
    %v3319 = vand.u32 %v53, 4294901760
    %v3320 = vsub.f32 %v53, %v3319
    %v3321 = vand.u32 %v3320, 4294901760
    %3322 = vmatmul.mubr.f32.gmra.mrb[0].mxu0 %v3321
    %v3323 = vpop.f32.mrb[0].mxu0
    %v3324 = vadd.f32 %v3239, %v3323
    %v3325 = vpop.f32.mrb[0].mxu0
    %3326 = vdwg.mxu0
    %3327 = vmatprep.subr.mxu0 0.0
    %v3328 = vand.u32 %v2957, 4294901760
    %v3329 = vsub.f32 %v2957, %v3328
    %v3330 = vand.u32 %v3329, 4294901760
    %3331 = vmatpush1.msra.mxu0 %v3330
    %3332 = vmatprep.subr.mxu0 0.0
    %v3333 = vand.u32 %v2958, 4294901760
    %v3334 = vsub.f32 %v2958, %v3333
    %v3335 = vand.u32 %v3334, 4294901760
    %3336 = vmatpush1.msra.mxu0 %v3335
    %3337 = vmatprep.subr.mxu0 0.0
    %v3338 = vand.u32 %v2959, 4294901760
    %v3339 = vsub.f32 %v2959, %v3338
    %v3340 = vand.u32 %v3339, 4294901760
    %3341 = vmatpush1.msra.mxu0 %v3340
    %3342 = vmatprep.subr.mxu0 0.0
    %v3343 = vand.u32 %v2960, 4294901760
    %v3344 = vsub.f32 %v2960, %v3343
    %v3345 = vand.u32 %v3344, 4294901760
    %3346 = vmatpush1.msra.mxu0 %v3345
    %3347 = vmatprep.subr.mxu0 0.0
    %3348 = vmatpush1.msra.mxu0 0.0
    %3349 = vmatprep.subr.mxu0 0.0
    %3350 = vmatpush1.msra.mxu0 0.0
    %3351 = vmatprep.subr.mxu0 0.0
    %3352 = vmatpush1.msra.mxu0 0.0
    %3353 = vmatprep.subr.mxu0 0.0
    %3354 = vmatpush1.msra.mxu0 0.0
    %3355 = vmatprep.subr.mxu0 0.0
    %3356 = vmatpush1.msra.mxu0 0.0
    %3357 = vmatprep.subr.mxu0 0.0
    %3358 = vmatpush1.msra.mxu0 0.0
    %3359 = vmatprep.subr.mxu0 0.0
    %3360 = vmatpush1.msra.mxu0 0.0
    %3361 = vmatprep.subr.mxu0 0.0
    %3362 = vmatpush1.msra.mxu0 0.0
    %3363 = vmatprep.subr.mxu0 0.0
    %3364 = vmatpush1.msra.mxu0 0.0
    %3365 = vmatprep.subr.mxu0 0.0
    %3366 = vmatpush1.msra.mxu0 0.0
    %3367 = vmatprep.subr.mxu0 0.0
    %3368 = vmatpush1.msra.mxu0 0.0
    %3369 = vmatprep.subr.mxu0 0.0
    %3370 = vmatpush1.msra.mxu0 0.0
    %3371 = vmatprep.subr.mxu0 0.0
    %3372 = vmatpush1.msra.mxu0 0.0
    %3373 = vmatprep.subr.mxu0 0.0
    %3374 = vmatpush1.msra.mxu0 0.0
    %3375 = vmatprep.subr.mxu0 0.0
    %3376 = vmatpush1.msra.mxu0 0.0
    %3377 = vmatprep.subr.mxu0 0.0
    %3378 = vmatpush1.msra.mxu0 0.0
    %3379 = vmatprep.subr.mxu0 0.0
    %3380 = vmatpush1.msra.mxu0 0.0
    %3381 = vmatprep.subr.mxu0 0.0
    %3382 = vmatpush1.msra.mxu0 0.0
    %3383 = vmatprep.subr.mxu0 0.0
    %3384 = vmatpush1.msra.mxu0 0.0
    %3385 = vmatprep.subr.mxu0 0.0
    %3386 = vmatpush1.msra.mxu0 0.0
    %3387 = vmatprep.subr.mxu0 0.0
    %3388 = vmatpush1.msra.mxu0 0.0
    %3389 = vmatprep.subr.mxu0 0.0
    %3390 = vmatpush1.msra.mxu0 0.0
    %3391 = vmatprep.subr.mxu0 0.0
    %3392 = vmatpush1.msra.mxu0 0.0
    %3393 = vmatprep.subr.mxu0 0.0
    %3394 = vmatpush1.msra.mxu0 0.0
    %3395 = vmatprep.subr.mxu0 0.0
    %3396 = vmatpush1.msra.mxu0 0.0
    %3397 = vmatprep.subr.mxu0 0.0
    %3398 = vmatpush1.msra.mxu0 0.0
    %3399 = vmatprep.subr.mxu0 0.0
    %3400 = vmatpush1.msra.mxu0 0.0
    %3401 = vmatprep.subr.mxu0 0.0
    %3402 = vmatpush1.msra.mxu0 0.0
    %3403 = vmatprep.mubr.f32.mxu0 0.0
    %v3404 = vand.u32 %v50, 4294901760
    %3405 = vmatmul.mubr.f32.gmra.mrb[0].mxu0 %v3404
    %v3406 = vpop.f32.mrb[0].mxu0
    %v3407 = vadd.f32 %v3316, %v3406
    %v3408 = vpop.f32.mrb[0].mxu0
    %3409 = vmatprep.mubr.f32.mxu0 0.0
    %v3410 = vand.u32 %v53, 4294901760
    %3411 = vmatmul.mubr.f32.gmra.mrb[0].mxu0 %v3410
    %v3412 = vpop.f32.mrb[0].mxu0
    %v3413 = vadd.f32 %v3324, %v3412
    %v3414 = vpop.f32.mrb[0].mxu0
    %3415 = vdwg.mxu0
    %3416 = vmatprep.subr.mxu0 0.0
    %v3417 = vand.u32 %v2957, 4294901760
    %3418 = vmatpush1.msra.mxu0 %v3417
    %3419 = vmatprep.subr.mxu0 0.0
    %v3420 = vand.u32 %v2958, 4294901760
    %3421 = vmatpush1.msra.mxu0 %v3420
    %3422 = vmatprep.subr.mxu0 0.0
    %v3423 = vand.u32 %v2959, 4294901760
    %3424 = vmatpush1.msra.mxu0 %v3423
    %3425 = vmatprep.subr.mxu0 0.0
    %v3426 = vand.u32 %v2960, 4294901760
    %3427 = vmatpush1.msra.mxu0 %v3426
    %3428 = vmatprep.subr.mxu0 0.0
    %3429 = vmatpush1.msra.mxu0 0.0
    %3430 = vmatprep.subr.mxu0 0.0
    %3431 = vmatpush1.msra.mxu0 0.0
    %3432 = vmatprep.subr.mxu0 0.0
    %3433 = vmatpush1.msra.mxu0 0.0
    %3434 = vmatprep.subr.mxu0 0.0
    %3435 = vmatpush1.msra.mxu0 0.0
    %3436 = vmatprep.subr.mxu0 0.0
    %3437 = vmatpush1.msra.mxu0 0.0
    %3438 = vmatprep.subr.mxu0 0.0
    %3439 = vmatpush1.msra.mxu0 0.0
    %3440 = vmatprep.subr.mxu0 0.0
    %3441 = vmatpush1.msra.mxu0 0.0
    %3442 = vmatprep.subr.mxu0 0.0
    %3443 = vmatpush1.msra.mxu0 0.0
    %3444 = vmatprep.subr.mxu0 0.0
    %3445 = vmatpush1.msra.mxu0 0.0
    %3446 = vmatprep.subr.mxu0 0.0
    %3447 = vmatpush1.msra.mxu0 0.0
    %3448 = vmatprep.subr.mxu0 0.0
    %3449 = vmatpush1.msra.mxu0 0.0
    %3450 = vmatprep.subr.mxu0 0.0
    %3451 = vmatpush1.msra.mxu0 0.0
    %3452 = vmatprep.subr.mxu0 0.0
    %3453 = vmatpush1.msra.mxu0 0.0
    %3454 = vmatprep.subr.mxu0 0.0
    %3455 = vmatpush1.msra.mxu0 0.0
    %3456 = vmatprep.subr.mxu0 0.0
    %3457 = vmatpush1.msra.mxu0 0.0
    %3458 = vmatprep.subr.mxu0 0.0
    %3459 = vmatpush1.msra.mxu0 0.0
    %3460 = vmatprep.subr.mxu0 0.0
    %3461 = vmatpush1.msra.mxu0 0.0
    %3462 = vmatprep.subr.mxu0 0.0
    %3463 = vmatpush1.msra.mxu0 0.0
    %3464 = vmatprep.subr.mxu0 0.0
    %3465 = vmatpush1.msra.mxu0 0.0
    %3466 = vmatprep.subr.mxu0 0.0
    %3467 = vmatpush1.msra.mxu0 0.0
    %3468 = vmatprep.subr.mxu0 0.0
    %3469 = vmatpush1.msra.mxu0 0.0
    %3470 = vmatprep.subr.mxu0 0.0
    %3471 = vmatpush1.msra.mxu0 0.0
    %3472 = vmatprep.subr.mxu0 0.0
    %3473 = vmatpush1.msra.mxu0 0.0
    %3474 = vmatprep.subr.mxu0 0.0
    %3475 = vmatpush1.msra.mxu0 0.0
    %3476 = vmatprep.subr.mxu0 0.0
    %3477 = vmatpush1.msra.mxu0 0.0
    %3478 = vmatprep.subr.mxu0 0.0
    %3479 = vmatpush1.msra.mxu0 0.0
    %3480 = vmatprep.subr.mxu0 0.0
    %3481 = vmatpush1.msra.mxu0 0.0
    %3482 = vmatprep.subr.mxu0 0.0
    %3483 = vmatpush1.msra.mxu0 0.0
    %3484 = vmatprep.mubr.f32.mxu0 0.0
    %v3485 = vand.u32 %v50, 4294901760
    %3486 = vmatmul.mubr.f32.gmra.mrb[0].mxu0 %v3485
    %v3487 = vpop.f32.mrb[0].mxu0
    %v3488 = vadd.f32 %v3407, %v3487
    %v3489 = vpop.f32.mrb[0].mxu0
    %3490 = vmatprep.mubr.f32.mxu0 0.0
    %v3491 = vand.u32 %v53, 4294901760
    %3492 = vmatmul.mubr.f32.gmra.mrb[0].mxu0 %v3491
    %v3493 = vpop.f32.mrb[0].mxu0
    %v3494 = vadd.f32 %v3413, %v3493
    %v3495 = vpop.f32.mrb[0].mxu0
    %3496 = vdwg.mxu0
    %s3497 = scalar_lea.vmem %s4, 32
    %v3498 = vld [vmem:[%s3497] sm:$0xff]
    %v3499 = vld [vmem:[%s3497 + $0x8] sm:$0xff]
    %v3500 = vld [vmem:[%s3497 + $0x10] sm:$0xff]
    %v3501 = vld [vmem:[%s3497 + $0x18] sm:$0xff]
    %s3502 = scalar_lea.vmem %s5, 1
    %v3503 = vld [vmem:[%s3502] sm:$0x1]
    %v3505 = vlaneseq
    %v3506 = vshrl.u32 %v3505, 7
    %v3507 = vsub.s32 0, %v3506
    %v3508 = vrot.slane %v3503, %v3507
    %3510 = vmatprep.subr.mxu0 0.0
    %v3511 = vand.u32 %v3498, 4294901760
    %3512 = vmatpush1.msra.mxu0 %v3511
    %3513 = vmatprep.subr.mxu0 0.0
    %v3514 = vand.u32 %v3499, 4294901760
    %3515 = vmatpush1.msra.mxu0 %v3514
    %3516 = vmatprep.subr.mxu0 0.0
    %v3517 = vand.u32 %v3500, 4294901760
    %3518 = vmatpush1.msra.mxu0 %v3517
    %3519 = vmatprep.subr.mxu0 0.0
    %v3520 = vand.u32 %v3501, 4294901760
    %3521 = vmatpush1.msra.mxu0 %v3520
    %3522 = vmatprep.subr.mxu0 0.0
    %3523 = vmatpush1.msra.mxu0 0.0
    %3524 = vmatprep.subr.mxu0 0.0
    %3525 = vmatpush1.msra.mxu0 0.0
    %3526 = vmatprep.subr.mxu0 0.0
    %3527 = vmatpush1.msra.mxu0 0.0
    %3528 = vmatprep.subr.mxu0 0.0
    %3529 = vmatpush1.msra.mxu0 0.0
    %3530 = vmatprep.subr.mxu0 0.0
    %3531 = vmatpush1.msra.mxu0 0.0
    %3532 = vmatprep.subr.mxu0 0.0
    %3533 = vmatpush1.msra.mxu0 0.0
    %3534 = vmatprep.subr.mxu0 0.0
    %3535 = vmatpush1.msra.mxu0 0.0
    %3536 = vmatprep.subr.mxu0 0.0
    %3537 = vmatpush1.msra.mxu0 0.0
    %3538 = vmatprep.subr.mxu0 0.0
    %3539 = vmatpush1.msra.mxu0 0.0
    %3540 = vmatprep.subr.mxu0 0.0
    %3541 = vmatpush1.msra.mxu0 0.0
    %3542 = vmatprep.subr.mxu0 0.0
    %3543 = vmatpush1.msra.mxu0 0.0
    %3544 = vmatprep.subr.mxu0 0.0
    %3545 = vmatpush1.msra.mxu0 0.0
    %3546 = vmatprep.subr.mxu0 0.0
    %3547 = vmatpush1.msra.mxu0 0.0
    %3548 = vmatprep.subr.mxu0 0.0
    %3549 = vmatpush1.msra.mxu0 0.0
    %3550 = vmatprep.subr.mxu0 0.0
    %3551 = vmatpush1.msra.mxu0 0.0
    %3552 = vmatprep.subr.mxu0 0.0
    %3553 = vmatpush1.msra.mxu0 0.0
    %3554 = vmatprep.subr.mxu0 0.0
    %3555 = vmatpush1.msra.mxu0 0.0
    %3556 = vmatprep.subr.mxu0 0.0
    %3557 = vmatpush1.msra.mxu0 0.0
    %3558 = vmatprep.subr.mxu0 0.0
    %3559 = vmatpush1.msra.mxu0 0.0
    %3560 = vmatprep.subr.mxu0 0.0
    %3561 = vmatpush1.msra.mxu0 0.0
    %3562 = vmatprep.subr.mxu0 0.0
    %3563 = vmatpush1.msra.mxu0 0.0
    %3564 = vmatprep.subr.mxu0 0.0
    %3565 = vmatpush1.msra.mxu0 0.0
    %3566 = vmatprep.subr.mxu0 0.0
    %3567 = vmatpush1.msra.mxu0 0.0
    %3568 = vmatprep.subr.mxu0 0.0
    %3569 = vmatpush1.msra.mxu0 0.0
    %3570 = vmatprep.subr.mxu0 0.0
    %3571 = vmatpush1.msra.mxu0 0.0
    %3572 = vmatprep.subr.mxu0 0.0
    %3573 = vmatpush1.msra.mxu0 0.0
    %3574 = vmatprep.subr.mxu0 0.0
    %3575 = vmatpush1.msra.mxu0 0.0
    %3576 = vmatprep.subr.mxu0 0.0
    %3577 = vmatpush1.msra.mxu0 0.0
    %3578 = vmatprep.mubr.f32.mxu0 0.0
    %v3579 = vand.u32 %v595, 4294901760
    %v3580 = vsub.f32 %v595, %v3579
    %v3581 = vand.u32 %v3580, 4294901760
    %v3582 = vsub.f32 %v3580, %v3581
    %v3583 = vand.u32 %v3582, 4294901760
    %3584 = vmatmul.mubr.f32.gmra.mrb[0].mxu0 %v3583
    %v3585 = vpop.f32.mrb[0].mxu0
    %v3586 = vadd.f32 %v3508, %v3585
    %v3587 = vpop.f32.mrb[0].mxu0
    %3588 = vmatprep.mubr.f32.mxu0 0.0
    %v3589 = vand.u32 %v598, 4294901760
    %v3590 = vsub.f32 %v598, %v3589
    %v3591 = vand.u32 %v3590, 4294901760
    %v3592 = vsub.f32 %v3590, %v3591
    %v3593 = vand.u32 %v3592, 4294901760
    %3594 = vmatmul.mubr.f32.gmra.mrb[0].mxu0 %v3593
    %v3595 = vpop.f32.mrb[0].mxu0
    %v3596 = vadd.f32 %v3508, %v3595
    %v3597 = vpop.f32.mrb[0].mxu0
    %3598 = vdwg.mxu0
    %3599 = vmatprep.subr.mxu0 0.0
    %v3600 = vand.u32 %v3498, 4294901760
    %v3601 = vsub.f32 %v3498, %v3600
    %v3602 = vand.u32 %v3601, 4294901760
    %v3603 = vsub.f32 %v3601, %v3602
    %v3604 = vand.u32 %v3603, 4294901760
    %3605 = vmatpush1.msra.mxu0 %v3604
    %3606 = vmatprep.subr.mxu0 0.0
    %v3607 = vand.u32 %v3499, 4294901760
    %v3608 = vsub.f32 %v3499, %v3607
    %v3609 = vand.u32 %v3608, 4294901760
    %v3610 = vsub.f32 %v3608, %v3609
    %v3611 = vand.u32 %v3610, 4294901760
    %3612 = vmatpush1.msra.mxu0 %v3611
    %3613 = vmatprep.subr.mxu0 0.0
    %v3614 = vand.u32 %v3500, 4294901760
    %v3615 = vsub.f32 %v3500, %v3614
    %v3616 = vand.u32 %v3615, 4294901760
    %v3617 = vsub.f32 %v3615, %v3616
    %v3618 = vand.u32 %v3617, 4294901760
    %3619 = vmatpush1.msra.mxu0 %v3618
    %3620 = vmatprep.subr.mxu0 0.0
    %v3621 = vand.u32 %v3501, 4294901760
    %v3622 = vsub.f32 %v3501, %v3621
    %v3623 = vand.u32 %v3622, 4294901760
    %v3624 = vsub.f32 %v3622, %v3623
    %v3625 = vand.u32 %v3624, 4294901760
    %3626 = vmatpush1.msra.mxu0 %v3625
    %3627 = vmatprep.subr.mxu0 0.0
    %3628 = vmatpush1.msra.mxu0 0.0
    %3629 = vmatprep.subr.mxu0 0.0
    %3630 = vmatpush1.msra.mxu0 0.0
    %3631 = vmatprep.subr.mxu0 0.0
    %3632 = vmatpush1.msra.mxu0 0.0
    %3633 = vmatprep.subr.mxu0 0.0
    %3634 = vmatpush1.msra.mxu0 0.0
    %3635 = vmatprep.subr.mxu0 0.0
    %3636 = vmatpush1.msra.mxu0 0.0
    %3637 = vmatprep.subr.mxu0 0.0
    %3638 = vmatpush1.msra.mxu0 0.0
    %3639 = vmatprep.subr.mxu0 0.0
    %3640 = vmatpush1.msra.mxu0 0.0
    %3641 = vmatprep.subr.mxu0 0.0
    %3642 = vmatpush1.msra.mxu0 0.0
    %3643 = vmatprep.subr.mxu0 0.0
    %3644 = vmatpush1.msra.mxu0 0.0
    %3645 = vmatprep.subr.mxu0 0.0
    %3646 = vmatpush1.msra.mxu0 0.0
    %3647 = vmatprep.subr.mxu0 0.0
    %3648 = vmatpush1.msra.mxu0 0.0
    %3649 = vmatprep.subr.mxu0 0.0
    %3650 = vmatpush1.msra.mxu0 0.0
    %3651 = vmatprep.subr.mxu0 0.0
    %3652 = vmatpush1.msra.mxu0 0.0
    %3653 = vmatprep.subr.mxu0 0.0
    %3654 = vmatpush1.msra.mxu0 0.0
    %3655 = vmatprep.subr.mxu0 0.0
    %3656 = vmatpush1.msra.mxu0 0.0
    %3657 = vmatprep.subr.mxu0 0.0
    %3658 = vmatpush1.msra.mxu0 0.0
    %3659 = vmatprep.subr.mxu0 0.0
    %3660 = vmatpush1.msra.mxu0 0.0
    %3661 = vmatprep.subr.mxu0 0.0
    %3662 = vmatpush1.msra.mxu0 0.0
    %3663 = vmatprep.subr.mxu0 0.0
    %3664 = vmatpush1.msra.mxu0 0.0
    %3665 = vmatprep.subr.mxu0 0.0
    %3666 = vmatpush1.msra.mxu0 0.0
    %3667 = vmatprep.subr.mxu0 0.0
    %3668 = vmatpush1.msra.mxu0 0.0
    %3669 = vmatprep.subr.mxu0 0.0
    %3670 = vmatpush1.msra.mxu0 0.0
    %3671 = vmatprep.subr.mxu0 0.0
    %3672 = vmatpush1.msra.mxu0 0.0
    %3673 = vmatprep.subr.mxu0 0.0
    %3674 = vmatpush1.msra.mxu0 0.0
    %3675 = vmatprep.subr.mxu0 0.0
    %3676 = vmatpush1.msra.mxu0 0.0
    %3677 = vmatprep.subr.mxu0 0.0
    %3678 = vmatpush1.msra.mxu0 0.0
    %3679 = vmatprep.subr.mxu0 0.0
    %3680 = vmatpush1.msra.mxu0 0.0
    %3681 = vmatprep.subr.mxu0 0.0
    %3682 = vmatpush1.msra.mxu0 0.0
    %3683 = vmatprep.mubr.f32.mxu0 0.0
    %v3684 = vand.u32 %v595, 4294901760
    %3685 = vmatmul.mubr.f32.gmra.mrb[0].mxu0 %v3684
    %v3686 = vpop.f32.mrb[0].mxu0
    %v3687 = vadd.f32 %v3586, %v3686
    %v3688 = vpop.f32.mrb[0].mxu0
    %3689 = vmatprep.mubr.f32.mxu0 0.0
    %v3690 = vand.u32 %v598, 4294901760
    %3691 = vmatmul.mubr.f32.gmra.mrb[0].mxu0 %v3690
    %v3692 = vpop.f32.mrb[0].mxu0
    %v3693 = vadd.f32 %v3596, %v3692
    %v3694 = vpop.f32.mrb[0].mxu0
    %3695 = vdwg.mxu0
    %3696 = vmatprep.subr.mxu0 0.0
    %v3697 = vand.u32 %v3498, 4294901760
    %v3698 = vsub.f32 %v3498, %v3697
    %3699 = vmatpush1.msra.mxu0 %v3698
    %3700 = vmatprep.subr.mxu0 0.0
    %v3701 = vand.u32 %v3499, 4294901760
    %v3702 = vsub.f32 %v3499, %v3701
    %3703 = vmatpush1.msra.mxu0 %v3702
    %3704 = vmatprep.subr.mxu0 0.0
    %v3705 = vand.u32 %v3500, 4294901760
    %v3706 = vsub.f32 %v3500, %v3705
    %3707 = vmatpush1.msra.mxu0 %v3706
    %3708 = vmatprep.subr.mxu0 0.0
    %v3709 = vand.u32 %v3501, 4294901760
    %v3710 = vsub.f32 %v3501, %v3709
    %3711 = vmatpush1.msra.mxu0 %v3710
    %3712 = vmatprep.subr.mxu0 0.0
    %3713 = vmatpush1.msra.mxu0 0.0
    %3714 = vmatprep.subr.mxu0 0.0
    %3715 = vmatpush1.msra.mxu0 0.0
    %3716 = vmatprep.subr.mxu0 0.0
    %3717 = vmatpush1.msra.mxu0 0.0
    %3718 = vmatprep.subr.mxu0 0.0
    %3719 = vmatpush1.msra.mxu0 0.0
    %3720 = vmatprep.subr.mxu0 0.0
    %3721 = vmatpush1.msra.mxu0 0.0
    %3722 = vmatprep.subr.mxu0 0.0
    %3723 = vmatpush1.msra.mxu0 0.0
    %3724 = vmatprep.subr.mxu0 0.0
    %3725 = vmatpush1.msra.mxu0 0.0
    %3726 = vmatprep.subr.mxu0 0.0
    %3727 = vmatpush1.msra.mxu0 0.0
    %3728 = vmatprep.subr.mxu0 0.0
    %3729 = vmatpush1.msra.mxu0 0.0
    %3730 = vmatprep.subr.mxu0 0.0
    %3731 = vmatpush1.msra.mxu0 0.0
    %3732 = vmatprep.subr.mxu0 0.0
    %3733 = vmatpush1.msra.mxu0 0.0
    %3734 = vmatprep.subr.mxu0 0.0
    %3735 = vmatpush1.msra.mxu0 0.0
    %3736 = vmatprep.subr.mxu0 0.0
    %3737 = vmatpush1.msra.mxu0 0.0
    %3738 = vmatprep.subr.mxu0 0.0
    %3739 = vmatpush1.msra.mxu0 0.0
    %3740 = vmatprep.subr.mxu0 0.0
    %3741 = vmatpush1.msra.mxu0 0.0
    %3742 = vmatprep.subr.mxu0 0.0
    %3743 = vmatpush1.msra.mxu0 0.0
    %3744 = vmatprep.subr.mxu0 0.0
    %3745 = vmatpush1.msra.mxu0 0.0
    %3746 = vmatprep.subr.mxu0 0.0
    %3747 = vmatpush1.msra.mxu0 0.0
    %3748 = vmatprep.subr.mxu0 0.0
    %3749 = vmatpush1.msra.mxu0 0.0
    %3750 = vmatprep.subr.mxu0 0.0
    %3751 = vmatpush1.msra.mxu0 0.0
    %3752 = vmatprep.subr.mxu0 0.0
    %3753 = vmatpush1.msra.mxu0 0.0
    %3754 = vmatprep.subr.mxu0 0.0
    %3755 = vmatpush1.msra.mxu0 0.0
    %3756 = vmatprep.subr.mxu0 0.0
    %3757 = vmatpush1.msra.mxu0 0.0
    %3758 = vmatprep.subr.mxu0 0.0
    %3759 = vmatpush1.msra.mxu0 0.0
    %3760 = vmatprep.subr.mxu0 0.0
    %3761 = vmatpush1.msra.mxu0 0.0
    %3762 = vmatprep.subr.mxu0 0.0
    %3763 = vmatpush1.msra.mxu0 0.0
    %3764 = vmatprep.subr.mxu0 0.0
    %3765 = vmatpush1.msra.mxu0 0.0
    %3766 = vmatprep.subr.mxu0 0.0
    %3767 = vmatpush1.msra.mxu0 0.0
    %3768 = vmatprep.mubr.f32.mxu0 0.0
    %v3769 = vand.u32 %v595, 4294901760
    %v3770 = vsub.f32 %v595, %v3769
    %3771 = vmatmul.mubr.f32.gmra.mrb[0].mxu0 %v3770
    %v3772 = vpop.f32.mrb[0].mxu0
    %v3773 = vadd.f32 %v3687, %v3772
    %v3774 = vpop.f32.mrb[0].mxu0
    %3775 = vmatprep.mubr.f32.mxu0 0.0
    %v3776 = vand.u32 %v598, 4294901760
    %v3777 = vsub.f32 %v598, %v3776
    %3778 = vmatmul.mubr.f32.gmra.mrb[0].mxu0 %v3777
    %v3779 = vpop.f32.mrb[0].mxu0
    %v3780 = vadd.f32 %v3693, %v3779
    %v3781 = vpop.f32.mrb[0].mxu0
    %3782 = vdwg.mxu0
    %3783 = vmatprep.subr.mxu0 0.0
    %v3784 = vand.u32 %v3498, 4294901760
    %3785 = vmatpush1.msra.mxu0 %v3784
    %3786 = vmatprep.subr.mxu0 0.0
    %v3787 = vand.u32 %v3499, 4294901760
    %3788 = vmatpush1.msra.mxu0 %v3787
    %3789 = vmatprep.subr.mxu0 0.0
    %v3790 = vand.u32 %v3500, 4294901760
    %3791 = vmatpush1.msra.mxu0 %v3790
    %3792 = vmatprep.subr.mxu0 0.0
    %v3793 = vand.u32 %v3501, 4294901760
    %3794 = vmatpush1.msra.mxu0 %v3793
    %3795 = vmatprep.subr.mxu0 0.0
    %3796 = vmatpush1.msra.mxu0 0.0
    %3797 = vmatprep.subr.mxu0 0.0
    %3798 = vmatpush1.msra.mxu0 0.0
    %3799 = vmatprep.subr.mxu0 0.0
    %3800 = vmatpush1.msra.mxu0 0.0
    %3801 = vmatprep.subr.mxu0 0.0
    %3802 = vmatpush1.msra.mxu0 0.0
    %3803 = vmatprep.subr.mxu0 0.0
    %3804 = vmatpush1.msra.mxu0 0.0
    %3805 = vmatprep.subr.mxu0 0.0
    %3806 = vmatpush1.msra.mxu0 0.0
    %3807 = vmatprep.subr.mxu0 0.0
    %3808 = vmatpush1.msra.mxu0 0.0
    %3809 = vmatprep.subr.mxu0 0.0
    %3810 = vmatpush1.msra.mxu0 0.0
    %3811 = vmatprep.subr.mxu0 0.0
    %3812 = vmatpush1.msra.mxu0 0.0
    %3813 = vmatprep.subr.mxu0 0.0
    %3814 = vmatpush1.msra.mxu0 0.0
    %3815 = vmatprep.subr.mxu0 0.0
    %3816 = vmatpush1.msra.mxu0 0.0
    %3817 = vmatprep.subr.mxu0 0.0
    %3818 = vmatpush1.msra.mxu0 0.0
    %3819 = vmatprep.subr.mxu0 0.0
    %3820 = vmatpush1.msra.mxu0 0.0
    %3821 = vmatprep.subr.mxu0 0.0
    %3822 = vmatpush1.msra.mxu0 0.0
    %3823 = vmatprep.subr.mxu0 0.0
    %3824 = vmatpush1.msra.mxu0 0.0
    %3825 = vmatprep.subr.mxu0 0.0
    %3826 = vmatpush1.msra.mxu0 0.0
    %3827 = vmatprep.subr.mxu0 0.0
    %3828 = vmatpush1.msra.mxu0 0.0
    %3829 = vmatprep.subr.mxu0 0.0
    %3830 = vmatpush1.msra.mxu0 0.0
    %3831 = vmatprep.subr.mxu0 0.0
    %3832 = vmatpush1.msra.mxu0 0.0
    %3833 = vmatprep.subr.mxu0 0.0
    %3834 = vmatpush1.msra.mxu0 0.0
    %3835 = vmatprep.subr.mxu0 0.0
    %3836 = vmatpush1.msra.mxu0 0.0
    %3837 = vmatprep.subr.mxu0 0.0
    %3838 = vmatpush1.msra.mxu0 0.0
    %3839 = vmatprep.subr.mxu0 0.0
    %3840 = vmatpush1.msra.mxu0 0.0
    %3841 = vmatprep.subr.mxu0 0.0
    %3842 = vmatpush1.msra.mxu0 0.0
    %3843 = vmatprep.subr.mxu0 0.0
    %3844 = vmatpush1.msra.mxu0 0.0
    %3845 = vmatprep.subr.mxu0 0.0
    %3846 = vmatpush1.msra.mxu0 0.0
    %3847 = vmatprep.subr.mxu0 0.0
    %3848 = vmatpush1.msra.mxu0 0.0
    %3849 = vmatprep.subr.mxu0 0.0
    %3850 = vmatpush1.msra.mxu0 0.0
    %3851 = vmatprep.mubr.f32.mxu0 0.0
    %v3852 = vand.u32 %v595, 4294901760
    %v3853 = vsub.f32 %v595, %v3852
    %v3854 = vand.u32 %v3853, 4294901760
    %3855 = vmatmul.mubr.f32.gmra.mrb[0].mxu0 %v3854
    %v3856 = vpop.f32.mrb[0].mxu0
    %v3857 = vadd.f32 %v3773, %v3856
    %v3858 = vpop.f32.mrb[0].mxu0
    %3859 = vmatprep.mubr.f32.mxu0 0.0
    %v3860 = vand.u32 %v598, 4294901760
    %v3861 = vsub.f32 %v598, %v3860
    %v3862 = vand.u32 %v3861, 4294901760
    %3863 = vmatmul.mubr.f32.gmra.mrb[0].mxu0 %v3862
    %v3864 = vpop.f32.mrb[0].mxu0
    %v3865 = vadd.f32 %v3780, %v3864
    %v3866 = vpop.f32.mrb[0].mxu0
    %3867 = vdwg.mxu0
    %3868 = vmatprep.subr.mxu0 0.0
    %v3869 = vand.u32 %v3498, 4294901760
    %v3870 = vsub.f32 %v3498, %v3869
    %v3871 = vand.u32 %v3870, 4294901760
    %3872 = vmatpush1.msra.mxu0 %v3871
    %3873 = vmatprep.subr.mxu0 0.0
    %v3874 = vand.u32 %v3499, 4294901760
    %v3875 = vsub.f32 %v3499, %v3874
    %v3876 = vand.u32 %v3875, 4294901760
    %3877 = vmatpush1.msra.mxu0 %v3876
    %3878 = vmatprep.subr.mxu0 0.0
    %v3879 = vand.u32 %v3500, 4294901760
    %v3880 = vsub.f32 %v3500, %v3879
    %v3881 = vand.u32 %v3880, 4294901760
    %3882 = vmatpush1.msra.mxu0 %v3881
    %3883 = vmatprep.subr.mxu0 0.0
    %v3884 = vand.u32 %v3501, 4294901760
    %v3885 = vsub.f32 %v3501, %v3884
    %v3886 = vand.u32 %v3885, 4294901760
    %3887 = vmatpush1.msra.mxu0 %v3886
    %3888 = vmatprep.subr.mxu0 0.0
    %3889 = vmatpush1.msra.mxu0 0.0
    %3890 = vmatprep.subr.mxu0 0.0
    %3891 = vmatpush1.msra.mxu0 0.0
    %3892 = vmatprep.subr.mxu0 0.0
    %3893 = vmatpush1.msra.mxu0 0.0
    %3894 = vmatprep.subr.mxu0 0.0
    %3895 = vmatpush1.msra.mxu0 0.0
    %3896 = vmatprep.subr.mxu0 0.0
    %3897 = vmatpush1.msra.mxu0 0.0
    %3898 = vmatprep.subr.mxu0 0.0
    %3899 = vmatpush1.msra.mxu0 0.0
    %3900 = vmatprep.subr.mxu0 0.0
    %3901 = vmatpush1.msra.mxu0 0.0
    %3902 = vmatprep.subr.mxu0 0.0
    %3903 = vmatpush1.msra.mxu0 0.0
    %3904 = vmatprep.subr.mxu0 0.0
    %3905 = vmatpush1.msra.mxu0 0.0
    %3906 = vmatprep.subr.mxu0 0.0
    %3907 = vmatpush1.msra.mxu0 0.0
    %3908 = vmatprep.subr.mxu0 0.0
    %3909 = vmatpush1.msra.mxu0 0.0
    %3910 = vmatprep.subr.mxu0 0.0
    %3911 = vmatpush1.msra.mxu0 0.0
    %3912 = vmatprep.subr.mxu0 0.0
    %3913 = vmatpush1.msra.mxu0 0.0
    %3914 = vmatprep.subr.mxu0 0.0
    %3915 = vmatpush1.msra.mxu0 0.0
    %3916 = vmatprep.subr.mxu0 0.0
    %3917 = vmatpush1.msra.mxu0 0.0
    %3918 = vmatprep.subr.mxu0 0.0
    %3919 = vmatpush1.msra.mxu0 0.0
    %3920 = vmatprep.subr.mxu0 0.0
    %3921 = vmatpush1.msra.mxu0 0.0
    %3922 = vmatprep.subr.mxu0 0.0
    %3923 = vmatpush1.msra.mxu0 0.0
    %3924 = vmatprep.subr.mxu0 0.0
    %3925 = vmatpush1.msra.mxu0 0.0
    %3926 = vmatprep.subr.mxu0 0.0
    %3927 = vmatpush1.msra.mxu0 0.0
    %3928 = vmatprep.subr.mxu0 0.0
    %3929 = vmatpush1.msra.mxu0 0.0
    %3930 = vmatprep.subr.mxu0 0.0
    %3931 = vmatpush1.msra.mxu0 0.0
    %3932 = vmatprep.subr.mxu0 0.0
    %3933 = vmatpush1.msra.mxu0 0.0
    %3934 = vmatprep.subr.mxu0 0.0
    %3935 = vmatpush1.msra.mxu0 0.0
    %3936 = vmatprep.subr.mxu0 0.0
    %3937 = vmatpush1.msra.mxu0 0.0
    %3938 = vmatprep.subr.mxu0 0.0
    %3939 = vmatpush1.msra.mxu0 0.0
    %3940 = vmatprep.subr.mxu0 0.0
    %3941 = vmatpush1.msra.mxu0 0.0
    %3942 = vmatprep.subr.mxu0 0.0
    %3943 = vmatpush1.msra.mxu0 0.0
    %3944 = vmatprep.mubr.f32.mxu0 0.0
    %v3945 = vand.u32 %v595, 4294901760
    %3946 = vmatmul.mubr.f32.gmra.mrb[0].mxu0 %v3945
    %v3947 = vpop.f32.mrb[0].mxu0
    %v3948 = vadd.f32 %v3857, %v3947
    %v3949 = vpop.f32.mrb[0].mxu0
    %3950 = vmatprep.mubr.f32.mxu0 0.0
    %v3951 = vand.u32 %v598, 4294901760
    %3952 = vmatmul.mubr.f32.gmra.mrb[0].mxu0 %v3951
    %v3953 = vpop.f32.mrb[0].mxu0
    %v3954 = vadd.f32 %v3865, %v3953
    %v3955 = vpop.f32.mrb[0].mxu0
    %3956 = vdwg.mxu0
    %3957 = vmatprep.subr.mxu0 0.0
    %v3958 = vand.u32 %v3498, 4294901760
    %3959 = vmatpush1.msra.mxu0 %v3958
    %3960 = vmatprep.subr.mxu0 0.0
    %v3961 = vand.u32 %v3499, 4294901760
    %3962 = vmatpush1.msra.mxu0 %v3961
    %3963 = vmatprep.subr.mxu0 0.0
    %v3964 = vand.u32 %v3500, 4294901760
    %3965 = vmatpush1.msra.mxu0 %v3964
    %3966 = vmatprep.subr.mxu0 0.0
    %v3967 = vand.u32 %v3501, 4294901760
    %3968 = vmatpush1.msra.mxu0 %v3967
    %3969 = vmatprep.subr.mxu0 0.0
    %3970 = vmatpush1.msra.mxu0 0.0
    %3971 = vmatprep.subr.mxu0 0.0
    %3972 = vmatpush1.msra.mxu0 0.0
    %3973 = vmatprep.subr.mxu0 0.0
    %3974 = vmatpush1.msra.mxu0 0.0
    %3975 = vmatprep.subr.mxu0 0.0
    %3976 = vmatpush1.msra.mxu0 0.0
    %3977 = vmatprep.subr.mxu0 0.0
    %3978 = vmatpush1.msra.mxu0 0.0
    %3979 = vmatprep.subr.mxu0 0.0
    %3980 = vmatpush1.msra.mxu0 0.0
    %3981 = vmatprep.subr.mxu0 0.0
    %3982 = vmatpush1.msra.mxu0 0.0
    %3983 = vmatprep.subr.mxu0 0.0
    %3984 = vmatpush1.msra.mxu0 0.0
    %3985 = vmatprep.subr.mxu0 0.0
    %3986 = vmatpush1.msra.mxu0 0.0
    %3987 = vmatprep.subr.mxu0 0.0
    %3988 = vmatpush1.msra.mxu0 0.0
    %3989 = vmatprep.subr.mxu0 0.0
    %3990 = vmatpush1.msra.mxu0 0.0
    %3991 = vmatprep.subr.mxu0 0.0
    %3992 = vmatpush1.msra.mxu0 0.0
    %3993 = vmatprep.subr.mxu0 0.0
    %3994 = vmatpush1.msra.mxu0 0.0
    %3995 = vmatprep.subr.mxu0 0.0
    %3996 = vmatpush1.msra.mxu0 0.0
    %3997 = vmatprep.subr.mxu0 0.0
    %3998 = vmatpush1.msra.mxu0 0.0
    %3999 = vmatprep.subr.mxu0 0.0
    %4000 = vmatpush1.msra.mxu0 0.0
    %4001 = vmatprep.subr.mxu0 0.0
    %4002 = vmatpush1.msra.mxu0 0.0
    %4003 = vmatprep.subr.mxu0 0.0
    %4004 = vmatpush1.msra.mxu0 0.0
    %4005 = vmatprep.subr.mxu0 0.0
    %4006 = vmatpush1.msra.mxu0 0.0
    %4007 = vmatprep.subr.mxu0 0.0
    %4008 = vmatpush1.msra.mxu0 0.0
    %4009 = vmatprep.subr.mxu0 0.0
    %4010 = vmatpush1.msra.mxu0 0.0
    %4011 = vmatprep.subr.mxu0 0.0
    %4012 = vmatpush1.msra.mxu0 0.0
    %4013 = vmatprep.subr.mxu0 0.0
    %4014 = vmatpush1.msra.mxu0 0.0
    %4015 = vmatprep.subr.mxu0 0.0
    %4016 = vmatpush1.msra.mxu0 0.0
    %4017 = vmatprep.subr.mxu0 0.0
    %4018 = vmatpush1.msra.mxu0 0.0
    %4019 = vmatprep.subr.mxu0 0.0
    %4020 = vmatpush1.msra.mxu0 0.0
    %4021 = vmatprep.subr.mxu0 0.0
    %4022 = vmatpush1.msra.mxu0 0.0
    %4023 = vmatprep.subr.mxu0 0.0
    %4024 = vmatpush1.msra.mxu0 0.0
    %4025 = vmatprep.mubr.f32.mxu0 0.0
    %v4026 = vand.u32 %v595, 4294901760
    %4027 = vmatmul.mubr.f32.gmra.mrb[0].mxu0 %v4026
    %v4028 = vpop.f32.mrb[0].mxu0
    %v4029 = vadd.f32 %v3948, %v4028
    %v4030 = vpop.f32.mrb[0].mxu0
    %4031 = vmatprep.mubr.f32.mxu0 0.0
    %v4032 = vand.u32 %v598, 4294901760
    %4033 = vmatmul.mubr.f32.gmra.mrb[0].mxu0 %v4032
    %v4034 = vpop.f32.mrb[0].mxu0
    %v4035 = vadd.f32 %v3954, %v4034
    %v4036 = vpop.f32.mrb[0].mxu0
    %4037 = vdwg.mxu0
    %v4039 = vsel %vm1128, %v4029, 0
    %v4042 = vsel %vm1128, %v3488, 0
    %4044 = vmatprep.subr.mxu0 0.0
    %v4045 = vand.u32 %v4042, 4294901760
    %4046 = vmatpush1.xpose.msra.mxu0 %v4045
    %4047 = vmatprep.subr.mxu0 0.0
    %4048 = vmatpush1.xpose.msra.mxu0 0.0
    %4049 = vmatprep.subr.mxu0 0.0
    %4050 = vmatpush1.xpose.msra.mxu0 0.0
    %4051 = vmatprep.subr.mxu0 0.0
    %4052 = vmatpush1.xpose.msra.mxu0 0.0
    %4053 = vmatprep.subr.mxu0 0.0
    %4054 = vmatpush1.xpose.msra.mxu0 0.0
    %4055 = vmatprep.subr.mxu0 0.0
    %4056 = vmatpush1.xpose.msra.mxu0 0.0
    %4057 = vmatprep.subr.mxu0 0.0
    %4058 = vmatpush1.xpose.msra.mxu0 0.0
    %4059 = vmatprep.subr.mxu0 0.0
    %4060 = vmatpush1.xpose.msra.mxu0 0.0
    %4061 = vmatprep.subr.mxu0 0.0
    %4062 = vmatpush1.xpose.msra.mxu0 0.0
    %4063 = vmatprep.subr.mxu0 0.0
    %4064 = vmatpush1.xpose.msra.mxu0 0.0
    %4065 = vmatprep.subr.mxu0 0.0
    %4066 = vmatpush1.xpose.msra.mxu0 0.0
    %4067 = vmatprep.subr.mxu0 0.0
    %4068 = vmatpush1.xpose.msra.mxu0 0.0
    %4069 = vmatprep.subr.mxu0 0.0
    %4070 = vmatpush1.xpose.msra.mxu0 0.0
    %4071 = vmatprep.subr.mxu0 0.0
    %4072 = vmatpush1.xpose.msra.mxu0 0.0
    %4073 = vmatprep.subr.mxu0 0.0
    %4074 = vmatpush1.xpose.msra.mxu0 0.0
    %4075 = vmatprep.subr.mxu0 0.0
    %4076 = vmatpush1.xpose.msra.mxu0 0.0
    %4077 = vmatprep.subr.mxu0 0.0
    %4078 = vmatpush1.xpose.msra.mxu0 0.0
    %4079 = vmatprep.subr.mxu0 0.0
    %4080 = vmatpush1.xpose.msra.mxu0 0.0
    %4081 = vmatprep.subr.mxu0 0.0
    %4082 = vmatpush1.xpose.msra.mxu0 0.0
    %4083 = vmatprep.subr.mxu0 0.0
    %4084 = vmatpush1.xpose.msra.mxu0 0.0
    %4085 = vmatprep.subr.mxu0 0.0
    %4086 = vmatpush1.xpose.msra.mxu0 0.0
    %4087 = vmatprep.subr.mxu0 0.0
    %4088 = vmatpush1.xpose.msra.mxu0 0.0
    %4089 = vmatprep.subr.mxu0 0.0
    %4090 = vmatpush1.xpose.msra.mxu0 0.0
    %4091 = vmatprep.subr.mxu0 0.0
    %4092 = vmatpush1.xpose.msra.mxu0 0.0
    %4093 = vmatprep.subr.mxu0 0.0
    %4094 = vmatpush1.xpose.msra.mxu0 0.0
    %4095 = vmatprep.subr.mxu0 0.0
    %4096 = vmatpush1.xpose.msra.mxu0 0.0
    %4097 = vmatprep.subr.mxu0 0.0
    %4098 = vmatpush1.xpose.msra.mxu0 0.0
    %4099 = vmatprep.subr.mxu0 0.0
    %4100 = vmatpush1.xpose.msra.mxu0 0.0
    %4101 = vmatprep.subr.mxu0 0.0
    %4102 = vmatpush1.xpose.msra.mxu0 0.0
    %4103 = vmatprep.subr.mxu0 0.0
    %4104 = vmatpush1.xpose.msra.mxu0 0.0
    %4105 = vmatprep.subr.mxu0 0.0
    %4106 = vmatpush1.xpose.msra.mxu0 0.0
    %4107 = vmatprep.subr.mxu0 0.0
    %4108 = vmatpush1.xpose.msra.mxu0 0.0
    %4109 = vmatprep.mubr.f32.mxu0 0.0
    %v4110 = vand.u32 %v4039, 4294901760
    %v4111 = vsub.f32 %v4039, %v4110
    %v4112 = vand.u32 %v4111, 4294901760
    %v4113 = vsub.f32 %v4111, %v4112
    %v4114 = vand.u32 %v4113, 4294901760
    %4115 = vmatmul.mubr.f32.gmra.mrb[0].mxu0 %v4114
    %v4116 = vpop.f32.mrb[0].mxu0
    %v4117 = vadd.f32 0.0, %v4116
    %v4118 = vpop.f32.mrb[0].mxu0
    %4119 = vdwg.mxu0
    %4120 = vmatprep.subr.mxu0 0.0
    %v4121 = vand.u32 %v4042, 4294901760
    %v4122 = vsub.f32 %v4042, %v4121
    %v4123 = vand.u32 %v4122, 4294901760
    %v4124 = vsub.f32 %v4122, %v4123
    %v4125 = vand.u32 %v4124, 4294901760
    %4126 = vmatpush1.xpose.msra.mxu0 %v4125
    %4127 = vmatprep.subr.mxu0 0.0
    %4128 = vmatpush1.xpose.msra.mxu0 0.0
    %4129 = vmatprep.subr.mxu0 0.0
    %4130 = vmatpush1.xpose.msra.mxu0 0.0
    %4131 = vmatprep.subr.mxu0 0.0
    %4132 = vmatpush1.xpose.msra.mxu0 0.0
    %4133 = vmatprep.subr.mxu0 0.0
    %4134 = vmatpush1.xpose.msra.mxu0 0.0
    %4135 = vmatprep.subr.mxu0 0.0
    %4136 = vmatpush1.xpose.msra.mxu0 0.0
    %4137 = vmatprep.subr.mxu0 0.0
    %4138 = vmatpush1.xpose.msra.mxu0 0.0
    %4139 = vmatprep.subr.mxu0 0.0
    %4140 = vmatpush1.xpose.msra.mxu0 0.0
    %4141 = vmatprep.subr.mxu0 0.0
    %4142 = vmatpush1.xpose.msra.mxu0 0.0
    %4143 = vmatprep.subr.mxu0 0.0
    %4144 = vmatpush1.xpose.msra.mxu0 0.0
    %4145 = vmatprep.subr.mxu0 0.0
    %4146 = vmatpush1.xpose.msra.mxu0 0.0
    %4147 = vmatprep.subr.mxu0 0.0
    %4148 = vmatpush1.xpose.msra.mxu0 0.0
    %4149 = vmatprep.subr.mxu0 0.0
    %4150 = vmatpush1.xpose.msra.mxu0 0.0
    %4151 = vmatprep.subr.mxu0 0.0
    %4152 = vmatpush1.xpose.msra.mxu0 0.0
    %4153 = vmatprep.subr.mxu0 0.0
    %4154 = vmatpush1.xpose.msra.mxu0 0.0
    %4155 = vmatprep.subr.mxu0 0.0
    %4156 = vmatpush1.xpose.msra.mxu0 0.0
    %4157 = vmatprep.subr.mxu0 0.0
    %4158 = vmatpush1.xpose.msra.mxu0 0.0
    %4159 = vmatprep.subr.mxu0 0.0
    %4160 = vmatpush1.xpose.msra.mxu0 0.0
    %4161 = vmatprep.subr.mxu0 0.0
    %4162 = vmatpush1.xpose.msra.mxu0 0.0
    %4163 = vmatprep.subr.mxu0 0.0
    %4164 = vmatpush1.xpose.msra.mxu0 0.0
    %4165 = vmatprep.subr.mxu0 0.0
    %4166 = vmatpush1.xpose.msra.mxu0 0.0
    %4167 = vmatprep.subr.mxu0 0.0
    %4168 = vmatpush1.xpose.msra.mxu0 0.0
    %4169 = vmatprep.subr.mxu0 0.0
    %4170 = vmatpush1.xpose.msra.mxu0 0.0
    %4171 = vmatprep.subr.mxu0 0.0
    %4172 = vmatpush1.xpose.msra.mxu0 0.0
    %4173 = vmatprep.subr.mxu0 0.0
    %4174 = vmatpush1.xpose.msra.mxu0 0.0
    %4175 = vmatprep.subr.mxu0 0.0
    %4176 = vmatpush1.xpose.msra.mxu0 0.0
    %4177 = vmatprep.subr.mxu0 0.0
    %4178 = vmatpush1.xpose.msra.mxu0 0.0
    %4179 = vmatprep.subr.mxu0 0.0
    %4180 = vmatpush1.xpose.msra.mxu0 0.0
    %4181 = vmatprep.subr.mxu0 0.0
    %4182 = vmatpush1.xpose.msra.mxu0 0.0
    %4183 = vmatprep.subr.mxu0 0.0
    %4184 = vmatpush1.xpose.msra.mxu0 0.0
    %4185 = vmatprep.subr.mxu0 0.0
    %4186 = vmatpush1.xpose.msra.mxu0 0.0
    %4187 = vmatprep.subr.mxu0 0.0
    %4188 = vmatpush1.xpose.msra.mxu0 0.0
    %4189 = vmatprep.mubr.f32.mxu0 0.0
    %v4190 = vand.u32 %v4039, 4294901760
    %4191 = vmatmul.mubr.f32.gmra.mrb[0].mxu0 %v4190
    %v4192 = vpop.f32.mrb[0].mxu0
    %v4193 = vadd.f32 %v4117, %v4192
    %v4194 = vpop.f32.mrb[0].mxu0
    %4195 = vdwg.mxu0
    %4196 = vmatprep.subr.mxu0 0.0
    %v4197 = vand.u32 %v4042, 4294901760
    %v4198 = vsub.f32 %v4042, %v4197
    %4199 = vmatpush1.xpose.msra.mxu0 %v4198
    %4200 = vmatprep.subr.mxu0 0.0
    %4201 = vmatpush1.xpose.msra.mxu0 0.0
    %4202 = vmatprep.subr.mxu0 0.0
    %4203 = vmatpush1.xpose.msra.mxu0 0.0
    %4204 = vmatprep.subr.mxu0 0.0
    %4205 = vmatpush1.xpose.msra.mxu0 0.0
    %4206 = vmatprep.subr.mxu0 0.0
    %4207 = vmatpush1.xpose.msra.mxu0 0.0
    %4208 = vmatprep.subr.mxu0 0.0
    %4209 = vmatpush1.xpose.msra.mxu0 0.0
    %4210 = vmatprep.subr.mxu0 0.0
    %4211 = vmatpush1.xpose.msra.mxu0 0.0
    %4212 = vmatprep.subr.mxu0 0.0
    %4213 = vmatpush1.xpose.msra.mxu0 0.0
    %4214 = vmatprep.subr.mxu0 0.0
    %4215 = vmatpush1.xpose.msra.mxu0 0.0
    %4216 = vmatprep.subr.mxu0 0.0
    %4217 = vmatpush1.xpose.msra.mxu0 0.0
    %4218 = vmatprep.subr.mxu0 0.0
    %4219 = vmatpush1.xpose.msra.mxu0 0.0
    %4220 = vmatprep.subr.mxu0 0.0
    %4221 = vmatpush1.xpose.msra.mxu0 0.0
    %4222 = vmatprep.subr.mxu0 0.0
    %4223 = vmatpush1.xpose.msra.mxu0 0.0
    %4224 = vmatprep.subr.mxu0 0.0
    %4225 = vmatpush1.xpose.msra.mxu0 0.0
    %4226 = vmatprep.subr.mxu0 0.0
    %4227 = vmatpush1.xpose.msra.mxu0 0.0
    %4228 = vmatprep.subr.mxu0 0.0
    %4229 = vmatpush1.xpose.msra.mxu0 0.0
    %4230 = vmatprep.subr.mxu0 0.0
    %4231 = vmatpush1.xpose.msra.mxu0 0.0
    %4232 = vmatprep.subr.mxu0 0.0
    %4233 = vmatpush1.xpose.msra.mxu0 0.0
    %4234 = vmatprep.subr.mxu0 0.0
    %4235 = vmatpush1.xpose.msra.mxu0 0.0
    %4236 = vmatprep.subr.mxu0 0.0
    %4237 = vmatpush1.xpose.msra.mxu0 0.0
    %4238 = vmatprep.subr.mxu0 0.0
    %4239 = vmatpush1.xpose.msra.mxu0 0.0
    %4240 = vmatprep.subr.mxu0 0.0
    %4241 = vmatpush1.xpose.msra.mxu0 0.0
    %4242 = vmatprep.subr.mxu0 0.0
    %4243 = vmatpush1.xpose.msra.mxu0 0.0
    %4244 = vmatprep.subr.mxu0 0.0
    %4245 = vmatpush1.xpose.msra.mxu0 0.0
    %4246 = vmatprep.subr.mxu0 0.0
    %4247 = vmatpush1.xpose.msra.mxu0 0.0
    %4248 = vmatprep.subr.mxu0 0.0
    %4249 = vmatpush1.xpose.msra.mxu0 0.0
    %4250 = vmatprep.subr.mxu0 0.0
    %4251 = vmatpush1.xpose.msra.mxu0 0.0
    %4252 = vmatprep.subr.mxu0 0.0
    %4253 = vmatpush1.xpose.msra.mxu0 0.0
    %4254 = vmatprep.subr.mxu0 0.0
    %4255 = vmatpush1.xpose.msra.mxu0 0.0
    %4256 = vmatprep.subr.mxu0 0.0
    %4257 = vmatpush1.xpose.msra.mxu0 0.0
    %4258 = vmatprep.subr.mxu0 0.0
    %4259 = vmatpush1.xpose.msra.mxu0 0.0
    %4260 = vmatprep.subr.mxu0 0.0
    %4261 = vmatpush1.xpose.msra.mxu0 0.0
    %4262 = vmatprep.mubr.f32.mxu0 0.0
    %v4263 = vand.u32 %v4039, 4294901760
    %v4264 = vsub.f32 %v4039, %v4263
    %4265 = vmatmul.mubr.f32.gmra.mrb[0].mxu0 %v4264
    %v4266 = vpop.f32.mrb[0].mxu0
    %v4267 = vadd.f32 %v4193, %v4266
    %v4268 = vpop.f32.mrb[0].mxu0
    %4269 = vdwg.mxu0
    %4270 = vmatprep.subr.mxu0 0.0
    %v4271 = vand.u32 %v4042, 4294901760
    %4272 = vmatpush1.xpose.msra.mxu0 %v4271
    %4273 = vmatprep.subr.mxu0 0.0
    %4274 = vmatpush1.xpose.msra.mxu0 0.0
    %4275 = vmatprep.subr.mxu0 0.0
    %4276 = vmatpush1.xpose.msra.mxu0 0.0
    %4277 = vmatprep.subr.mxu0 0.0
    %4278 = vmatpush1.xpose.msra.mxu0 0.0
    %4279 = vmatprep.subr.mxu0 0.0
    %4280 = vmatpush1.xpose.msra.mxu0 0.0
    %4281 = vmatprep.subr.mxu0 0.0
    %4282 = vmatpush1.xpose.msra.mxu0 0.0
    %4283 = vmatprep.subr.mxu0 0.0
    %4284 = vmatpush1.xpose.msra.mxu0 0.0
    %4285 = vmatprep.subr.mxu0 0.0
    %4286 = vmatpush1.xpose.msra.mxu0 0.0
    %4287 = vmatprep.subr.mxu0 0.0
    %4288 = vmatpush1.xpose.msra.mxu0 0.0
    %4289 = vmatprep.subr.mxu0 0.0
    %4290 = vmatpush1.xpose.msra.mxu0 0.0
    %4291 = vmatprep.subr.mxu0 0.0
    %4292 = vmatpush1.xpose.msra.mxu0 0.0
    %4293 = vmatprep.subr.mxu0 0.0
    %4294 = vmatpush1.xpose.msra.mxu0 0.0
    %4295 = vmatprep.subr.mxu0 0.0
    %4296 = vmatpush1.xpose.msra.mxu0 0.0
    %4297 = vmatprep.subr.mxu0 0.0
    %4298 = vmatpush1.xpose.msra.mxu0 0.0
    %4299 = vmatprep.subr.mxu0 0.0
    %4300 = vmatpush1.xpose.msra.mxu0 0.0
    %4301 = vmatprep.subr.mxu0 0.0
    %4302 = vmatpush1.xpose.msra.mxu0 0.0
    %4303 = vmatprep.subr.mxu0 0.0
    %4304 = vmatpush1.xpose.msra.mxu0 0.0
    %4305 = vmatprep.subr.mxu0 0.0
    %4306 = vmatpush1.xpose.msra.mxu0 0.0
    %4307 = vmatprep.subr.mxu0 0.0
    %4308 = vmatpush1.xpose.msra.mxu0 0.0
    %4309 = vmatprep.subr.mxu0 0.0
    %4310 = vmatpush1.xpose.msra.mxu0 0.0
    %4311 = vmatprep.subr.mxu0 0.0
    %4312 = vmatpush1.xpose.msra.mxu0 0.0
    %4313 = vmatprep.subr.mxu0 0.0
    %4314 = vmatpush1.xpose.msra.mxu0 0.0
    %4315 = vmatprep.subr.mxu0 0.0
    %4316 = vmatpush1.xpose.msra.mxu0 0.0
    %4317 = vmatprep.subr.mxu0 0.0
    %4318 = vmatpush1.xpose.msra.mxu0 0.0
    %4319 = vmatprep.subr.mxu0 0.0
    %4320 = vmatpush1.xpose.msra.mxu0 0.0
    %4321 = vmatprep.subr.mxu0 0.0
    %4322 = vmatpush1.xpose.msra.mxu0 0.0
    %4323 = vmatprep.subr.mxu0 0.0
    %4324 = vmatpush1.xpose.msra.mxu0 0.0
    %4325 = vmatprep.subr.mxu0 0.0
    %4326 = vmatpush1.xpose.msra.mxu0 0.0
    %4327 = vmatprep.subr.mxu0 0.0
    %4328 = vmatpush1.xpose.msra.mxu0 0.0
    %4329 = vmatprep.subr.mxu0 0.0
    %4330 = vmatpush1.xpose.msra.mxu0 0.0
    %4331 = vmatprep.subr.mxu0 0.0
    %4332 = vmatpush1.xpose.msra.mxu0 0.0
    %4333 = vmatprep.subr.mxu0 0.0
    %4334 = vmatpush1.xpose.msra.mxu0 0.0
    %4335 = vmatprep.mubr.f32.mxu0 0.0
    %v4336 = vand.u32 %v4039, 4294901760
    %v4337 = vsub.f32 %v4039, %v4336
    %v4338 = vand.u32 %v4337, 4294901760
    %4339 = vmatmul.mubr.f32.gmra.mrb[0].mxu0 %v4338
    %v4340 = vpop.f32.mrb[0].mxu0
    %v4341 = vadd.f32 %v4267, %v4340
    %v4342 = vpop.f32.mrb[0].mxu0
    %4343 = vdwg.mxu0
    %4344 = vmatprep.subr.mxu0 0.0
    %v4345 = vand.u32 %v4042, 4294901760
    %v4346 = vsub.f32 %v4042, %v4345
    %v4347 = vand.u32 %v4346, 4294901760
    %4348 = vmatpush1.xpose.msra.mxu0 %v4347
    %4349 = vmatprep.subr.mxu0 0.0
    %4350 = vmatpush1.xpose.msra.mxu0 0.0
    %4351 = vmatprep.subr.mxu0 0.0
    %4352 = vmatpush1.xpose.msra.mxu0 0.0
    %4353 = vmatprep.subr.mxu0 0.0
    %4354 = vmatpush1.xpose.msra.mxu0 0.0
    %4355 = vmatprep.subr.mxu0 0.0
    %4356 = vmatpush1.xpose.msra.mxu0 0.0
    %4357 = vmatprep.subr.mxu0 0.0
    %4358 = vmatpush1.xpose.msra.mxu0 0.0
    %4359 = vmatprep.subr.mxu0 0.0
    %4360 = vmatpush1.xpose.msra.mxu0 0.0
    %4361 = vmatprep.subr.mxu0 0.0
    %4362 = vmatpush1.xpose.msra.mxu0 0.0
    %4363 = vmatprep.subr.mxu0 0.0
    %4364 = vmatpush1.xpose.msra.mxu0 0.0
    %4365 = vmatprep.subr.mxu0 0.0
    %4366 = vmatpush1.xpose.msra.mxu0 0.0
    %4367 = vmatprep.subr.mxu0 0.0
    %4368 = vmatpush1.xpose.msra.mxu0 0.0
    %4369 = vmatprep.subr.mxu0 0.0
    %4370 = vmatpush1.xpose.msra.mxu0 0.0
    %4371 = vmatprep.subr.mxu0 0.0
    %4372 = vmatpush1.xpose.msra.mxu0 0.0
    %4373 = vmatprep.subr.mxu0 0.0
    %4374 = vmatpush1.xpose.msra.mxu0 0.0
    %4375 = vmatprep.subr.mxu0 0.0
    %4376 = vmatpush1.xpose.msra.mxu0 0.0
    %4377 = vmatprep.subr.mxu0 0.0
    %4378 = vmatpush1.xpose.msra.mxu0 0.0
    %4379 = vmatprep.subr.mxu0 0.0
    %4380 = vmatpush1.xpose.msra.mxu0 0.0
    %4381 = vmatprep.subr.mxu0 0.0
    %4382 = vmatpush1.xpose.msra.mxu0 0.0
    %4383 = vmatprep.subr.mxu0 0.0
    %4384 = vmatpush1.xpose.msra.mxu0 0.0
    %4385 = vmatprep.subr.mxu0 0.0
    %4386 = vmatpush1.xpose.msra.mxu0 0.0
    %4387 = vmatprep.subr.mxu0 0.0
    %4388 = vmatpush1.xpose.msra.mxu0 0.0
    %4389 = vmatprep.subr.mxu0 0.0
    %4390 = vmatpush1.xpose.msra.mxu0 0.0
    %4391 = vmatprep.subr.mxu0 0.0
    %4392 = vmatpush1.xpose.msra.mxu0 0.0
    %4393 = vmatprep.subr.mxu0 0.0
    %4394 = vmatpush1.xpose.msra.mxu0 0.0
    %4395 = vmatprep.subr.mxu0 0.0
    %4396 = vmatpush1.xpose.msra.mxu0 0.0
    %4397 = vmatprep.subr.mxu0 0.0
    %4398 = vmatpush1.xpose.msra.mxu0 0.0
    %4399 = vmatprep.subr.mxu0 0.0
    %4400 = vmatpush1.xpose.msra.mxu0 0.0
    %4401 = vmatprep.subr.mxu0 0.0
    %4402 = vmatpush1.xpose.msra.mxu0 0.0
    %4403 = vmatprep.subr.mxu0 0.0
    %4404 = vmatpush1.xpose.msra.mxu0 0.0
    %4405 = vmatprep.subr.mxu0 0.0
    %4406 = vmatpush1.xpose.msra.mxu0 0.0
    %4407 = vmatprep.subr.mxu0 0.0
    %4408 = vmatpush1.xpose.msra.mxu0 0.0
    %4409 = vmatprep.subr.mxu0 0.0
    %4410 = vmatpush1.xpose.msra.mxu0 0.0
    %4411 = vmatprep.mubr.f32.mxu0 0.0
    %v4412 = vand.u32 %v4039, 4294901760
    %4413 = vmatmul.mubr.f32.gmra.mrb[0].mxu0 %v4412
    %v4414 = vpop.f32.mrb[0].mxu0
    %v4415 = vadd.f32 %v4341, %v4414
    %v4416 = vpop.f32.mrb[0].mxu0
    %4417 = vdwg.mxu0
    %4418 = vmatprep.subr.mxu0 0.0
    %v4419 = vand.u32 %v4042, 4294901760
    %4420 = vmatpush1.xpose.msra.mxu0 %v4419
    %4421 = vmatprep.subr.mxu0 0.0
    %4422 = vmatpush1.xpose.msra.mxu0 0.0
    %4423 = vmatprep.subr.mxu0 0.0
    %4424 = vmatpush1.xpose.msra.mxu0 0.0
    %4425 = vmatprep.subr.mxu0 0.0
    %4426 = vmatpush1.xpose.msra.mxu0 0.0
    %4427 = vmatprep.subr.mxu0 0.0
    %4428 = vmatpush1.xpose.msra.mxu0 0.0
    %4429 = vmatprep.subr.mxu0 0.0
    %4430 = vmatpush1.xpose.msra.mxu0 0.0
    %4431 = vmatprep.subr.mxu0 0.0
    %4432 = vmatpush1.xpose.msra.mxu0 0.0
    %4433 = vmatprep.subr.mxu0 0.0
    %4434 = vmatpush1.xpose.msra.mxu0 0.0
    %4435 = vmatprep.subr.mxu0 0.0
    %4436 = vmatpush1.xpose.msra.mxu0 0.0
    %4437 = vmatprep.subr.mxu0 0.0
    %4438 = vmatpush1.xpose.msra.mxu0 0.0
    %4439 = vmatprep.subr.mxu0 0.0
    %4440 = vmatpush1.xpose.msra.mxu0 0.0
    %4441 = vmatprep.subr.mxu0 0.0
    %4442 = vmatpush1.xpose.msra.mxu0 0.0
    %4443 = vmatprep.subr.mxu0 0.0
    %4444 = vmatpush1.xpose.msra.mxu0 0.0
    %4445 = vmatprep.subr.mxu0 0.0
    %4446 = vmatpush1.xpose.msra.mxu0 0.0
    %4447 = vmatprep.subr.mxu0 0.0
    %4448 = vmatpush1.xpose.msra.mxu0 0.0
    %4449 = vmatprep.subr.mxu0 0.0
    %4450 = vmatpush1.xpose.msra.mxu0 0.0
    %4451 = vmatprep.subr.mxu0 0.0
    %4452 = vmatpush1.xpose.msra.mxu0 0.0
    %4453 = vmatprep.subr.mxu0 0.0
    %4454 = vmatpush1.xpose.msra.mxu0 0.0
    %4455 = vmatprep.subr.mxu0 0.0
    %4456 = vmatpush1.xpose.msra.mxu0 0.0
    %4457 = vmatprep.subr.mxu0 0.0
    %4458 = vmatpush1.xpose.msra.mxu0 0.0
    %4459 = vmatprep.subr.mxu0 0.0
    %4460 = vmatpush1.xpose.msra.mxu0 0.0
    %4461 = vmatprep.subr.mxu0 0.0
    %4462 = vmatpush1.xpose.msra.mxu0 0.0
    %4463 = vmatprep.subr.mxu0 0.0
    %4464 = vmatpush1.xpose.msra.mxu0 0.0
    %4465 = vmatprep.subr.mxu0 0.0
    %4466 = vmatpush1.xpose.msra.mxu0 0.0
    %4467 = vmatprep.subr.mxu0 0.0
    %4468 = vmatpush1.xpose.msra.mxu0 0.0
    %4469 = vmatprep.subr.mxu0 0.0
    %4470 = vmatpush1.xpose.msra.mxu0 0.0
    %4471 = vmatprep.subr.mxu0 0.0
    %4472 = vmatpush1.xpose.msra.mxu0 0.0
    %4473 = vmatprep.subr.mxu0 0.0
    %4474 = vmatpush1.xpose.msra.mxu0 0.0
    %4475 = vmatprep.subr.mxu0 0.0
    %4476 = vmatpush1.xpose.msra.mxu0 0.0
    %4477 = vmatprep.subr.mxu0 0.0
    %4478 = vmatpush1.xpose.msra.mxu0 0.0
    %4479 = vmatprep.subr.mxu0 0.0
    %4480 = vmatpush1.xpose.msra.mxu0 0.0
    %4481 = vmatprep.subr.mxu0 0.0
    %4482 = vmatpush1.xpose.msra.mxu0 0.0
    %4483 = vmatprep.mubr.f32.mxu0 0.0
    %v4484 = vand.u32 %v4039, 4294901760
    %4485 = vmatmul.mubr.f32.gmra.mrb[0].mxu0 %v4484
    %v4486 = vpop.f32.mrb[0].mxu0
    %v4487 = vadd.f32 %v4415, %v4486
    %v4488 = vpop.f32.mrb[0].mxu0
    %4489 = vdwg.mxu0
    %v4491 = vsel %vm1128, %v4035, 0
    %v4494 = vsel %vm1128, %v3494, 0
    %4496 = vmatprep.subr.mxu0 0.0
    %v4497 = vand.u32 %v4494, 4294901760
    %4498 = vmatpush1.xpose.msra.mxu0 %v4497
    %4499 = vmatprep.subr.mxu0 0.0
    %4500 = vmatpush1.xpose.msra.mxu0 0.0
    %4501 = vmatprep.subr.mxu0 0.0
    %4502 = vmatpush1.xpose.msra.mxu0 0.0
    %4503 = vmatprep.subr.mxu0 0.0
    %4504 = vmatpush1.xpose.msra.mxu0 0.0
    %4505 = vmatprep.subr.mxu0 0.0
    %4506 = vmatpush1.xpose.msra.mxu0 0.0
    %4507 = vmatprep.subr.mxu0 0.0
    %4508 = vmatpush1.xpose.msra.mxu0 0.0
    %4509 = vmatprep.subr.mxu0 0.0
    %4510 = vmatpush1.xpose.msra.mxu0 0.0
    %4511 = vmatprep.subr.mxu0 0.0
    %4512 = vmatpush1.xpose.msra.mxu0 0.0
    %4513 = vmatprep.subr.mxu0 0.0
    %4514 = vmatpush1.xpose.msra.mxu0 0.0
    %4515 = vmatprep.subr.mxu0 0.0
    %4516 = vmatpush1.xpose.msra.mxu0 0.0
    %4517 = vmatprep.subr.mxu0 0.0
    %4518 = vmatpush1.xpose.msra.mxu0 0.0
    %4519 = vmatprep.subr.mxu0 0.0
    %4520 = vmatpush1.xpose.msra.mxu0 0.0
    %4521 = vmatprep.subr.mxu0 0.0
    %4522 = vmatpush1.xpose.msra.mxu0 0.0
    %4523 = vmatprep.subr.mxu0 0.0
    %4524 = vmatpush1.xpose.msra.mxu0 0.0
    %4525 = vmatprep.subr.mxu0 0.0
    %4526 = vmatpush1.xpose.msra.mxu0 0.0
    %4527 = vmatprep.subr.mxu0 0.0
    %4528 = vmatpush1.xpose.msra.mxu0 0.0
    %4529 = vmatprep.subr.mxu0 0.0
    %4530 = vmatpush1.xpose.msra.mxu0 0.0
    %4531 = vmatprep.subr.mxu0 0.0
    %4532 = vmatpush1.xpose.msra.mxu0 0.0
    %4533 = vmatprep.subr.mxu0 0.0
    %4534 = vmatpush1.xpose.msra.mxu0 0.0
    %4535 = vmatprep.subr.mxu0 0.0
    %4536 = vmatpush1.xpose.msra.mxu0 0.0
    %4537 = vmatprep.subr.mxu0 0.0
    %4538 = vmatpush1.xpose.msra.mxu0 0.0
    %4539 = vmatprep.subr.mxu0 0.0
    %4540 = vmatpush1.xpose.msra.mxu0 0.0
    %4541 = vmatprep.subr.mxu0 0.0
    %4542 = vmatpush1.xpose.msra.mxu0 0.0
    %4543 = vmatprep.subr.mxu0 0.0
    %4544 = vmatpush1.xpose.msra.mxu0 0.0
    %4545 = vmatprep.subr.mxu0 0.0
    %4546 = vmatpush1.xpose.msra.mxu0 0.0
    %4547 = vmatprep.subr.mxu0 0.0
    %4548 = vmatpush1.xpose.msra.mxu0 0.0
    %4549 = vmatprep.subr.mxu0 0.0
    %4550 = vmatpush1.xpose.msra.mxu0 0.0
    %4551 = vmatprep.subr.mxu0 0.0
    %4552 = vmatpush1.xpose.msra.mxu0 0.0
    %4553 = vmatprep.subr.mxu0 0.0
    %4554 = vmatpush1.xpose.msra.mxu0 0.0
    %4555 = vmatprep.subr.mxu0 0.0
    %4556 = vmatpush1.xpose.msra.mxu0 0.0
    %4557 = vmatprep.subr.mxu0 0.0
    %4558 = vmatpush1.xpose.msra.mxu0 0.0
    %4559 = vmatprep.subr.mxu0 0.0
    %4560 = vmatpush1.xpose.msra.mxu0 0.0
    %4561 = vmatprep.mubr.f32.mxu0 0.0
    %v4562 = vand.u32 %v4491, 4294901760
    %v4563 = vsub.f32 %v4491, %v4562
    %v4564 = vand.u32 %v4563, 4294901760
    %v4565 = vsub.f32 %v4563, %v4564
    %v4566 = vand.u32 %v4565, 4294901760
    %4567 = vmatmul.mubr.f32.gmra.mrb[0].mxu0 %v4566
    %v4568 = vpop.f32.mrb[0].mxu0
    %v4569 = vadd.f32 0.0, %v4568
    %v4570 = vpop.f32.mrb[0].mxu0
    %4571 = vdwg.mxu0
    %4572 = vmatprep.subr.mxu0 0.0
    %v4573 = vand.u32 %v4494, 4294901760
    %v4574 = vsub.f32 %v4494, %v4573
    %v4575 = vand.u32 %v4574, 4294901760
    %v4576 = vsub.f32 %v4574, %v4575
    %v4577 = vand.u32 %v4576, 4294901760
    %4578 = vmatpush1.xpose.msra.mxu0 %v4577
    %4579 = vmatprep.subr.mxu0 0.0
    %4580 = vmatpush1.xpose.msra.mxu0 0.0
    %4581 = vmatprep.subr.mxu0 0.0
    %4582 = vmatpush1.xpose.msra.mxu0 0.0
    %4583 = vmatprep.subr.mxu0 0.0
    %4584 = vmatpush1.xpose.msra.mxu0 0.0
    %4585 = vmatprep.subr.mxu0 0.0
    %4586 = vmatpush1.xpose.msra.mxu0 0.0
    %4587 = vmatprep.subr.mxu0 0.0
    %4588 = vmatpush1.xpose.msra.mxu0 0.0
    %4589 = vmatprep.subr.mxu0 0.0
    %4590 = vmatpush1.xpose.msra.mxu0 0.0
    %4591 = vmatprep.subr.mxu0 0.0
    %4592 = vmatpush1.xpose.msra.mxu0 0.0
    %4593 = vmatprep.subr.mxu0 0.0
    %4594 = vmatpush1.xpose.msra.mxu0 0.0
    %4595 = vmatprep.subr.mxu0 0.0
    %4596 = vmatpush1.xpose.msra.mxu0 0.0
    %4597 = vmatprep.subr.mxu0 0.0
    %4598 = vmatpush1.xpose.msra.mxu0 0.0
    %4599 = vmatprep.subr.mxu0 0.0
    %4600 = vmatpush1.xpose.msra.mxu0 0.0
    %4601 = vmatprep.subr.mxu0 0.0
    %4602 = vmatpush1.xpose.msra.mxu0 0.0
    %4603 = vmatprep.subr.mxu0 0.0
    %4604 = vmatpush1.xpose.msra.mxu0 0.0
    %4605 = vmatprep.subr.mxu0 0.0
    %4606 = vmatpush1.xpose.msra.mxu0 0.0
    %4607 = vmatprep.subr.mxu0 0.0
    %4608 = vmatpush1.xpose.msra.mxu0 0.0
    %4609 = vmatprep.subr.mxu0 0.0
    %4610 = vmatpush1.xpose.msra.mxu0 0.0
    %4611 = vmatprep.subr.mxu0 0.0
    %4612 = vmatpush1.xpose.msra.mxu0 0.0
    %4613 = vmatprep.subr.mxu0 0.0
    %4614 = vmatpush1.xpose.msra.mxu0 0.0
    %4615 = vmatprep.subr.mxu0 0.0
    %4616 = vmatpush1.xpose.msra.mxu0 0.0
    %4617 = vmatprep.subr.mxu0 0.0
    %4618 = vmatpush1.xpose.msra.mxu0 0.0
    %4619 = vmatprep.subr.mxu0 0.0
    %4620 = vmatpush1.xpose.msra.mxu0 0.0
    %4621 = vmatprep.subr.mxu0 0.0
    %4622 = vmatpush1.xpose.msra.mxu0 0.0
    %4623 = vmatprep.subr.mxu0 0.0
    %4624 = vmatpush1.xpose.msra.mxu0 0.0
    %4625 = vmatprep.subr.mxu0 0.0
    %4626 = vmatpush1.xpose.msra.mxu0 0.0
    %4627 = vmatprep.subr.mxu0 0.0
    %4628 = vmatpush1.xpose.msra.mxu0 0.0
    %4629 = vmatprep.subr.mxu0 0.0
    %4630 = vmatpush1.xpose.msra.mxu0 0.0
    %4631 = vmatprep.subr.mxu0 0.0
    %4632 = vmatpush1.xpose.msra.mxu0 0.0
    %4633 = vmatprep.subr.mxu0 0.0
    %4634 = vmatpush1.xpose.msra.mxu0 0.0
    %4635 = vmatprep.subr.mxu0 0.0
    %4636 = vmatpush1.xpose.msra.mxu0 0.0
    %4637 = vmatprep.subr.mxu0 0.0
    %4638 = vmatpush1.xpose.msra.mxu0 0.0
    %4639 = vmatprep.subr.mxu0 0.0
    %4640 = vmatpush1.xpose.msra.mxu0 0.0
    %4641 = vmatprep.mubr.f32.mxu0 0.0
    %v4642 = vand.u32 %v4491, 4294901760
    %4643 = vmatmul.mubr.f32.gmra.mrb[0].mxu0 %v4642
    %v4644 = vpop.f32.mrb[0].mxu0
    %v4645 = vadd.f32 %v4569, %v4644
    %v4646 = vpop.f32.mrb[0].mxu0
    %4647 = vdwg.mxu0
    %4648 = vmatprep.subr.mxu0 0.0
    %v4649 = vand.u32 %v4494, 4294901760
    %v4650 = vsub.f32 %v4494, %v4649
    %4651 = vmatpush1.xpose.msra.mxu0 %v4650
    %4652 = vmatprep.subr.mxu0 0.0
    %4653 = vmatpush1.xpose.msra.mxu0 0.0
    %4654 = vmatprep.subr.mxu0 0.0
    %4655 = vmatpush1.xpose.msra.mxu0 0.0
    %4656 = vmatprep.subr.mxu0 0.0
    %4657 = vmatpush1.xpose.msra.mxu0 0.0
    %4658 = vmatprep.subr.mxu0 0.0
    %4659 = vmatpush1.xpose.msra.mxu0 0.0
    %4660 = vmatprep.subr.mxu0 0.0
    %4661 = vmatpush1.xpose.msra.mxu0 0.0
    %4662 = vmatprep.subr.mxu0 0.0
    %4663 = vmatpush1.xpose.msra.mxu0 0.0
    %4664 = vmatprep.subr.mxu0 0.0
    %4665 = vmatpush1.xpose.msra.mxu0 0.0
    %4666 = vmatprep.subr.mxu0 0.0
    %4667 = vmatpush1.xpose.msra.mxu0 0.0
    %4668 = vmatprep.subr.mxu0 0.0
    %4669 = vmatpush1.xpose.msra.mxu0 0.0
    %4670 = vmatprep.subr.mxu0 0.0
    %4671 = vmatpush1.xpose.msra.mxu0 0.0
    %4672 = vmatprep.subr.mxu0 0.0
    %4673 = vmatpush1.xpose.msra.mxu0 0.0
    %4674 = vmatprep.subr.mxu0 0.0
    %4675 = vmatpush1.xpose.msra.mxu0 0.0
    %4676 = vmatprep.subr.mxu0 0.0
    %4677 = vmatpush1.xpose.msra.mxu0 0.0
    %4678 = vmatprep.subr.mxu0 0.0
    %4679 = vmatpush1.xpose.msra.mxu0 0.0
    %4680 = vmatprep.subr.mxu0 0.0
    %4681 = vmatpush1.xpose.msra.mxu0 0.0
    %4682 = vmatprep.subr.mxu0 0.0
    %4683 = vmatpush1.xpose.msra.mxu0 0.0
    %4684 = vmatprep.subr.mxu0 0.0
    %4685 = vmatpush1.xpose.msra.mxu0 0.0
    %4686 = vmatprep.subr.mxu0 0.0
    %4687 = vmatpush1.xpose.msra.mxu0 0.0
    %4688 = vmatprep.subr.mxu0 0.0
    %4689 = vmatpush1.xpose.msra.mxu0 0.0
    %4690 = vmatprep.subr.mxu0 0.0
    %4691 = vmatpush1.xpose.msra.mxu0 0.0
    %4692 = vmatprep.subr.mxu0 0.0
    %4693 = vmatpush1.xpose.msra.mxu0 0.0
    %4694 = vmatprep.subr.mxu0 0.0
    %4695 = vmatpush1.xpose.msra.mxu0 0.0
    %4696 = vmatprep.subr.mxu0 0.0
    %4697 = vmatpush1.xpose.msra.mxu0 0.0
    %4698 = vmatprep.subr.mxu0 0.0
    %4699 = vmatpush1.xpose.msra.mxu0 0.0
    %4700 = vmatprep.subr.mxu0 0.0
    %4701 = vmatpush1.xpose.msra.mxu0 0.0
    %4702 = vmatprep.subr.mxu0 0.0
    %4703 = vmatpush1.xpose.msra.mxu0 0.0
    %4704 = vmatprep.subr.mxu0 0.0
    %4705 = vmatpush1.xpose.msra.mxu0 0.0
    %4706 = vmatprep.subr.mxu0 0.0
    %4707 = vmatpush1.xpose.msra.mxu0 0.0
    %4708 = vmatprep.subr.mxu0 0.0
    %4709 = vmatpush1.xpose.msra.mxu0 0.0
    %4710 = vmatprep.subr.mxu0 0.0
    %4711 = vmatpush1.xpose.msra.mxu0 0.0
    %4712 = vmatprep.subr.mxu0 0.0
    %4713 = vmatpush1.xpose.msra.mxu0 0.0
    %4714 = vmatprep.mubr.f32.mxu0 0.0
    %v4715 = vand.u32 %v4491, 4294901760
    %v4716 = vsub.f32 %v4491, %v4715
    %4717 = vmatmul.mubr.f32.gmra.mrb[0].mxu0 %v4716
    %v4718 = vpop.f32.mrb[0].mxu0
    %v4719 = vadd.f32 %v4645, %v4718
    %v4720 = vpop.f32.mrb[0].mxu0
    %4721 = vdwg.mxu0
    %4722 = vmatprep.subr.mxu0 0.0
    %v4723 = vand.u32 %v4494, 4294901760
    %4724 = vmatpush1.xpose.msra.mxu0 %v4723
    %4725 = vmatprep.subr.mxu0 0.0
    %4726 = vmatpush1.xpose.msra.mxu0 0.0
    %4727 = vmatprep.subr.mxu0 0.0
    %4728 = vmatpush1.xpose.msra.mxu0 0.0
    %4729 = vmatprep.subr.mxu0 0.0
    %4730 = vmatpush1.xpose.msra.mxu0 0.0
    %4731 = vmatprep.subr.mxu0 0.0
    %4732 = vmatpush1.xpose.msra.mxu0 0.0
    %4733 = vmatprep.subr.mxu0 0.0
    %4734 = vmatpush1.xpose.msra.mxu0 0.0
    %4735 = vmatprep.subr.mxu0 0.0
    %4736 = vmatpush1.xpose.msra.mxu0 0.0
    %4737 = vmatprep.subr.mxu0 0.0
    %4738 = vmatpush1.xpose.msra.mxu0 0.0
    %4739 = vmatprep.subr.mxu0 0.0
    %4740 = vmatpush1.xpose.msra.mxu0 0.0
    %4741 = vmatprep.subr.mxu0 0.0
    %4742 = vmatpush1.xpose.msra.mxu0 0.0
    %4743 = vmatprep.subr.mxu0 0.0
    %4744 = vmatpush1.xpose.msra.mxu0 0.0
    %4745 = vmatprep.subr.mxu0 0.0
    %4746 = vmatpush1.xpose.msra.mxu0 0.0
    %4747 = vmatprep.subr.mxu0 0.0
    %4748 = vmatpush1.xpose.msra.mxu0 0.0
    %4749 = vmatprep.subr.mxu0 0.0
    %4750 = vmatpush1.xpose.msra.mxu0 0.0
    %4751 = vmatprep.subr.mxu0 0.0
    %4752 = vmatpush1.xpose.msra.mxu0 0.0
    %4753 = vmatprep.subr.mxu0 0.0
    %4754 = vmatpush1.xpose.msra.mxu0 0.0
    %4755 = vmatprep.subr.mxu0 0.0
    %4756 = vmatpush1.xpose.msra.mxu0 0.0
    %4757 = vmatprep.subr.mxu0 0.0
    %4758 = vmatpush1.xpose.msra.mxu0 0.0
    %4759 = vmatprep.subr.mxu0 0.0
    %4760 = vmatpush1.xpose.msra.mxu0 0.0
    %4761 = vmatprep.subr.mxu0 0.0
    %4762 = vmatpush1.xpose.msra.mxu0 0.0
    %4763 = vmatprep.subr.mxu0 0.0
    %4764 = vmatpush1.xpose.msra.mxu0 0.0
    %4765 = vmatprep.subr.mxu0 0.0
    %4766 = vmatpush1.xpose.msra.mxu0 0.0
    %4767 = vmatprep.subr.mxu0 0.0
    %4768 = vmatpush1.xpose.msra.mxu0 0.0
    %4769 = vmatprep.subr.mxu0 0.0
    %4770 = vmatpush1.xpose.msra.mxu0 0.0
    %4771 = vmatprep.subr.mxu0 0.0
    %4772 = vmatpush1.xpose.msra.mxu0 0.0
    %4773 = vmatprep.subr.mxu0 0.0
    %4774 = vmatpush1.xpose.msra.mxu0 0.0
    %4775 = vmatprep.subr.mxu0 0.0
    %4776 = vmatpush1.xpose.msra.mxu0 0.0
    %4777 = vmatprep.subr.mxu0 0.0
    %4778 = vmatpush1.xpose.msra.mxu0 0.0
    %4779 = vmatprep.subr.mxu0 0.0
    %4780 = vmatpush1.xpose.msra.mxu0 0.0
    %4781 = vmatprep.subr.mxu0 0.0
    %4782 = vmatpush1.xpose.msra.mxu0 0.0
    %4783 = vmatprep.subr.mxu0 0.0
    %4784 = vmatpush1.xpose.msra.mxu0 0.0
    %4785 = vmatprep.subr.mxu0 0.0
    %4786 = vmatpush1.xpose.msra.mxu0 0.0
    %4787 = vmatprep.mubr.f32.mxu0 0.0
    %v4788 = vand.u32 %v4491, 4294901760
    %v4789 = vsub.f32 %v4491, %v4788
    %v4790 = vand.u32 %v4789, 4294901760
    %4791 = vmatmul.mubr.f32.gmra.mrb[0].mxu0 %v4790
    %v4792 = vpop.f32.mrb[0].mxu0
    %v4793 = vadd.f32 %v4719, %v4792
    %v4794 = vpop.f32.mrb[0].mxu0
    %4795 = vdwg.mxu0
    %4796 = vmatprep.subr.mxu0 0.0
    %v4797 = vand.u32 %v4494, 4294901760
    %v4798 = vsub.f32 %v4494, %v4797
    %v4799 = vand.u32 %v4798, 4294901760
    %4800 = vmatpush1.xpose.msra.mxu0 %v4799
    %4801 = vmatprep.subr.mxu0 0.0
    %4802 = vmatpush1.xpose.msra.mxu0 0.0
    %4803 = vmatprep.subr.mxu0 0.0
    %4804 = vmatpush1.xpose.msra.mxu0 0.0
    %4805 = vmatprep.subr.mxu0 0.0
    %4806 = vmatpush1.xpose.msra.mxu0 0.0
    %4807 = vmatprep.subr.mxu0 0.0
    %4808 = vmatpush1.xpose.msra.mxu0 0.0
    %4809 = vmatprep.subr.mxu0 0.0
    %4810 = vmatpush1.xpose.msra.mxu0 0.0
    %4811 = vmatprep.subr.mxu0 0.0
    %4812 = vmatpush1.xpose.msra.mxu0 0.0
    %4813 = vmatprep.subr.mxu0 0.0
    %4814 = vmatpush1.xpose.msra.mxu0 0.0
    %4815 = vmatprep.subr.mxu0 0.0
    %4816 = vmatpush1.xpose.msra.mxu0 0.0
    %4817 = vmatprep.subr.mxu0 0.0
    %4818 = vmatpush1.xpose.msra.mxu0 0.0
    %4819 = vmatprep.subr.mxu0 0.0
    %4820 = vmatpush1.xpose.msra.mxu0 0.0
    %4821 = vmatprep.subr.mxu0 0.0
    %4822 = vmatpush1.xpose.msra.mxu0 0.0
    %4823 = vmatprep.subr.mxu0 0.0
    %4824 = vmatpush1.xpose.msra.mxu0 0.0
    %4825 = vmatprep.subr.mxu0 0.0
    %4826 = vmatpush1.xpose.msra.mxu0 0.0
    %4827 = vmatprep.subr.mxu0 0.0
    %4828 = vmatpush1.xpose.msra.mxu0 0.0
    %4829 = vmatprep.subr.mxu0 0.0
    %4830 = vmatpush1.xpose.msra.mxu0 0.0
    %4831 = vmatprep.subr.mxu0 0.0
    %4832 = vmatpush1.xpose.msra.mxu0 0.0
    %4833 = vmatprep.subr.mxu0 0.0
    %4834 = vmatpush1.xpose.msra.mxu0 0.0
    %4835 = vmatprep.subr.mxu0 0.0
    %4836 = vmatpush1.xpose.msra.mxu0 0.0
    %4837 = vmatprep.subr.mxu0 0.0
    %4838 = vmatpush1.xpose.msra.mxu0 0.0
    %4839 = vmatprep.subr.mxu0 0.0
    %4840 = vmatpush1.xpose.msra.mxu0 0.0
    %4841 = vmatprep.subr.mxu0 0.0
    %4842 = vmatpush1.xpose.msra.mxu0 0.0
    %4843 = vmatprep.subr.mxu0 0.0
    %4844 = vmatpush1.xpose.msra.mxu0 0.0
    %4845 = vmatprep.subr.mxu0 0.0
    %4846 = vmatpush1.xpose.msra.mxu0 0.0
    %4847 = vmatprep.subr.mxu0 0.0
    %4848 = vmatpush1.xpose.msra.mxu0 0.0
    %4849 = vmatprep.subr.mxu0 0.0
    %4850 = vmatpush1.xpose.msra.mxu0 0.0
    %4851 = vmatprep.subr.mxu0 0.0
    %4852 = vmatpush1.xpose.msra.mxu0 0.0
    %4853 = vmatprep.subr.mxu0 0.0
    %4854 = vmatpush1.xpose.msra.mxu0 0.0
    %4855 = vmatprep.subr.mxu0 0.0
    %4856 = vmatpush1.xpose.msra.mxu0 0.0
    %4857 = vmatprep.subr.mxu0 0.0
    %4858 = vmatpush1.xpose.msra.mxu0 0.0
    %4859 = vmatprep.subr.mxu0 0.0
    %4860 = vmatpush1.xpose.msra.mxu0 0.0
    %4861 = vmatprep.subr.mxu0 0.0
    %4862 = vmatpush1.xpose.msra.mxu0 0.0
    %4863 = vmatprep.mubr.f32.mxu0 0.0
    %v4864 = vand.u32 %v4491, 4294901760
    %4865 = vmatmul.mubr.f32.gmra.mrb[0].mxu0 %v4864
    %v4866 = vpop.f32.mrb[0].mxu0
    %v4867 = vadd.f32 %v4793, %v4866
    %v4868 = vpop.f32.mrb[0].mxu0
    %4869 = vdwg.mxu0
    %4870 = vmatprep.subr.mxu0 0.0
    %v4871 = vand.u32 %v4494, 4294901760
    %4872 = vmatpush1.xpose.msra.mxu0 %v4871
    %4873 = vmatprep.subr.mxu0 0.0
    %4874 = vmatpush1.xpose.msra.mxu0 0.0
    %4875 = vmatprep.subr.mxu0 0.0
    %4876 = vmatpush1.xpose.msra.mxu0 0.0
    %4877 = vmatprep.subr.mxu0 0.0
    %4878 = vmatpush1.xpose.msra.mxu0 0.0
    %4879 = vmatprep.subr.mxu0 0.0
    %4880 = vmatpush1.xpose.msra.mxu0 0.0
    %4881 = vmatprep.subr.mxu0 0.0
    %4882 = vmatpush1.xpose.msra.mxu0 0.0
    %4883 = vmatprep.subr.mxu0 0.0
    %4884 = vmatpush1.xpose.msra.mxu0 0.0
    %4885 = vmatprep.subr.mxu0 0.0
    %4886 = vmatpush1.xpose.msra.mxu0 0.0
    %4887 = vmatprep.subr.mxu0 0.0
    %4888 = vmatpush1.xpose.msra.mxu0 0.0
    %4889 = vmatprep.subr.mxu0 0.0
    %4890 = vmatpush1.xpose.msra.mxu0 0.0
    %4891 = vmatprep.subr.mxu0 0.0
    %4892 = vmatpush1.xpose.msra.mxu0 0.0
    %4893 = vmatprep.subr.mxu0 0.0
    %4894 = vmatpush1.xpose.msra.mxu0 0.0
    %4895 = vmatprep.subr.mxu0 0.0
    %4896 = vmatpush1.xpose.msra.mxu0 0.0
    %4897 = vmatprep.subr.mxu0 0.0
    %4898 = vmatpush1.xpose.msra.mxu0 0.0
    %4899 = vmatprep.subr.mxu0 0.0
    %4900 = vmatpush1.xpose.msra.mxu0 0.0
    %4901 = vmatprep.subr.mxu0 0.0
    %4902 = vmatpush1.xpose.msra.mxu0 0.0
    %4903 = vmatprep.subr.mxu0 0.0
    %4904 = vmatpush1.xpose.msra.mxu0 0.0
    %4905 = vmatprep.subr.mxu0 0.0
    %4906 = vmatpush1.xpose.msra.mxu0 0.0
    %4907 = vmatprep.subr.mxu0 0.0
    %4908 = vmatpush1.xpose.msra.mxu0 0.0
    %4909 = vmatprep.subr.mxu0 0.0
    %4910 = vmatpush1.xpose.msra.mxu0 0.0
    %4911 = vmatprep.subr.mxu0 0.0
    %4912 = vmatpush1.xpose.msra.mxu0 0.0
    %4913 = vmatprep.subr.mxu0 0.0
    %4914 = vmatpush1.xpose.msra.mxu0 0.0
    %4915 = vmatprep.subr.mxu0 0.0
    %4916 = vmatpush1.xpose.msra.mxu0 0.0
    %4917 = vmatprep.subr.mxu0 0.0
    %4918 = vmatpush1.xpose.msra.mxu0 0.0
    %4919 = vmatprep.subr.mxu0 0.0
    %4920 = vmatpush1.xpose.msra.mxu0 0.0
    %4921 = vmatprep.subr.mxu0 0.0
    %4922 = vmatpush1.xpose.msra.mxu0 0.0
    %4923 = vmatprep.subr.mxu0 0.0
    %4924 = vmatpush1.xpose.msra.mxu0 0.0
    %4925 = vmatprep.subr.mxu0 0.0
    %4926 = vmatpush1.xpose.msra.mxu0 0.0
    %4927 = vmatprep.subr.mxu0 0.0
    %4928 = vmatpush1.xpose.msra.mxu0 0.0
    %4929 = vmatprep.subr.mxu0 0.0
    %4930 = vmatpush1.xpose.msra.mxu0 0.0
    %4931 = vmatprep.subr.mxu0 0.0
    %4932 = vmatpush1.xpose.msra.mxu0 0.0
    %4933 = vmatprep.subr.mxu0 0.0
    %4934 = vmatpush1.xpose.msra.mxu0 0.0
    %4935 = vmatprep.mubr.f32.mxu0 0.0
    %v4936 = vand.u32 %v4491, 4294901760
    %4937 = vmatmul.mubr.f32.gmra.mrb[0].mxu0 %v4936
    %v4938 = vpop.f32.mrb[0].mxu0
    %v4939 = vadd.f32 %v4867, %v4938
    %v4940 = vpop.f32.mrb[0].mxu0
    %4941 = vdwg.mxu0
    %v4942 = vsel %vm2033, %v4487, -inf
    %4943 = vmax.xlane.f32.xlu0 %v4942
    %v4944 = vpop.xlane.xlu0 %4943
    %v4945 = vsel %vm2033, %v4939, -inf
    %4946 = vmax.xlane.f32.xlu0 %v4945
    %v4947 = vpop.xlane.xlu0 %4946
    %v4948 = vsub.f32 %v4487, %v4944
    %v4949 = vsub.f32 %v4939, %v4947
    %v4950 = vmul.f32 %v4948, 1.442695
    %v4951 = vpow.pop %v4950
    %v4952 = vmul.f32 %v4949, 1.442695
    %v4953 = vpow.pop %v4952
    %v4954 = vsel %vm2033, %v4951, 0.0
    %4955 = vadd.xlane.f32.xlu0 %v4954
    %v4956 = vpop.xlane.xlu0 %4955
    %v4957 = vsel %vm2033, %v4953, 0.0
    %4958 = vadd.xlane.f32.xlu0 %v4957
    %v4959 = vpop.xlane.xlu0 %4958
    %v4960 = vrcp.pop %v4956
    %v4961 = vrcp.pop %v4959
    %v4962 = vmul.f32 %v4951, %v4960
    %v4963 = vmul.f32 %v4953, %v4961
    %s4964 = scalar_lea.vmem [#allocation4], 16
    %4965 = vst.msk [vmem:[%s4964] sm:$0xff] %vm2033, %v4962
    %4966 = vst.msk [vmem:[%s4964 + $0x8] sm:$0xff] %vm2033, %v4963
    %v4968 = vsel %vm2033, %v4962, 0
    %4970 = vmatprep.subr.mxu0 0.0
    %v4971 = vand.u32 %v3488, 4294901760
    %4972 = vmatpush1.msra.mxu0 %v4971
    %4973 = vmatprep.subr.mxu0 0.0
    %4974 = vmatpush1.msra.mxu0 0.0
    %4975 = vmatprep.subr.mxu0 0.0
    %4976 = vmatpush1.msra.mxu0 0.0
    %4977 = vmatprep.subr.mxu0 0.0
    %4978 = vmatpush1.msra.mxu0 0.0
    %4979 = vmatprep.subr.mxu0 0.0
    %4980 = vmatpush1.msra.mxu0 0.0
    %4981 = vmatprep.subr.mxu0 0.0
    %4982 = vmatpush1.msra.mxu0 0.0
    %4983 = vmatprep.subr.mxu0 0.0
    %4984 = vmatpush1.msra.mxu0 0.0
    %4985 = vmatprep.subr.mxu0 0.0
    %4986 = vmatpush1.msra.mxu0 0.0
    %4987 = vmatprep.subr.mxu0 0.0
    %4988 = vmatpush1.msra.mxu0 0.0
    %4989 = vmatprep.subr.mxu0 0.0
    %4990 = vmatpush1.msra.mxu0 0.0
    %4991 = vmatprep.subr.mxu0 0.0
    %4992 = vmatpush1.msra.mxu0 0.0
    %4993 = vmatprep.subr.mxu0 0.0
    %4994 = vmatpush1.msra.mxu0 0.0
    %4995 = vmatprep.subr.mxu0 0.0
    %4996 = vmatpush1.msra.mxu0 0.0
    %4997 = vmatprep.subr.mxu0 0.0
    %4998 = vmatpush1.msra.mxu0 0.0
    %4999 = vmatprep.subr.mxu0 0.0
    %5000 = vmatpush1.msra.mxu0 0.0
    %5001 = vmatprep.subr.mxu0 0.0
    %5002 = vmatpush1.msra.mxu0 0.0
    %5003 = vmatprep.subr.mxu0 0.0
    %5004 = vmatpush1.msra.mxu0 0.0
    %5005 = vmatprep.subr.mxu0 0.0
    %5006 = vmatpush1.msra.mxu0 0.0
    %5007 = vmatprep.subr.mxu0 0.0
    %5008 = vmatpush1.msra.mxu0 0.0
    %5009 = vmatprep.subr.mxu0 0.0
    %5010 = vmatpush1.msra.mxu0 0.0
    %5011 = vmatprep.subr.mxu0 0.0
    %5012 = vmatpush1.msra.mxu0 0.0
    %5013 = vmatprep.subr.mxu0 0.0
    %5014 = vmatpush1.msra.mxu0 0.0
    %5015 = vmatprep.subr.mxu0 0.0
    %5016 = vmatpush1.msra.mxu0 0.0
    %5017 = vmatprep.subr.mxu0 0.0
    %5018 = vmatpush1.msra.mxu0 0.0
    %5019 = vmatprep.subr.mxu0 0.0
    %5020 = vmatpush1.msra.mxu0 0.0
    %5021 = vmatprep.subr.mxu0 0.0
    %5022 = vmatpush1.msra.mxu0 0.0
    %5023 = vmatprep.subr.mxu0 0.0
    %5024 = vmatpush1.msra.mxu0 0.0
    %5025 = vmatprep.subr.mxu0 0.0
    %5026 = vmatpush1.msra.mxu0 0.0
    %5027 = vmatprep.subr.mxu0 0.0
    %5028 = vmatpush1.msra.mxu0 0.0
    %5029 = vmatprep.subr.mxu0 0.0
    %5030 = vmatpush1.msra.mxu0 0.0
    %5031 = vmatprep.subr.mxu0 0.0
    %5032 = vmatpush1.msra.mxu0 0.0
    %5033 = vmatprep.subr.mxu0 0.0
    %5034 = vmatpush1.msra.mxu0 0.0
    %5035 = vmatprep.mubr.f32.mxu0 0.0
    %v5036 = vand.u32 %v4968, 4294901760
    %v5037 = vsub.f32 %v4968, %v5036
    %v5038 = vand.u32 %v5037, 4294901760
    %v5039 = vsub.f32 %v5037, %v5038
    %v5040 = vand.u32 %v5039, 4294901760
    %5041 = vmatmul.mubr.f32.gmra.mrb[0].mxu0 %v5040
    %v5042 = vpop.f32.mrb[0].mxu0
    %v5043 = vadd.f32 0.0, %v5042
    %v5044 = vpop.f32.mrb[0].mxu0
    %5045 = vdwg.mxu0
    %5046 = vmatprep.subr.mxu0 0.0
    %v5047 = vand.u32 %v3488, 4294901760
    %v5048 = vsub.f32 %v3488, %v5047
    %v5049 = vand.u32 %v5048, 4294901760
    %v5050 = vsub.f32 %v5048, %v5049
    %v5051 = vand.u32 %v5050, 4294901760
    %5052 = vmatpush1.msra.mxu0 %v5051
    %5053 = vmatprep.subr.mxu0 0.0
    %5054 = vmatpush1.msra.mxu0 0.0
    %5055 = vmatprep.subr.mxu0 0.0
    %5056 = vmatpush1.msra.mxu0 0.0
    %5057 = vmatprep.subr.mxu0 0.0
    %5058 = vmatpush1.msra.mxu0 0.0
    %5059 = vmatprep.subr.mxu0 0.0
    %5060 = vmatpush1.msra.mxu0 0.0
    %5061 = vmatprep.subr.mxu0 0.0
    %5062 = vmatpush1.msra.mxu0 0.0
    %5063 = vmatprep.subr.mxu0 0.0
    %5064 = vmatpush1.msra.mxu0 0.0
    %5065 = vmatprep.subr.mxu0 0.0
    %5066 = vmatpush1.msra.mxu0 0.0
    %5067 = vmatprep.subr.mxu0 0.0
    %5068 = vmatpush1.msra.mxu0 0.0
    %5069 = vmatprep.subr.mxu0 0.0
    %5070 = vmatpush1.msra.mxu0 0.0
    %5071 = vmatprep.subr.mxu0 0.0
    %5072 = vmatpush1.msra.mxu0 0.0
    %5073 = vmatprep.subr.mxu0 0.0
    %5074 = vmatpush1.msra.mxu0 0.0
    %5075 = vmatprep.subr.mxu0 0.0
    %5076 = vmatpush1.msra.mxu0 0.0
    %5077 = vmatprep.subr.mxu0 0.0
    %5078 = vmatpush1.msra.mxu0 0.0
    %5079 = vmatprep.subr.mxu0 0.0
    %5080 = vmatpush1.msra.mxu0 0.0
    %5081 = vmatprep.subr.mxu0 0.0
    %5082 = vmatpush1.msra.mxu0 0.0
    %5083 = vmatprep.subr.mxu0 0.0
    %5084 = vmatpush1.msra.mxu0 0.0
    %5085 = vmatprep.subr.mxu0 0.0
    %5086 = vmatpush1.msra.mxu0 0.0
    %5087 = vmatprep.subr.mxu0 0.0
    %5088 = vmatpush1.msra.mxu0 0.0
    %5089 = vmatprep.subr.mxu0 0.0
    %5090 = vmatpush1.msra.mxu0 0.0
    %5091 = vmatprep.subr.mxu0 0.0
    %5092 = vmatpush1.msra.mxu0 0.0
    %5093 = vmatprep.subr.mxu0 0.0
    %5094 = vmatpush1.msra.mxu0 0.0
    %5095 = vmatprep.subr.mxu0 0.0
    %5096 = vmatpush1.msra.mxu0 0.0
    %5097 = vmatprep.subr.mxu0 0.0
    %5098 = vmatpush1.msra.mxu0 0.0
    %5099 = vmatprep.subr.mxu0 0.0
    %5100 = vmatpush1.msra.mxu0 0.0
    %5101 = vmatprep.subr.mxu0 0.0
    %5102 = vmatpush1.msra.mxu0 0.0
    %5103 = vmatprep.subr.mxu0 0.0
    %5104 = vmatpush1.msra.mxu0 0.0
    %5105 = vmatprep.subr.mxu0 0.0
    %5106 = vmatpush1.msra.mxu0 0.0
    %5107 = vmatprep.subr.mxu0 0.0
    %5108 = vmatpush1.msra.mxu0 0.0
    %5109 = vmatprep.subr.mxu0 0.0
    %5110 = vmatpush1.msra.mxu0 0.0
    %5111 = vmatprep.subr.mxu0 0.0
    %5112 = vmatpush1.msra.mxu0 0.0
    %5113 = vmatprep.subr.mxu0 0.0
    %5114 = vmatpush1.msra.mxu0 0.0
    %5115 = vmatprep.mubr.f32.mxu0 0.0
    %v5116 = vand.u32 %v4968, 4294901760
    %5117 = vmatmul.mubr.f32.gmra.mrb[0].mxu0 %v5116
    %v5118 = vpop.f32.mrb[0].mxu0
    %v5119 = vadd.f32 %v5043, %v5118
    %v5120 = vpop.f32.mrb[0].mxu0
    %5121 = vdwg.mxu0
    %5122 = vmatprep.subr.mxu0 0.0
    %v5123 = vand.u32 %v3488, 4294901760
    %v5124 = vsub.f32 %v3488, %v5123
    %5125 = vmatpush1.msra.mxu0 %v5124
    %5126 = vmatprep.subr.mxu0 0.0
    %5127 = vmatpush1.msra.mxu0 0.0
    %5128 = vmatprep.subr.mxu0 0.0
    %5129 = vmatpush1.msra.mxu0 0.0
    %5130 = vmatprep.subr.mxu0 0.0
    %5131 = vmatpush1.msra.mxu0 0.0
    %5132 = vmatprep.subr.mxu0 0.0
    %5133 = vmatpush1.msra.mxu0 0.0
    %5134 = vmatprep.subr.mxu0 0.0
    %5135 = vmatpush1.msra.mxu0 0.0
    %5136 = vmatprep.subr.mxu0 0.0
    %5137 = vmatpush1.msra.mxu0 0.0
    %5138 = vmatprep.subr.mxu0 0.0
    %5139 = vmatpush1.msra.mxu0 0.0
    %5140 = vmatprep.subr.mxu0 0.0
    %5141 = vmatpush1.msra.mxu0 0.0
    %5142 = vmatprep.subr.mxu0 0.0
    %5143 = vmatpush1.msra.mxu0 0.0
    %5144 = vmatprep.subr.mxu0 0.0
    %5145 = vmatpush1.msra.mxu0 0.0
    %5146 = vmatprep.subr.mxu0 0.0
    %5147 = vmatpush1.msra.mxu0 0.0
    %5148 = vmatprep.subr.mxu0 0.0
    %5149 = vmatpush1.msra.mxu0 0.0
    %5150 = vmatprep.subr.mxu0 0.0
    %5151 = vmatpush1.msra.mxu0 0.0
    %5152 = vmatprep.subr.mxu0 0.0
    %5153 = vmatpush1.msra.mxu0 0.0
    %5154 = vmatprep.subr.mxu0 0.0
    %5155 = vmatpush1.msra.mxu0 0.0
    %5156 = vmatprep.subr.mxu0 0.0
    %5157 = vmatpush1.msra.mxu0 0.0
    %5158 = vmatprep.subr.mxu0 0.0
    %5159 = vmatpush1.msra.mxu0 0.0
    %5160 = vmatprep.subr.mxu0 0.0
    %5161 = vmatpush1.msra.mxu0 0.0
    %5162 = vmatprep.subr.mxu0 0.0
    %5163 = vmatpush1.msra.mxu0 0.0
    %5164 = vmatprep.subr.mxu0 0.0
    %5165 = vmatpush1.msra.mxu0 0.0
    %5166 = vmatprep.subr.mxu0 0.0
    %5167 = vmatpush1.msra.mxu0 0.0
    %5168 = vmatprep.subr.mxu0 0.0
    %5169 = vmatpush1.msra.mxu0 0.0
    %5170 = vmatprep.subr.mxu0 0.0
    %5171 = vmatpush1.msra.mxu0 0.0
    %5172 = vmatprep.subr.mxu0 0.0
    %5173 = vmatpush1.msra.mxu0 0.0
    %5174 = vmatprep.subr.mxu0 0.0
    %5175 = vmatpush1.msra.mxu0 0.0
    %5176 = vmatprep.subr.mxu0 0.0
    %5177 = vmatpush1.msra.mxu0 0.0
    %5178 = vmatprep.subr.mxu0 0.0
    %5179 = vmatpush1.msra.mxu0 0.0
    %5180 = vmatprep.subr.mxu0 0.0
    %5181 = vmatpush1.msra.mxu0 0.0
    %5182 = vmatprep.subr.mxu0 0.0
    %5183 = vmatpush1.msra.mxu0 0.0
    %5184 = vmatprep.subr.mxu0 0.0
    %5185 = vmatpush1.msra.mxu0 0.0
    %5186 = vmatprep.subr.mxu0 0.0
    %5187 = vmatpush1.msra.mxu0 0.0
    %5188 = vmatprep.mubr.f32.mxu0 0.0
    %v5189 = vand.u32 %v4968, 4294901760
    %v5190 = vsub.f32 %v4968, %v5189
    %5191 = vmatmul.mubr.f32.gmra.mrb[0].mxu0 %v5190
    %v5192 = vpop.f32.mrb[0].mxu0
    %v5193 = vadd.f32 %v5119, %v5192
    %v5194 = vpop.f32.mrb[0].mxu0
    %5195 = vdwg.mxu0
    %5196 = vmatprep.subr.mxu0 0.0
    %v5197 = vand.u32 %v3488, 4294901760
    %5198 = vmatpush1.msra.mxu0 %v5197
    %5199 = vmatprep.subr.mxu0 0.0
    %5200 = vmatpush1.msra.mxu0 0.0
    %5201 = vmatprep.subr.mxu0 0.0
    %5202 = vmatpush1.msra.mxu0 0.0
    %5203 = vmatprep.subr.mxu0 0.0
    %5204 = vmatpush1.msra.mxu0 0.0
    %5205 = vmatprep.subr.mxu0 0.0
    %5206 = vmatpush1.msra.mxu0 0.0
    %5207 = vmatprep.subr.mxu0 0.0
    %5208 = vmatpush1.msra.mxu0 0.0
    %5209 = vmatprep.subr.mxu0 0.0
    %5210 = vmatpush1.msra.mxu0 0.0
    %5211 = vmatprep.subr.mxu0 0.0
    %5212 = vmatpush1.msra.mxu0 0.0
    %5213 = vmatprep.subr.mxu0 0.0
    %5214 = vmatpush1.msra.mxu0 0.0
    %5215 = vmatprep.subr.mxu0 0.0
    %5216 = vmatpush1.msra.mxu0 0.0
    %5217 = vmatprep.subr.mxu0 0.0
    %5218 = vmatpush1.msra.mxu0 0.0
    %5219 = vmatprep.subr.mxu0 0.0
    %5220 = vmatpush1.msra.mxu0 0.0
    %5221 = vmatprep.subr.mxu0 0.0
    %5222 = vmatpush1.msra.mxu0 0.0
    %5223 = vmatprep.subr.mxu0 0.0
    %5224 = vmatpush1.msra.mxu0 0.0
    %5225 = vmatprep.subr.mxu0 0.0
    %5226 = vmatpush1.msra.mxu0 0.0
    %5227 = vmatprep.subr.mxu0 0.0
    %5228 = vmatpush1.msra.mxu0 0.0
    %5229 = vmatprep.subr.mxu0 0.0
    %5230 = vmatpush1.msra.mxu0 0.0
    %5231 = vmatprep.subr.mxu0 0.0
    %5232 = vmatpush1.msra.mxu0 0.0
    %5233 = vmatprep.subr.mxu0 0.0
    %5234 = vmatpush1.msra.mxu0 0.0
    %5235 = vmatprep.subr.mxu0 0.0
    %5236 = vmatpush1.msra.mxu0 0.0
    %5237 = vmatprep.subr.mxu0 0.0
    %5238 = vmatpush1.msra.mxu0 0.0
    %5239 = vmatprep.subr.mxu0 0.0
    %5240 = vmatpush1.msra.mxu0 0.0
    %5241 = vmatprep.subr.mxu0 0.0
    %5242 = vmatpush1.msra.mxu0 0.0
    %5243 = vmatprep.subr.mxu0 0.0
    %5244 = vmatpush1.msra.mxu0 0.0
    %5245 = vmatprep.subr.mxu0 0.0
    %5246 = vmatpush1.msra.mxu0 0.0
    %5247 = vmatprep.subr.mxu0 0.0
    %5248 = vmatpush1.msra.mxu0 0.0
    %5249 = vmatprep.subr.mxu0 0.0
    %5250 = vmatpush1.msra.mxu0 0.0
    %5251 = vmatprep.subr.mxu0 0.0
    %5252 = vmatpush1.msra.mxu0 0.0
    %5253 = vmatprep.subr.mxu0 0.0
    %5254 = vmatpush1.msra.mxu0 0.0
    %5255 = vmatprep.subr.mxu0 0.0
    %5256 = vmatpush1.msra.mxu0 0.0
    %5257 = vmatprep.subr.mxu0 0.0
    %5258 = vmatpush1.msra.mxu0 0.0
    %5259 = vmatprep.subr.mxu0 0.0
    %5260 = vmatpush1.msra.mxu0 0.0
    %5261 = vmatprep.mubr.f32.mxu0 0.0
    %v5262 = vand.u32 %v4968, 4294901760
    %v5263 = vsub.f32 %v4968, %v5262
    %v5264 = vand.u32 %v5263, 4294901760
    %5265 = vmatmul.mubr.f32.gmra.mrb[0].mxu0 %v5264
    %v5266 = vpop.f32.mrb[0].mxu0
    %v5267 = vadd.f32 %v5193, %v5266
    %v5268 = vpop.f32.mrb[0].mxu0
    %5269 = vdwg.mxu0
    %5270 = vmatprep.subr.mxu0 0.0
    %v5271 = vand.u32 %v3488, 4294901760
    %v5272 = vsub.f32 %v3488, %v5271
    %v5273 = vand.u32 %v5272, 4294901760
    %5274 = vmatpush1.msra.mxu0 %v5273
    %5275 = vmatprep.subr.mxu0 0.0
    %5276 = vmatpush1.msra.mxu0 0.0
    %5277 = vmatprep.subr.mxu0 0.0
    %5278 = vmatpush1.msra.mxu0 0.0
    %5279 = vmatprep.subr.mxu0 0.0
    %5280 = vmatpush1.msra.mxu0 0.0
    %5281 = vmatprep.subr.mxu0 0.0
    %5282 = vmatpush1.msra.mxu0 0.0
    %5283 = vmatprep.subr.mxu0 0.0
    %5284 = vmatpush1.msra.mxu0 0.0
    %5285 = vmatprep.subr.mxu0 0.0
    %5286 = vmatpush1.msra.mxu0 0.0
    %5287 = vmatprep.subr.mxu0 0.0
    %5288 = vmatpush1.msra.mxu0 0.0
    %5289 = vmatprep.subr.mxu0 0.0
    %5290 = vmatpush1.msra.mxu0 0.0
    %5291 = vmatprep.subr.mxu0 0.0
    %5292 = vmatpush1.msra.mxu0 0.0
    %5293 = vmatprep.subr.mxu0 0.0
    %5294 = vmatpush1.msra.mxu0 0.0
    %5295 = vmatprep.subr.mxu0 0.0
    %5296 = vmatpush1.msra.mxu0 0.0
    %5297 = vmatprep.subr.mxu0 0.0
    %5298 = vmatpush1.msra.mxu0 0.0
    %5299 = vmatprep.subr.mxu0 0.0
    %5300 = vmatpush1.msra.mxu0 0.0
    %5301 = vmatprep.subr.mxu0 0.0
    %5302 = vmatpush1.msra.mxu0 0.0
    %5303 = vmatprep.subr.mxu0 0.0
    %5304 = vmatpush1.msra.mxu0 0.0
    %5305 = vmatprep.subr.mxu0 0.0
    %5306 = vmatpush1.msra.mxu0 0.0
    %5307 = vmatprep.subr.mxu0 0.0
    %5308 = vmatpush1.msra.mxu0 0.0
    %5309 = vmatprep.subr.mxu0 0.0
    %5310 = vmatpush1.msra.mxu0 0.0
    %5311 = vmatprep.subr.mxu0 0.0
    %5312 = vmatpush1.msra.mxu0 0.0
    %5313 = vmatprep.subr.mxu0 0.0
    %5314 = vmatpush1.msra.mxu0 0.0
    %5315 = vmatprep.subr.mxu0 0.0
    %5316 = vmatpush1.msra.mxu0 0.0
    %5317 = vmatprep.subr.mxu0 0.0
    %5318 = vmatpush1.msra.mxu0 0.0
    %5319 = vmatprep.subr.mxu0 0.0
    %5320 = vmatpush1.msra.mxu0 0.0
    %5321 = vmatprep.subr.mxu0 0.0
    %5322 = vmatpush1.msra.mxu0 0.0
    %5323 = vmatprep.subr.mxu0 0.0
    %5324 = vmatpush1.msra.mxu0 0.0
    %5325 = vmatprep.subr.mxu0 0.0
    %5326 = vmatpush1.msra.mxu0 0.0
    %5327 = vmatprep.subr.mxu0 0.0
    %5328 = vmatpush1.msra.mxu0 0.0
    %5329 = vmatprep.subr.mxu0 0.0
    %5330 = vmatpush1.msra.mxu0 0.0
    %5331 = vmatprep.subr.mxu0 0.0
    %5332 = vmatpush1.msra.mxu0 0.0
    %5333 = vmatprep.subr.mxu0 0.0
    %5334 = vmatpush1.msra.mxu0 0.0
    %5335 = vmatprep.subr.mxu0 0.0
    %5336 = vmatpush1.msra.mxu0 0.0
    %5337 = vmatprep.mubr.f32.mxu0 0.0
    %v5338 = vand.u32 %v4968, 4294901760
    %5339 = vmatmul.mubr.f32.gmra.mrb[0].mxu0 %v5338
    %v5340 = vpop.f32.mrb[0].mxu0
    %v5341 = vadd.f32 %v5267, %v5340
    %v5342 = vpop.f32.mrb[0].mxu0
    %5343 = vdwg.mxu0
    %5344 = vmatprep.subr.mxu0 0.0
    %v5345 = vand.u32 %v3488, 4294901760
    %5346 = vmatpush1.msra.mxu0 %v5345
    %5347 = vmatprep.subr.mxu0 0.0
    %5348 = vmatpush1.msra.mxu0 0.0
    %5349 = vmatprep.subr.mxu0 0.0
    %5350 = vmatpush1.msra.mxu0 0.0
    %5351 = vmatprep.subr.mxu0 0.0
    %5352 = vmatpush1.msra.mxu0 0.0
    %5353 = vmatprep.subr.mxu0 0.0
    %5354 = vmatpush1.msra.mxu0 0.0
    %5355 = vmatprep.subr.mxu0 0.0
    %5356 = vmatpush1.msra.mxu0 0.0
    %5357 = vmatprep.subr.mxu0 0.0
    %5358 = vmatpush1.msra.mxu0 0.0
    %5359 = vmatprep.subr.mxu0 0.0
    %5360 = vmatpush1.msra.mxu0 0.0
    %5361 = vmatprep.subr.mxu0 0.0
    %5362 = vmatpush1.msra.mxu0 0.0
    %5363 = vmatprep.subr.mxu0 0.0
    %5364 = vmatpush1.msra.mxu0 0.0
    %5365 = vmatprep.subr.mxu0 0.0
    %5366 = vmatpush1.msra.mxu0 0.0
    %5367 = vmatprep.subr.mxu0 0.0
    %5368 = vmatpush1.msra.mxu0 0.0
    %5369 = vmatprep.subr.mxu0 0.0
    %5370 = vmatpush1.msra.mxu0 0.0
    %5371 = vmatprep.subr.mxu0 0.0
    %5372 = vmatpush1.msra.mxu0 0.0
    %5373 = vmatprep.subr.mxu0 0.0
    %5374 = vmatpush1.msra.mxu0 0.0
    %5375 = vmatprep.subr.mxu0 0.0
    %5376 = vmatpush1.msra.mxu0 0.0
    %5377 = vmatprep.subr.mxu0 0.0
    %5378 = vmatpush1.msra.mxu0 0.0
    %5379 = vmatprep.subr.mxu0 0.0
    %5380 = vmatpush1.msra.mxu0 0.0
    %5381 = vmatprep.subr.mxu0 0.0
    %5382 = vmatpush1.msra.mxu0 0.0
    %5383 = vmatprep.subr.mxu0 0.0
    %5384 = vmatpush1.msra.mxu0 0.0
    %5385 = vmatprep.subr.mxu0 0.0
    %5386 = vmatpush1.msra.mxu0 0.0
    %5387 = vmatprep.subr.mxu0 0.0
    %5388 = vmatpush1.msra.mxu0 0.0
    %5389 = vmatprep.subr.mxu0 0.0
    %5390 = vmatpush1.msra.mxu0 0.0
    %5391 = vmatprep.subr.mxu0 0.0
    %5392 = vmatpush1.msra.mxu0 0.0
    %5393 = vmatprep.subr.mxu0 0.0
    %5394 = vmatpush1.msra.mxu0 0.0
    %5395 = vmatprep.subr.mxu0 0.0
    %5396 = vmatpush1.msra.mxu0 0.0
    %5397 = vmatprep.subr.mxu0 0.0
    %5398 = vmatpush1.msra.mxu0 0.0
    %5399 = vmatprep.subr.mxu0 0.0
    %5400 = vmatpush1.msra.mxu0 0.0
    %5401 = vmatprep.subr.mxu0 0.0
    %5402 = vmatpush1.msra.mxu0 0.0
    %5403 = vmatprep.subr.mxu0 0.0
    %5404 = vmatpush1.msra.mxu0 0.0
    %5405 = vmatprep.subr.mxu0 0.0
    %5406 = vmatpush1.msra.mxu0 0.0
    %5407 = vmatprep.subr.mxu0 0.0
    %5408 = vmatpush1.msra.mxu0 0.0
    %5409 = vmatprep.mubr.f32.mxu0 0.0
    %v5410 = vand.u32 %v4968, 4294901760
    %5411 = vmatmul.mubr.f32.gmra.mrb[0].mxu0 %v5410
    %v5412 = vpop.f32.mrb[0].mxu0
    %v5413 = vadd.f32 %v5341, %v5412
    %v5414 = vpop.f32.mrb[0].mxu0
    %5415 = vdwg.mxu0
    %v5417 = vsel %vm2033, %v4963, 0
    %5419 = vmatprep.subr.mxu0 0.0
    %v5420 = vand.u32 %v3494, 4294901760
    %5421 = vmatpush1.msra.mxu0 %v5420
    %5422 = vmatprep.subr.mxu0 0.0
    %5423 = vmatpush1.msra.mxu0 0.0
    %5424 = vmatprep.subr.mxu0 0.0
    %5425 = vmatpush1.msra.mxu0 0.0
    %5426 = vmatprep.subr.mxu0 0.0
    %5427 = vmatpush1.msra.mxu0 0.0
    %5428 = vmatprep.subr.mxu0 0.0
    %5429 = vmatpush1.msra.mxu0 0.0
    %5430 = vmatprep.subr.mxu0 0.0
    %5431 = vmatpush1.msra.mxu0 0.0
    %5432 = vmatprep.subr.mxu0 0.0
    %5433 = vmatpush1.msra.mxu0 0.0
    %5434 = vmatprep.subr.mxu0 0.0
    %5435 = vmatpush1.msra.mxu0 0.0
    %5436 = vmatprep.subr.mxu0 0.0
    %5437 = vmatpush1.msra.mxu0 0.0
    %5438 = vmatprep.subr.mxu0 0.0
    %5439 = vmatpush1.msra.mxu0 0.0
    %5440 = vmatprep.subr.mxu0 0.0
    %5441 = vmatpush1.msra.mxu0 0.0
    %5442 = vmatprep.subr.mxu0 0.0
    %5443 = vmatpush1.msra.mxu0 0.0
    %5444 = vmatprep.subr.mxu0 0.0
    %5445 = vmatpush1.msra.mxu0 0.0
    %5446 = vmatprep.subr.mxu0 0.0
    %5447 = vmatpush1.msra.mxu0 0.0
    %5448 = vmatprep.subr.mxu0 0.0
    %5449 = vmatpush1.msra.mxu0 0.0
    %5450 = vmatprep.subr.mxu0 0.0
    %5451 = vmatpush1.msra.mxu0 0.0
    %5452 = vmatprep.subr.mxu0 0.0
    %5453 = vmatpush1.msra.mxu0 0.0
    %5454 = vmatprep.subr.mxu0 0.0
    %5455 = vmatpush1.msra.mxu0 0.0
    %5456 = vmatprep.subr.mxu0 0.0
    %5457 = vmatpush1.msra.mxu0 0.0
    %5458 = vmatprep.subr.mxu0 0.0
    %5459 = vmatpush1.msra.mxu0 0.0
    %5460 = vmatprep.subr.mxu0 0.0
    %5461 = vmatpush1.msra.mxu0 0.0
    %5462 = vmatprep.subr.mxu0 0.0
    %5463 = vmatpush1.msra.mxu0 0.0
    %5464 = vmatprep.subr.mxu0 0.0
    %5465 = vmatpush1.msra.mxu0 0.0
    %5466 = vmatprep.subr.mxu0 0.0
    %5467 = vmatpush1.msra.mxu0 0.0
    %5468 = vmatprep.subr.mxu0 0.0
    %5469 = vmatpush1.msra.mxu0 0.0
    %5470 = vmatprep.subr.mxu0 0.0
    %5471 = vmatpush1.msra.mxu0 0.0
    %5472 = vmatprep.subr.mxu0 0.0
    %5473 = vmatpush1.msra.mxu0 0.0
    %5474 = vmatprep.subr.mxu0 0.0
    %5475 = vmatpush1.msra.mxu0 0.0
    %5476 = vmatprep.subr.mxu0 0.0
    %5477 = vmatpush1.msra.mxu0 0.0
    %5478 = vmatprep.subr.mxu0 0.0
    %5479 = vmatpush1.msra.mxu0 0.0
    %5480 = vmatprep.subr.mxu0 0.0
    %5481 = vmatpush1.msra.mxu0 0.0
    %5482 = vmatprep.subr.mxu0 0.0
    %5483 = vmatpush1.msra.mxu0 0.0
    %5484 = vmatprep.mubr.f32.mxu0 0.0
    %v5485 = vand.u32 %v5417, 4294901760
    %v5486 = vsub.f32 %v5417, %v5485
    %v5487 = vand.u32 %v5486, 4294901760
    %v5488 = vsub.f32 %v5486, %v5487
    %v5489 = vand.u32 %v5488, 4294901760
    %5490 = vmatmul.mubr.f32.gmra.mrb[0].mxu0 %v5489
    %v5491 = vpop.f32.mrb[0].mxu0
    %v5492 = vadd.f32 0.0, %v5491
    %v5493 = vpop.f32.mrb[0].mxu0
    %5494 = vdwg.mxu0
    %5495 = vmatprep.subr.mxu0 0.0
    %v5496 = vand.u32 %v3494, 4294901760
    %v5497 = vsub.f32 %v3494, %v5496
    %v5498 = vand.u32 %v5497, 4294901760
    %v5499 = vsub.f32 %v5497, %v5498
    %v5500 = vand.u32 %v5499, 4294901760
    %5501 = vmatpush1.msra.mxu0 %v5500
    %5502 = vmatprep.subr.mxu0 0.0
    %5503 = vmatpush1.msra.mxu0 0.0
    %5504 = vmatprep.subr.mxu0 0.0
    %5505 = vmatpush1.msra.mxu0 0.0
    %5506 = vmatprep.subr.mxu0 0.0
    %5507 = vmatpush1.msra.mxu0 0.0
    %5508 = vmatprep.subr.mxu0 0.0
    %5509 = vmatpush1.msra.mxu0 0.0
    %5510 = vmatprep.subr.mxu0 0.0
    %5511 = vmatpush1.msra.mxu0 0.0
    %5512 = vmatprep.subr.mxu0 0.0
    %5513 = vmatpush1.msra.mxu0 0.0
    %5514 = vmatprep.subr.mxu0 0.0
    %5515 = vmatpush1.msra.mxu0 0.0
    %5516 = vmatprep.subr.mxu0 0.0
    %5517 = vmatpush1.msra.mxu0 0.0
    %5518 = vmatprep.subr.mxu0 0.0
    %5519 = vmatpush1.msra.mxu0 0.0
    %5520 = vmatprep.subr.mxu0 0.0
    %5521 = vmatpush1.msra.mxu0 0.0
    %5522 = vmatprep.subr.mxu0 0.0
    %5523 = vmatpush1.msra.mxu0 0.0
    %5524 = vmatprep.subr.mxu0 0.0
    %5525 = vmatpush1.msra.mxu0 0.0
    %5526 = vmatprep.subr.mxu0 0.0
    %5527 = vmatpush1.msra.mxu0 0.0
    %5528 = vmatprep.subr.mxu0 0.0
    %5529 = vmatpush1.msra.mxu0 0.0
    %5530 = vmatprep.subr.mxu0 0.0
    %5531 = vmatpush1.msra.mxu0 0.0
    %5532 = vmatprep.subr.mxu0 0.0
    %5533 = vmatpush1.msra.mxu0 0.0
    %5534 = vmatprep.subr.mxu0 0.0
    %5535 = vmatpush1.msra.mxu0 0.0
    %5536 = vmatprep.subr.mxu0 0.0
    %5537 = vmatpush1.msra.mxu0 0.0
    %5538 = vmatprep.subr.mxu0 0.0
    %5539 = vmatpush1.msra.mxu0 0.0
    %5540 = vmatprep.subr.mxu0 0.0
    %5541 = vmatpush1.msra.mxu0 0.0
    %5542 = vmatprep.subr.mxu0 0.0
    %5543 = vmatpush1.msra.mxu0 0.0
    %5544 = vmatprep.subr.mxu0 0.0
    %5545 = vmatpush1.msra.mxu0 0.0
    %5546 = vmatprep.subr.mxu0 0.0
    %5547 = vmatpush1.msra.mxu0 0.0
    %5548 = vmatprep.subr.mxu0 0.0
    %5549 = vmatpush1.msra.mxu0 0.0
    %5550 = vmatprep.subr.mxu0 0.0
    %5551 = vmatpush1.msra.mxu0 0.0
    %5552 = vmatprep.subr.mxu0 0.0
    %5553 = vmatpush1.msra.mxu0 0.0
    %5554 = vmatprep.subr.mxu0 0.0
    %5555 = vmatpush1.msra.mxu0 0.0
    %5556 = vmatprep.subr.mxu0 0.0
    %5557 = vmatpush1.msra.mxu0 0.0
    %5558 = vmatprep.subr.mxu0 0.0
    %5559 = vmatpush1.msra.mxu0 0.0
    %5560 = vmatprep.subr.mxu0 0.0
    %5561 = vmatpush1.msra.mxu0 0.0
    %5562 = vmatprep.subr.mxu0 0.0
    %5563 = vmatpush1.msra.mxu0 0.0
    %5564 = vmatprep.mubr.f32.mxu0 0.0
    %v5565 = vand.u32 %v5417, 4294901760
    %5566 = vmatmul.mubr.f32.gmra.mrb[0].mxu0 %v5565
    %v5567 = vpop.f32.mrb[0].mxu0
    %v5568 = vadd.f32 %v5492, %v5567
    %v5569 = vpop.f32.mrb[0].mxu0
    %5570 = vdwg.mxu0
    %5571 = vmatprep.subr.mxu0 0.0
    %v5572 = vand.u32 %v3494, 4294901760
    %v5573 = vsub.f32 %v3494, %v5572
    %5574 = vmatpush1.msra.mxu0 %v5573
    %5575 = vmatprep.subr.mxu0 0.0
    %5576 = vmatpush1.msra.mxu0 0.0
    %5577 = vmatprep.subr.mxu0 0.0
    %5578 = vmatpush1.msra.mxu0 0.0
    %5579 = vmatprep.subr.mxu0 0.0
    %5580 = vmatpush1.msra.mxu0 0.0
    %5581 = vmatprep.subr.mxu0 0.0
    %5582 = vmatpush1.msra.mxu0 0.0
    %5583 = vmatprep.subr.mxu0 0.0
    %5584 = vmatpush1.msra.mxu0 0.0
    %5585 = vmatprep.subr.mxu0 0.0
    %5586 = vmatpush1.msra.mxu0 0.0
    %5587 = vmatprep.subr.mxu0 0.0
    %5588 = vmatpush1.msra.mxu0 0.0
    %5589 = vmatprep.subr.mxu0 0.0
    %5590 = vmatpush1.msra.mxu0 0.0
    %5591 = vmatprep.subr.mxu0 0.0
    %5592 = vmatpush1.msra.mxu0 0.0
    %5593 = vmatprep.subr.mxu0 0.0
    %5594 = vmatpush1.msra.mxu0 0.0
    %5595 = vmatprep.subr.mxu0 0.0
    %5596 = vmatpush1.msra.mxu0 0.0
    %5597 = vmatprep.subr.mxu0 0.0
    %5598 = vmatpush1.msra.mxu0 0.0
    %5599 = vmatprep.subr.mxu0 0.0
    %5600 = vmatpush1.msra.mxu0 0.0
    %5601 = vmatprep.subr.mxu0 0.0
    %5602 = vmatpush1.msra.mxu0 0.0
    %5603 = vmatprep.subr.mxu0 0.0
    %5604 = vmatpush1.msra.mxu0 0.0
    %5605 = vmatprep.subr.mxu0 0.0
    %5606 = vmatpush1.msra.mxu0 0.0
    %5607 = vmatprep.subr.mxu0 0.0
    %5608 = vmatpush1.msra.mxu0 0.0
    %5609 = vmatprep.subr.mxu0 0.0
    %5610 = vmatpush1.msra.mxu0 0.0
    %5611 = vmatprep.subr.mxu0 0.0
    %5612 = vmatpush1.msra.mxu0 0.0
    %5613 = vmatprep.subr.mxu0 0.0
    %5614 = vmatpush1.msra.mxu0 0.0
    %5615 = vmatprep.subr.mxu0 0.0
    %5616 = vmatpush1.msra.mxu0 0.0
    %5617 = vmatprep.subr.mxu0 0.0
    %5618 = vmatpush1.msra.mxu0 0.0
    %5619 = vmatprep.subr.mxu0 0.0
    %5620 = vmatpush1.msra.mxu0 0.0
    %5621 = vmatprep.subr.mxu0 0.0
    %5622 = vmatpush1.msra.mxu0 0.0
    %5623 = vmatprep.subr.mxu0 0.0
    %5624 = vmatpush1.msra.mxu0 0.0
    %5625 = vmatprep.subr.mxu0 0.0
    %5626 = vmatpush1.msra.mxu0 0.0
    %5627 = vmatprep.subr.mxu0 0.0
    %5628 = vmatpush1.msra.mxu0 0.0
    %5629 = vmatprep.subr.mxu0 0.0
    %5630 = vmatpush1.msra.mxu0 0.0
    %5631 = vmatprep.subr.mxu0 0.0
    %5632 = vmatpush1.msra.mxu0 0.0
    %5633 = vmatprep.subr.mxu0 0.0
    %5634 = vmatpush1.msra.mxu0 0.0
    %5635 = vmatprep.subr.mxu0 0.0
    %5636 = vmatpush1.msra.mxu0 0.0
    %5637 = vmatprep.mubr.f32.mxu0 0.0
    %v5638 = vand.u32 %v5417, 4294901760
    %v5639 = vsub.f32 %v5417, %v5638
    %5640 = vmatmul.mubr.f32.gmra.mrb[0].mxu0 %v5639
    %v5641 = vpop.f32.mrb[0].mxu0
    %v5642 = vadd.f32 %v5568, %v5641
    %v5643 = vpop.f32.mrb[0].mxu0
    %5644 = vdwg.mxu0
    %5645 = vmatprep.subr.mxu0 0.0
    %v5646 = vand.u32 %v3494, 4294901760
    %5647 = vmatpush1.msra.mxu0 %v5646
    %5648 = vmatprep.subr.mxu0 0.0
    %5649 = vmatpush1.msra.mxu0 0.0
    %5650 = vmatprep.subr.mxu0 0.0
    %5651 = vmatpush1.msra.mxu0 0.0
    %5652 = vmatprep.subr.mxu0 0.0
    %5653 = vmatpush1.msra.mxu0 0.0
    %5654 = vmatprep.subr.mxu0 0.0
    %5655 = vmatpush1.msra.mxu0 0.0
    %5656 = vmatprep.subr.mxu0 0.0
    %5657 = vmatpush1.msra.mxu0 0.0
    %5658 = vmatprep.subr.mxu0 0.0
    %5659 = vmatpush1.msra.mxu0 0.0
    %5660 = vmatprep.subr.mxu0 0.0
    %5661 = vmatpush1.msra.mxu0 0.0
    %5662 = vmatprep.subr.mxu0 0.0
    %5663 = vmatpush1.msra.mxu0 0.0
    %5664 = vmatprep.subr.mxu0 0.0
    %5665 = vmatpush1.msra.mxu0 0.0
    %5666 = vmatprep.subr.mxu0 0.0
    %5667 = vmatpush1.msra.mxu0 0.0
    %5668 = vmatprep.subr.mxu0 0.0
    %5669 = vmatpush1.msra.mxu0 0.0
    %5670 = vmatprep.subr.mxu0 0.0
    %5671 = vmatpush1.msra.mxu0 0.0
    %5672 = vmatprep.subr.mxu0 0.0
    %5673 = vmatpush1.msra.mxu0 0.0
    %5674 = vmatprep.subr.mxu0 0.0
    %5675 = vmatpush1.msra.mxu0 0.0
    %5676 = vmatprep.subr.mxu0 0.0
    %5677 = vmatpush1.msra.mxu0 0.0
    %5678 = vmatprep.subr.mxu0 0.0
    %5679 = vmatpush1.msra.mxu0 0.0
    %5680 = vmatprep.subr.mxu0 0.0
    %5681 = vmatpush1.msra.mxu0 0.0
    %5682 = vmatprep.subr.mxu0 0.0
    %5683 = vmatpush1.msra.mxu0 0.0
    %5684 = vmatprep.subr.mxu0 0.0
    %5685 = vmatpush1.msra.mxu0 0.0
    %5686 = vmatprep.subr.mxu0 0.0
    %5687 = vmatpush1.msra.mxu0 0.0
    %5688 = vmatprep.subr.mxu0 0.0
    %5689 = vmatpush1.msra.mxu0 0.0
    %5690 = vmatprep.subr.mxu0 0.0
    %5691 = vmatpush1.msra.mxu0 0.0
    %5692 = vmatprep.subr.mxu0 0.0
    %5693 = vmatpush1.msra.mxu0 0.0
    %5694 = vmatprep.subr.mxu0 0.0
    %5695 = vmatpush1.msra.mxu0 0.0
    %5696 = vmatprep.subr.mxu0 0.0
    %5697 = vmatpush1.msra.mxu0 0.0
    %5698 = vmatprep.subr.mxu0 0.0
    %5699 = vmatpush1.msra.mxu0 0.0
    %5700 = vmatprep.subr.mxu0 0.0
    %5701 = vmatpush1.msra.mxu0 0.0
    %5702 = vmatprep.subr.mxu0 0.0
    %5703 = vmatpush1.msra.mxu0 0.0
    %5704 = vmatprep.subr.mxu0 0.0
    %5705 = vmatpush1.msra.mxu0 0.0
    %5706 = vmatprep.subr.mxu0 0.0
    %5707 = vmatpush1.msra.mxu0 0.0
    %5708 = vmatprep.subr.mxu0 0.0
    %5709 = vmatpush1.msra.mxu0 0.0
    %5710 = vmatprep.mubr.f32.mxu0 0.0
    %v5711 = vand.u32 %v5417, 4294901760
    %v5712 = vsub.f32 %v5417, %v5711
    %v5713 = vand.u32 %v5712, 4294901760
    %5714 = vmatmul.mubr.f32.gmra.mrb[0].mxu0 %v5713
    %v5715 = vpop.f32.mrb[0].mxu0
    %v5716 = vadd.f32 %v5642, %v5715
    %v5717 = vpop.f32.mrb[0].mxu0
    %5718 = vdwg.mxu0
    %5719 = vmatprep.subr.mxu0 0.0
    %v5720 = vand.u32 %v3494, 4294901760
    %v5721 = vsub.f32 %v3494, %v5720
    %v5722 = vand.u32 %v5721, 4294901760
    %5723 = vmatpush1.msra.mxu0 %v5722
    %5724 = vmatprep.subr.mxu0 0.0
    %5725 = vmatpush1.msra.mxu0 0.0
    %5726 = vmatprep.subr.mxu0 0.0
    %5727 = vmatpush1.msra.mxu0 0.0
    %5728 = vmatprep.subr.mxu0 0.0
    %5729 = vmatpush1.msra.mxu0 0.0
    %5730 = vmatprep.subr.mxu0 0.0
    %5731 = vmatpush1.msra.mxu0 0.0
    %5732 = vmatprep.subr.mxu0 0.0
    %5733 = vmatpush1.msra.mxu0 0.0
    %5734 = vmatprep.subr.mxu0 0.0
    %5735 = vmatpush1.msra.mxu0 0.0
    %5736 = vmatprep.subr.mxu0 0.0
    %5737 = vmatpush1.msra.mxu0 0.0
    %5738 = vmatprep.subr.mxu0 0.0
    %5739 = vmatpush1.msra.mxu0 0.0
    %5740 = vmatprep.subr.mxu0 0.0
    %5741 = vmatpush1.msra.mxu0 0.0
    %5742 = vmatprep.subr.mxu0 0.0
    %5743 = vmatpush1.msra.mxu0 0.0
    %5744 = vmatprep.subr.mxu0 0.0
    %5745 = vmatpush1.msra.mxu0 0.0
    %5746 = vmatprep.subr.mxu0 0.0
    %5747 = vmatpush1.msra.mxu0 0.0
    %5748 = vmatprep.subr.mxu0 0.0
    %5749 = vmatpush1.msra.mxu0 0.0
    %5750 = vmatprep.subr.mxu0 0.0
    %5751 = vmatpush1.msra.mxu0 0.0
    %5752 = vmatprep.subr.mxu0 0.0
    %5753 = vmatpush1.msra.mxu0 0.0
    %5754 = vmatprep.subr.mxu0 0.0
    %5755 = vmatpush1.msra.mxu0 0.0
    %5756 = vmatprep.subr.mxu0 0.0
    %5757 = vmatpush1.msra.mxu0 0.0
    %5758 = vmatprep.subr.mxu0 0.0
    %5759 = vmatpush1.msra.mxu0 0.0
    %5760 = vmatprep.subr.mxu0 0.0
    %5761 = vmatpush1.msra.mxu0 0.0
    %5762 = vmatprep.subr.mxu0 0.0
    %5763 = vmatpush1.msra.mxu0 0.0
    %5764 = vmatprep.subr.mxu0 0.0
    %5765 = vmatpush1.msra.mxu0 0.0
    %5766 = vmatprep.subr.mxu0 0.0
    %5767 = vmatpush1.msra.mxu0 0.0
    %5768 = vmatprep.subr.mxu0 0.0
    %5769 = vmatpush1.msra.mxu0 0.0
    %5770 = vmatprep.subr.mxu0 0.0
    %5771 = vmatpush1.msra.mxu0 0.0
    %5772 = vmatprep.subr.mxu0 0.0
    %5773 = vmatpush1.msra.mxu0 0.0
    %5774 = vmatprep.subr.mxu0 0.0
    %5775 = vmatpush1.msra.mxu0 0.0
    %5776 = vmatprep.subr.mxu0 0.0
    %5777 = vmatpush1.msra.mxu0 0.0
    %5778 = vmatprep.subr.mxu0 0.0
    %5779 = vmatpush1.msra.mxu0 0.0
    %5780 = vmatprep.subr.mxu0 0.0
    %5781 = vmatpush1.msra.mxu0 0.0
    %5782 = vmatprep.subr.mxu0 0.0
    %5783 = vmatpush1.msra.mxu0 0.0
    %5784 = vmatprep.subr.mxu0 0.0
    %5785 = vmatpush1.msra.mxu0 0.0
    %5786 = vmatprep.mubr.f32.mxu0 0.0
    %v5787 = vand.u32 %v5417, 4294901760
    %5788 = vmatmul.mubr.f32.gmra.mrb[0].mxu0 %v5787
    %v5789 = vpop.f32.mrb[0].mxu0
    %v5790 = vadd.f32 %v5716, %v5789
    %v5791 = vpop.f32.mrb[0].mxu0
    %5792 = vdwg.mxu0
    %5793 = vmatprep.subr.mxu0 0.0
    %v5794 = vand.u32 %v3494, 4294901760
    %5795 = vmatpush1.msra.mxu0 %v5794
    %5796 = vmatprep.subr.mxu0 0.0
    %5797 = vmatpush1.msra.mxu0 0.0
    %5798 = vmatprep.subr.mxu0 0.0
    %5799 = vmatpush1.msra.mxu0 0.0
    %5800 = vmatprep.subr.mxu0 0.0
    %5801 = vmatpush1.msra.mxu0 0.0
    %5802 = vmatprep.subr.mxu0 0.0
    %5803 = vmatpush1.msra.mxu0 0.0
    %5804 = vmatprep.subr.mxu0 0.0
    %5805 = vmatpush1.msra.mxu0 0.0
    %5806 = vmatprep.subr.mxu0 0.0
    %5807 = vmatpush1.msra.mxu0 0.0
    %5808 = vmatprep.subr.mxu0 0.0
    %5809 = vmatpush1.msra.mxu0 0.0
    %5810 = vmatprep.subr.mxu0 0.0
    %5811 = vmatpush1.msra.mxu0 0.0
    %5812 = vmatprep.subr.mxu0 0.0
    %5813 = vmatpush1.msra.mxu0 0.0
    %5814 = vmatprep.subr.mxu0 0.0
    %5815 = vmatpush1.msra.mxu0 0.0
    %5816 = vmatprep.subr.mxu0 0.0
    %5817 = vmatpush1.msra.mxu0 0.0
    %5818 = vmatprep.subr.mxu0 0.0
    %5819 = vmatpush1.msra.mxu0 0.0
    %5820 = vmatprep.subr.mxu0 0.0
    %5821 = vmatpush1.msra.mxu0 0.0
    %5822 = vmatprep.subr.mxu0 0.0
    %5823 = vmatpush1.msra.mxu0 0.0
    %5824 = vmatprep.subr.mxu0 0.0
    %5825 = vmatpush1.msra.mxu0 0.0
    %5826 = vmatprep.subr.mxu0 0.0
    %5827 = vmatpush1.msra.mxu0 0.0
    %5828 = vmatprep.subr.mxu0 0.0
    %5829 = vmatpush1.msra.mxu0 0.0
    %5830 = vmatprep.subr.mxu0 0.0
    %5831 = vmatpush1.msra.mxu0 0.0
    %5832 = vmatprep.subr.mxu0 0.0
    %5833 = vmatpush1.msra.mxu0 0.0
    %5834 = vmatprep.subr.mxu0 0.0
    %5835 = vmatpush1.msra.mxu0 0.0
    %5836 = vmatprep.subr.mxu0 0.0
    %5837 = vmatpush1.msra.mxu0 0.0
    %5838 = vmatprep.subr.mxu0 0.0
    %5839 = vmatpush1.msra.mxu0 0.0
    %5840 = vmatprep.subr.mxu0 0.0
    %5841 = vmatpush1.msra.mxu0 0.0
    %5842 = vmatprep.subr.mxu0 0.0
    %5843 = vmatpush1.msra.mxu0 0.0
    %5844 = vmatprep.subr.mxu0 0.0
    %5845 = vmatpush1.msra.mxu0 0.0
    %5846 = vmatprep.subr.mxu0 0.0
    %5847 = vmatpush1.msra.mxu0 0.0
    %5848 = vmatprep.subr.mxu0 0.0
    %5849 = vmatpush1.msra.mxu0 0.0
    %5850 = vmatprep.subr.mxu0 0.0
    %5851 = vmatpush1.msra.mxu0 0.0
    %5852 = vmatprep.subr.mxu0 0.0
    %5853 = vmatpush1.msra.mxu0 0.0
    %5854 = vmatprep.subr.mxu0 0.0
    %5855 = vmatpush1.msra.mxu0 0.0
    %5856 = vmatprep.subr.mxu0 0.0
    %5857 = vmatpush1.msra.mxu0 0.0
    %5858 = vmatprep.mubr.f32.mxu0 0.0
    %v5859 = vand.u32 %v5417, 4294901760
    %5860 = vmatmul.mubr.f32.gmra.mrb[0].mxu0 %v5859
    %v5861 = vpop.f32.mrb[0].mxu0
    %v5862 = vadd.f32 %v5790, %v5861
    %v5863 = vpop.f32.mrb[0].mxu0
    %5864 = vdwg.mxu0
    %v5865 = vld [vmem:[%s6] sm:$0xff]
    %v5866 = vld [vmem:[%s6 + $0x8] sm:$0xff]
    %s5867 = scalar_lea.vmem %s6, 16
    %v5868 = vld [vmem:[%s5867] sm:$0xff]
    %v5869 = vld [vmem:[%s5867 + $0x8] sm:$0xff]
    %v5871 = vsel %vm1128, %v5413, 0
    %v5874 = vsel %vm1128, %v5862, 0
    %5876 = vmatprep.subr.mxu0 0.0
    %v5877 = vand.u32 %v5868, 4294901760
    %5878 = vmatpush1.msra.mxu0 %v5877
    %5879 = vmatprep.subr.mxu0 0.0
    %v5880 = vand.u32 %v5869, 4294901760
    %5881 = vmatpush1.msra.mxu0 %v5880
    %5882 = vmatprep.subr.mxu0 0.0
    %5883 = vmatpush1.msra.mxu0 0.0
    %5884 = vmatprep.subr.mxu0 0.0
    %5885 = vmatpush1.msra.mxu0 0.0
    %5886 = vmatprep.subr.mxu0 0.0
    %5887 = vmatpush1.msra.mxu0 0.0
    %5888 = vmatprep.subr.mxu0 0.0
    %5889 = vmatpush1.msra.mxu0 0.0
    %5890 = vmatprep.subr.mxu0 0.0
    %5891 = vmatpush1.msra.mxu0 0.0
    %5892 = vmatprep.subr.mxu0 0.0
    %5893 = vmatpush1.msra.mxu0 0.0
    %5894 = vmatprep.subr.mxu0 0.0
    %5895 = vmatpush1.msra.mxu0 0.0
    %5896 = vmatprep.subr.mxu0 0.0
    %5897 = vmatpush1.msra.mxu0 0.0
    %5898 = vmatprep.subr.mxu0 0.0
    %5899 = vmatpush1.msra.mxu0 0.0
    %5900 = vmatprep.subr.mxu0 0.0
    %5901 = vmatpush1.msra.mxu0 0.0
    %5902 = vmatprep.subr.mxu0 0.0
    %5903 = vmatpush1.msra.mxu0 0.0
    %5904 = vmatprep.subr.mxu0 0.0
    %5905 = vmatpush1.msra.mxu0 0.0
    %5906 = vmatprep.subr.mxu0 0.0
    %5907 = vmatpush1.msra.mxu0 0.0
    %5908 = vmatprep.subr.mxu0 0.0
    %5909 = vmatpush1.msra.mxu0 0.0
    %5910 = vmatprep.subr.mxu0 0.0
    %5911 = vmatpush1.msra.mxu0 0.0
    %5912 = vmatprep.subr.mxu0 0.0
    %5913 = vmatpush1.msra.mxu0 0.0
    %5914 = vmatprep.subr.mxu0 0.0
    %5915 = vmatpush1.msra.mxu0 0.0
    %5916 = vmatprep.subr.mxu0 0.0
    %5917 = vmatpush1.msra.mxu0 0.0
    %5918 = vmatprep.subr.mxu0 0.0
    %5919 = vmatpush1.msra.mxu0 0.0
    %5920 = vmatprep.subr.mxu0 0.0
    %5921 = vmatpush1.msra.mxu0 0.0
    %5922 = vmatprep.subr.mxu0 0.0
    %5923 = vmatpush1.msra.mxu0 0.0
    %5924 = vmatprep.subr.mxu0 0.0
    %5925 = vmatpush1.msra.mxu0 0.0
    %5926 = vmatprep.subr.mxu0 0.0
    %5927 = vmatpush1.msra.mxu0 0.0
    %5928 = vmatprep.subr.mxu0 0.0
    %5929 = vmatpush1.msra.mxu0 0.0
    %5930 = vmatprep.subr.mxu0 0.0
    %5931 = vmatpush1.msra.mxu0 0.0
    %5932 = vmatprep.subr.mxu0 0.0
    %5933 = vmatpush1.msra.mxu0 0.0
    %5934 = vmatprep.subr.mxu0 0.0
    %5935 = vmatpush1.msra.mxu0 0.0
    %5936 = vmatprep.subr.mxu0 0.0
    %5937 = vmatpush1.msra.mxu0 0.0
    %5938 = vmatprep.subr.mxu0 0.0
    %5939 = vmatpush1.msra.mxu0 0.0
    %5940 = vmatprep.subr.mxu0 0.0
    %5941 = vmatpush1.msra.mxu0 0.0
    %5942 = vmatprep.mubr.f32.mxu0 0.0
    %v5943 = vand.u32 %v5871, 4294901760
    %v5944 = vsub.f32 %v5871, %v5943
    %v5945 = vand.u32 %v5944, 4294901760
    %v5946 = vsub.f32 %v5944, %v5945
    %v5947 = vand.u32 %v5946, 4294901760
    %5948 = vmatmul.mubr.f32.gmra.mrb[0].mxu0 %v5947
    %v5949 = vpop.f32.mrb[0].mxu0
    %v5950 = vadd.f32 0.0, %v5949
    %v5951 = vpop.f32.mrb[0].mxu0
    %5952 = vmatprep.mubr.f32.mxu0 0.0
    %v5953 = vand.u32 %v5874, 4294901760
    %v5954 = vsub.f32 %v5874, %v5953
    %v5955 = vand.u32 %v5954, 4294901760
    %v5956 = vsub.f32 %v5954, %v5955
    %v5957 = vand.u32 %v5956, 4294901760
    %5958 = vmatmul.mubr.f32.gmra.mrb[0].mxu0 %v5957
    %v5959 = vpop.f32.mrb[0].mxu0
    %v5960 = vadd.f32 0.0, %v5959
    %v5961 = vpop.f32.mrb[0].mxu0
    %5962 = vdwg.mxu0
    %5963 = vmatprep.subr.mxu0 0.0
    %v5964 = vand.u32 %v5868, 4294901760
    %v5965 = vsub.f32 %v5868, %v5964
    %v5966 = vand.u32 %v5965, 4294901760
    %v5967 = vsub.f32 %v5965, %v5966
    %v5968 = vand.u32 %v5967, 4294901760
    %5969 = vmatpush1.msra.mxu0 %v5968
    %5970 = vmatprep.subr.mxu0 0.0
    %v5971 = vand.u32 %v5869, 4294901760
    %v5972 = vsub.f32 %v5869, %v5971
    %v5973 = vand.u32 %v5972, 4294901760
    %v5974 = vsub.f32 %v5972, %v5973
    %v5975 = vand.u32 %v5974, 4294901760
    %5976 = vmatpush1.msra.mxu0 %v5975
    %5977 = vmatprep.subr.mxu0 0.0
    %5978 = vmatpush1.msra.mxu0 0.0
    %5979 = vmatprep.subr.mxu0 0.0
    %5980 = vmatpush1.msra.mxu0 0.0
    %5981 = vmatprep.subr.mxu0 0.0
    %5982 = vmatpush1.msra.mxu0 0.0
    %5983 = vmatprep.subr.mxu0 0.0
    %5984 = vmatpush1.msra.mxu0 0.0
    %5985 = vmatprep.subr.mxu0 0.0
    %5986 = vmatpush1.msra.mxu0 0.0
    %5987 = vmatprep.subr.mxu0 0.0
    %5988 = vmatpush1.msra.mxu0 0.0
    %5989 = vmatprep.subr.mxu0 0.0
    %5990 = vmatpush1.msra.mxu0 0.0
    %5991 = vmatprep.subr.mxu0 0.0
    %5992 = vmatpush1.msra.mxu0 0.0
    %5993 = vmatprep.subr.mxu0 0.0
    %5994 = vmatpush1.msra.mxu0 0.0
    %5995 = vmatprep.subr.mxu0 0.0
    %5996 = vmatpush1.msra.mxu0 0.0
    %5997 = vmatprep.subr.mxu0 0.0
    %5998 = vmatpush1.msra.mxu0 0.0
    %5999 = vmatprep.subr.mxu0 0.0
    %6000 = vmatpush1.msra.mxu0 0.0
    %6001 = vmatprep.subr.mxu0 0.0
    %6002 = vmatpush1.msra.mxu0 0.0
    %6003 = vmatprep.subr.mxu0 0.0
    %6004 = vmatpush1.msra.mxu0 0.0
    %6005 = vmatprep.subr.mxu0 0.0
    %6006 = vmatpush1.msra.mxu0 0.0
    %6007 = vmatprep.subr.mxu0 0.0
    %6008 = vmatpush1.msra.mxu0 0.0
    %6009 = vmatprep.subr.mxu0 0.0
    %6010 = vmatpush1.msra.mxu0 0.0
    %6011 = vmatprep.subr.mxu0 0.0
    %6012 = vmatpush1.msra.mxu0 0.0
    %6013 = vmatprep.subr.mxu0 0.0
    %6014 = vmatpush1.msra.mxu0 0.0
    %6015 = vmatprep.subr.mxu0 0.0
    %6016 = vmatpush1.msra.mxu0 0.0
    %6017 = vmatprep.subr.mxu0 0.0
    %6018 = vmatpush1.msra.mxu0 0.0
    %6019 = vmatprep.subr.mxu0 0.0
    %6020 = vmatpush1.msra.mxu0 0.0
    %6021 = vmatprep.subr.mxu0 0.0
    %6022 = vmatpush1.msra.mxu0 0.0
    %6023 = vmatprep.subr.mxu0 0.0
    %6024 = vmatpush1.msra.mxu0 0.0
    %6025 = vmatprep.subr.mxu0 0.0
    %6026 = vmatpush1.msra.mxu0 0.0
    %6027 = vmatprep.subr.mxu0 0.0
    %6028 = vmatpush1.msra.mxu0 0.0
    %6029 = vmatprep.subr.mxu0 0.0
    %6030 = vmatpush1.msra.mxu0 0.0
    %6031 = vmatprep.subr.mxu0 0.0
    %6032 = vmatpush1.msra.mxu0 0.0
    %6033 = vmatprep.subr.mxu0 0.0
    %6034 = vmatpush1.msra.mxu0 0.0
    %6035 = vmatprep.subr.mxu0 0.0
    %6036 = vmatpush1.msra.mxu0 0.0
    %6037 = vmatprep.mubr.f32.mxu0 0.0
    %v6038 = vand.u32 %v5871, 4294901760
    %6039 = vmatmul.mubr.f32.gmra.mrb[0].mxu0 %v6038
    %v6040 = vpop.f32.mrb[0].mxu0
    %v6041 = vadd.f32 %v5950, %v6040
    %v6042 = vpop.f32.mrb[0].mxu0
    %6043 = vmatprep.mubr.f32.mxu0 0.0
    %v6044 = vand.u32 %v5874, 4294901760
    %6045 = vmatmul.mubr.f32.gmra.mrb[0].mxu0 %v6044
    %v6046 = vpop.f32.mrb[0].mxu0
    %v6047 = vadd.f32 %v5960, %v6046
    %v6048 = vpop.f32.mrb[0].mxu0
    %6049 = vdwg.mxu0
    %6050 = vmatprep.subr.mxu0 0.0
    %v6051 = vand.u32 %v5868, 4294901760
    %v6052 = vsub.f32 %v5868, %v6051
    %6053 = vmatpush1.msra.mxu0 %v6052
    %6054 = vmatprep.subr.mxu0 0.0
    %v6055 = vand.u32 %v5869, 4294901760
    %v6056 = vsub.f32 %v5869, %v6055
    %6057 = vmatpush1.msra.mxu0 %v6056
    %6058 = vmatprep.subr.mxu0 0.0
    %6059 = vmatpush1.msra.mxu0 0.0
    %6060 = vmatprep.subr.mxu0 0.0
    %6061 = vmatpush1.msra.mxu0 0.0
    %6062 = vmatprep.subr.mxu0 0.0
    %6063 = vmatpush1.msra.mxu0 0.0
    %6064 = vmatprep.subr.mxu0 0.0
    %6065 = vmatpush1.msra.mxu0 0.0
    %6066 = vmatprep.subr.mxu0 0.0
    %6067 = vmatpush1.msra.mxu0 0.0
    %6068 = vmatprep.subr.mxu0 0.0
    %6069 = vmatpush1.msra.mxu0 0.0
    %6070 = vmatprep.subr.mxu0 0.0
    %6071 = vmatpush1.msra.mxu0 0.0
    %6072 = vmatprep.subr.mxu0 0.0
    %6073 = vmatpush1.msra.mxu0 0.0
    %6074 = vmatprep.subr.mxu0 0.0
    %6075 = vmatpush1.msra.mxu0 0.0
    %6076 = vmatprep.subr.mxu0 0.0
    %6077 = vmatpush1.msra.mxu0 0.0
    %6078 = vmatprep.subr.mxu0 0.0
    %6079 = vmatpush1.msra.mxu0 0.0
    %6080 = vmatprep.subr.mxu0 0.0
    %6081 = vmatpush1.msra.mxu0 0.0
    %6082 = vmatprep.subr.mxu0 0.0
    %6083 = vmatpush1.msra.mxu0 0.0
    %6084 = vmatprep.subr.mxu0 0.0
    %6085 = vmatpush1.msra.mxu0 0.0
    %6086 = vmatprep.subr.mxu0 0.0
    %6087 = vmatpush1.msra.mxu0 0.0
    %6088 = vmatprep.subr.mxu0 0.0
    %6089 = vmatpush1.msra.mxu0 0.0
    %6090 = vmatprep.subr.mxu0 0.0
    %6091 = vmatpush1.msra.mxu0 0.0
    %6092 = vmatprep.subr.mxu0 0.0
    %6093 = vmatpush1.msra.mxu0 0.0
    %6094 = vmatprep.subr.mxu0 0.0
    %6095 = vmatpush1.msra.mxu0 0.0
    %6096 = vmatprep.subr.mxu0 0.0
    %6097 = vmatpush1.msra.mxu0 0.0
    %6098 = vmatprep.subr.mxu0 0.0
    %6099 = vmatpush1.msra.mxu0 0.0
    %6100 = vmatprep.subr.mxu0 0.0
    %6101 = vmatpush1.msra.mxu0 0.0
    %6102 = vmatprep.subr.mxu0 0.0
    %6103 = vmatpush1.msra.mxu0 0.0
    %6104 = vmatprep.subr.mxu0 0.0
    %6105 = vmatpush1.msra.mxu0 0.0
    %6106 = vmatprep.subr.mxu0 0.0
    %6107 = vmatpush1.msra.mxu0 0.0
    %6108 = vmatprep.subr.mxu0 0.0
    %6109 = vmatpush1.msra.mxu0 0.0
    %6110 = vmatprep.subr.mxu0 0.0
    %6111 = vmatpush1.msra.mxu0 0.0
    %6112 = vmatprep.subr.mxu0 0.0
    %6113 = vmatpush1.msra.mxu0 0.0
    %6114 = vmatprep.subr.mxu0 0.0
    %6115 = vmatpush1.msra.mxu0 0.0
    %6116 = vmatprep.subr.mxu0 0.0
    %6117 = vmatpush1.msra.mxu0 0.0
    %6118 = vmatprep.mubr.f32.mxu0 0.0
    %v6119 = vand.u32 %v5871, 4294901760
    %v6120 = vsub.f32 %v5871, %v6119
    %6121 = vmatmul.mubr.f32.gmra.mrb[0].mxu0 %v6120
    %v6122 = vpop.f32.mrb[0].mxu0
    %v6123 = vadd.f32 %v6041, %v6122
    %v6124 = vpop.f32.mrb[0].mxu0
    %6125 = vmatprep.mubr.f32.mxu0 0.0
    %v6126 = vand.u32 %v5874, 4294901760
    %v6127 = vsub.f32 %v5874, %v6126
    %6128 = vmatmul.mubr.f32.gmra.mrb[0].mxu0 %v6127
    %v6129 = vpop.f32.mrb[0].mxu0
    %v6130 = vadd.f32 %v6047, %v6129
    %v6131 = vpop.f32.mrb[0].mxu0
    %6132 = vdwg.mxu0
    %6133 = vmatprep.subr.mxu0 0.0
    %v6134 = vand.u32 %v5868, 4294901760
    %6135 = vmatpush1.msra.mxu0 %v6134
    %6136 = vmatprep.subr.mxu0 0.0
    %v6137 = vand.u32 %v5869, 4294901760
    %6138 = vmatpush1.msra.mxu0 %v6137
    %6139 = vmatprep.subr.mxu0 0.0
    %6140 = vmatpush1.msra.mxu0 0.0
    %6141 = vmatprep.subr.mxu0 0.0
    %6142 = vmatpush1.msra.mxu0 0.0
    %6143 = vmatprep.subr.mxu0 0.0
    %6144 = vmatpush1.msra.mxu0 0.0
    %6145 = vmatprep.subr.mxu0 0.0
    %6146 = vmatpush1.msra.mxu0 0.0
    %6147 = vmatprep.subr.mxu0 0.0
    %6148 = vmatpush1.msra.mxu0 0.0
    %6149 = vmatprep.subr.mxu0 0.0
    %6150 = vmatpush1.msra.mxu0 0.0
    %6151 = vmatprep.subr.mxu0 0.0
    %6152 = vmatpush1.msra.mxu0 0.0
    %6153 = vmatprep.subr.mxu0 0.0
    %6154 = vmatpush1.msra.mxu0 0.0
    %6155 = vmatprep.subr.mxu0 0.0
    %6156 = vmatpush1.msra.mxu0 0.0
    %6157 = vmatprep.subr.mxu0 0.0
    %6158 = vmatpush1.msra.mxu0 0.0
    %6159 = vmatprep.subr.mxu0 0.0
    %6160 = vmatpush1.msra.mxu0 0.0
    %6161 = vmatprep.subr.mxu0 0.0
    %6162 = vmatpush1.msra.mxu0 0.0
    %6163 = vmatprep.subr.mxu0 0.0
    %6164 = vmatpush1.msra.mxu0 0.0
    %6165 = vmatprep.subr.mxu0 0.0
    %6166 = vmatpush1.msra.mxu0 0.0
    %6167 = vmatprep.subr.mxu0 0.0
    %6168 = vmatpush1.msra.mxu0 0.0
    %6169 = vmatprep.subr.mxu0 0.0
    %6170 = vmatpush1.msra.mxu0 0.0
    %6171 = vmatprep.subr.mxu0 0.0
    %6172 = vmatpush1.msra.mxu0 0.0
    %6173 = vmatprep.subr.mxu0 0.0
    %6174 = vmatpush1.msra.mxu0 0.0
    %6175 = vmatprep.subr.mxu0 0.0
    %6176 = vmatpush1.msra.mxu0 0.0
    %6177 = vmatprep.subr.mxu0 0.0
    %6178 = vmatpush1.msra.mxu0 0.0
    %6179 = vmatprep.subr.mxu0 0.0
    %6180 = vmatpush1.msra.mxu0 0.0
    %6181 = vmatprep.subr.mxu0 0.0
    %6182 = vmatpush1.msra.mxu0 0.0
    %6183 = vmatprep.subr.mxu0 0.0
    %6184 = vmatpush1.msra.mxu0 0.0
    %6185 = vmatprep.subr.mxu0 0.0
    %6186 = vmatpush1.msra.mxu0 0.0
    %6187 = vmatprep.subr.mxu0 0.0
    %6188 = vmatpush1.msra.mxu0 0.0
    %6189 = vmatprep.subr.mxu0 0.0
    %6190 = vmatpush1.msra.mxu0 0.0
    %6191 = vmatprep.subr.mxu0 0.0
    %6192 = vmatpush1.msra.mxu0 0.0
    %6193 = vmatprep.subr.mxu0 0.0
    %6194 = vmatpush1.msra.mxu0 0.0
    %6195 = vmatprep.subr.mxu0 0.0
    %6196 = vmatpush1.msra.mxu0 0.0
    %6197 = vmatprep.subr.mxu0 0.0
    %6198 = vmatpush1.msra.mxu0 0.0
    %6199 = vmatprep.mubr.f32.mxu0 0.0
    %v6200 = vand.u32 %v5871, 4294901760
    %v6201 = vsub.f32 %v5871, %v6200
    %v6202 = vand.u32 %v6201, 4294901760
    %6203 = vmatmul.mubr.f32.gmra.mrb[0].mxu0 %v6202
    %v6204 = vpop.f32.mrb[0].mxu0
    %v6205 = vadd.f32 %v6123, %v6204
    %v6206 = vpop.f32.mrb[0].mxu0
    %6207 = vmatprep.mubr.f32.mxu0 0.0
    %v6208 = vand.u32 %v5874, 4294901760
    %v6209 = vsub.f32 %v5874, %v6208
    %v6210 = vand.u32 %v6209, 4294901760
    %6211 = vmatmul.mubr.f32.gmra.mrb[0].mxu0 %v6210
    %v6212 = vpop.f32.mrb[0].mxu0
    %v6213 = vadd.f32 %v6130, %v6212
    %v6214 = vpop.f32.mrb[0].mxu0
    %6215 = vdwg.mxu0
    %6216 = vmatprep.subr.mxu0 0.0
    %v6217 = vand.u32 %v5868, 4294901760
    %v6218 = vsub.f32 %v5868, %v6217
    %v6219 = vand.u32 %v6218, 4294901760
    %6220 = vmatpush1.msra.mxu0 %v6219
    %6221 = vmatprep.subr.mxu0 0.0
    %v6222 = vand.u32 %v5869, 4294901760
    %v6223 = vsub.f32 %v5869, %v6222
    %v6224 = vand.u32 %v6223, 4294901760
    %6225 = vmatpush1.msra.mxu0 %v6224
    %6226 = vmatprep.subr.mxu0 0.0
    %6227 = vmatpush1.msra.mxu0 0.0
    %6228 = vmatprep.subr.mxu0 0.0
    %6229 = vmatpush1.msra.mxu0 0.0
    %6230 = vmatprep.subr.mxu0 0.0
    %6231 = vmatpush1.msra.mxu0 0.0
    %6232 = vmatprep.subr.mxu0 0.0
    %6233 = vmatpush1.msra.mxu0 0.0
    %6234 = vmatprep.subr.mxu0 0.0
    %6235 = vmatpush1.msra.mxu0 0.0
    %6236 = vmatprep.subr.mxu0 0.0
    %6237 = vmatpush1.msra.mxu0 0.0
    %6238 = vmatprep.subr.mxu0 0.0
    %6239 = vmatpush1.msra.mxu0 0.0
    %6240 = vmatprep.subr.mxu0 0.0
    %6241 = vmatpush1.msra.mxu0 0.0
    %6242 = vmatprep.subr.mxu0 0.0
    %6243 = vmatpush1.msra.mxu0 0.0
    %6244 = vmatprep.subr.mxu0 0.0
    %6245 = vmatpush1.msra.mxu0 0.0
    %6246 = vmatprep.subr.mxu0 0.0
    %6247 = vmatpush1.msra.mxu0 0.0
    %6248 = vmatprep.subr.mxu0 0.0
    %6249 = vmatpush1.msra.mxu0 0.0
    %6250 = vmatprep.subr.mxu0 0.0
    %6251 = vmatpush1.msra.mxu0 0.0
    %6252 = vmatprep.subr.mxu0 0.0
    %6253 = vmatpush1.msra.mxu0 0.0
    %6254 = vmatprep.subr.mxu0 0.0
    %6255 = vmatpush1.msra.mxu0 0.0
    %6256 = vmatprep.subr.mxu0 0.0
    %6257 = vmatpush1.msra.mxu0 0.0
    %6258 = vmatprep.subr.mxu0 0.0
    %6259 = vmatpush1.msra.mxu0 0.0
    %6260 = vmatprep.subr.mxu0 0.0
    %6261 = vmatpush1.msra.mxu0 0.0
    %6262 = vmatprep.subr.mxu0 0.0
    %6263 = vmatpush1.msra.mxu0 0.0
    %6264 = vmatprep.subr.mxu0 0.0
    %6265 = vmatpush1.msra.mxu0 0.0
    %6266 = vmatprep.subr.mxu0 0.0
    %6267 = vmatpush1.msra.mxu0 0.0
    %6268 = vmatprep.subr.mxu0 0.0
    %6269 = vmatpush1.msra.mxu0 0.0
    %6270 = vmatprep.subr.mxu0 0.0
    %6271 = vmatpush1.msra.mxu0 0.0
    %6272 = vmatprep.subr.mxu0 0.0
    %6273 = vmatpush1.msra.mxu0 0.0
    %6274 = vmatprep.subr.mxu0 0.0
    %6275 = vmatpush1.msra.mxu0 0.0
    %6276 = vmatprep.subr.mxu0 0.0
    %6277 = vmatpush1.msra.mxu0 0.0
    %6278 = vmatprep.subr.mxu0 0.0
    %6279 = vmatpush1.msra.mxu0 0.0
    %6280 = vmatprep.subr.mxu0 0.0
    %6281 = vmatpush1.msra.mxu0 0.0
    %6282 = vmatprep.subr.mxu0 0.0
    %6283 = vmatpush1.msra.mxu0 0.0
    %6284 = vmatprep.subr.mxu0 0.0
    %6285 = vmatpush1.msra.mxu0 0.0
    %6286 = vmatprep.mubr.f32.mxu0 0.0
    %v6287 = vand.u32 %v5871, 4294901760
    %6288 = vmatmul.mubr.f32.gmra.mrb[0].mxu0 %v6287
    %v6289 = vpop.f32.mrb[0].mxu0
    %v6290 = vadd.f32 %v6205, %v6289
    %v6291 = vpop.f32.mrb[0].mxu0
    %6292 = vmatprep.mubr.f32.mxu0 0.0
    %v6293 = vand.u32 %v5874, 4294901760
    %6294 = vmatmul.mubr.f32.gmra.mrb[0].mxu0 %v6293
    %v6295 = vpop.f32.mrb[0].mxu0
    %v6296 = vadd.f32 %v6213, %v6295
    %v6297 = vpop.f32.mrb[0].mxu0
    %6298 = vdwg.mxu0
    %6299 = vmatprep.subr.mxu0 0.0
    %v6300 = vand.u32 %v5868, 4294901760
    %6301 = vmatpush1.msra.mxu0 %v6300
    %6302 = vmatprep.subr.mxu0 0.0
    %v6303 = vand.u32 %v5869, 4294901760
    %6304 = vmatpush1.msra.mxu0 %v6303
    %6305 = vmatprep.subr.mxu0 0.0
    %6306 = vmatpush1.msra.mxu0 0.0
    %6307 = vmatprep.subr.mxu0 0.0
    %6308 = vmatpush1.msra.mxu0 0.0
    %6309 = vmatprep.subr.mxu0 0.0
    %6310 = vmatpush1.msra.mxu0 0.0
    %6311 = vmatprep.subr.mxu0 0.0
    %6312 = vmatpush1.msra.mxu0 0.0
    %6313 = vmatprep.subr.mxu0 0.0
    %6314 = vmatpush1.msra.mxu0 0.0
    %6315 = vmatprep.subr.mxu0 0.0
    %6316 = vmatpush1.msra.mxu0 0.0
    %6317 = vmatprep.subr.mxu0 0.0
    %6318 = vmatpush1.msra.mxu0 0.0
    %6319 = vmatprep.subr.mxu0 0.0
    %6320 = vmatpush1.msra.mxu0 0.0
    %6321 = vmatprep.subr.mxu0 0.0
    %6322 = vmatpush1.msra.mxu0 0.0
    %6323 = vmatprep.subr.mxu0 0.0
    %6324 = vmatpush1.msra.mxu0 0.0
    %6325 = vmatprep.subr.mxu0 0.0
    %6326 = vmatpush1.msra.mxu0 0.0
    %6327 = vmatprep.subr.mxu0 0.0
    %6328 = vmatpush1.msra.mxu0 0.0
    %6329 = vmatprep.subr.mxu0 0.0
    %6330 = vmatpush1.msra.mxu0 0.0
    %6331 = vmatprep.subr.mxu0 0.0
    %6332 = vmatpush1.msra.mxu0 0.0
    %6333 = vmatprep.subr.mxu0 0.0
    %6334 = vmatpush1.msra.mxu0 0.0
    %6335 = vmatprep.subr.mxu0 0.0
    %6336 = vmatpush1.msra.mxu0 0.0
    %6337 = vmatprep.subr.mxu0 0.0
    %6338 = vmatpush1.msra.mxu0 0.0
    %6339 = vmatprep.subr.mxu0 0.0
    %6340 = vmatpush1.msra.mxu0 0.0
    %6341 = vmatprep.subr.mxu0 0.0
    %6342 = vmatpush1.msra.mxu0 0.0
    %6343 = vmatprep.subr.mxu0 0.0
    %6344 = vmatpush1.msra.mxu0 0.0
    %6345 = vmatprep.subr.mxu0 0.0
    %6346 = vmatpush1.msra.mxu0 0.0
    %6347 = vmatprep.subr.mxu0 0.0
    %6348 = vmatpush1.msra.mxu0 0.0
    %6349 = vmatprep.subr.mxu0 0.0
    %6350 = vmatpush1.msra.mxu0 0.0
    %6351 = vmatprep.subr.mxu0 0.0
    %6352 = vmatpush1.msra.mxu0 0.0
    %6353 = vmatprep.subr.mxu0 0.0
    %6354 = vmatpush1.msra.mxu0 0.0
    %6355 = vmatprep.subr.mxu0 0.0
    %6356 = vmatpush1.msra.mxu0 0.0
    %6357 = vmatprep.subr.mxu0 0.0
    %6358 = vmatpush1.msra.mxu0 0.0
    %6359 = vmatprep.subr.mxu0 0.0
    %6360 = vmatpush1.msra.mxu0 0.0
    %6361 = vmatprep.subr.mxu0 0.0
    %6362 = vmatpush1.msra.mxu0 0.0
    %6363 = vmatprep.subr.mxu0 0.0
    %6364 = vmatpush1.msra.mxu0 0.0
    %6365 = vmatprep.mubr.f32.mxu0 0.0
    %v6366 = vand.u32 %v5871, 4294901760
    %6367 = vmatmul.mubr.f32.gmra.mrb[0].mxu0 %v6366
    %v6368 = vpop.f32.mrb[0].mxu0
    %v6369 = vadd.f32 %v6290, %v6368
    %v6370 = vpop.f32.mrb[0].mxu0
    %6371 = vmatprep.mubr.f32.mxu0 0.0
    %v6372 = vand.u32 %v5874, 4294901760
    %6373 = vmatmul.mubr.f32.gmra.mrb[0].mxu0 %v6372
    %v6374 = vpop.f32.mrb[0].mxu0
    %v6375 = vadd.f32 %v6296, %v6374
    %v6376 = vpop.f32.mrb[0].mxu0
    %6377 = vdwg.mxu0
    %v6379 = vsel %vm1128, %v2504, 0
    %v6382 = vsel %vm1128, %v2953, 0
    %6384 = vmatprep.subr.mxu0 0.0
    %v6385 = vand.u32 %v5865, 4294901760
    %6386 = vmatpush1.msra.mxu0 %v6385
    %6387 = vmatprep.subr.mxu0 0.0
    %v6388 = vand.u32 %v5866, 4294901760
    %6389 = vmatpush1.msra.mxu0 %v6388
    %6390 = vmatprep.subr.mxu0 0.0
    %6391 = vmatpush1.msra.mxu0 0.0
    %6392 = vmatprep.subr.mxu0 0.0
    %6393 = vmatpush1.msra.mxu0 0.0
    %6394 = vmatprep.subr.mxu0 0.0
    %6395 = vmatpush1.msra.mxu0 0.0
    %6396 = vmatprep.subr.mxu0 0.0
    %6397 = vmatpush1.msra.mxu0 0.0
    %6398 = vmatprep.subr.mxu0 0.0
    %6399 = vmatpush1.msra.mxu0 0.0
    %6400 = vmatprep.subr.mxu0 0.0
    %6401 = vmatpush1.msra.mxu0 0.0
    %6402 = vmatprep.subr.mxu0 0.0
    %6403 = vmatpush1.msra.mxu0 0.0
    %6404 = vmatprep.subr.mxu0 0.0
    %6405 = vmatpush1.msra.mxu0 0.0
    %6406 = vmatprep.subr.mxu0 0.0
    %6407 = vmatpush1.msra.mxu0 0.0
    %6408 = vmatprep.subr.mxu0 0.0
    %6409 = vmatpush1.msra.mxu0 0.0
    %6410 = vmatprep.subr.mxu0 0.0
    %6411 = vmatpush1.msra.mxu0 0.0
    %6412 = vmatprep.subr.mxu0 0.0
    %6413 = vmatpush1.msra.mxu0 0.0
    %6414 = vmatprep.subr.mxu0 0.0
    %6415 = vmatpush1.msra.mxu0 0.0
    %6416 = vmatprep.subr.mxu0 0.0
    %6417 = vmatpush1.msra.mxu0 0.0
    %6418 = vmatprep.subr.mxu0 0.0
    %6419 = vmatpush1.msra.mxu0 0.0
    %6420 = vmatprep.subr.mxu0 0.0
    %6421 = vmatpush1.msra.mxu0 0.0
    %6422 = vmatprep.subr.mxu0 0.0
    %6423 = vmatpush1.msra.mxu0 0.0
    %6424 = vmatprep.subr.mxu0 0.0
    %6425 = vmatpush1.msra.mxu0 0.0
    %6426 = vmatprep.subr.mxu0 0.0
    %6427 = vmatpush1.msra.mxu0 0.0
    %6428 = vmatprep.subr.mxu0 0.0
    %6429 = vmatpush1.msra.mxu0 0.0
    %6430 = vmatprep.subr.mxu0 0.0
    %6431 = vmatpush1.msra.mxu0 0.0
    %6432 = vmatprep.subr.mxu0 0.0
    %6433 = vmatpush1.msra.mxu0 0.0
    %6434 = vmatprep.subr.mxu0 0.0
    %6435 = vmatpush1.msra.mxu0 0.0
    %6436 = vmatprep.subr.mxu0 0.0
    %6437 = vmatpush1.msra.mxu0 0.0
    %6438 = vmatprep.subr.mxu0 0.0
    %6439 = vmatpush1.msra.mxu0 0.0
    %6440 = vmatprep.subr.mxu0 0.0
    %6441 = vmatpush1.msra.mxu0 0.0
    %6442 = vmatprep.subr.mxu0 0.0
    %6443 = vmatpush1.msra.mxu0 0.0
    %6444 = vmatprep.subr.mxu0 0.0
    %6445 = vmatpush1.msra.mxu0 0.0
    %6446 = vmatprep.subr.mxu0 0.0
    %6447 = vmatpush1.msra.mxu0 0.0
    %6448 = vmatprep.subr.mxu0 0.0
    %6449 = vmatpush1.msra.mxu0 0.0
    %6450 = vmatprep.mubr.f32.mxu0 0.0
    %v6451 = vand.u32 %v6379, 4294901760
    %v6452 = vsub.f32 %v6379, %v6451
    %v6453 = vand.u32 %v6452, 4294901760
    %v6454 = vsub.f32 %v6452, %v6453
    %v6455 = vand.u32 %v6454, 4294901760
    %6456 = vmatmul.mubr.f32.gmra.mrb[0].mxu0 %v6455
    %v6457 = vpop.f32.mrb[0].mxu0
    %v6458 = vadd.f32 %v6369, %v6457
    %v6459 = vpop.f32.mrb[0].mxu0
    %6460 = vmatprep.mubr.f32.mxu0 0.0
    %v6461 = vand.u32 %v6382, 4294901760
    %v6462 = vsub.f32 %v6382, %v6461
    %v6463 = vand.u32 %v6462, 4294901760
    %v6464 = vsub.f32 %v6462, %v6463
    %v6465 = vand.u32 %v6464, 4294901760
    %6466 = vmatmul.mubr.f32.gmra.mrb[0].mxu0 %v6465
    %v6467 = vpop.f32.mrb[0].mxu0
    %v6468 = vadd.f32 %v6375, %v6467
    %v6469 = vpop.f32.mrb[0].mxu0
    %6470 = vdwg.mxu0
    %6471 = vmatprep.subr.mxu0 0.0
    %v6472 = vand.u32 %v5865, 4294901760
    %v6473 = vsub.f32 %v5865, %v6472
    %v6474 = vand.u32 %v6473, 4294901760
    %v6475 = vsub.f32 %v6473, %v6474
    %v6476 = vand.u32 %v6475, 4294901760
    %6477 = vmatpush1.msra.mxu0 %v6476
    %6478 = vmatprep.subr.mxu0 0.0
    %v6479 = vand.u32 %v5866, 4294901760
    %v6480 = vsub.f32 %v5866, %v6479
    %v6481 = vand.u32 %v6480, 4294901760
    %v6482 = vsub.f32 %v6480, %v6481
    %v6483 = vand.u32 %v6482, 4294901760
    %6484 = vmatpush1.msra.mxu0 %v6483
    %6485 = vmatprep.subr.mxu0 0.0
    %6486 = vmatpush1.msra.mxu0 0.0
    %6487 = vmatprep.subr.mxu0 0.0
    %6488 = vmatpush1.msra.mxu0 0.0
    %6489 = vmatprep.subr.mxu0 0.0
    %6490 = vmatpush1.msra.mxu0 0.0
    %6491 = vmatprep.subr.mxu0 0.0
    %6492 = vmatpush1.msra.mxu0 0.0
    %6493 = vmatprep.subr.mxu0 0.0
    %6494 = vmatpush1.msra.mxu0 0.0
    %6495 = vmatprep.subr.mxu0 0.0
    %6496 = vmatpush1.msra.mxu0 0.0
    %6497 = vmatprep.subr.mxu0 0.0
    %6498 = vmatpush1.msra.mxu0 0.0
    %6499 = vmatprep.subr.mxu0 0.0
    %6500 = vmatpush1.msra.mxu0 0.0
    %6501 = vmatprep.subr.mxu0 0.0
    %6502 = vmatpush1.msra.mxu0 0.0
    %6503 = vmatprep.subr.mxu0 0.0
    %6504 = vmatpush1.msra.mxu0 0.0
    %6505 = vmatprep.subr.mxu0 0.0
    %6506 = vmatpush1.msra.mxu0 0.0
    %6507 = vmatprep.subr.mxu0 0.0
    %6508 = vmatpush1.msra.mxu0 0.0
    %6509 = vmatprep.subr.mxu0 0.0
    %6510 = vmatpush1.msra.mxu0 0.0
    %6511 = vmatprep.subr.mxu0 0.0
    %6512 = vmatpush1.msra.mxu0 0.0
    %6513 = vmatprep.subr.mxu0 0.0
    %6514 = vmatpush1.msra.mxu0 0.0
    %6515 = vmatprep.subr.mxu0 0.0
    %6516 = vmatpush1.msra.mxu0 0.0
    %6517 = vmatprep.subr.mxu0 0.0
    %6518 = vmatpush1.msra.mxu0 0.0
    %6519 = vmatprep.subr.mxu0 0.0
    %6520 = vmatpush1.msra.mxu0 0.0
    %6521 = vmatprep.subr.mxu0 0.0
    %6522 = vmatpush1.msra.mxu0 0.0
    %6523 = vmatprep.subr.mxu0 0.0
    %6524 = vmatpush1.msra.mxu0 0.0
    %6525 = vmatprep.subr.mxu0 0.0
    %6526 = vmatpush1.msra.mxu0 0.0
    %6527 = vmatprep.subr.mxu0 0.0
    %6528 = vmatpush1.msra.mxu0 0.0
    %6529 = vmatprep.subr.mxu0 0.0
    %6530 = vmatpush1.msra.mxu0 0.0
    %6531 = vmatprep.subr.mxu0 0.0
    %6532 = vmatpush1.msra.mxu0 0.0
    %6533 = vmatprep.subr.mxu0 0.0
    %6534 = vmatpush1.msra.mxu0 0.0
    %6535 = vmatprep.subr.mxu0 0.0
    %6536 = vmatpush1.msra.mxu0 0.0
    %6537 = vmatprep.subr.mxu0 0.0
    %6538 = vmatpush1.msra.mxu0 0.0
    %6539 = vmatprep.subr.mxu0 0.0
    %6540 = vmatpush1.msra.mxu0 0.0
    %6541 = vmatprep.subr.mxu0 0.0
    %6542 = vmatpush1.msra.mxu0 0.0
    %6543 = vmatprep.subr.mxu0 0.0
    %6544 = vmatpush1.msra.mxu0 0.0
    %6545 = vmatprep.mubr.f32.mxu0 0.0
    %v6546 = vand.u32 %v6379, 4294901760
    %6547 = vmatmul.mubr.f32.gmra.mrb[0].mxu0 %v6546
    %v6548 = vpop.f32.mrb[0].mxu0
    %v6549 = vadd.f32 %v6458, %v6548
    %v6550 = vpop.f32.mrb[0].mxu0
    %6551 = vmatprep.mubr.f32.mxu0 0.0
    %v6552 = vand.u32 %v6382, 4294901760
    %6553 = vmatmul.mubr.f32.gmra.mrb[0].mxu0 %v6552
    %v6554 = vpop.f32.mrb[0].mxu0
    %v6555 = vadd.f32 %v6468, %v6554
    %v6556 = vpop.f32.mrb[0].mxu0
    %6557 = vdwg.mxu0
    %6558 = vmatprep.subr.mxu0 0.0
    %v6559 = vand.u32 %v5865, 4294901760
    %v6560 = vsub.f32 %v5865, %v6559
    %6561 = vmatpush1.msra.mxu0 %v6560
    %6562 = vmatprep.subr.mxu0 0.0
    %v6563 = vand.u32 %v5866, 4294901760
    %v6564 = vsub.f32 %v5866, %v6563
    %6565 = vmatpush1.msra.mxu0 %v6564
    %6566 = vmatprep.subr.mxu0 0.0
    %6567 = vmatpush1.msra.mxu0 0.0
    %6568 = vmatprep.subr.mxu0 0.0
    %6569 = vmatpush1.msra.mxu0 0.0
    %6570 = vmatprep.subr.mxu0 0.0
    %6571 = vmatpush1.msra.mxu0 0.0
    %6572 = vmatprep.subr.mxu0 0.0
    %6573 = vmatpush1.msra.mxu0 0.0
    %6574 = vmatprep.subr.mxu0 0.0
    %6575 = vmatpush1.msra.mxu0 0.0
    %6576 = vmatprep.subr.mxu0 0.0
    %6577 = vmatpush1.msra.mxu0 0.0
    %6578 = vmatprep.subr.mxu0 0.0
    %6579 = vmatpush1.msra.mxu0 0.0
    %6580 = vmatprep.subr.mxu0 0.0
    %6581 = vmatpush1.msra.mxu0 0.0
    %6582 = vmatprep.subr.mxu0 0.0
    %6583 = vmatpush1.msra.mxu0 0.0
    %6584 = vmatprep.subr.mxu0 0.0
    %6585 = vmatpush1.msra.mxu0 0.0
    %6586 = vmatprep.subr.mxu0 0.0
    %6587 = vmatpush1.msra.mxu0 0.0
    %6588 = vmatprep.subr.mxu0 0.0
    %6589 = vmatpush1.msra.mxu0 0.0
    %6590 = vmatprep.subr.mxu0 0.0
    %6591 = vmatpush1.msra.mxu0 0.0
    %6592 = vmatprep.subr.mxu0 0.0
    %6593 = vmatpush1.msra.mxu0 0.0
    %6594 = vmatprep.subr.mxu0 0.0
    %6595 = vmatpush1.msra.mxu0 0.0
    %6596 = vmatprep.subr.mxu0 0.0
    %6597 = vmatpush1.msra.mxu0 0.0
    %6598 = vmatprep.subr.mxu0 0.0
    %6599 = vmatpush1.msra.mxu0 0.0
    %6600 = vmatprep.subr.mxu0 0.0
    %6601 = vmatpush1.msra.mxu0 0.0
    %6602 = vmatprep.subr.mxu0 0.0
    %6603 = vmatpush1.msra.mxu0 0.0
    %6604 = vmatprep.subr.mxu0 0.0
    %6605 = vmatpush1.msra.mxu0 0.0
    %6606 = vmatprep.subr.mxu0 0.0
    %6607 = vmatpush1.msra.mxu0 0.0
    %6608 = vmatprep.subr.mxu0 0.0
    %6609 = vmatpush1.msra.mxu0 0.0
    %6610 = vmatprep.subr.mxu0 0.0
    %6611 = vmatpush1.msra.mxu0 0.0
    %6612 = vmatprep.subr.mxu0 0.0
    %6613 = vmatpush1.msra.mxu0 0.0
    %6614 = vmatprep.subr.mxu0 0.0
    %6615 = vmatpush1.msra.mxu0 0.0
    %6616 = vmatprep.subr.mxu0 0.0
    %6617 = vmatpush1.msra.mxu0 0.0
    %6618 = vmatprep.subr.mxu0 0.0
    %6619 = vmatpush1.msra.mxu0 0.0
    %6620 = vmatprep.subr.mxu0 0.0
    %6621 = vmatpush1.msra.mxu0 0.0
    %6622 = vmatprep.subr.mxu0 0.0
    %6623 = vmatpush1.msra.mxu0 0.0
    %6624 = vmatprep.subr.mxu0 0.0
    %6625 = vmatpush1.msra.mxu0 0.0
    %6626 = vmatprep.mubr.f32.mxu0 0.0
    %v6627 = vand.u32 %v6379, 4294901760
    %v6628 = vsub.f32 %v6379, %v6627
    %6629 = vmatmul.mubr.f32.gmra.mrb[0].mxu0 %v6628
    %v6630 = vpop.f32.mrb[0].mxu0
    %v6631 = vadd.f32 %v6549, %v6630
    %v6632 = vpop.f32.mrb[0].mxu0
    %6633 = vmatprep.mubr.f32.mxu0 0.0
    %v6634 = vand.u32 %v6382, 4294901760
    %v6635 = vsub.f32 %v6382, %v6634
    %6636 = vmatmul.mubr.f32.gmra.mrb[0].mxu0 %v6635
    %v6637 = vpop.f32.mrb[0].mxu0
    %v6638 = vadd.f32 %v6555, %v6637
    %v6639 = vpop.f32.mrb[0].mxu0
    %6640 = vdwg.mxu0
    %6641 = vmatprep.subr.mxu0 0.0
    %v6642 = vand.u32 %v5865, 4294901760
    %6643 = vmatpush1.msra.mxu0 %v6642
    %6644 = vmatprep.subr.mxu0 0.0
    %v6645 = vand.u32 %v5866, 4294901760
    %6646 = vmatpush1.msra.mxu0 %v6645
    %6647 = vmatprep.subr.mxu0 0.0
    %6648 = vmatpush1.msra.mxu0 0.0
    %6649 = vmatprep.subr.mxu0 0.0
    %6650 = vmatpush1.msra.mxu0 0.0
    %6651 = vmatprep.subr.mxu0 0.0
    %6652 = vmatpush1.msra.mxu0 0.0
    %6653 = vmatprep.subr.mxu0 0.0
    %6654 = vmatpush1.msra.mxu0 0.0
    %6655 = vmatprep.subr.mxu0 0.0
    %6656 = vmatpush1.msra.mxu0 0.0
    %6657 = vmatprep.subr.mxu0 0.0
    %6658 = vmatpush1.msra.mxu0 0.0
    %6659 = vmatprep.subr.mxu0 0.0
    %6660 = vmatpush1.msra.mxu0 0.0
    %6661 = vmatprep.subr.mxu0 0.0
    %6662 = vmatpush1.msra.mxu0 0.0
    %6663 = vmatprep.subr.mxu0 0.0
    %6664 = vmatpush1.msra.mxu0 0.0
    %6665 = vmatprep.subr.mxu0 0.0
    %6666 = vmatpush1.msra.mxu0 0.0
    %6667 = vmatprep.subr.mxu0 0.0
    %6668 = vmatpush1.msra.mxu0 0.0
    %6669 = vmatprep.subr.mxu0 0.0
    %6670 = vmatpush1.msra.mxu0 0.0
    %6671 = vmatprep.subr.mxu0 0.0
    %6672 = vmatpush1.msra.mxu0 0.0
    %6673 = vmatprep.subr.mxu0 0.0
    %6674 = vmatpush1.msra.mxu0 0.0
    %6675 = vmatprep.subr.mxu0 0.0
    %6676 = vmatpush1.msra.mxu0 0.0
    %6677 = vmatprep.subr.mxu0 0.0
    %6678 = vmatpush1.msra.mxu0 0.0
    %6679 = vmatprep.subr.mxu0 0.0
    %6680 = vmatpush1.msra.mxu0 0.0
    %6681 = vmatprep.subr.mxu0 0.0
    %6682 = vmatpush1.msra.mxu0 0.0
    %6683 = vmatprep.subr.mxu0 0.0
    %6684 = vmatpush1.msra.mxu0 0.0
    %6685 = vmatprep.subr.mxu0 0.0
    %6686 = vmatpush1.msra.mxu0 0.0
    %6687 = vmatprep.subr.mxu0 0.0
    %6688 = vmatpush1.msra.mxu0 0.0
    %6689 = vmatprep.subr.mxu0 0.0
    %6690 = vmatpush1.msra.mxu0 0.0
    %6691 = vmatprep.subr.mxu0 0.0
    %6692 = vmatpush1.msra.mxu0 0.0
    %6693 = vmatprep.subr.mxu0 0.0
    %6694 = vmatpush1.msra.mxu0 0.0
    %6695 = vmatprep.subr.mxu0 0.0
    %6696 = vmatpush1.msra.mxu0 0.0
    %6697 = vmatprep.subr.mxu0 0.0
    %6698 = vmatpush1.msra.mxu0 0.0
    %6699 = vmatprep.subr.mxu0 0.0
    %6700 = vmatpush1.msra.mxu0 0.0
    %6701 = vmatprep.subr.mxu0 0.0
    %6702 = vmatpush1.msra.mxu0 0.0
    %6703 = vmatprep.subr.mxu0 0.0
    %6704 = vmatpush1.msra.mxu0 0.0
    %6705 = vmatprep.subr.mxu0 0.0
    %6706 = vmatpush1.msra.mxu0 0.0
    %6707 = vmatprep.mubr.f32.mxu0 0.0
    %v6708 = vand.u32 %v6379, 4294901760
    %v6709 = vsub.f32 %v6379, %v6708
    %v6710 = vand.u32 %v6709, 4294901760
    %6711 = vmatmul.mubr.f32.gmra.mrb[0].mxu0 %v6710
    %v6712 = vpop.f32.mrb[0].mxu0
    %v6713 = vadd.f32 %v6631, %v6712
    %v6714 = vpop.f32.mrb[0].mxu0
    %6715 = vmatprep.mubr.f32.mxu0 0.0
    %v6716 = vand.u32 %v6382, 4294901760
    %v6717 = vsub.f32 %v6382, %v6716
    %v6718 = vand.u32 %v6717, 4294901760
    %6719 = vmatmul.mubr.f32.gmra.mrb[0].mxu0 %v6718
    %v6720 = vpop.f32.mrb[0].mxu0
    %v6721 = vadd.f32 %v6638, %v6720
    %v6722 = vpop.f32.mrb[0].mxu0
    %6723 = vdwg.mxu0
    %6724 = vmatprep.subr.mxu0 0.0
    %v6725 = vand.u32 %v5865, 4294901760
    %v6726 = vsub.f32 %v5865, %v6725
    %v6727 = vand.u32 %v6726, 4294901760
    %6728 = vmatpush1.msra.mxu0 %v6727
    %6729 = vmatprep.subr.mxu0 0.0
    %v6730 = vand.u32 %v5866, 4294901760
    %v6731 = vsub.f32 %v5866, %v6730
    %v6732 = vand.u32 %v6731, 4294901760
    %6733 = vmatpush1.msra.mxu0 %v6732
    %6734 = vmatprep.subr.mxu0 0.0
    %6735 = vmatpush1.msra.mxu0 0.0
    %6736 = vmatprep.subr.mxu0 0.0
    %6737 = vmatpush1.msra.mxu0 0.0
    %6738 = vmatprep.subr.mxu0 0.0
    %6739 = vmatpush1.msra.mxu0 0.0
    %6740 = vmatprep.subr.mxu0 0.0
    %6741 = vmatpush1.msra.mxu0 0.0
    %6742 = vmatprep.subr.mxu0 0.0
    %6743 = vmatpush1.msra.mxu0 0.0
    %6744 = vmatprep.subr.mxu0 0.0
    %6745 = vmatpush1.msra.mxu0 0.0
    %6746 = vmatprep.subr.mxu0 0.0
    %6747 = vmatpush1.msra.mxu0 0.0
    %6748 = vmatprep.subr.mxu0 0.0
    %6749 = vmatpush1.msra.mxu0 0.0
    %6750 = vmatprep.subr.mxu0 0.0
    %6751 = vmatpush1.msra.mxu0 0.0
    %6752 = vmatprep.subr.mxu0 0.0
    %6753 = vmatpush1.msra.mxu0 0.0
    %6754 = vmatprep.subr.mxu0 0.0
    %6755 = vmatpush1.msra.mxu0 0.0
    %6756 = vmatprep.subr.mxu0 0.0
    %6757 = vmatpush1.msra.mxu0 0.0
    %6758 = vmatprep.subr.mxu0 0.0
    %6759 = vmatpush1.msra.mxu0 0.0
    %6760 = vmatprep.subr.mxu0 0.0
    %6761 = vmatpush1.msra.mxu0 0.0
    %6762 = vmatprep.subr.mxu0 0.0
    %6763 = vmatpush1.msra.mxu0 0.0
    %6764 = vmatprep.subr.mxu0 0.0
    %6765 = vmatpush1.msra.mxu0 0.0
    %6766 = vmatprep.subr.mxu0 0.0
    %6767 = vmatpush1.msra.mxu0 0.0
    %6768 = vmatprep.subr.mxu0 0.0
    %6769 = vmatpush1.msra.mxu0 0.0
    %6770 = vmatprep.subr.mxu0 0.0
    %6771 = vmatpush1.msra.mxu0 0.0
    %6772 = vmatprep.subr.mxu0 0.0
    %6773 = vmatpush1.msra.mxu0 0.0
    %6774 = vmatprep.subr.mxu0 0.0
    %6775 = vmatpush1.msra.mxu0 0.0
    %6776 = vmatprep.subr.mxu0 0.0
    %6777 = vmatpush1.msra.mxu0 0.0
    %6778 = vmatprep.subr.mxu0 0.0
    %6779 = vmatpush1.msra.mxu0 0.0
    %6780 = vmatprep.subr.mxu0 0.0
    %6781 = vmatpush1.msra.mxu0 0.0
    %6782 = vmatprep.subr.mxu0 0.0
    %6783 = vmatpush1.msra.mxu0 0.0
    %6784 = vmatprep.subr.mxu0 0.0
    %6785 = vmatpush1.msra.mxu0 0.0
    %6786 = vmatprep.subr.mxu0 0.0
    %6787 = vmatpush1.msra.mxu0 0.0
    %6788 = vmatprep.subr.mxu0 0.0
    %6789 = vmatpush1.msra.mxu0 0.0
    %6790 = vmatprep.subr.mxu0 0.0
    %6791 = vmatpush1.msra.mxu0 0.0
    %6792 = vmatprep.subr.mxu0 0.0
    %6793 = vmatpush1.msra.mxu0 0.0
    %6794 = vmatprep.mubr.f32.mxu0 0.0
    %v6795 = vand.u32 %v6379, 4294901760
    %6796 = vmatmul.mubr.f32.gmra.mrb[0].mxu0 %v6795
    %v6797 = vpop.f32.mrb[0].mxu0
    %v6798 = vadd.f32 %v6713, %v6797
    %v6799 = vpop.f32.mrb[0].mxu0
    %6800 = vmatprep.mubr.f32.mxu0 0.0
    %v6801 = vand.u32 %v6382, 4294901760
    %6802 = vmatmul.mubr.f32.gmra.mrb[0].mxu0 %v6801
    %v6803 = vpop.f32.mrb[0].mxu0
    %v6804 = vadd.f32 %v6721, %v6803
    %v6805 = vpop.f32.mrb[0].mxu0
    %6806 = vdwg.mxu0
    %6807 = vmatprep.subr.mxu0 0.0
    %v6808 = vand.u32 %v5865, 4294901760
    %6809 = vmatpush1.msra.mxu0 %v6808
    %6810 = vmatprep.subr.mxu0 0.0
    %v6811 = vand.u32 %v5866, 4294901760
    %6812 = vmatpush1.msra.mxu0 %v6811
    %6813 = vmatprep.subr.mxu0 0.0
    %6814 = vmatpush1.msra.mxu0 0.0
    %6815 = vmatprep.subr.mxu0 0.0
    %6816 = vmatpush1.msra.mxu0 0.0
    %6817 = vmatprep.subr.mxu0 0.0
    %6818 = vmatpush1.msra.mxu0 0.0
    %6819 = vmatprep.subr.mxu0 0.0
    %6820 = vmatpush1.msra.mxu0 0.0
    %6821 = vmatprep.subr.mxu0 0.0
    %6822 = vmatpush1.msra.mxu0 0.0
    %6823 = vmatprep.subr.mxu0 0.0
    %6824 = vmatpush1.msra.mxu0 0.0
    %6825 = vmatprep.subr.mxu0 0.0
    %6826 = vmatpush1.msra.mxu0 0.0
    %6827 = vmatprep.subr.mxu0 0.0
    %6828 = vmatpush1.msra.mxu0 0.0
    %6829 = vmatprep.subr.mxu0 0.0
    %6830 = vmatpush1.msra.mxu0 0.0
    %6831 = vmatprep.subr.mxu0 0.0
    %6832 = vmatpush1.msra.mxu0 0.0
    %6833 = vmatprep.subr.mxu0 0.0
    %6834 = vmatpush1.msra.mxu0 0.0
    %6835 = vmatprep.subr.mxu0 0.0
    %6836 = vmatpush1.msra.mxu0 0.0
    %6837 = vmatprep.subr.mxu0 0.0
    %6838 = vmatpush1.msra.mxu0 0.0
    %6839 = vmatprep.subr.mxu0 0.0
    %6840 = vmatpush1.msra.mxu0 0.0
    %6841 = vmatprep.subr.mxu0 0.0
    %6842 = vmatpush1.msra.mxu0 0.0
    %6843 = vmatprep.subr.mxu0 0.0
    %6844 = vmatpush1.msra.mxu0 0.0
    %6845 = vmatprep.subr.mxu0 0.0
    %6846 = vmatpush1.msra.mxu0 0.0
    %6847 = vmatprep.subr.mxu0 0.0
    %6848 = vmatpush1.msra.mxu0 0.0
    %6849 = vmatprep.subr.mxu0 0.0
    %6850 = vmatpush1.msra.mxu0 0.0
    %6851 = vmatprep.subr.mxu0 0.0
    %6852 = vmatpush1.msra.mxu0 0.0
    %6853 = vmatprep.subr.mxu0 0.0
    %6854 = vmatpush1.msra.mxu0 0.0
    %6855 = vmatprep.subr.mxu0 0.0
    %6856 = vmatpush1.msra.mxu0 0.0
    %6857 = vmatprep.subr.mxu0 0.0
    %6858 = vmatpush1.msra.mxu0 0.0
    %6859 = vmatprep.subr.mxu0 0.0
    %6860 = vmatpush1.msra.mxu0 0.0
    %6861 = vmatprep.subr.mxu0 0.0
    %6862 = vmatpush1.msra.mxu0 0.0
    %6863 = vmatprep.subr.mxu0 0.0
    %6864 = vmatpush1.msra.mxu0 0.0
    %6865 = vmatprep.subr.mxu0 0.0
    %6866 = vmatpush1.msra.mxu0 0.0
    %6867 = vmatprep.subr.mxu0 0.0
    %6868 = vmatpush1.msra.mxu0 0.0
    %6869 = vmatprep.subr.mxu0 0.0
    %6870 = vmatpush1.msra.mxu0 0.0
    %6871 = vmatprep.subr.mxu0 0.0
    %6872 = vmatpush1.msra.mxu0 0.0
    %6873 = vmatprep.mubr.f32.mxu0 0.0
    %v6874 = vand.u32 %v6379, 4294901760
    %6875 = vmatmul.mubr.f32.gmra.mrb[0].mxu0 %v6874
    %v6876 = vpop.f32.mrb[0].mxu0
    %v6877 = vadd.f32 %v6798, %v6876
    %v6878 = vpop.f32.mrb[0].mxu0
    %6879 = vmatprep.mubr.f32.mxu0 0.0
    %v6880 = vand.u32 %v6382, 4294901760
    %6881 = vmatmul.mubr.f32.gmra.mrb[0].mxu0 %v6880
    %v6882 = vpop.f32.mrb[0].mxu0
    %v6883 = vadd.f32 %v6804, %v6882
    %v6884 = vpop.f32.mrb[0].mxu0
    %6885 = vdwg.mxu0
    %v6886 = vld [vmem:[%s7] sm:$0x1]
    %v6888 = vlaneseq
    %v6889 = vshrl.u32 %v6888, 7
    %v6890 = vsub.s32 0, %v6889
    %v6891 = vrot.slane %v6886, %v6890
    %v6893 = vadd.f32 %v6877, %v6891
    %v6894 = vadd.f32 %v6883, %v6891
    %6895 = vst.msk [vmem:[#allocation2] sm:$0xff] %vm48, %v6893
    %6896 = vst.msk [vmem:[#allocation2 + $0x8] sm:$0xff] %vm48, %v6894
    // Predicated region
    $region34: #{tpu_custom_call.1} parent=1 // pred_check
      _
    $region35: #{tpu_custom_call.1} parent=1 // pred_check_branch
      %6898 = sbr.rel (0) target = $region37
    $region36: #{tpu_custom_call.1} parent=1 // pred_region
      %s6900 = ssub.s32 256, 256
      %6901 = vsyncadd [#allocation3], %s6900
      %s6902 = sshll.u32 [#allocation2], 4
      %s6903 = int_to_ptr.vmem [resolvable:$true] %s6902
      %6908 = dma.vmem_to_hbm [thread:$0]  %s6903, 256, %s8, [#allocation3], 128, 128, 8
    $region37: #{tpu_custom_call.1} parent=1 // pred_fallthru
      _
    // Predicated region
    $region38: #{tpu_custom_call.1} parent=1 // pred_check
      _
    $region39: #{tpu_custom_call.1} parent=1 // pred_check_branch
      %6910 = sbr.rel (0) target = $region41
    $region40: #{tpu_custom_call.1} parent=1 // pred_region
      %s6912 = ssub.s32 512, 512
      %6913 = vsyncadd [#allocation5], %s6912
      %s6914 = sshll.u32 [#allocation4], 4
      %s6915 = int_to_ptr.vmem [resolvable:$true] %s6914
      %6920 = dma.vmem_to_hbm [thread:$0]  %s6915, 512, %s9, [#allocation5], 128, 128, 8
    $region41: #{tpu_custom_call.1} parent=1 // pred_fallthru
      _
    // Predicated region
    $region42: #{tpu_custom_call.1} parent=1 // pred_check
      _
    $region43: #{tpu_custom_call.1} parent=1 // pred_check_branch
      %6922 = sbr.rel (0) target = $region45
    $region44: #{tpu_custom_call.1} parent=1 // pred_region
      %6923 = dma.done [#allocation3], 256
    $region45: #{tpu_custom_call.1} parent=1 // pred_fallthru
      _
    // Predicated region
    $region46: #{tpu_custom_call.1} parent=1 // pred_check
      _
    $region47: #{tpu_custom_call.1} parent=1 // pred_check_branch
      %6925 = sbr.rel (0) target = $region49
    $region48: #{tpu_custom_call.1} parent=1 // pred_region
      %6926 = dma.done [#allocation5], 512
    $region49: #{tpu_custom_call.1} parent=1 // pred_fallthru
      _
    %6927 = vsyncpa [#allocation3], 1
    %6928 = vsyncpa [#allocation5], 1

</llo_original>
